<compile_context>
chip_gen: v7x
topology: tpu7x:2x2x1
jax: 0.10.0
libtpu: 0.0.40
codegen_flags: <defaults>
</compile_context>

<pallas_src>
import jax
import jax.numpy as jnp
from jax.experimental import pallas as pl
from jax.experimental.pallas import tpu as pltpu

# ----------------------- small, self-consistent config -----------------------
B = 2                     # batch
NL = 16                   # max_curves_num == nl (pos_emb broadcast requires equality)
NQ = 8                    # wireframe_latent_num
BNL = B * NL              # 32 context rows (batch folded onto sublanes)
BNQ = B * NQ              # 16 query rows
COOR_EMB = 32             # coor_embed_dim -> PointEmbed output dim = 3 * COOR_EMB
PED = 3 * COOR_EMB        # 96
PE_HIDDEN = 48            # 24 sin + 24 cos fourier features
NF = PE_HIDDEN // 6       # 8 frequencies per coordinate
PE_FEAT = 3 * NF          # 24
MAX_COL, COL_EMB = 6, 16
MAX_ROW, ROW_EMB = 32, 32
CURVE_CH, CURVE_EMB = 12, 32
D = 128                   # attention dim
DEPTH = 2
HEADS = 4
DH = 32
FF_MULT = 4
FFD = FF_MULT * D         # 512
OUT_CH = 2 * 8            # double_z=True
INIT_DIM = 2 * PED + COL_EMB + ROW_EMB + CURVE_EMB   # 272

MXU_DTYPE = jnp.bfloat16  # matmul operand dtype (f32 accumulation everywhere)

# --------------------- packed-slab row offsets (all static) -------------------
# bf16 weight slab, 128 lanes
WS_SIN0, WS_COS0, WS_SIN1, WS_COS1 = 0, 128, 256, 384
WS_DIRECT = 512           # rows 0:3 pts0, 3:6 pts1, 6:18 curve (folded), rest 0
WS_OUTW = 640             # out_w zero-padded to (128,128)
WS_W2 = 768               # + FFD*l per layer
W_ROWS = WS_W2 + FFD * DEPTH                     # 1792

# f32 param slab, 512 lanes (128-wide vectors live in lanes [0:128))
PW = FFD                                         # 512
PR_EVEC, PR_FING, PR_FINB, PR_OUTB = 0, 1, 2, 3
PR_QINIT = 8                                     # 16 rows of batch-tiled queries
PR_LAYER = 24                                    # per layer (8 rows): g_att,b_att,g_ff,b_ff,bo,b2,b1,pad
P_ROWS = PR_LAYER + 8 * DEPTH                    # 40

# f32 activation slab, 128 lanes (built per call in the wrapper)
AR_REP = 0                                       # 2*BNL rows: coords repeated x NF (fourier input)
AR_DIRECT = 2 * BNL                              # BNL rows: [pts0|pts1|curve|0]
AR_CTXADD = AR_DIRECT + BNL                      # BNL rows: gathered col/row proj + static ctx bias
AR_MASK = AR_CTXADD + BNL                        # BNQ rows: additive attn bias (0 / -1e30) in lanes [0:BNL)
A_ROWS = AR_MASK + BNQ                           # 144


def _ln(x, g, b, eps=1e-5):
    mu = jnp.mean(x, axis=-1, keepdims=True)
    var = jnp.mean((x - mu) ** 2, axis=-1, keepdims=True)
    return (x - mu) * jax.lax.rsqrt(var + eps) * g + b


# ------------------------------ fused Pallas kernel ---------------------------
def _encoder1d_kernel(act_ref, w_ref, w1_ref, aw_ref, p_ref, o_ref):
    f32 = jnp.float32

    def mm(a, b):        # 2-D matmul, bf16 MXU operands, f32 accumulate
        return jnp.dot(a.astype(MXU_DTYPE), b.astype(MXU_DTYPE),
                       preferred_element_type=f32)

    def bmm(eq, a, b):   # head-batched matmul (heads on the leading axis)
        return jnp.einsum(eq, a.astype(MXU_DTYPE), b.astype(MXU_DTYPE),
                          preferred_element_type=f32)

    def vec(row):        # (1,128) f32 parameter row
        return p_ref[row:row + 1, 0:D]

    def wblk(r0, rows=D):
        return w_ref[r0:r0 + rows, :]           # (rows,128) bf16 weight block

    # ---- context build: PointEmbed + embeddings + attn_project_in (all pre-folded) ----
    # fourier phases stay in f32 (bf16 would lose phase accuracy at high freqs)
    proj = act_ref[AR_REP:AR_REP + 2 * BNL, :] * vec(PR_EVEC)        # (64,128)
    sn = jnp.sin(proj).astype(MXU_DTYPE)
    cs = jnp.cos(proj).astype(MXU_DTYPE)
    ctx = (jnp.dot(sn[:BNL], wblk(WS_SIN0), preferred_element_type=f32)
           + jnp.dot(cs[:BNL], wblk(WS_COS0), preferred_element_type=f32)
           + jnp.dot(sn[BNL:], wblk(WS_SIN1), preferred_element_type=f32)
           + jnp.dot(cs[BNL:], wblk(WS_COS1), preferred_element_type=f32)
           + mm(act_ref[AR_DIRECT:AR_DIRECT + BNL, :], wblk(WS_DIRECT))
           + act_ref[AR_CTXADD:AR_CTXADD + BNL, :])                   # (32,128) f32

    x = p_ref[PR_QINIT:PR_QINIT + BNQ, 0:D]                           # (16,128) queries
    bias = act_ref[AR_MASK:AR_MASK + BNQ, 0:BNL]                      # (16,32) additive mask bias
    ctx_h = jnp.broadcast_to(ctx.astype(MXU_DTYPE)[None], (HEADS, BNL, D))
    scale = f32(DH ** -0.5)

    for l in range(DEPTH):
        pb = PR_LAYER + 8 * l
        # -- cross-attention (pre-norm on queries only), heads batched on axis 0 --
        xn = _ln(x, vec(pb + 0), vec(pb + 1))
        xn_h = jnp.broadcast_to(xn.astype(MXU_DTYPE)[None], (HEADS, BNQ, D))
        q = bmm('hqd,hed->hqe', xn_h, aw_ref[4 * l + 0])              # (H,16,32)
        k = bmm('hkd,hed->hke', ctx_h, aw_ref[4 * l + 1])             # (H,32,32)
        v = bmm('hkd,hed->hke', ctx_h, aw_ref[4 * l + 2])             # (H,32,32)
        s = bmm('hqe,hke->hqk', q, k) * scale + bias[None]            # (H,16,32)
        s = s - jnp.max(s, axis=-1, keepdims=True)
        ap = jnp.exp(s)
        ap = ap * pl.reciprocal(jnp.sum(ap, axis=-1, keepdims=True), approx=True)
        oh = bmm('hqk,hke->hqe', ap, v)                               # (H,16,32)
        att = bmm('hqe,hed->hqd', oh, aw_ref[4 * l + 3])              # (H,16,128)
        x = jnp.sum(att, axis=0) + vec(pb + 4) + x                    # merge heads + residual

        # -- feed-forward (pre-norm) --
        yn = _ln(x, vec(pb + 2), vec(pb + 3))
        h = mm(yn, w1_ref[D * l:D * (l + 1), :]) + p_ref[pb + 6:pb + 7, :]   # (16,512)
        # TODO(synk): PyTorch nn.GELU default is erf-exact; tanh approximation used here.
        h = jax.nn.gelu(h, approximate=True)
        x = mm(h, wblk(WS_W2 + FFD * l, FFD)) + vec(pb + 5) + x

    # ---- final norm + project_out (lane-dense padded output) ----
    xn = _ln(x, vec(PR_FING), vec(PR_FINB))
    o_ref[...] = mm(xn, wblk(WS_OUTW)) + vec(PR_OUTB)


def _whole_spec(a):
    nd = a.ndim
    return pl.BlockSpec(a.shape, lambda i, _nd=nd: (0,) * _nd)


# --------------------------------- forward -----------------------------------
@jax.jit
def encoder1d_forward(kp, xs, flag_diffs):
    bsz, nl, _ = xs.shape
    assert bsz == B and nl == NL, "kernel params are specialized to (B, NL)"

    # 'b nl (nlv d) -> (b nl nlv) d' handled as two lane-aligned endpoint streams
    pts0 = xs[..., 0:3].reshape(bsz * nl, 3)
    pts1 = xs[..., 3:6].reshape(bsz * nl, 3)
    curve = xs[..., 6:].reshape(bsz * nl, CURVE_CH)

    flag = flag_diffs[..., 0]
    col_idx = flag_diffs[..., 1].reshape(-1)
    row_idx = flag_diffs[..., 2].reshape(-1)

    # TODO(synk): nn.Embedding lookups are pure gathers; kept as XLA glue on the
    # pre-projected (., 128) tables outside the kernel.
    ctx_add = (kp["ctx_bias"]
               + jnp.take(kp["col_proj"], col_idx, axis=0)
               + jnp.take(kp["row_proj"], row_idx, axis=0))            # (BNL, 128)

    # fourier input: each coordinate repeated NF times along lanes, both endpoints stacked
    pts_all = jnp.concatenate([pts0, pts1], axis=0)                    # (2*BNL, 3)
    rep = jnp.pad(jnp.repeat(pts_all, NF, axis=1), ((0, 0), (0, D - PE_FEAT)))
    # direct (un-foldable-through-sin) features: raw pts + curve channels
    direct = jnp.pad(jnp.concatenate([pts0, pts1, curve], axis=1),
                     ((0, 0), (0, D - (6 + CURVE_CH))))                # (BNL, 128)

    # block-diagonal batch mask x context validity (flag >= 1), as an additive bias
    bq = jnp.repeat(jnp.arange(bsz), NQ)
    bc = jnp.repeat(jnp.arange(bsz), nl)
    valid = (flag >= 1).reshape(bsz * nl)
    attend = (bq[:, None] == bc[None, :]) & valid[None, :]
    mask_bias = jnp.where(attend, 0.0, -1e30).astype(jnp.float32)      # (BNQ, BNL)
    mask_pad = jnp.pad(mask_bias, ((0, 0), (0, D - BNL)))

    act = jnp.concatenate([rep, direct, ctx_add, mask_pad], axis=0).astype(jnp.float32)

    args = (act, kp["w_slab"], kp["w1_slab"], kp["attnw"], kp["p_slab"])
    out = pl.pallas_call(
        _encoder1d_kernel,
        out_shape=jax.ShapeDtypeStruct((BNQ, D), jnp.float32),
        grid=(1,),
        in_specs=[_whole_spec(a) for a in args],
        out_specs=pl.BlockSpec((BNQ, D), lambda i: (0, 0)),
        compiler_params=pltpu.CompilerParams(dimension_semantics=("arbitrary",)),
    )(*args)
    return out[:, :OUT_CH].reshape(bsz, NQ, OUT_CH)


# ----------------------------- parameter init --------------------------------
def init_params(key):
    ks = iter(jax.random.split(key, 64))

    def nrm(shape, scale=0.02):
        return (scale * jax.random.normal(next(ks), shape)).astype(jnp.float32)

    params = dict(
        pe_w=nrm((PE_HIDDEN + 3, PED)),           # rows [sin(24) | cos(24) | xyz(3)]
        pe_b=jnp.zeros((1, PED), jnp.float32),
        col_tab=nrm((MAX_COL, COL_EMB), 1.0),
        row_tab=nrm((MAX_ROW, ROW_EMB), 1.0),
        lat_w=nrm((CURVE_CH, CURVE_EMB)),
        lat_b=jnp.zeros((1, CURVE_EMB), jnp.float32),
        pin_w=nrm((INIT_DIM, D)),                 # rows [pe0(96)|pe1(96)|col(16)|row(32)|curve(32)]
        pin_b=jnp.zeros((1, D), jnp.float32),
        pos_emb=nrm((NL, D), 1.0),
        queries=nrm((NQ, D), 1.0),
        final_g=jnp.ones((1, D), jnp.float32),
        final_beta=jnp.zeros((1, D), jnp.float32),
        out_w=nrm((D, OUT_CH)),
        out_b=jnp.zeros((1, OUT_CH), jnp.float32),
    )
    inner = HEADS * DH
    layers = []
    for _ in range(DEPTH):
        layers.append(dict(
            attn_g=jnp.ones((1, D), jnp.float32), attn_beta=jnp.zeros((1, D), jnp.float32),
            wq=nrm((D, inner)), wk=nrm((D, inner)), wv=nrm((D, inner)),
            wo=nrm((inner, D)), bo=jnp.zeros((1, D), jnp.float32),
            ff_g=jnp.ones((1, D), jnp.float32), ff_beta=jnp.zeros((1, D), jnp.float32),
            w1=nrm((D, FFD)), b1=jnp.zeros((1, FFD), jnp.float32),
            w2=nrm((FFD, D)), b2=jnp.zeros((1, D), jnp.float32),
        ))
    params["layers"] = layers
    return params


def pack_params(p):
    """One-time rearrangement + algebraic folding of module parameters into slabs."""
    f32 = jnp.float32
    pe_w, pin_w = p["pe_w"], p["pin_w"]
    pin0 = pin_w[0:PED]                                    # endpoint-0 block of attn_project_in
    pin1 = pin_w[PED:2 * PED]
    pin_col = pin_w[2 * PED:2 * PED + COL_EMB]
    pin_row = pin_w[2 * PED + COL_EMB:2 * PED + COL_EMB + ROW_EMB]
    pin_cur = pin_w[2 * PED + COL_EMB + ROW_EMB:]
    w_sin, w_cos, w_pts = pe_w[:PE_FEAT], pe_w[PE_FEAT:2 * PE_FEAT], pe_w[2 * PE_FEAT:]

    def pad_rows(a, rows):
        return jnp.pad(a, ((0, rows - a.shape[0]), (0, 0)))

    # folded (f32) context projections; cos-weight padding rows MUST be zero (cos(0)=1)
    wsin0 = pad_rows(w_sin @ pin0, D)
    wcos0 = pad_rows(w_cos @ pin0, D)
    wsin1 = pad_rows(w_sin @ pin1, D)
    wcos1 = pad_rows(w_cos @ pin1, D)
    w_direct = pad_rows(jnp.concatenate(
        [w_pts @ pin0, w_pts @ pin1, p["lat_w"] @ pin_cur], axis=0), D)
    out_w_pad = jnp.pad(p["out_w"], ((0, 0), (0, D - OUT_CH)))
    w2_all = jnp.concatenate([lp["w2"] for lp in p["layers"]], axis=0)
    w_slab = jnp.concatenate(
        [wsin0, wcos0, wsin1, wcos1, w_direct, out_w_pad, w2_all], axis=0).astype(MXU_DTYPE)
    assert w_slab.shape == (W_ROWS, D)

    w1_slab = jnp.concatenate([lp["w1"] for lp in p["layers"]], axis=0).astype(MXU_DTYPE)

    def qkv_t(w):     # (D, H*dh) -> (H, dh, D)
        return w.reshape(D, HEADS, DH).transpose(1, 2, 0)

    def o_heads(w):   # (H*dh, D) -> (H, dh, D)
        return w.reshape(HEADS, DH, D)

    attnw = jnp.concatenate(
        [jnp.stack([qkv_t(lp["wq"]), qkv_t(lp["wk"]), qkv_t(lp["wv"]), o_heads(lp["wo"])], axis=0)
         for lp in p["layers"]], axis=0).astype(MXU_DTYPE)            # (DEPTH*4, H, dh, D)

    # f32 param slab (512 lanes); 128-wide rows padded with zeros
    e = (2.0 ** jnp.arange(NF, dtype=f32)) * jnp.pi
    evec = jnp.zeros((1, PW), f32).at[0, 0:PE_FEAT].set(jnp.tile(e, 3))

    def row128(v):
        v = jnp.asarray(v, f32).reshape(1, -1)
        return jnp.pad(v, ((0, 0), (0, PW - v.shape[1])))

    rows = [evec, row128(p["final_g"]), row128(p["final_beta"]), row128(p["out_b"]),
            jnp.zeros((4, PW), f32),
            jnp.pad(jnp.tile(p["queries"], (B, 1)), ((0, 0), (0, PW - D)))]
    for lp in p["layers"]:
        rows += [row128(lp["attn_g"]), row128(lp["attn_beta"]),
                 row128(lp["ff_g"]), row128(lp["ff_beta"]),
                 row128(lp["bo"]), row128(lp["b2"]),
                 lp["b1"].reshape(1, FFD).astype(f32), jnp.zeros((1, PW), f32)]
    p_slab = jnp.concatenate(rows, axis=0)
    assert p_slab.shape == (P_ROWS, PW)

    # static additive context bias: pos_emb + pin_b + folded constant terms, batch-tiled
    ctx_bias = (jnp.tile(p["pos_emb"], (B, 1)) + p["pin_b"]
                + p["pe_b"] @ pin0 + p["pe_b"] @ pin1 + p["lat_b"] @ pin_cur)
    col_proj = p["col_tab"] @ pin_col                                 # (MAX_COL, 128)
    row_proj = p["row_tab"] @ pin_row                                 # (MAX_ROW, 128)

    return dict(w_slab=w_slab, w1_slab=w1_slab, attnw=attnw, p_slab=p_slab,
                ctx_bias=ctx_bias, col_proj=col_proj, row_proj=row_proj)


if __name__ == "__main__":
    root = jax.random.PRNGKey(0)
    k_param, k_xs, k_flag, k_col, k_row = jax.random.split(root, 5)

    params = init_params(k_param)
    kp = pack_params(params)

    xs = jax.random.normal(k_xs, (B, NL, 6 + CURVE_CH), dtype=jnp.float32)
    flag = (jax.random.uniform(k_flag, (B, NL, 1)) > 0.3).astype(jnp.int32)
    flag = flag.at[:, 0, :].set(1)                 # guarantee >=1 valid curve per batch
    col = jax.random.randint(k_col, (B, NL, 1), 0, MAX_COL)
    row = jax.random.randint(k_row, (B, NL, 1), 0, MAX_ROW)
    flag_diffs = jnp.concatenate([flag, col, row], axis=-1).astype(jnp.int32)

    out = encoder1d_forward(kp, xs, flag_diffs)    # (B, wireframe_latent_num, 2*out_channels)
    jax.block_until_ready(out)
    assert out.shape == (B, NQ, OUT_CH)
    assert bool(jnp.all(jnp.isfinite(out)))
    print("KERNEL_OK")
</pallas_src>

<mosaic_0001>
module attributes {stable_mosaic.version = 11 : i64} {
  func.func @_encoder1d_kernel(%arg0: i32, %arg1: memref<144x128xf32, #tpu.memory_space<vmem>>, %arg2: memref<1792x128xbf16, #tpu.memory_space<vmem>>, %arg3: memref<256x512xbf16, #tpu.memory_space<vmem>>, %arg4: memref<8x4x32x128xbf16, #tpu.memory_space<vmem>>, %arg5: memref<40x512xf32, #tpu.memory_space<vmem>>, %arg6: memref<16x128xf32, #tpu.memory_space<vmem>>) attributes {dimension_semantics = [#tpu.dimension_semantics<arbitrary>], iteration_bounds = array<i64: 1>, scalar_prefetch = 0 : i64, scratch_operands = 0 : i64, tpu.core_type = #tpu.core_type<tc>, window_params = [{pipeline_mode = #tpu.pipeline_mode<synchronous>, transform_indices = @transform_0, window_bounds = array<i64: 144, 128>}, {pipeline_mode = #tpu.pipeline_mode<synchronous>, transform_indices = @transform_1, window_bounds = array<i64: 1792, 128>}, {pipeline_mode = #tpu.pipeline_mode<synchronous>, transform_indices = @transform_2, window_bounds = array<i64: 256, 512>}, {pipeline_mode = #tpu.pipeline_mode<synchronous>, transform_indices = @transform_3, window_bounds = array<i64: 8, 4, 32, 128>}, {pipeline_mode = #tpu.pipeline_mode<synchronous>, transform_indices = @transform_4, window_bounds = array<i64: 40, 512>}, {pipeline_mode = #tpu.pipeline_mode<synchronous>, transform_indices = @transform_5, window_bounds = array<i64: 16, 128>}]} {
    %c0 = arith.constant 0 : index
    %c0_0 = arith.constant 0 : index
    %0 = vector.load %arg1[%c0, %c0_0] : memref<144x128xf32, #tpu.memory_space<vmem>>, vector<64x128xf32>
    %c0_1 = arith.constant 0 : index
    %c0_2 = arith.constant 0 : index
    %1 = vector.load %arg5[%c0_1, %c0_2] : memref<40x512xf32, #tpu.memory_space<vmem>>, vector<1x128xf32>
    %2 = vector.broadcast %1 : vector<1x128xf32> to vector<64x128xf32>
    %3 = arith.mulf %0, %2 : vector<64x128xf32>
    %4 = math.sin %3 : vector<64x128xf32>
    %5 = arith.truncf %4 : vector<64x128xf32> to vector<64x128xbf16>
    %6 = math.cos %3 : vector<64x128xf32>
    %7 = arith.truncf %6 : vector<64x128xf32> to vector<64x128xbf16>
    %8 = vector.extract_strided_slice %5 {offsets = [0, 0], sizes = [32, 128], strides = [1, 1]} : vector<64x128xbf16> to vector<32x128xbf16>
    %c0_3 = arith.constant 0 : index
    %c0_4 = arith.constant 0 : index
    %9 = vector.load %arg2[%c0_3, %c0_4] : memref<1792x128xbf16, #tpu.memory_space<vmem>>, vector<128x128xbf16>
    %cst = arith.constant dense<0.000000e+00> : vector<32x128xf32>
    %10 = tpu.matmul %8, %9, %cst {dimension_numbers = #tpu.dot_dimension_numbers<[1], [0], [0], [1], [0, 0, 1, 1], [], []>} : vector<32x128xbf16>, vector<128x128xbf16>, vector<32x128xf32> -> vector<32x128xf32>
    %11 = vector.extract_strided_slice %7 {offsets = [0, 0], sizes = [32, 128], strides = [1, 1]} : vector<64x128xbf16> to vector<32x128xbf16>
    %c128 = arith.constant 128 : index
    %c0_5 = arith.constant 0 : index
    %12 = vector.load %arg2[%c128, %c0_5] : memref<1792x128xbf16, #tpu.memory_space<vmem>>, vector<128x128xbf16>
    %cst_6 = arith.constant dense<0.000000e+00> : vector<32x128xf32>
    %13 = tpu.matmul %11, %12, %cst_6 {dimension_numbers = #tpu.dot_dimension_numbers<[1], [0], [0], [1], [0, 0, 1, 1], [], []>} : vector<32x128xbf16>, vector<128x128xbf16>, vector<32x128xf32> -> vector<32x128xf32>
    %14 = arith.addf %10, %13 : vector<32x128xf32>
    %15 = vector.extract_strided_slice %5 {offsets = [32, 0], sizes = [32, 128], strides = [1, 1]} : vector<64x128xbf16> to vector<32x128xbf16>
    %c256 = arith.constant 256 : index
    %c0_7 = arith.constant 0 : index
    %16 = vector.load %arg2[%c256, %c0_7] : memref<1792x128xbf16, #tpu.memory_space<vmem>>, vector<128x128xbf16>
    %cst_8 = arith.constant dense<0.000000e+00> : vector<32x128xf32>
    %17 = tpu.matmul %15, %16, %cst_8 {dimension_numbers = #tpu.dot_dimension_numbers<[1], [0], [0], [1], [0, 0, 1, 1], [], []>} : vector<32x128xbf16>, vector<128x128xbf16>, vector<32x128xf32> -> vector<32x128xf32>
    %18 = arith.addf %14, %17 : vector<32x128xf32>
    %19 = vector.extract_strided_slice %7 {offsets = [32, 0], sizes = [32, 128], strides = [1, 1]} : vector<64x128xbf16> to vector<32x128xbf16>
    %c384 = arith.constant 384 : index
    %c0_9 = arith.constant 0 : index
    %20 = vector.load %arg2[%c384, %c0_9] : memref<1792x128xbf16, #tpu.memory_space<vmem>>, vector<128x128xbf16>
    %cst_10 = arith.constant dense<0.000000e+00> : vector<32x128xf32>
    %21 = tpu.matmul %19, %20, %cst_10 {dimension_numbers = #tpu.dot_dimension_numbers<[1], [0], [0], [1], [0, 0, 1, 1], [], []>} : vector<32x128xbf16>, vector<128x128xbf16>, vector<32x128xf32> -> vector<32x128xf32>
    %22 = arith.addf %18, %21 : vector<32x128xf32>
    %c64 = arith.constant 64 : index
    %c0_11 = arith.constant 0 : index
    %23 = vector.load %arg1[%c64, %c0_11] : memref<144x128xf32, #tpu.memory_space<vmem>>, vector<32x128xf32>
    %c512 = arith.constant 512 : index
    %c0_12 = arith.constant 0 : index
    %24 = vector.load %arg2[%c512, %c0_12] : memref<1792x128xbf16, #tpu.memory_space<vmem>>, vector<128x128xbf16>
    %25 = arith.truncf %23 : vector<32x128xf32> to vector<32x128xbf16>
    %cst_13 = arith.constant dense<0.000000e+00> : vector<32x128xf32>
    %26 = tpu.matmul %25, %24, %cst_13 {dimension_numbers = #tpu.dot_dimension_numbers<[1], [0], [0], [1], [0, 0, 1, 1], [], []>} : vector<32x128xbf16>, vector<128x128xbf16>, vector<32x128xf32> -> vector<32x128xf32>
    %27 = arith.addf %22, %26 : vector<32x128xf32>
    %c96 = arith.constant 96 : index
    %c0_14 = arith.constant 0 : index
    %28 = vector.load %arg1[%c96, %c0_14] : memref<144x128xf32, #tpu.memory_space<vmem>>, vector<32x128xf32>
    %29 = arith.addf %27, %28 : vector<32x128xf32>
    %c8 = arith.constant 8 : index
    %c0_15 = arith.constant 0 : index
    %30 = vector.load %arg5[%c8, %c0_15] : memref<40x512xf32, #tpu.memory_space<vmem>>, vector<16x128xf32>
    %c128_16 = arith.constant 128 : index
    %c0_17 = arith.constant 0 : index
    %31 = vector.load %arg1[%c128_16, %c0_17] : memref<144x128xf32, #tpu.memory_space<vmem>>, vector<16x32xf32>
    %32 = arith.truncf %29 : vector<32x128xf32> to vector<32x128xbf16>
    %33 = vector.shape_cast %32 : vector<32x128xbf16> to vector<1x32x128xbf16>
    %34 = vector.shape_cast %33 : vector<1x32x128xbf16> to vector<1x32x128xbf16>
    %35 = vector.broadcast %34 : vector<1x32x128xbf16> to vector<4x32x128xbf16>
    %c24 = arith.constant 24 : index
    %c0_18 = arith.constant 0 : index
    %36 = vector.load %arg5[%c24, %c0_18] : memref<40x512xf32, #tpu.memory_space<vmem>>, vector<1x128xf32>
    %c25 = arith.constant 25 : index
    %c0_19 = arith.constant 0 : index
    %37 = vector.load %arg5[%c25, %c0_19] : memref<40x512xf32, #tpu.memory_space<vmem>>, vector<1x128xf32>
    %cst_20 = arith.constant dense<0.000000e+00> : vector<16xf32>
    %38 = vector.multi_reduction <add>, %30, %cst_20 [1] : vector<16x128xf32> to vector<16xf32>
    %39 = vector.shape_cast %38 : vector<16xf32> to vector<16x1xf32>
    %cst_21 = arith.constant 1.280000e+02 : f32
    %40 = vector.broadcast %cst_21 : f32 to vector<16x1xf32>
    %41 = arith.divf %39, %40 : vector<16x1xf32>
    %42 = vector.broadcast %41 : vector<16x1xf32> to vector<16x128xf32>
    %43 = arith.subf %30, %42 : vector<16x128xf32>
    %44 = arith.mulf %43, %43 : vector<16x128xf32>
    %cst_22 = arith.constant dense<0.000000e+00> : vector<16xf32>
    %45 = vector.multi_reduction <add>, %44, %cst_22 [1] : vector<16x128xf32> to vector<16xf32>
    %46 = vector.shape_cast %45 : vector<16xf32> to vector<16x1xf32>
    %cst_23 = arith.constant 1.280000e+02 : f32
    %47 = vector.broadcast %cst_23 : f32 to vector<16x1xf32>
    %48 = arith.divf %46, %47 : vector<16x1xf32>
    %49 = vector.broadcast %41 : vector<16x1xf32> to vector<16x128xf32>
    %50 = arith.subf %30, %49 : vector<16x128xf32>
    %cst_24 = arith.constant 9.99999974E-6 : f32
    %51 = vector.broadcast %cst_24 : f32 to vector<16x1xf32>
    %52 = arith.addf %48, %51 : vector<16x1xf32>
    %53 = math.rsqrt %52 : vector<16x1xf32>
    %54 = vector.broadcast %53 : vector<16x1xf32> to vector<16x128xf32>
    %55 = arith.mulf %50, %54 : vector<16x128xf32>
    %56 = vector.broadcast %36 : vector<1x128xf32> to vector<16x128xf32>
    %57 = arith.mulf %55, %56 : vector<16x128xf32>
    %58 = vector.broadcast %37 : vector<1x128xf32> to vector<16x128xf32>
    %59 = arith.addf %57, %58 : vector<16x128xf32>
    %60 = arith.truncf %59 : vector<16x128xf32> to vector<16x128xbf16>
    %61 = vector.shape_cast %60 : vector<16x128xbf16> to vector<1x16x128xbf16>
    %62 = vector.shape_cast %61 : vector<1x16x128xbf16> to vector<1x16x128xbf16>
    %63 = vector.broadcast %62 : vector<1x16x128xbf16> to vector<4x16x128xbf16>
    %c0_25 = arith.constant 0 : index
    %c0_26 = arith.constant 0 : index
    %c0_27 = arith.constant 0 : index
    %c0_28 = arith.constant 0 : index
    %64 = vector.load %arg4[%c0_25, %c0_26, %c0_27, %c0_28] : memref<8x4x32x128xbf16, #tpu.memory_space<vmem>>, vector<1x4x32x128xbf16>
    %65 = vector.shape_cast %64 : vector<1x4x32x128xbf16> to vector<4x32x128xbf16>
    "tpu.trace_start"() <{level = 10 : i32, message = "hqd,hed->hqe"}> : () -> ()
    %cst_29 = arith.constant dense<0.000000e+00> : vector<4x16x32xf32>
    %66 = tpu.matmul %63, %65, %cst_29 {dimension_numbers = #tpu.dot_dimension_numbers<[2], [2], [1], [1], [0, 0, 0, 1, 1, 1], [0], [0]>} : vector<4x16x128xbf16>, vector<4x32x128xbf16>, vector<4x16x32xf32> -> vector<4x16x32xf32>
    "tpu.trace_stop"() : () -> ()
    %c1 = arith.constant 1 : index
    %c0_30 = arith.constant 0 : index
    %c0_31 = arith.constant 0 : index
    %c0_32 = arith.constant 0 : index
    %67 = vector.load %arg4[%c1, %c0_30, %c0_31, %c0_32] : memref<8x4x32x128xbf16, #tpu.memory_space<vmem>>, vector<1x4x32x128xbf16>
    %68 = vector.shape_cast %67 : vector<1x4x32x128xbf16> to vector<4x32x128xbf16>
    "tpu.trace_start"() <{level = 10 : i32, message = "hkd,hed->hke"}> : () -> ()
    %cst_33 = arith.constant dense<0.000000e+00> : vector<4x32x32xf32>
    %69 = tpu.matmul %35, %68, %cst_33 {dimension_numbers = #tpu.dot_dimension_numbers<[2], [2], [1], [1], [0, 0, 0, 1, 1, 1], [0], [0]>} : vector<4x32x128xbf16>, vector<4x32x128xbf16>, vector<4x32x32xf32> -> vector<4x32x32xf32>
    "tpu.trace_stop"() : () -> ()
    %c2 = arith.constant 2 : index
    %c0_34 = arith.constant 0 : index
    %c0_35 = arith.constant 0 : index
    %c0_36 = arith.constant 0 : index
    %70 = vector.load %arg4[%c2, %c0_34, %c0_35, %c0_36] : memref<8x4x32x128xbf16, #tpu.memory_space<vmem>>, vector<1x4x32x128xbf16>
    %71 = vector.shape_cast %70 : vector<1x4x32x128xbf16> to vector<4x32x128xbf16>
    "tpu.trace_start"() <{level = 10 : i32, message = "hkd,hed->hke"}> : () -> ()
    %cst_37 = arith.constant dense<0.000000e+00> : vector<4x32x32xf32>
    %72 = tpu.matmul %35, %71, %cst_37 {dimension_numbers = #tpu.dot_dimension_numbers<[2], [2], [1], [1], [0, 0, 0, 1, 1, 1], [0], [0]>} : vector<4x32x128xbf16>, vector<4x32x128xbf16>, vector<4x32x32xf32> -> vector<4x32x32xf32>
    "tpu.trace_stop"() : () -> ()
    %73 = arith.truncf %66 : vector<4x16x32xf32> to vector<4x16x32xbf16>
    %74 = arith.truncf %69 : vector<4x32x32xf32> to vector<4x32x32xbf16>
    "tpu.trace_start"() <{level = 10 : i32, message = "hqe,hke->hqk"}> : () -> ()
    %cst_38 = arith.constant dense<0.000000e+00> : vector<4x16x32xf32>
    %75 = tpu.matmul %73, %74, %cst_38 {dimension_numbers = #tpu.dot_dimension_numbers<[2], [2], [1], [1], [0, 0, 0, 1, 1, 1], [0], [0]>} : vector<4x16x32xbf16>, vector<4x32x32xbf16>, vector<4x16x32xf32> -> vector<4x16x32xf32>
    "tpu.trace_stop"() : () -> ()
    %cst_39 = arith.constant 0.176776692 : f32
    %76 = vector.broadcast %cst_39 : f32 to vector<4x16x32xf32>
    %77 = arith.mulf %75, %76 : vector<4x16x32xf32>
    %78 = vector.shape_cast %31 : vector<16x32xf32> to vector<1x16x32xf32>
    %79 = vector.broadcast %78 : vector<1x16x32xf32> to vector<4x16x32xf32>
    %80 = arith.addf %77, %79 : vector<4x16x32xf32>
    %cst_40 = arith.constant dense<0xFF800000> : vector<4x16xf32>
    %81 = vector.multi_reduction <maximumf>, %80, %cst_40 [2] : vector<4x16x32xf32> to vector<4x16xf32>
    %82 = vector.shape_cast %81 : vector<4x16xf32> to vector<4x16x1xf32>
    %83 = vector.broadcast %82 : vector<4x16x1xf32> to vector<4x16x32xf32>
    %84 = arith.subf %80, %83 : vector<4x16x32xf32>
    %85 = math.exp %84 : vector<4x16x32xf32>
    %cst_41 = arith.constant dense<0.000000e+00> : vector<4x16xf32>
    %86 = vector.multi_reduction <add>, %85, %cst_41 [2] : vector<4x16x32xf32> to vector<4x16xf32>
    %87 = vector.shape_cast %86 : vector<4x16xf32> to vector<4x16x1xf32>
    %88 = tpu.reciprocal %87 {approx = true} : vector<4x16x1xf32> -> vector<4x16x1xf32>
    %89 = vector.broadcast %88 : vector<4x16x1xf32> to vector<4x16x32xf32>
    %90 = arith.mulf %85, %89 : vector<4x16x32xf32>
    %91 = arith.truncf %90 : vector<4x16x32xf32> to vector<4x16x32xbf16>
    %92 = arith.truncf %72 : vector<4x32x32xf32> to vector<4x32x32xbf16>
    "tpu.trace_start"() <{level = 10 : i32, message = "hqk,hke->hqe"}> : () -> ()
    %cst_42 = arith.constant dense<0.000000e+00> : vector<4x16x32xf32>
    %93 = tpu.matmul %91, %92, %cst_42 {dimension_numbers = #tpu.dot_dimension_numbers<[2], [1], [1], [2], [0, 0, 0, 1, 1, 2], [0], [0]>} : vector<4x16x32xbf16>, vector<4x32x32xbf16>, vector<4x16x32xf32> -> vector<4x16x32xf32>
    "tpu.trace_stop"() : () -> ()
    %c3 = arith.constant 3 : index
    %c0_43 = arith.constant 0 : index
    %c0_44 = arith.constant 0 : index
    %c0_45 = arith.constant 0 : index
    %94 = vector.load %arg4[%c3, %c0_43, %c0_44, %c0_45] : memref<8x4x32x128xbf16, #tpu.memory_space<vmem>>, vector<1x4x32x128xbf16>
    %95 = vector.shape_cast %94 : vector<1x4x32x128xbf16> to vector<4x32x128xbf16>
    %96 = arith.truncf %93 : vector<4x16x32xf32> to vector<4x16x32xbf16>
    "tpu.trace_start"() <{level = 10 : i32, message = "hqe,hed->hqd"}> : () -> ()
    %cst_46 = arith.constant dense<0.000000e+00> : vector<4x16x128xf32>
    %97 = tpu.matmul %96, %95, %cst_46 {dimension_numbers = #tpu.dot_dimension_numbers<[2], [1], [1], [2], [0, 0, 0, 1, 1, 2], [0], [0]>} : vector<4x16x32xbf16>, vector<4x32x128xbf16>, vector<4x16x128xf32> -> vector<4x16x128xf32>
    "tpu.trace_stop"() : () -> ()
    %cst_47 = arith.constant dense<0.000000e+00> : vector<16x128xf32>
    %98 = vector.multi_reduction <add>, %97, %cst_47 [0] : vector<4x16x128xf32> to vector<16x128xf32>
    %c28 = arith.constant 28 : index
    %c0_48 = arith.constant 0 : index
    %99 = vector.load %arg5[%c28, %c0_48] : memref<40x512xf32, #tpu.memory_space<vmem>>, vector<1x128xf32>
    %100 = vector.broadcast %99 : vector<1x128xf32> to vector<16x128xf32>
    %101 = arith.addf %98, %100 : vector<16x128xf32>
    %102 = arith.addf %101, %30 : vector<16x128xf32>
    %c26 = arith.constant 26 : index
    %c0_49 = arith.constant 0 : index
    %103 = vector.load %arg5[%c26, %c0_49] : memref<40x512xf32, #tpu.memory_space<vmem>>, vector<1x128xf32>
    %c27 = arith.constant 27 : index
    %c0_50 = arith.constant 0 : index
    %104 = vector.load %arg5[%c27, %c0_50] : memref<40x512xf32, #tpu.memory_space<vmem>>, vector<1x128xf32>
    %cst_51 = arith.constant dense<0.000000e+00> : vector<16xf32>
    %105 = vector.multi_reduction <add>, %102, %cst_51 [1] : vector<16x128xf32> to vector<16xf32>
    %106 = vector.shape_cast %105 : vector<16xf32> to vector<16x1xf32>
    %cst_52 = arith.constant 1.280000e+02 : f32
    %107 = vector.broadcast %cst_52 : f32 to vector<16x1xf32>
    %108 = arith.divf %106, %107 : vector<16x1xf32>
    %109 = vector.broadcast %108 : vector<16x1xf32> to vector<16x128xf32>
    %110 = arith.subf %102, %109 : vector<16x128xf32>
    %111 = arith.mulf %110, %110 : vector<16x128xf32>
    %cst_53 = arith.constant dense<0.000000e+00> : vector<16xf32>
    %112 = vector.multi_reduction <add>, %111, %cst_53 [1] : vector<16x128xf32> to vector<16xf32>
    %113 = vector.shape_cast %112 : vector<16xf32> to vector<16x1xf32>
    %cst_54 = arith.constant 1.280000e+02 : f32
    %114 = vector.broadcast %cst_54 : f32 to vector<16x1xf32>
    %115 = arith.divf %113, %114 : vector<16x1xf32>
    %116 = vector.broadcast %108 : vector<16x1xf32> to vector<16x128xf32>
    %117 = arith.subf %102, %116 : vector<16x128xf32>
    %cst_55 = arith.constant 9.99999974E-6 : f32
    %118 = vector.broadcast %cst_55 : f32 to vector<16x1xf32>
    %119 = arith.addf %115, %118 : vector<16x1xf32>
    %120 = math.rsqrt %119 : vector<16x1xf32>
    %121 = vector.broadcast %120 : vector<16x1xf32> to vector<16x128xf32>
    %122 = arith.mulf %117, %121 : vector<16x128xf32>
    %123 = vector.broadcast %103 : vector<1x128xf32> to vector<16x128xf32>
    %124 = arith.mulf %122, %123 : vector<16x128xf32>
    %125 = vector.broadcast %104 : vector<1x128xf32> to vector<16x128xf32>
    %126 = arith.addf %124, %125 : vector<16x128xf32>
    %c0_56 = arith.constant 0 : index
    %c0_57 = arith.constant 0 : index
    %127 = vector.load %arg3[%c0_56, %c0_57] : memref<256x512xbf16, #tpu.memory_space<vmem>>, vector<128x512xbf16>
    %128 = arith.truncf %126 : vector<16x128xf32> to vector<16x128xbf16>
    %cst_58 = arith.constant dense<0.000000e+00> : vector<16x512xf32>
    %129 = tpu.matmul %128, %127, %cst_58 {dimension_numbers = #tpu.dot_dimension_numbers<[1], [0], [0], [1], [0, 0, 1, 1], [], []>} : vector<16x128xbf16>, vector<128x512xbf16>, vector<16x512xf32> -> vector<16x512xf32>
    %c30 = arith.constant 30 : index
    %c0_59 = arith.constant 0 : index
    %130 = vector.load %arg5[%c30, %c0_59] : memref<40x512xf32, #tpu.memory_space<vmem>>, vector<1x512xf32>
    %131 = vector.broadcast %130 : vector<1x512xf32> to vector<16x512xf32>
    %132 = arith.addf %129, %131 : vector<16x512xf32>
    %133 = arith.mulf %132, %132 : vector<16x512xf32>
    %134 = arith.mulf %132, %133 : vector<16x512xf32>
    %cst_60 = arith.constant 4.471500e-02 : f32
    %135 = vector.broadcast %cst_60 : f32 to vector<16x512xf32>
    %136 = arith.mulf %135, %134 : vector<16x512xf32>
    %137 = arith.addf %132, %136 : vector<16x512xf32>
    %cst_61 = arith.constant 0.797884583 : f32
    %138 = vector.broadcast %cst_61 : f32 to vector<16x512xf32>
    %139 = arith.mulf %138, %137 : vector<16x512xf32>
    %140 = math.tanh %139 : vector<16x512xf32>
    %cst_62 = arith.constant 1.000000e+00 : f32
    %141 = vector.broadcast %cst_62 : f32 to vector<16x512xf32>
    %142 = arith.addf %141, %140 : vector<16x512xf32>
    %cst_63 = arith.constant 5.000000e-01 : f32
    %143 = vector.broadcast %cst_63 : f32 to vector<16x512xf32>
    %144 = arith.mulf %143, %142 : vector<16x512xf32>
    %145 = arith.mulf %132, %144 : vector<16x512xf32>
    %c768 = arith.constant 768 : index
    %c0_64 = arith.constant 0 : index
    %146 = vector.load %arg2[%c768, %c0_64] : memref<1792x128xbf16, #tpu.memory_space<vmem>>, vector<512x128xbf16>
    %147 = arith.truncf %145 : vector<16x512xf32> to vector<16x512xbf16>
    %cst_65 = arith.constant dense<0.000000e+00> : vector<16x128xf32>
    %148 = tpu.matmul %147, %146, %cst_65 {dimension_numbers = #tpu.dot_dimension_numbers<[1], [0], [0], [1], [0, 0, 1, 1], [], []>} : vector<16x512xbf16>, vector<512x128xbf16>, vector<16x128xf32> -> vector<16x128xf32>
    %c29 = arith.constant 29 : index
    %c0_66 = arith.constant 0 : index
    %149 = vector.load %arg5[%c29, %c0_66] : memref<40x512xf32, #tpu.memory_space<vmem>>, vector<1x128xf32>
    %150 = vector.broadcast %149 : vector<1x128xf32> to vector<16x128xf32>
    %151 = arith.addf %148, %150 : vector<16x128xf32>
    %152 = arith.addf %151, %102 : vector<16x128xf32>
    %c32 = arith.constant 32 : index
    %c0_67 = arith.constant 0 : index
    %153 = vector.load %arg5[%c32, %c0_67] : memref<40x512xf32, #tpu.memory_space<vmem>>, vector<1x128xf32>
    %c33 = arith.constant 33 : index
    %c0_68 = arith.constant 0 : index
    %154 = vector.load %arg5[%c33, %c0_68] : memref<40x512xf32, #tpu.memory_space<vmem>>, vector<1x128xf32>
    %cst_69 = arith.constant dense<0.000000e+00> : vector<16xf32>
    %155 = vector.multi_reduction <add>, %152, %cst_69 [1] : vector<16x128xf32> to vector<16xf32>
    %156 = vector.shape_cast %155 : vector<16xf32> to vector<16x1xf32>
    %cst_70 = arith.constant 1.280000e+02 : f32
    %157 = vector.broadcast %cst_70 : f32 to vector<16x1xf32>
    %158 = arith.divf %156, %157 : vector<16x1xf32>
    %159 = vector.broadcast %158 : vector<16x1xf32> to vector<16x128xf32>
    %160 = arith.subf %152, %159 : vector<16x128xf32>
    %161 = arith.mulf %160, %160 : vector<16x128xf32>
    %cst_71 = arith.constant dense<0.000000e+00> : vector<16xf32>
    %162 = vector.multi_reduction <add>, %161, %cst_71 [1] : vector<16x128xf32> to vector<16xf32>
    %163 = vector.shape_cast %162 : vector<16xf32> to vector<16x1xf32>
    %cst_72 = arith.constant 1.280000e+02 : f32
    %164 = vector.broadcast %cst_72 : f32 to vector<16x1xf32>
    %165 = arith.divf %163, %164 : vector<16x1xf32>
    %166 = vector.broadcast %158 : vector<16x1xf32> to vector<16x128xf32>
    %167 = arith.subf %152, %166 : vector<16x128xf32>
    %cst_73 = arith.constant 9.99999974E-6 : f32
    %168 = vector.broadcast %cst_73 : f32 to vector<16x1xf32>
    %169 = arith.addf %165, %168 : vector<16x1xf32>
    %170 = math.rsqrt %169 : vector<16x1xf32>
    %171 = vector.broadcast %170 : vector<16x1xf32> to vector<16x128xf32>
    %172 = arith.mulf %167, %171 : vector<16x128xf32>
    %173 = vector.broadcast %153 : vector<1x128xf32> to vector<16x128xf32>
    %174 = arith.mulf %172, %173 : vector<16x128xf32>
    %175 = vector.broadcast %154 : vector<1x128xf32> to vector<16x128xf32>
    %176 = arith.addf %174, %175 : vector<16x128xf32>
    %177 = arith.truncf %176 : vector<16x128xf32> to vector<16x128xbf16>
    %178 = vector.shape_cast %177 : vector<16x128xbf16> to vector<1x16x128xbf16>
    %179 = vector.shape_cast %178 : vector<1x16x128xbf16> to vector<1x16x128xbf16>
    %180 = vector.broadcast %179 : vector<1x16x128xbf16> to vector<4x16x128xbf16>
    %c4 = arith.constant 4 : index
    %c0_74 = arith.constant 0 : index
    %c0_75 = arith.constant 0 : index
    %c0_76 = arith.constant 0 : index
    %181 = vector.load %arg4[%c4, %c0_74, %c0_75, %c0_76] : memref<8x4x32x128xbf16, #tpu.memory_space<vmem>>, vector<1x4x32x128xbf16>
    %182 = vector.shape_cast %181 : vector<1x4x32x128xbf16> to vector<4x32x128xbf16>
    "tpu.trace_start"() <{level = 10 : i32, message = "hqd,hed->hqe"}> : () -> ()
    %cst_77 = arith.constant dense<0.000000e+00> : vector<4x16x32xf32>
    %183 = tpu.matmul %180, %182, %cst_77 {dimension_numbers = #tpu.dot_dimension_numbers<[2], [2], [1], [1], [0, 0, 0, 1, 1, 1], [0], [0]>} : vector<4x16x128xbf16>, vector<4x32x128xbf16>, vector<4x16x32xf32> -> vector<4x16x32xf32>
    "tpu.trace_stop"() : () -> ()
    %c5 = arith.constant 5 : index
    %c0_78 = arith.constant 0 : index
    %c0_79 = arith.constant 0 : index
    %c0_80 = arith.constant 0 : index
    %184 = vector.load %arg4[%c5, %c0_78, %c0_79, %c0_80] : memref<8x4x32x128xbf16, #tpu.memory_space<vmem>>, vector<1x4x32x128xbf16>
    %185 = vector.shape_cast %184 : vector<1x4x32x128xbf16> to vector<4x32x128xbf16>
    "tpu.trace_start"() <{level = 10 : i32, message = "hkd,hed->hke"}> : () -> ()
    %cst_81 = arith.constant dense<0.000000e+00> : vector<4x32x32xf32>
    %186 = tpu.matmul %35, %185, %cst_81 {dimension_numbers = #tpu.dot_dimension_numbers<[2], [2], [1], [1], [0, 0, 0, 1, 1, 1], [0], [0]>} : vector<4x32x128xbf16>, vector<4x32x128xbf16>, vector<4x32x32xf32> -> vector<4x32x32xf32>
    "tpu.trace_stop"() : () -> ()
    %c6 = arith.constant 6 : index
    %c0_82 = arith.constant 0 : index
    %c0_83 = arith.constant 0 : index
    %c0_84 = arith.constant 0 : index
    %187 = vector.load %arg4[%c6, %c0_82, %c0_83, %c0_84] : memref<8x4x32x128xbf16, #tpu.memory_space<vmem>>, vector<1x4x32x128xbf16>
    %188 = vector.shape_cast %187 : vector<1x4x32x128xbf16> to vector<4x32x128xbf16>
    "tpu.trace_start"() <{level = 10 : i32, message = "hkd,hed->hke"}> : () -> ()
    %cst_85 = arith.constant dense<0.000000e+00> : vector<4x32x32xf32>
    %189 = tpu.matmul %35, %188, %cst_85 {dimension_numbers = #tpu.dot_dimension_numbers<[2], [2], [1], [1], [0, 0, 0, 1, 1, 1], [0], [0]>} : vector<4x32x128xbf16>, vector<4x32x128xbf16>, vector<4x32x32xf32> -> vector<4x32x32xf32>
    "tpu.trace_stop"() : () -> ()
    %190 = arith.truncf %183 : vector<4x16x32xf32> to vector<4x16x32xbf16>
    %191 = arith.truncf %186 : vector<4x32x32xf32> to vector<4x32x32xbf16>
    "tpu.trace_start"() <{level = 10 : i32, message = "hqe,hke->hqk"}> : () -> ()
    %cst_86 = arith.constant dense<0.000000e+00> : vector<4x16x32xf32>
    %192 = tpu.matmul %190, %191, %cst_86 {dimension_numbers = #tpu.dot_dimension_numbers<[2], [2], [1], [1], [0, 0, 0, 1, 1, 1], [0], [0]>} : vector<4x16x32xbf16>, vector<4x32x32xbf16>, vector<4x16x32xf32> -> vector<4x16x32xf32>
    "tpu.trace_stop"() : () -> ()
    %cst_87 = arith.constant 0.176776692 : f32
    %193 = vector.broadcast %cst_87 : f32 to vector<4x16x32xf32>
    %194 = arith.mulf %192, %193 : vector<4x16x32xf32>
    %195 = vector.shape_cast %31 : vector<16x32xf32> to vector<1x16x32xf32>
    %196 = vector.broadcast %195 : vector<1x16x32xf32> to vector<4x16x32xf32>
    %197 = arith.addf %194, %196 : vector<4x16x32xf32>
    %cst_88 = arith.constant dense<0xFF800000> : vector<4x16xf32>
    %198 = vector.multi_reduction <maximumf>, %197, %cst_88 [2] : vector<4x16x32xf32> to vector<4x16xf32>
    %199 = vector.shape_cast %198 : vector<4x16xf32> to vector<4x16x1xf32>
    %200 = vector.broadcast %199 : vector<4x16x1xf32> to vector<4x16x32xf32>
    %201 = arith.subf %197, %200 : vector<4x16x32xf32>
    %202 = math.exp %201 : vector<4x16x32xf32>
    %cst_89 = arith.constant dense<0.000000e+00> : vector<4x16xf32>
    %203 = vector.multi_reduction <add>, %202, %cst_89 [2] : vector<4x16x32xf32> to vector<4x16xf32>
    %204 = vector.shape_cast %203 : vector<4x16xf32> to vector<4x16x1xf32>
    %205 = tpu.reciprocal %204 {approx = true} : vector<4x16x1xf32> -> vector<4x16x1xf32>
    %206 = vector.broadcast %205 : vector<4x16x1xf32> to vector<4x16x32xf32>
    %207 = arith.mulf %202, %206 : vector<4x16x32xf32>
    %208 = arith.truncf %207 : vector<4x16x32xf32> to vector<4x16x32xbf16>
    %209 = arith.truncf %189 : vector<4x32x32xf32> to vector<4x32x32xbf16>
    "tpu.trace_start"() <{level = 10 : i32, message = "hqk,hke->hqe"}> : () -> ()
    %cst_90 = arith.constant dense<0.000000e+00> : vector<4x16x32xf32>
    %210 = tpu.matmul %208, %209, %cst_90 {dimension_numbers = #tpu.dot_dimension_numbers<[2], [1], [1], [2], [0, 0, 0, 1, 1, 2], [0], [0]>} : vector<4x16x32xbf16>, vector<4x32x32xbf16>, vector<4x16x32xf32> -> vector<4x16x32xf32>
    "tpu.trace_stop"() : () -> ()
    %c7 = arith.constant 7 : index
    %c0_91 = arith.constant 0 : index
    %c0_92 = arith.constant 0 : index
    %c0_93 = arith.constant 0 : index
    %211 = vector.load %arg4[%c7, %c0_91, %c0_92, %c0_93] : memref<8x4x32x128xbf16, #tpu.memory_space<vmem>>, vector<1x4x32x128xbf16>
    %212 = vector.shape_cast %211 : vector<1x4x32x128xbf16> to vector<4x32x128xbf16>
    %213 = arith.truncf %210 : vector<4x16x32xf32> to vector<4x16x32xbf16>
    "tpu.trace_start"() <{level = 10 : i32, message = "hqe,hed->hqd"}> : () -> ()
    %cst_94 = arith.constant dense<0.000000e+00> : vector<4x16x128xf32>
    %214 = tpu.matmul %213, %212, %cst_94 {dimension_numbers = #tpu.dot_dimension_numbers<[2], [1], [1], [2], [0, 0, 0, 1, 1, 2], [0], [0]>} : vector<4x16x32xbf16>, vector<4x32x128xbf16>, vector<4x16x128xf32> -> vector<4x16x128xf32>
    "tpu.trace_stop"() : () -> ()
    %cst_95 = arith.constant dense<0.000000e+00> : vector<16x128xf32>
    %215 = vector.multi_reduction <add>, %214, %cst_95 [0] : vector<4x16x128xf32> to vector<16x128xf32>
    %c36 = arith.constant 36 : index
    %c0_96 = arith.constant 0 : index
    %216 = vector.load %arg5[%c36, %c0_96] : memref<40x512xf32, #tpu.memory_space<vmem>>, vector<1x128xf32>
    %217 = vector.broadcast %216 : vector<1x128xf32> to vector<16x128xf32>
    %218 = arith.addf %215, %217 : vector<16x128xf32>
    %219 = arith.addf %218, %152 : vector<16x128xf32>
    %c34 = arith.constant 34 : index
    %c0_97 = arith.constant 0 : index
    %220 = vector.load %arg5[%c34, %c0_97] : memref<40x512xf32, #tpu.memory_space<vmem>>, vector<1x128xf32>
    %c35 = arith.constant 35 : index
    %c0_98 = arith.constant 0 : index
    %221 = vector.load %arg5[%c35, %c0_98] : memref<40x512xf32, #tpu.memory_space<vmem>>, vector<1x128xf32>
    %cst_99 = arith.constant dense<0.000000e+00> : vector<16xf32>
    %222 = vector.multi_reduction <add>, %219, %cst_99 [1] : vector<16x128xf32> to vector<16xf32>
    %223 = vector.shape_cast %222 : vector<16xf32> to vector<16x1xf32>
    %cst_100 = arith.constant 1.280000e+02 : f32
    %224 = vector.broadcast %cst_100 : f32 to vector<16x1xf32>
    %225 = arith.divf %223, %224 : vector<16x1xf32>
    %226 = vector.broadcast %225 : vector<16x1xf32> to vector<16x128xf32>
    %227 = arith.subf %219, %226 : vector<16x128xf32>
    %228 = arith.mulf %227, %227 : vector<16x128xf32>
    %cst_101 = arith.constant dense<0.000000e+00> : vector<16xf32>
    %229 = vector.multi_reduction <add>, %228, %cst_101 [1] : vector<16x128xf32> to vector<16xf32>
    %230 = vector.shape_cast %229 : vector<16xf32> to vector<16x1xf32>
    %cst_102 = arith.constant 1.280000e+02 : f32
    %231 = vector.broadcast %cst_102 : f32 to vector<16x1xf32>
    %232 = arith.divf %230, %231 : vector<16x1xf32>
    %233 = vector.broadcast %225 : vector<16x1xf32> to vector<16x128xf32>
    %234 = arith.subf %219, %233 : vector<16x128xf32>
    %cst_103 = arith.constant 9.99999974E-6 : f32
    %235 = vector.broadcast %cst_103 : f32 to vector<16x1xf32>
    %236 = arith.addf %232, %235 : vector<16x1xf32>
    %237 = math.rsqrt %236 : vector<16x1xf32>
    %238 = vector.broadcast %237 : vector<16x1xf32> to vector<16x128xf32>
    %239 = arith.mulf %234, %238 : vector<16x128xf32>
    %240 = vector.broadcast %220 : vector<1x128xf32> to vector<16x128xf32>
    %241 = arith.mulf %239, %240 : vector<16x128xf32>
    %242 = vector.broadcast %221 : vector<1x128xf32> to vector<16x128xf32>
    %243 = arith.addf %241, %242 : vector<16x128xf32>
    %c128_104 = arith.constant 128 : index
    %c0_105 = arith.constant 0 : index
    %244 = vector.load %arg3[%c128_104, %c0_105] : memref<256x512xbf16, #tpu.memory_space<vmem>>, vector<128x512xbf16>
    %245 = arith.truncf %243 : vector<16x128xf32> to vector<16x128xbf16>
    %cst_106 = arith.constant dense<0.000000e+00> : vector<16x512xf32>
    %246 = tpu.matmul %245, %244, %cst_106 {dimension_numbers = #tpu.dot_dimension_numbers<[1], [0], [0], [1], [0, 0, 1, 1], [], []>} : vector<16x128xbf16>, vector<128x512xbf16>, vector<16x512xf32> -> vector<16x512xf32>
    %c38 = arith.constant 38 : index
    %c0_107 = arith.constant 0 : index
    %247 = vector.load %arg5[%c38, %c0_107] : memref<40x512xf32, #tpu.memory_space<vmem>>, vector<1x512xf32>
    %248 = vector.broadcast %247 : vector<1x512xf32> to vector<16x512xf32>
    %249 = arith.addf %246, %248 : vector<16x512xf32>
    %250 = arith.mulf %249, %249 : vector<16x512xf32>
    %251 = arith.mulf %249, %250 : vector<16x512xf32>
    %cst_108 = arith.constant 4.471500e-02 : f32
    %252 = vector.broadcast %cst_108 : f32 to vector<16x512xf32>
    %253 = arith.mulf %252, %251 : vector<16x512xf32>
    %254 = arith.addf %249, %253 : vector<16x512xf32>
    %cst_109 = arith.constant 0.797884583 : f32
    %255 = vector.broadcast %cst_109 : f32 to vector<16x512xf32>
    %256 = arith.mulf %255, %254 : vector<16x512xf32>
    %257 = math.tanh %256 : vector<16x512xf32>
    %cst_110 = arith.constant 1.000000e+00 : f32
    %258 = vector.broadcast %cst_110 : f32 to vector<16x512xf32>
    %259 = arith.addf %258, %257 : vector<16x512xf32>
    %cst_111 = arith.constant 5.000000e-01 : f32
    %260 = vector.broadcast %cst_111 : f32 to vector<16x512xf32>
    %261 = arith.mulf %260, %259 : vector<16x512xf32>
    %262 = arith.mulf %249, %261 : vector<16x512xf32>
    %c1280 = arith.constant 1280 : index
    %c0_112 = arith.constant 0 : index
    %263 = vector.load %arg2[%c1280, %c0_112] : memref<1792x128xbf16, #tpu.memory_space<vmem>>, vector<512x128xbf16>
    %264 = arith.truncf %262 : vector<16x512xf32> to vector<16x512xbf16>
    %cst_113 = arith.constant dense<0.000000e+00> : vector<16x128xf32>
    %265 = tpu.matmul %264, %263, %cst_113 {dimension_numbers = #tpu.dot_dimension_numbers<[1], [0], [0], [1], [0, 0, 1, 1], [], []>} : vector<16x512xbf16>, vector<512x128xbf16>, vector<16x128xf32> -> vector<16x128xf32>
    %c37 = arith.constant 37 : index
    %c0_114 = arith.constant 0 : index
    %266 = vector.load %arg5[%c37, %c0_114] : memref<40x512xf32, #tpu.memory_space<vmem>>, vector<1x128xf32>
    %267 = vector.broadcast %266 : vector<1x128xf32> to vector<16x128xf32>
    %268 = arith.addf %265, %267 : vector<16x128xf32>
    %269 = arith.addf %268, %219 : vector<16x128xf32>
    %c1_115 = arith.constant 1 : index
    %c0_116 = arith.constant 0 : index
    %270 = vector.load %arg5[%c1_115, %c0_116] : memref<40x512xf32, #tpu.memory_space<vmem>>, vector<1x128xf32>
    %c2_117 = arith.constant 2 : index
    %c0_118 = arith.constant 0 : index
    %271 = vector.load %arg5[%c2_117, %c0_118] : memref<40x512xf32, #tpu.memory_space<vmem>>, vector<1x128xf32>
    %cst_119 = arith.constant dense<0.000000e+00> : vector<16xf32>
    %272 = vector.multi_reduction <add>, %269, %cst_119 [1] : vector<16x128xf32> to vector<16xf32>
    %273 = vector.shape_cast %272 : vector<16xf32> to vector<16x1xf32>
    %cst_120 = arith.constant 1.280000e+02 : f32
    %274 = vector.broadcast %cst_120 : f32 to vector<16x1xf32>
    %275 = arith.divf %273, %274 : vector<16x1xf32>
    %276 = vector.broadcast %275 : vector<16x1xf32> to vector<16x128xf32>
    %277 = arith.subf %269, %276 : vector<16x128xf32>
    %278 = arith.mulf %277, %277 : vector<16x128xf32>
    %cst_121 = arith.constant dense<0.000000e+00> : vector<16xf32>
    %279 = vector.multi_reduction <add>, %278, %cst_121 [1] : vector<16x128xf32> to vector<16xf32>
    %280 = vector.shape_cast %279 : vector<16xf32> to vector<16x1xf32>
    %cst_122 = arith.constant 1.280000e+02 : f32
    %281 = vector.broadcast %cst_122 : f32 to vector<16x1xf32>
    %282 = arith.divf %280, %281 : vector<16x1xf32>
    %283 = vector.broadcast %275 : vector<16x1xf32> to vector<16x128xf32>
    %284 = arith.subf %269, %283 : vector<16x128xf32>
    %cst_123 = arith.constant 9.99999974E-6 : f32
    %285 = vector.broadcast %cst_123 : f32 to vector<16x1xf32>
    %286 = arith.addf %282, %285 : vector<16x1xf32>
    %287 = math.rsqrt %286 : vector<16x1xf32>
    %288 = vector.broadcast %287 : vector<16x1xf32> to vector<16x128xf32>
    %289 = arith.mulf %284, %288 : vector<16x128xf32>
    %290 = vector.broadcast %270 : vector<1x128xf32> to vector<16x128xf32>
    %291 = arith.mulf %289, %290 : vector<16x128xf32>
    %292 = vector.broadcast %271 : vector<1x128xf32> to vector<16x128xf32>
    %293 = arith.addf %291, %292 : vector<16x128xf32>
    %c640 = arith.constant 640 : index
    %c0_124 = arith.constant 0 : index
    %294 = vector.load %arg2[%c640, %c0_124] : memref<1792x128xbf16, #tpu.memory_space<vmem>>, vector<128x128xbf16>
    %295 = arith.truncf %293 : vector<16x128xf32> to vector<16x128xbf16>
    %cst_125 = arith.constant dense<0.000000e+00> : vector<16x128xf32>
    %296 = tpu.matmul %295, %294, %cst_125 {dimension_numbers = #tpu.dot_dimension_numbers<[1], [0], [0], [1], [0, 0, 1, 1], [], []>} : vector<16x128xbf16>, vector<128x128xbf16>, vector<16x128xf32> -> vector<16x128xf32>
    %c3_126 = arith.constant 3 : index
    %c0_127 = arith.constant 0 : index
    %297 = vector.load %arg5[%c3_126, %c0_127] : memref<40x512xf32, #tpu.memory_space<vmem>>, vector<1x128xf32>
    %298 = vector.broadcast %297 : vector<1x128xf32> to vector<16x128xf32>
    %299 = arith.addf %296, %298 : vector<16x128xf32>
    %c0_128 = arith.constant 0 : index
    %c0_129 = arith.constant 0 : index
    %300 = vector.load %arg6[%c0_128, %c0_129] : memref<16x128xf32, #tpu.memory_space<vmem>>, vector<16x128xf32>
    tpu.vector_store %arg6[%c0_128, %c0_129], %299 {strides = array<i32>} : memref<16x128xf32, #tpu.memory_space<vmem>>, vector<16x128xf32>,
    return
  }
  func.func @transform_0(%arg0: i32) -> (i32, i32) {
    %c0_i32 = arith.constant 0 : i32
    %c0_i32_0 = arith.constant 0 : i32
    %c0_i32_1 = arith.constant 0 : i32
    return %c0_i32, %c0_i32_0 : i32, i32
  }
  func.func @transform_1(%arg0: i32) -> (i32, i32) {
    %c0_i32 = arith.constant 0 : i32
    %c0_i32_0 = arith.constant 0 : i32
    %c0_i32_1 = arith.constant 0 : i32
    return %c0_i32, %c0_i32_0 : i32, i32
  }
  func.func @transform_2(%arg0: i32) -> (i32, i32) {
    %c0_i32 = arith.constant 0 : i32
    %c0_i32_0 = arith.constant 0 : i32
    %c0_i32_1 = arith.constant 0 : i32
    return %c0_i32, %c0_i32_0 : i32, i32
  }
  func.func @transform_3(%arg0: i32) -> (i32, i32, i32, i32) {
    %c0_i32 = arith.constant 0 : i32
    %c0_i32_0 = arith.constant 0 : i32
    %c0_i32_1 = arith.constant 0 : i32
    %c0_i32_2 = arith.constant 0 : i32
    %c0_i32_3 = arith.constant 0 : i32
    return %c0_i32, %c0_i32_0, %c0_i32_1, %c0_i32_2 : i32, i32, i32, i32
  }
  func.func @transform_4(%arg0: i32) -> (i32, i32) {
    %c0_i32 = arith.constant 0 : i32
    %c0_i32_0 = arith.constant 0 : i32
    %c0_i32_1 = arith.constant 0 : i32
    return %c0_i32, %c0_i32_0 : i32, i32
  }
  func.func @transform_5(%arg0: i32) -> (i32, i32) {
    %c0_i32 = arith.constant 0 : i32
    %c0_i32_0 = arith.constant 0 : i32
    %c0_i32_1 = arith.constant 0 : i32
    return %c0_i32, %c0_i32_0 : i32, i32
  }
}

</mosaic_0001>

<llo_original>
// kernel: eq.11
$region0: #{eq.11}
  %s0 = inlined_call_operand.vmem [shape: s32[2,16], index: 0, kind: input, shape index: {}]
  %s1 = inlined_call_operand.vmem [shape: s32[32], index: 1, kind: output, shape index: {}]
  $region1: #{eq.11} parent=0
    #allocation0 [shape = 'u8[4096]{0}', space=vmem, size = 0x1000, scoped, tag = 'scoped mem for output reshape']
    #allocation1 [shape = 'u8[4096]{0}', space=vmem, size = 0x1000, scoped, tag = 'scoped mem for input reshape']
    %s3 = sshllo.u32 0, 2
    %v4 = vld [vmem:[%s0] sm:%s3]
    %5 = vst [vmem:[#allocation1] sm:%s3] %v4
    %v6 = vld [vmem:[#allocation1] sm:$0x1]
    %vm7 = vcmask 130048
    %8 = vst.msk [vmem:[#allocation0] sm:$0x1] %vm7, %v6
    %s9 = scalar_lea.vmem [#allocation1], 1
    %v10 = vld [vmem:[%s9] sm:$0x1]
    %11 = vrot.lane.b32.xlu0 %v10, 16
    %v12 = vpop.permute.xlu0 %11
    %vm13 = vcmask 261248
    %14 = vst.msk [vmem:[#allocation0] sm:$0x1] %vm13, %v12
    %s16 = sshllo.u32 0, 1
    %v18 = vld [vmem:[#allocation0] sm:%s16]
    %s19 = sshllo.u32 0, 1
    %20 = vst [vmem:[%s1] sm:%s19] %v18

// kernel: eq.8
$region0: #{eq.8}
  %s0 = inlined_call_operand.vmem [shape: s32[2,8], index: 0, kind: input, shape index: {}]
  %s1 = inlined_call_operand.vmem [shape: s32[16], index: 1, kind: output, shape index: {}]
  $region1: #{eq.8} parent=0
    #allocation0 [shape = 'u8[4096]{0}', space=vmem, size = 0x1000, scoped, tag = 'scoped mem for output reshape']
    #allocation1 [shape = 'u8[4096]{0}', space=vmem, size = 0x1000, scoped, tag = 'scoped mem for input reshape']
    %s3 = sshllo.u32 0, 2
    %v4 = vld [vmem:[%s0] sm:%s3]
    %5 = vst [vmem:[#allocation1] sm:%s3] %v4
    %v6 = vld [vmem:[#allocation1] sm:$0x1]
    %vm7 = vcmask 64512
    %8 = vst.msk [vmem:[#allocation0] sm:$0x1] %vm7, %v6
    %s9 = scalar_lea.vmem [#allocation1], 1
    %v10 = vld [vmem:[%s9] sm:$0x1]
    %11 = vrot.lane.b32.xlu0 %v10, 8
    %v12 = vpop.permute.xlu0 %11
    %vm13 = vcmask 130112
    %14 = vst.msk [vmem:[#allocation0] sm:$0x1] %vm13, %v12
    %s16 = sshllo.u32 0, 1
    %v18 = vld [vmem:[#allocation0] sm:%s16]
    %s19 = sshllo.u32 0, 1
    %20 = vst [vmem:[%s1] sm:%s19] %v18

// kernel: encoder1d_forward.1
$region0: #{encoder1d_forward.1}
  #allocation0 [shape = 'u32[]', space=smem, size = 0x4, offset = 0x4, fixed_abs, tag = 'smem constant byte address 0x4 - core index']
  #allocation1 [shape = 'u32[144,128]{1,0:T(1,128)}', space=vmem, size = 0x12000, scoped, tag = 'internal scratch']
  %s0 = inlined_call_operand.vmem [shape: f32[144,128], index: 0, kind: input, shape index: {}]
  %s1 = inlined_call_operand.vmem [shape: bf16[1792,128], index: 1, kind: input, shape index: {}]
  %s2 = inlined_call_operand.vmem [shape: bf16[256,512], index: 2, kind: input, shape index: {}]
  %s3 = inlined_call_operand.hbm [shape: bf16[8,4,32,128], index: 3, kind: input, shape index: {}]
  %s4 = inlined_call_operand.hbm [shape: f32[40,512], index: 4, kind: input, shape index: {}]
  %s5 = inlined_call_operand.vmem [shape: f32[16,128], index: 5, kind: output, shape index: {}]
  %s6 = sld [smem:[#allocation0]]
  $region38: #{encoder1d_forward.1} parent=0
    _
  %s8 = ssub.s32 1, %s6
  %s9 = scalar_select 0, %s8, %s6
  $region1: #{encoder1d_forward.1} parent=0
    #allocation2 [shape = 'u8[262144]{0}', space=vmem, size = 0x40000, scoped, tag = 'input window, operand 3, single buffered']
    #allocation3 [shape = 's32[1]{0}', space=sflag, size = 0x4, scoped, tag = 'scoped memory for encoder1d_forward.1']
    #allocation4 [shape = 'u8[81920]{0}', space=vmem, size = 0x14000, scoped, tag = 'input window, operand 4, single buffered']
    #allocation5 [shape = 's32[1]{0}', space=sflag, size = 0x4, scoped, tag = 'scoped memory for encoder1d_forward.1']
    %10 = vsyncpa [#allocation3], 0
    %11 = vsyncpa [#allocation5], 0
    // Predicated region
    $region2: #{encoder1d_forward.1} parent=1 // pred_check
      _
    $region3: #{encoder1d_forward.1} parent=1 // pred_check_branch
      %13 = sbr.rel (0) target = $region5
    $region4: #{encoder1d_forward.1} parent=1 // pred_region
      _
    $region5: #{encoder1d_forward.1} parent=1 // pred_fallthru
      _
    // Predicated region
    $region6: #{encoder1d_forward.1} parent=1 // pred_check
      _
    $region7: #{encoder1d_forward.1} parent=1 // pred_check_branch
      %15 = sbr.rel (0) target = $region9
    $region8: #{encoder1d_forward.1} parent=1 // pred_region
      _
    $region9: #{encoder1d_forward.1} parent=1 // pred_fallthru
      _
    // Predicated region
    $region10: #{encoder1d_forward.1} parent=1 // pred_check
      _
    $region11: #{encoder1d_forward.1} parent=1 // pred_check_branch
      %17 = sbr.rel (0) target = $region13
    $region12: #{encoder1d_forward.1} parent=1 // pred_region
      _
    $region13: #{encoder1d_forward.1} parent=1 // pred_fallthru
      _
    // Predicated region
    $region14: #{encoder1d_forward.1} parent=1 // pred_check
      _
    $region15: #{encoder1d_forward.1} parent=1 // pred_check_branch
      %19 = sbr.rel (0) target = $region17
    $region16: #{encoder1d_forward.1} parent=1 // pred_region
      %s21 = ssub.s32 8192, 8192
      %22 = vsyncadd [#allocation3], %s21
      %s23 = sshll.u32 [#allocation2], 4
      %s24 = int_to_ptr.vmem [resolvable:$true] %s23
      %29 = dma.hbm_to_vmem [thread:$0]  %s3, 8192, %s24, [#allocation3], 64, 64, 4
    $region17: #{encoder1d_forward.1} parent=1 // pred_fallthru
      _
    // Predicated region
    $region18: #{encoder1d_forward.1} parent=1 // pred_check
      _
    $region19: #{encoder1d_forward.1} parent=1 // pred_check_branch
      %31 = sbr.rel (0) target = $region21
    $region20: #{encoder1d_forward.1} parent=1 // pred_region
      %s33 = ssub.s32 2560, 2560
      %34 = vsyncadd [#allocation5], %s33
      %s35 = sshll.u32 [#allocation4], 4
      %s36 = int_to_ptr.vmem [resolvable:$true] %s35
      %41 = dma.hbm_to_vmem [thread:$0]  %s4, 2560, %s36, [#allocation5], 512, 512, 32
    $region21: #{encoder1d_forward.1} parent=1 // pred_fallthru
      _
    // Predicated region
    $region22: #{encoder1d_forward.1} parent=1 // pred_check
      _
    $region23: #{encoder1d_forward.1} parent=1 // pred_check_branch
      %43 = sbr.rel (0) target = $region25
    $region24: #{encoder1d_forward.1} parent=1 // pred_region
      %44 = dma.done [#allocation3], 8192
    $region25: #{encoder1d_forward.1} parent=1 // pred_fallthru
      _
    // Predicated region
    $region26: #{encoder1d_forward.1} parent=1 // pred_check
      _
    $region27: #{encoder1d_forward.1} parent=1 // pred_check_branch
      %46 = sbr.rel (0) target = $region29
    $region28: #{encoder1d_forward.1} parent=1 // pred_region
      %47 = dma.done [#allocation5], 2560
    $region29: #{encoder1d_forward.1} parent=1 // pred_fallthru
      _
    %v49 = vld [vmem:[%s0] sm:$0xff]
    %v50 = vld [vmem:[%s0 + $0x8] sm:$0xff]
    %v51 = vld [vmem:[%s0 + $0x10] sm:$0xff]
    %v52 = vld [vmem:[%s0 + $0x18] sm:$0xff]
    %v53 = vld [vmem:[%s0 + $0x20] sm:$0xff]
    %v54 = vld [vmem:[%s0 + $0x28] sm:$0xff]
    %v55 = vld [vmem:[%s0 + $0x30] sm:$0xff]
    %v56 = vld [vmem:[%s0 + $0x38] sm:$0xff]
    %v57 = vld [vmem:[#allocation4] ss:$0 sm:$0xff]
    %v58 = vmul.f32 %v49, %v57
    %v59 = vmul.f32 %v50, %v57
    %v60 = vmul.f32 %v51, %v57
    %v61 = vmul.f32 %v52, %v57
    %v62 = vmul.f32 %v53, %v57
    %v63 = vmul.f32 %v54, %v57
    %v64 = vmul.f32 %v55, %v57
    %v65 = vmul.f32 %v56, %v57
    %v66 = vand.u32 2147483647, %v58
    %vm67 = vcmp.le.f32.partialorder %v66, 0.7853982
    %vm68 = vcmp.lt.s32.totalorder %v58, 0
    %v69 = vand.u32 %v58, 2139095040
    %v70 = vshrl.u32 %v69, 23
    %v71 = vsub.s32 %v70, 127
    %v72 = vand.u32 2147483647, %v58
    %v73 = vand.u32 %v72, 8388607
    %v74 = vor.u32 %v73, 8388608
    %v75 = vsub.s32 0, %v74
    %v76 = vadd.s32 %v71, 1
    %vm77 = vcmp.gt.s32.totalorder %v76, 0
    %v78 = vsel %vm77, %v76, 0
    %v79 = vshrl.u32 %v78, 5
    %v80 = vand.u32 %v78, 31
    %v81 = vsub.s32 32, %v80
    %v82 = vshrl.u32 683565275, %v81
    %v83 = vshll.u32 683565275, %v80
    %v84 = vshrl.u32 2475754826, %v81
    %v85 = vor.u32 %v83, %v84
    %v86 = vshll.u32 2475754826, %v80
    %v87 = vshrl.u32 2131351028, %v81
    %v88 = vor.u32 %v86, %v87
    %v89 = vshll.u32 2131351028, %v80
    %v90 = vshrl.u32 2102212464, %v81
    %v91 = vor.u32 %v89, %v90
    %v92 = vshll.u32 2102212464, %v80
    %v93 = vshrl.u32 920167782, %v81
    %v94 = vor.u32 %v92, %v93
    %v95 = vshll.u32 920167782, %v80
    %v96 = vshrl.u32 1326507024, %v81
    %v97 = vor.u32 %v95, %v96
    %vm98 = vcmp.lt.s32.totalorder %v79, 1
    %vm99 = vcmp.lt.s32.totalorder %v79, 2
    %vm100 = vcmp.lt.s32.totalorder %v79, 3
    %vm101 = vcmp.lt.s32.totalorder %v79, 4
    %v102 = vsel %vm98, %v82, %v85
    %v103 = vsel %vm101, %v91, 2102212464
    %v104 = vsel %vm100, %v88, %v103
    %v105 = vsel %vm99, %v102, %v104
    %v106 = vsel %vm98, %v85, %v88
    %v107 = vsel %vm101, %v94, 920167782
    %v108 = vsel %vm100, %v91, %v107
    %v109 = vsel %vm99, %v106, %v108
    %v110 = vsel %vm98, %v88, %v91
    %v111 = vsel %vm101, %v97, 1326507024
    %v112 = vsel %vm100, %v94, %v111
    %v113 = vsel %vm99, %v110, %v112
    %v114 = vshll.u32 %v74, 8
    %v115 = vmul.u32.u64.compose %v114, %v113
    %v116 = vextract.low.u32 %v115
    %v117 = vextract.high.u32 %v115
    %v118 = vmul.u32.u64.compose %v114, %v109
    %v119 = vextract.low.u32 %v118
    %v120 = vextract.high.u32 %v118
    %v121 = vmul.u32 %v114, %v105
    %v122 = vadd.s32 %v117, %v119
    %vm123 = vc.u32 %v117, %v119
    %v124 = vadd.s32 %v120, 1
    %v125 = vsel %vm123, %v124, %v120
    %v126 = vadd.s32 %v121, %v125
    %v127 = vadd.s32 %v126, 536870912
    %v128 = vshrl.u32 %v127, 30
    %v129 = vshll.u32 %v128, 30
    %v130 = vsub.s32 %v126, %v129
    %vm131 = vcmp.lt.s32.totalorder %v130, 0
    %v132 = vsub.s32 0, %v130
    %v133 = vsel %vm131, %v132, %v130
    %v134 = vclz %v133
    %v135 = vsub.s32 %v134, 2
    %vm136 = vcmp.gt.s32.totalorder 0, %v135
    %v137 = vsel %vm136, 0, %v135
    %v138 = vsub.s32 32, %v137
    %v139 = vshll.u32 %v130, %v137
    %v140 = vshrl.u32 %v122, %v138
    %v141 = vor.u32 %v139, %v140
    %v142 = vsub.s32 4294967266, %v137
    %v143 = vadd.s32 %v142, 127
    %v144 = vshll.u32 %v143, 23
    %v145 = vor.u32 4788187, %v144
    %v146 = vand.u32 2147483647, %v145
    %v148 = vcvt.s32.f32 %v141
    %v149 = vmul.f32 %v148, %v146
    %v150 = vxor.u32 %v149, 2147483648
    %v151 = vsel %vm68, %v150, %v149
    %v152 = vsub.s32 4, %v128
    %v153 = vsel %vm68, %v152, %v128
    %v154 = vsel %vm67, %v58, %v151
    %v155 = vsel %vm67, 0, %v153
    %v156 = vcosq.f32.pop %v154
    %v157 = vsinq.f32.pop %v154
    %vm158 = vweird.f32 %v58
    %v159 = vadd.s32 %v155, 3
    %v160 = vand.u32 %v159, 3
    %vm161 = vcmp.lt.s32.totalorder %v160, 2
    %vm162 = vcmp.eq.s32.totalorder %v160, 0
    %v163 = vxor.u32 %v157, 2147483648
    %v164 = vsel %vm162, %v156, %v163
    %vm165 = vcmp.eq.s32.totalorder %v160, 2
    %v166 = vxor.u32 %v156, 2147483648
    %v167 = vsel %vm165, %v166, %v157
    %v168 = vsel %vm161, %v164, %v167
    %v169 = vsel %vm158, nan, %v168
    %v170 = vand.u32 2147483647, %v59
    %vm171 = vcmp.le.f32.partialorder %v170, 0.7853982
    %vm172 = vcmp.lt.s32.totalorder %v59, 0
    %v173 = vand.u32 %v59, 2139095040
    %v174 = vshrl.u32 %v173, 23
    %v175 = vsub.s32 %v174, 127
    %v176 = vand.u32 2147483647, %v59
    %v177 = vand.u32 %v176, 8388607
    %v178 = vor.u32 %v177, 8388608
    %v179 = vsub.s32 0, %v178
    %v180 = vadd.s32 %v175, 1
    %vm181 = vcmp.gt.s32.totalorder %v180, 0
    %v182 = vsel %vm181, %v180, 0
    %v183 = vshrl.u32 %v182, 5
    %v184 = vand.u32 %v182, 31
    %v185 = vsub.s32 32, %v184
    %v186 = vshrl.u32 683565275, %v185
    %v187 = vshll.u32 683565275, %v184
    %v188 = vshrl.u32 2475754826, %v185
    %v189 = vor.u32 %v187, %v188
    %v190 = vshll.u32 2475754826, %v184
    %v191 = vshrl.u32 2131351028, %v185
    %v192 = vor.u32 %v190, %v191
    %v193 = vshll.u32 2131351028, %v184
    %v194 = vshrl.u32 2102212464, %v185
    %v195 = vor.u32 %v193, %v194
    %v196 = vshll.u32 2102212464, %v184
    %v197 = vshrl.u32 920167782, %v185
    %v198 = vor.u32 %v196, %v197
    %v199 = vshll.u32 920167782, %v184
    %v200 = vshrl.u32 1326507024, %v185
    %v201 = vor.u32 %v199, %v200
    %vm202 = vcmp.lt.s32.totalorder %v183, 1
    %vm203 = vcmp.lt.s32.totalorder %v183, 2
    %vm204 = vcmp.lt.s32.totalorder %v183, 3
    %vm205 = vcmp.lt.s32.totalorder %v183, 4
    %v206 = vsel %vm202, %v186, %v189
    %v207 = vsel %vm205, %v195, 2102212464
    %v208 = vsel %vm204, %v192, %v207
    %v209 = vsel %vm203, %v206, %v208
    %v210 = vsel %vm202, %v189, %v192
    %v211 = vsel %vm205, %v198, 920167782
    %v212 = vsel %vm204, %v195, %v211
    %v213 = vsel %vm203, %v210, %v212
    %v214 = vsel %vm202, %v192, %v195
    %v215 = vsel %vm205, %v201, 1326507024
    %v216 = vsel %vm204, %v198, %v215
    %v217 = vsel %vm203, %v214, %v216
    %v218 = vshll.u32 %v178, 8
    %v219 = vmul.u32.u64.compose %v218, %v217
    %v220 = vextract.low.u32 %v219
    %v221 = vextract.high.u32 %v219
    %v222 = vmul.u32.u64.compose %v218, %v213
    %v223 = vextract.low.u32 %v222
    %v224 = vextract.high.u32 %v222
    %v225 = vmul.u32 %v218, %v209
    %v226 = vadd.s32 %v221, %v223
    %vm227 = vc.u32 %v221, %v223
    %v228 = vadd.s32 %v224, 1
    %v229 = vsel %vm227, %v228, %v224
    %v230 = vadd.s32 %v225, %v229
    %v231 = vadd.s32 %v230, 536870912
    %v232 = vshrl.u32 %v231, 30
    %v233 = vshll.u32 %v232, 30
    %v234 = vsub.s32 %v230, %v233
    %vm235 = vcmp.lt.s32.totalorder %v234, 0
    %v236 = vsub.s32 0, %v234
    %v237 = vsel %vm235, %v236, %v234
    %v238 = vclz %v237
    %v239 = vsub.s32 %v238, 2
    %vm240 = vcmp.gt.s32.totalorder 0, %v239
    %v241 = vsel %vm240, 0, %v239
    %v242 = vsub.s32 32, %v241
    %v243 = vshll.u32 %v234, %v241
    %v244 = vshrl.u32 %v226, %v242
    %v245 = vor.u32 %v243, %v244
    %v246 = vsub.s32 4294967266, %v241
    %v247 = vadd.s32 %v246, 127
    %v248 = vshll.u32 %v247, 23
    %v249 = vor.u32 4788187, %v248
    %v250 = vand.u32 2147483647, %v249
    %v252 = vcvt.s32.f32 %v245
    %v253 = vmul.f32 %v252, %v250
    %v254 = vxor.u32 %v253, 2147483648
    %v255 = vsel %vm172, %v254, %v253
    %v256 = vsub.s32 4, %v232
    %v257 = vsel %vm172, %v256, %v232
    %v258 = vsel %vm171, %v59, %v255
    %v259 = vsel %vm171, 0, %v257
    %v260 = vcosq.f32.pop %v258
    %v261 = vsinq.f32.pop %v258
    %vm262 = vweird.f32 %v59
    %v263 = vadd.s32 %v259, 3
    %v264 = vand.u32 %v263, 3
    %vm265 = vcmp.lt.s32.totalorder %v264, 2
    %vm266 = vcmp.eq.s32.totalorder %v264, 0
    %v267 = vxor.u32 %v261, 2147483648
    %v268 = vsel %vm266, %v260, %v267
    %vm269 = vcmp.eq.s32.totalorder %v264, 2
    %v270 = vxor.u32 %v260, 2147483648
    %v271 = vsel %vm269, %v270, %v261
    %v272 = vsel %vm265, %v268, %v271
    %v273 = vsel %vm262, nan, %v272
    %v274 = vand.u32 2147483647, %v60
    %vm275 = vcmp.le.f32.partialorder %v274, 0.7853982
    %vm276 = vcmp.lt.s32.totalorder %v60, 0
    %v277 = vand.u32 %v60, 2139095040
    %v278 = vshrl.u32 %v277, 23
    %v279 = vsub.s32 %v278, 127
    %v280 = vand.u32 2147483647, %v60
    %v281 = vand.u32 %v280, 8388607
    %v282 = vor.u32 %v281, 8388608
    %v283 = vsub.s32 0, %v282
    %v284 = vadd.s32 %v279, 1
    %vm285 = vcmp.gt.s32.totalorder %v284, 0
    %v286 = vsel %vm285, %v284, 0
    %v287 = vshrl.u32 %v286, 5
    %v288 = vand.u32 %v286, 31
    %v289 = vsub.s32 32, %v288
    %v290 = vshrl.u32 683565275, %v289
    %v291 = vshll.u32 683565275, %v288
    %v292 = vshrl.u32 2475754826, %v289
    %v293 = vor.u32 %v291, %v292
    %v294 = vshll.u32 2475754826, %v288
    %v295 = vshrl.u32 2131351028, %v289
    %v296 = vor.u32 %v294, %v295
    %v297 = vshll.u32 2131351028, %v288
    %v298 = vshrl.u32 2102212464, %v289
    %v299 = vor.u32 %v297, %v298
    %v300 = vshll.u32 2102212464, %v288
    %v301 = vshrl.u32 920167782, %v289
    %v302 = vor.u32 %v300, %v301
    %v303 = vshll.u32 920167782, %v288
    %v304 = vshrl.u32 1326507024, %v289
    %v305 = vor.u32 %v303, %v304
    %vm306 = vcmp.lt.s32.totalorder %v287, 1
    %vm307 = vcmp.lt.s32.totalorder %v287, 2
    %vm308 = vcmp.lt.s32.totalorder %v287, 3
    %vm309 = vcmp.lt.s32.totalorder %v287, 4
    %v310 = vsel %vm306, %v290, %v293
    %v311 = vsel %vm309, %v299, 2102212464
    %v312 = vsel %vm308, %v296, %v311
    %v313 = vsel %vm307, %v310, %v312
    %v314 = vsel %vm306, %v293, %v296
    %v315 = vsel %vm309, %v302, 920167782
    %v316 = vsel %vm308, %v299, %v315
    %v317 = vsel %vm307, %v314, %v316
    %v318 = vsel %vm306, %v296, %v299
    %v319 = vsel %vm309, %v305, 1326507024
    %v320 = vsel %vm308, %v302, %v319
    %v321 = vsel %vm307, %v318, %v320
    %v322 = vshll.u32 %v282, 8
    %v323 = vmul.u32.u64.compose %v322, %v321
    %v324 = vextract.low.u32 %v323
    %v325 = vextract.high.u32 %v323
    %v326 = vmul.u32.u64.compose %v322, %v317
    %v327 = vextract.low.u32 %v326
    %v328 = vextract.high.u32 %v326
    %v329 = vmul.u32 %v322, %v313
    %v330 = vadd.s32 %v325, %v327
    %vm331 = vc.u32 %v325, %v327
    %v332 = vadd.s32 %v328, 1
    %v333 = vsel %vm331, %v332, %v328
    %v334 = vadd.s32 %v329, %v333
    %v335 = vadd.s32 %v334, 536870912
    %v336 = vshrl.u32 %v335, 30
    %v337 = vshll.u32 %v336, 30
    %v338 = vsub.s32 %v334, %v337
    %vm339 = vcmp.lt.s32.totalorder %v338, 0
    %v340 = vsub.s32 0, %v338
    %v341 = vsel %vm339, %v340, %v338
    %v342 = vclz %v341
    %v343 = vsub.s32 %v342, 2
    %vm344 = vcmp.gt.s32.totalorder 0, %v343
    %v345 = vsel %vm344, 0, %v343
    %v346 = vsub.s32 32, %v345
    %v347 = vshll.u32 %v338, %v345
    %v348 = vshrl.u32 %v330, %v346
    %v349 = vor.u32 %v347, %v348
    %v350 = vsub.s32 4294967266, %v345
    %v351 = vadd.s32 %v350, 127
    %v352 = vshll.u32 %v351, 23
    %v353 = vor.u32 4788187, %v352
    %v354 = vand.u32 2147483647, %v353
    %v356 = vcvt.s32.f32 %v349
    %v357 = vmul.f32 %v356, %v354
    %v358 = vxor.u32 %v357, 2147483648
    %v359 = vsel %vm276, %v358, %v357
    %v360 = vsub.s32 4, %v336
    %v361 = vsel %vm276, %v360, %v336
    %v362 = vsel %vm275, %v60, %v359
    %v363 = vsel %vm275, 0, %v361
    %v364 = vcosq.f32.pop %v362
    %v365 = vsinq.f32.pop %v362
    %vm366 = vweird.f32 %v60
    %v367 = vadd.s32 %v363, 3
    %v368 = vand.u32 %v367, 3
    %vm369 = vcmp.lt.s32.totalorder %v368, 2
    %vm370 = vcmp.eq.s32.totalorder %v368, 0
    %v371 = vxor.u32 %v365, 2147483648
    %v372 = vsel %vm370, %v364, %v371
    %vm373 = vcmp.eq.s32.totalorder %v368, 2
    %v374 = vxor.u32 %v364, 2147483648
    %v375 = vsel %vm373, %v374, %v365
    %v376 = vsel %vm369, %v372, %v375
    %v377 = vsel %vm366, nan, %v376
    %v378 = vand.u32 2147483647, %v61
    %vm379 = vcmp.le.f32.partialorder %v378, 0.7853982
    %vm380 = vcmp.lt.s32.totalorder %v61, 0
    %v381 = vand.u32 %v61, 2139095040
    %v382 = vshrl.u32 %v381, 23
    %v383 = vsub.s32 %v382, 127
    %v384 = vand.u32 2147483647, %v61
    %v385 = vand.u32 %v384, 8388607
    %v386 = vor.u32 %v385, 8388608
    %v387 = vsub.s32 0, %v386
    %v388 = vadd.s32 %v383, 1
    %vm389 = vcmp.gt.s32.totalorder %v388, 0
    %v390 = vsel %vm389, %v388, 0
    %v391 = vshrl.u32 %v390, 5
    %v392 = vand.u32 %v390, 31
    %v393 = vsub.s32 32, %v392
    %v394 = vshrl.u32 683565275, %v393
    %v395 = vshll.u32 683565275, %v392
    %v396 = vshrl.u32 2475754826, %v393
    %v397 = vor.u32 %v395, %v396
    %v398 = vshll.u32 2475754826, %v392
    %v399 = vshrl.u32 2131351028, %v393
    %v400 = vor.u32 %v398, %v399
    %v401 = vshll.u32 2131351028, %v392
    %v402 = vshrl.u32 2102212464, %v393
    %v403 = vor.u32 %v401, %v402
    %v404 = vshll.u32 2102212464, %v392
    %v405 = vshrl.u32 920167782, %v393
    %v406 = vor.u32 %v404, %v405
    %v407 = vshll.u32 920167782, %v392
    %v408 = vshrl.u32 1326507024, %v393
    %v409 = vor.u32 %v407, %v408
    %vm410 = vcmp.lt.s32.totalorder %v391, 1
    %vm411 = vcmp.lt.s32.totalorder %v391, 2
    %vm412 = vcmp.lt.s32.totalorder %v391, 3
    %vm413 = vcmp.lt.s32.totalorder %v391, 4
    %v414 = vsel %vm410, %v394, %v397
    %v415 = vsel %vm413, %v403, 2102212464
    %v416 = vsel %vm412, %v400, %v415
    %v417 = vsel %vm411, %v414, %v416
    %v418 = vsel %vm410, %v397, %v400
    %v419 = vsel %vm413, %v406, 920167782
    %v420 = vsel %vm412, %v403, %v419
    %v421 = vsel %vm411, %v418, %v420
    %v422 = vsel %vm410, %v400, %v403
    %v423 = vsel %vm413, %v409, 1326507024
    %v424 = vsel %vm412, %v406, %v423
    %v425 = vsel %vm411, %v422, %v424
    %v426 = vshll.u32 %v386, 8
    %v427 = vmul.u32.u64.compose %v426, %v425
    %v428 = vextract.low.u32 %v427
    %v429 = vextract.high.u32 %v427
    %v430 = vmul.u32.u64.compose %v426, %v421
    %v431 = vextract.low.u32 %v430
    %v432 = vextract.high.u32 %v430
    %v433 = vmul.u32 %v426, %v417
    %v434 = vadd.s32 %v429, %v431
    %vm435 = vc.u32 %v429, %v431
    %v436 = vadd.s32 %v432, 1
    %v437 = vsel %vm435, %v436, %v432
    %v438 = vadd.s32 %v433, %v437
    %v439 = vadd.s32 %v438, 536870912
    %v440 = vshrl.u32 %v439, 30
    %v441 = vshll.u32 %v440, 30
    %v442 = vsub.s32 %v438, %v441
    %vm443 = vcmp.lt.s32.totalorder %v442, 0
    %v444 = vsub.s32 0, %v442
    %v445 = vsel %vm443, %v444, %v442
    %v446 = vclz %v445
    %v447 = vsub.s32 %v446, 2
    %vm448 = vcmp.gt.s32.totalorder 0, %v447
    %v449 = vsel %vm448, 0, %v447
    %v450 = vsub.s32 32, %v449
    %v451 = vshll.u32 %v442, %v449
    %v452 = vshrl.u32 %v434, %v450
    %v453 = vor.u32 %v451, %v452
    %v454 = vsub.s32 4294967266, %v449
    %v455 = vadd.s32 %v454, 127
    %v456 = vshll.u32 %v455, 23
    %v457 = vor.u32 4788187, %v456
    %v458 = vand.u32 2147483647, %v457
    %v460 = vcvt.s32.f32 %v453
    %v461 = vmul.f32 %v460, %v458
    %v462 = vxor.u32 %v461, 2147483648
    %v463 = vsel %vm380, %v462, %v461
    %v464 = vsub.s32 4, %v440
    %v465 = vsel %vm380, %v464, %v440
    %v466 = vsel %vm379, %v61, %v463
    %v467 = vsel %vm379, 0, %v465
    %v468 = vcosq.f32.pop %v466
    %v469 = vsinq.f32.pop %v466
    %vm470 = vweird.f32 %v61
    %v471 = vadd.s32 %v467, 3
    %v472 = vand.u32 %v471, 3
    %vm473 = vcmp.lt.s32.totalorder %v472, 2
    %vm474 = vcmp.eq.s32.totalorder %v472, 0
    %v475 = vxor.u32 %v469, 2147483648
    %v476 = vsel %vm474, %v468, %v475
    %vm477 = vcmp.eq.s32.totalorder %v472, 2
    %v478 = vxor.u32 %v468, 2147483648
    %v479 = vsel %vm477, %v478, %v469
    %v480 = vsel %vm473, %v476, %v479
    %v481 = vsel %vm470, nan, %v480
    %v482 = vand.u32 2147483647, %v62
    %vm483 = vcmp.le.f32.partialorder %v482, 0.7853982
    %vm484 = vcmp.lt.s32.totalorder %v62, 0
    %v485 = vand.u32 %v62, 2139095040
    %v486 = vshrl.u32 %v485, 23
    %v487 = vsub.s32 %v486, 127
    %v488 = vand.u32 2147483647, %v62
    %v489 = vand.u32 %v488, 8388607
    %v490 = vor.u32 %v489, 8388608
    %v491 = vsub.s32 0, %v490
    %v492 = vadd.s32 %v487, 1
    %vm493 = vcmp.gt.s32.totalorder %v492, 0
    %v494 = vsel %vm493, %v492, 0
    %v495 = vshrl.u32 %v494, 5
    %v496 = vand.u32 %v494, 31
    %v497 = vsub.s32 32, %v496
    %v498 = vshrl.u32 683565275, %v497
    %v499 = vshll.u32 683565275, %v496
    %v500 = vshrl.u32 2475754826, %v497
    %v501 = vor.u32 %v499, %v500
    %v502 = vshll.u32 2475754826, %v496
    %v503 = vshrl.u32 2131351028, %v497
    %v504 = vor.u32 %v502, %v503
    %v505 = vshll.u32 2131351028, %v496
    %v506 = vshrl.u32 2102212464, %v497
    %v507 = vor.u32 %v505, %v506
    %v508 = vshll.u32 2102212464, %v496
    %v509 = vshrl.u32 920167782, %v497
    %v510 = vor.u32 %v508, %v509
    %v511 = vshll.u32 920167782, %v496
    %v512 = vshrl.u32 1326507024, %v497
    %v513 = vor.u32 %v511, %v512
    %vm514 = vcmp.lt.s32.totalorder %v495, 1
    %vm515 = vcmp.lt.s32.totalorder %v495, 2
    %vm516 = vcmp.lt.s32.totalorder %v495, 3
    %vm517 = vcmp.lt.s32.totalorder %v495, 4
    %v518 = vsel %vm514, %v498, %v501
    %v519 = vsel %vm517, %v507, 2102212464
    %v520 = vsel %vm516, %v504, %v519
    %v521 = vsel %vm515, %v518, %v520
    %v522 = vsel %vm514, %v501, %v504
    %v523 = vsel %vm517, %v510, 920167782
    %v524 = vsel %vm516, %v507, %v523
    %v525 = vsel %vm515, %v522, %v524
    %v526 = vsel %vm514, %v504, %v507
    %v527 = vsel %vm517, %v513, 1326507024
    %v528 = vsel %vm516, %v510, %v527
    %v529 = vsel %vm515, %v526, %v528
    %v530 = vshll.u32 %v490, 8
    %v531 = vmul.u32.u64.compose %v530, %v529
    %v532 = vextract.low.u32 %v531
    %v533 = vextract.high.u32 %v531
    %v534 = vmul.u32.u64.compose %v530, %v525
    %v535 = vextract.low.u32 %v534
    %v536 = vextract.high.u32 %v534
    %v537 = vmul.u32 %v530, %v521
    %v538 = vadd.s32 %v533, %v535
    %vm539 = vc.u32 %v533, %v535
    %v540 = vadd.s32 %v536, 1
    %v541 = vsel %vm539, %v540, %v536
    %v542 = vadd.s32 %v537, %v541
    %v543 = vadd.s32 %v542, 536870912
    %v544 = vshrl.u32 %v543, 30
    %v545 = vshll.u32 %v544, 30
    %v546 = vsub.s32 %v542, %v545
    %vm547 = vcmp.lt.s32.totalorder %v546, 0
    %v548 = vsub.s32 0, %v546
    %v549 = vsel %vm547, %v548, %v546
    %v550 = vclz %v549
    %v551 = vsub.s32 %v550, 2
    %vm552 = vcmp.gt.s32.totalorder 0, %v551
    %v553 = vsel %vm552, 0, %v551
    %v554 = vsub.s32 32, %v553
    %v555 = vshll.u32 %v546, %v553
    %v556 = vshrl.u32 %v538, %v554
    %v557 = vor.u32 %v555, %v556
    %v558 = vsub.s32 4294967266, %v553
    %v559 = vadd.s32 %v558, 127
    %v560 = vshll.u32 %v559, 23
    %v561 = vor.u32 4788187, %v560
    %v562 = vand.u32 2147483647, %v561
    %v564 = vcvt.s32.f32 %v557
    %v565 = vmul.f32 %v564, %v562
    %v566 = vxor.u32 %v565, 2147483648
    %v567 = vsel %vm484, %v566, %v565
    %v568 = vsub.s32 4, %v544
    %v569 = vsel %vm484, %v568, %v544
    %v570 = vsel %vm483, %v62, %v567
    %v571 = vsel %vm483, 0, %v569
    %v572 = vcosq.f32.pop %v570
    %v573 = vsinq.f32.pop %v570
    %vm574 = vweird.f32 %v62
    %v575 = vadd.s32 %v571, 3
    %v576 = vand.u32 %v575, 3
    %vm577 = vcmp.lt.s32.totalorder %v576, 2
    %vm578 = vcmp.eq.s32.totalorder %v576, 0
    %v579 = vxor.u32 %v573, 2147483648
    %v580 = vsel %vm578, %v572, %v579
    %vm581 = vcmp.eq.s32.totalorder %v576, 2
    %v582 = vxor.u32 %v572, 2147483648
    %v583 = vsel %vm581, %v582, %v573
    %v584 = vsel %vm577, %v580, %v583
    %v585 = vsel %vm574, nan, %v584
    %v586 = vand.u32 2147483647, %v63
    %vm587 = vcmp.le.f32.partialorder %v586, 0.7853982
    %vm588 = vcmp.lt.s32.totalorder %v63, 0
    %v589 = vand.u32 %v63, 2139095040
    %v590 = vshrl.u32 %v589, 23
    %v591 = vsub.s32 %v590, 127
    %v592 = vand.u32 2147483647, %v63
    %v593 = vand.u32 %v592, 8388607
    %v594 = vor.u32 %v593, 8388608
    %v595 = vsub.s32 0, %v594
    %v596 = vadd.s32 %v591, 1
    %vm597 = vcmp.gt.s32.totalorder %v596, 0
    %v598 = vsel %vm597, %v596, 0
    %v599 = vshrl.u32 %v598, 5
    %v600 = vand.u32 %v598, 31
    %v601 = vsub.s32 32, %v600
    %v602 = vshrl.u32 683565275, %v601
    %v603 = vshll.u32 683565275, %v600
    %v604 = vshrl.u32 2475754826, %v601
    %v605 = vor.u32 %v603, %v604
    %v606 = vshll.u32 2475754826, %v600
    %v607 = vshrl.u32 2131351028, %v601
    %v608 = vor.u32 %v606, %v607
    %v609 = vshll.u32 2131351028, %v600
    %v610 = vshrl.u32 2102212464, %v601
    %v611 = vor.u32 %v609, %v610
    %v612 = vshll.u32 2102212464, %v600
    %v613 = vshrl.u32 920167782, %v601
    %v614 = vor.u32 %v612, %v613
    %v615 = vshll.u32 920167782, %v600
    %v616 = vshrl.u32 1326507024, %v601
    %v617 = vor.u32 %v615, %v616
    %vm618 = vcmp.lt.s32.totalorder %v599, 1
    %vm619 = vcmp.lt.s32.totalorder %v599, 2
    %vm620 = vcmp.lt.s32.totalorder %v599, 3
    %vm621 = vcmp.lt.s32.totalorder %v599, 4
    %v622 = vsel %vm618, %v602, %v605
    %v623 = vsel %vm621, %v611, 2102212464
    %v624 = vsel %vm620, %v608, %v623
    %v625 = vsel %vm619, %v622, %v624
    %v626 = vsel %vm618, %v605, %v608
    %v627 = vsel %vm621, %v614, 920167782
    %v628 = vsel %vm620, %v611, %v627
    %v629 = vsel %vm619, %v626, %v628
    %v630 = vsel %vm618, %v608, %v611
    %v631 = vsel %vm621, %v617, 1326507024
    %v632 = vsel %vm620, %v614, %v631
    %v633 = vsel %vm619, %v630, %v632
    %v634 = vshll.u32 %v594, 8
    %v635 = vmul.u32.u64.compose %v634, %v633
    %v636 = vextract.low.u32 %v635
    %v637 = vextract.high.u32 %v635
    %v638 = vmul.u32.u64.compose %v634, %v629
    %v639 = vextract.low.u32 %v638
    %v640 = vextract.high.u32 %v638
    %v641 = vmul.u32 %v634, %v625
    %v642 = vadd.s32 %v637, %v639
    %vm643 = vc.u32 %v637, %v639
    %v644 = vadd.s32 %v640, 1
    %v645 = vsel %vm643, %v644, %v640
    %v646 = vadd.s32 %v641, %v645
    %v647 = vadd.s32 %v646, 536870912
    %v648 = vshrl.u32 %v647, 30
    %v649 = vshll.u32 %v648, 30
    %v650 = vsub.s32 %v646, %v649
    %vm651 = vcmp.lt.s32.totalorder %v650, 0
    %v652 = vsub.s32 0, %v650
    %v653 = vsel %vm651, %v652, %v650
    %v654 = vclz %v653
    %v655 = vsub.s32 %v654, 2
    %vm656 = vcmp.gt.s32.totalorder 0, %v655
    %v657 = vsel %vm656, 0, %v655
    %v658 = vsub.s32 32, %v657
    %v659 = vshll.u32 %v650, %v657
    %v660 = vshrl.u32 %v642, %v658
    %v661 = vor.u32 %v659, %v660
    %v662 = vsub.s32 4294967266, %v657
    %v663 = vadd.s32 %v662, 127
    %v664 = vshll.u32 %v663, 23
    %v665 = vor.u32 4788187, %v664
    %v666 = vand.u32 2147483647, %v665
    %v668 = vcvt.s32.f32 %v661
    %v669 = vmul.f32 %v668, %v666
    %v670 = vxor.u32 %v669, 2147483648
    %v671 = vsel %vm588, %v670, %v669
    %v672 = vsub.s32 4, %v648
    %v673 = vsel %vm588, %v672, %v648
    %v674 = vsel %vm587, %v63, %v671
    %v675 = vsel %vm587, 0, %v673
    %v676 = vcosq.f32.pop %v674
    %v677 = vsinq.f32.pop %v674
    %vm678 = vweird.f32 %v63
    %v679 = vadd.s32 %v675, 3
    %v680 = vand.u32 %v679, 3
    %vm681 = vcmp.lt.s32.totalorder %v680, 2
    %vm682 = vcmp.eq.s32.totalorder %v680, 0
    %v683 = vxor.u32 %v677, 2147483648
    %v684 = vsel %vm682, %v676, %v683
    %vm685 = vcmp.eq.s32.totalorder %v680, 2
    %v686 = vxor.u32 %v676, 2147483648
    %v687 = vsel %vm685, %v686, %v677
    %v688 = vsel %vm681, %v684, %v687
    %v689 = vsel %vm678, nan, %v688
    %v690 = vand.u32 2147483647, %v64
    %vm691 = vcmp.le.f32.partialorder %v690, 0.7853982
    %vm692 = vcmp.lt.s32.totalorder %v64, 0
    %v693 = vand.u32 %v64, 2139095040
    %v694 = vshrl.u32 %v693, 23
    %v695 = vsub.s32 %v694, 127
    %v696 = vand.u32 2147483647, %v64
    %v697 = vand.u32 %v696, 8388607
    %v698 = vor.u32 %v697, 8388608
    %v699 = vsub.s32 0, %v698
    %v700 = vadd.s32 %v695, 1
    %vm701 = vcmp.gt.s32.totalorder %v700, 0
    %v702 = vsel %vm701, %v700, 0
    %v703 = vshrl.u32 %v702, 5
    %v704 = vand.u32 %v702, 31
    %v705 = vsub.s32 32, %v704
    %v706 = vshrl.u32 683565275, %v705
    %v707 = vshll.u32 683565275, %v704
    %v708 = vshrl.u32 2475754826, %v705
    %v709 = vor.u32 %v707, %v708
    %v710 = vshll.u32 2475754826, %v704
    %v711 = vshrl.u32 2131351028, %v705
    %v712 = vor.u32 %v710, %v711
    %v713 = vshll.u32 2131351028, %v704
    %v714 = vshrl.u32 2102212464, %v705
    %v715 = vor.u32 %v713, %v714
    %v716 = vshll.u32 2102212464, %v704
    %v717 = vshrl.u32 920167782, %v705
    %v718 = vor.u32 %v716, %v717
    %v719 = vshll.u32 920167782, %v704
    %v720 = vshrl.u32 1326507024, %v705
    %v721 = vor.u32 %v719, %v720
    %vm722 = vcmp.lt.s32.totalorder %v703, 1
    %vm723 = vcmp.lt.s32.totalorder %v703, 2
    %vm724 = vcmp.lt.s32.totalorder %v703, 3
    %vm725 = vcmp.lt.s32.totalorder %v703, 4
    %v726 = vsel %vm722, %v706, %v709
    %v727 = vsel %vm725, %v715, 2102212464
    %v728 = vsel %vm724, %v712, %v727
    %v729 = vsel %vm723, %v726, %v728
    %v730 = vsel %vm722, %v709, %v712
    %v731 = vsel %vm725, %v718, 920167782
    %v732 = vsel %vm724, %v715, %v731
    %v733 = vsel %vm723, %v730, %v732
    %v734 = vsel %vm722, %v712, %v715
    %v735 = vsel %vm725, %v721, 1326507024
    %v736 = vsel %vm724, %v718, %v735
    %v737 = vsel %vm723, %v734, %v736
    %v738 = vshll.u32 %v698, 8
    %v739 = vmul.u32.u64.compose %v738, %v737
    %v740 = vextract.low.u32 %v739
    %v741 = vextract.high.u32 %v739
    %v742 = vmul.u32.u64.compose %v738, %v733
    %v743 = vextract.low.u32 %v742
    %v744 = vextract.high.u32 %v742
    %v745 = vmul.u32 %v738, %v729
    %v746 = vadd.s32 %v741, %v743
    %vm747 = vc.u32 %v741, %v743
    %v748 = vadd.s32 %v744, 1
    %v749 = vsel %vm747, %v748, %v744
    %v750 = vadd.s32 %v745, %v749
    %v751 = vadd.s32 %v750, 536870912
    %v752 = vshrl.u32 %v751, 30
    %v753 = vshll.u32 %v752, 30
    %v754 = vsub.s32 %v750, %v753
    %vm755 = vcmp.lt.s32.totalorder %v754, 0
    %v756 = vsub.s32 0, %v754
    %v757 = vsel %vm755, %v756, %v754
    %v758 = vclz %v757
    %v759 = vsub.s32 %v758, 2
    %vm760 = vcmp.gt.s32.totalorder 0, %v759
    %v761 = vsel %vm760, 0, %v759
    %v762 = vsub.s32 32, %v761
    %v763 = vshll.u32 %v754, %v761
    %v764 = vshrl.u32 %v746, %v762
    %v765 = vor.u32 %v763, %v764
    %v766 = vsub.s32 4294967266, %v761
    %v767 = vadd.s32 %v766, 127
    %v768 = vshll.u32 %v767, 23
    %v769 = vor.u32 4788187, %v768
    %v770 = vand.u32 2147483647, %v769
    %v772 = vcvt.s32.f32 %v765
    %v773 = vmul.f32 %v772, %v770
    %v774 = vxor.u32 %v773, 2147483648
    %v775 = vsel %vm692, %v774, %v773
    %v776 = vsub.s32 4, %v752
    %v777 = vsel %vm692, %v776, %v752
    %v778 = vsel %vm691, %v64, %v775
    %v779 = vsel %vm691, 0, %v777
    %v780 = vcosq.f32.pop %v778
    %v781 = vsinq.f32.pop %v778
    %vm782 = vweird.f32 %v64
    %v783 = vadd.s32 %v779, 3
    %v784 = vand.u32 %v783, 3
    %vm785 = vcmp.lt.s32.totalorder %v784, 2
    %vm786 = vcmp.eq.s32.totalorder %v784, 0
    %v787 = vxor.u32 %v781, 2147483648
    %v788 = vsel %vm786, %v780, %v787
    %vm789 = vcmp.eq.s32.totalorder %v784, 2
    %v790 = vxor.u32 %v780, 2147483648
    %v791 = vsel %vm789, %v790, %v781
    %v792 = vsel %vm785, %v788, %v791
    %v793 = vsel %vm782, nan, %v792
    %v794 = vand.u32 2147483647, %v65
    %vm795 = vcmp.le.f32.partialorder %v794, 0.7853982
    %vm796 = vcmp.lt.s32.totalorder %v65, 0
    %v797 = vand.u32 %v65, 2139095040
    %v798 = vshrl.u32 %v797, 23
    %v799 = vsub.s32 %v798, 127
    %v800 = vand.u32 2147483647, %v65
    %v801 = vand.u32 %v800, 8388607
    %v802 = vor.u32 %v801, 8388608
    %v803 = vsub.s32 0, %v802
    %v804 = vadd.s32 %v799, 1
    %vm805 = vcmp.gt.s32.totalorder %v804, 0
    %v806 = vsel %vm805, %v804, 0
    %v807 = vshrl.u32 %v806, 5
    %v808 = vand.u32 %v806, 31
    %v809 = vsub.s32 32, %v808
    %v810 = vshrl.u32 683565275, %v809
    %v811 = vshll.u32 683565275, %v808
    %v812 = vshrl.u32 2475754826, %v809
    %v813 = vor.u32 %v811, %v812
    %v814 = vshll.u32 2475754826, %v808
    %v815 = vshrl.u32 2131351028, %v809
    %v816 = vor.u32 %v814, %v815
    %v817 = vshll.u32 2131351028, %v808
    %v818 = vshrl.u32 2102212464, %v809
    %v819 = vor.u32 %v817, %v818
    %v820 = vshll.u32 2102212464, %v808
    %v821 = vshrl.u32 920167782, %v809
    %v822 = vor.u32 %v820, %v821
    %v823 = vshll.u32 920167782, %v808
    %v824 = vshrl.u32 1326507024, %v809
    %v825 = vor.u32 %v823, %v824
    %vm826 = vcmp.lt.s32.totalorder %v807, 1
    %vm827 = vcmp.lt.s32.totalorder %v807, 2
    %vm828 = vcmp.lt.s32.totalorder %v807, 3
    %vm829 = vcmp.lt.s32.totalorder %v807, 4
    %v830 = vsel %vm826, %v810, %v813
    %v831 = vsel %vm829, %v819, 2102212464
    %v832 = vsel %vm828, %v816, %v831
    %v833 = vsel %vm827, %v830, %v832
    %v834 = vsel %vm826, %v813, %v816
    %v835 = vsel %vm829, %v822, 920167782
    %v836 = vsel %vm828, %v819, %v835
    %v837 = vsel %vm827, %v834, %v836
    %v838 = vsel %vm826, %v816, %v819
    %v839 = vsel %vm829, %v825, 1326507024
    %v840 = vsel %vm828, %v822, %v839
    %v841 = vsel %vm827, %v838, %v840
    %v842 = vshll.u32 %v802, 8
    %v843 = vmul.u32.u64.compose %v842, %v841
    %v844 = vextract.low.u32 %v843
    %v845 = vextract.high.u32 %v843
    %v846 = vmul.u32.u64.compose %v842, %v837
    %v847 = vextract.low.u32 %v846
    %v848 = vextract.high.u32 %v846
    %v849 = vmul.u32 %v842, %v833
    %v850 = vadd.s32 %v845, %v847
    %vm851 = vc.u32 %v845, %v847
    %v852 = vadd.s32 %v848, 1
    %v853 = vsel %vm851, %v852, %v848
    %v854 = vadd.s32 %v849, %v853
    %v855 = vadd.s32 %v854, 536870912
    %v856 = vshrl.u32 %v855, 30
    %v857 = vshll.u32 %v856, 30
    %v858 = vsub.s32 %v854, %v857
    %vm859 = vcmp.lt.s32.totalorder %v858, 0
    %v860 = vsub.s32 0, %v858
    %v861 = vsel %vm859, %v860, %v858
    %v862 = vclz %v861
    %v863 = vsub.s32 %v862, 2
    %vm864 = vcmp.gt.s32.totalorder 0, %v863
    %v865 = vsel %vm864, 0, %v863
    %v866 = vsub.s32 32, %v865
    %v867 = vshll.u32 %v858, %v865
    %v868 = vshrl.u32 %v850, %v866
    %v869 = vor.u32 %v867, %v868
    %v870 = vsub.s32 4294967266, %v865
    %v871 = vadd.s32 %v870, 127
    %v872 = vshll.u32 %v871, 23
    %v873 = vor.u32 4788187, %v872
    %v874 = vand.u32 2147483647, %v873
    %v876 = vcvt.s32.f32 %v869
    %v877 = vmul.f32 %v876, %v874
    %v878 = vxor.u32 %v877, 2147483648
    %v879 = vsel %vm796, %v878, %v877
    %v880 = vsub.s32 4, %v856
    %v881 = vsel %vm796, %v880, %v856
    %v882 = vsel %vm795, %v65, %v879
    %v883 = vsel %vm795, 0, %v881
    %v884 = vcosq.f32.pop %v882
    %v885 = vsinq.f32.pop %v882
    %vm886 = vweird.f32 %v65
    %v887 = vadd.s32 %v883, 3
    %v888 = vand.u32 %v887, 3
    %vm889 = vcmp.lt.s32.totalorder %v888, 2
    %vm890 = vcmp.eq.s32.totalorder %v888, 0
    %v891 = vxor.u32 %v885, 2147483648
    %v892 = vsel %vm890, %v884, %v891
    %vm893 = vcmp.eq.s32.totalorder %v888, 2
    %v894 = vxor.u32 %v884, 2147483648
    %v895 = vsel %vm893, %v894, %v885
    %v896 = vsel %vm889, %v892, %v895
    %v897 = vsel %vm886, nan, %v896
    %v898 = vpack.c.bf16 %v273, %v169
    %v899 = vpack.c.bf16 %v481, %v377
    %v900 = vpack.c.bf16 %v689, %v585
    %v901 = vpack.c.bf16 %v897, %v793
    %v902 = vand.u32 2147483647, %v58
    %vm903 = vcmp.le.f32.partialorder %v902, 0.7853982
    %vm904 = vcmp.lt.s32.totalorder %v58, 0
    %v905 = vand.u32 %v58, 2139095040
    %v906 = vshrl.u32 %v905, 23
    %v907 = vsub.s32 %v906, 127
    %v908 = vand.u32 2147483647, %v58
    %v909 = vand.u32 %v908, 8388607
    %v910 = vor.u32 %v909, 8388608
    %v911 = vsub.s32 0, %v910
    %v912 = vadd.s32 %v907, 1
    %vm913 = vcmp.gt.s32.totalorder %v912, 0
    %v914 = vsel %vm913, %v912, 0
    %v915 = vshrl.u32 %v914, 5
    %v916 = vand.u32 %v914, 31
    %v917 = vsub.s32 32, %v916
    %v918 = vshrl.u32 683565275, %v917
    %v919 = vshll.u32 683565275, %v916
    %v920 = vshrl.u32 2475754826, %v917
    %v921 = vor.u32 %v919, %v920
    %v922 = vshll.u32 2475754826, %v916
    %v923 = vshrl.u32 2131351028, %v917
    %v924 = vor.u32 %v922, %v923
    %v925 = vshll.u32 2131351028, %v916
    %v926 = vshrl.u32 2102212464, %v917
    %v927 = vor.u32 %v925, %v926
    %v928 = vshll.u32 2102212464, %v916
    %v929 = vshrl.u32 920167782, %v917
    %v930 = vor.u32 %v928, %v929
    %v931 = vshll.u32 920167782, %v916
    %v932 = vshrl.u32 1326507024, %v917
    %v933 = vor.u32 %v931, %v932
    %vm934 = vcmp.lt.s32.totalorder %v915, 1
    %vm935 = vcmp.lt.s32.totalorder %v915, 2
    %vm936 = vcmp.lt.s32.totalorder %v915, 3
    %vm937 = vcmp.lt.s32.totalorder %v915, 4
    %v938 = vsel %vm934, %v918, %v921
    %v939 = vsel %vm937, %v927, 2102212464
    %v940 = vsel %vm936, %v924, %v939
    %v941 = vsel %vm935, %v938, %v940
    %v942 = vsel %vm934, %v921, %v924
    %v943 = vsel %vm937, %v930, 920167782
    %v944 = vsel %vm936, %v927, %v943
    %v945 = vsel %vm935, %v942, %v944
    %v946 = vsel %vm934, %v924, %v927
    %v947 = vsel %vm937, %v933, 1326507024
    %v948 = vsel %vm936, %v930, %v947
    %v949 = vsel %vm935, %v946, %v948
    %v950 = vshll.u32 %v910, 8
    %v951 = vmul.u32.u64.compose %v950, %v949
    %v952 = vextract.low.u32 %v951
    %v953 = vextract.high.u32 %v951
    %v954 = vmul.u32.u64.compose %v950, %v945
    %v955 = vextract.low.u32 %v954
    %v956 = vextract.high.u32 %v954
    %v957 = vmul.u32 %v950, %v941
    %v958 = vadd.s32 %v953, %v955
    %vm959 = vc.u32 %v953, %v955
    %v960 = vadd.s32 %v956, 1
    %v961 = vsel %vm959, %v960, %v956
    %v962 = vadd.s32 %v957, %v961
    %v963 = vadd.s32 %v962, 536870912
    %v964 = vshrl.u32 %v963, 30
    %v965 = vshll.u32 %v964, 30
    %v966 = vsub.s32 %v962, %v965
    %vm967 = vcmp.lt.s32.totalorder %v966, 0
    %v968 = vsub.s32 0, %v966
    %v969 = vsel %vm967, %v968, %v966
    %v970 = vclz %v969
    %v971 = vsub.s32 %v970, 2
    %vm972 = vcmp.gt.s32.totalorder 0, %v971
    %v973 = vsel %vm972, 0, %v971
    %v974 = vsub.s32 32, %v973
    %v975 = vshll.u32 %v966, %v973
    %v976 = vshrl.u32 %v958, %v974
    %v977 = vor.u32 %v975, %v976
    %v978 = vsub.s32 4294967266, %v973
    %v979 = vadd.s32 %v978, 127
    %v980 = vshll.u32 %v979, 23
    %v981 = vor.u32 4788187, %v980
    %v982 = vand.u32 2147483647, %v981
    %v984 = vcvt.s32.f32 %v977
    %v985 = vmul.f32 %v984, %v982
    %v986 = vxor.u32 %v985, 2147483648
    %v987 = vsel %vm904, %v986, %v985
    %v988 = vsub.s32 4, %v964
    %v989 = vsel %vm904, %v988, %v964
    %v990 = vsel %vm903, %v58, %v987
    %v991 = vsel %vm903, 0, %v989
    %v992 = vcosq.f32.pop %v990
    %v993 = vsinq.f32.pop %v990
    %vm994 = vweird.f32 %v58
    %v995 = vand.u32 %v991, 3
    %vm996 = vcmp.lt.s32.totalorder %v995, 2
    %vm997 = vcmp.eq.s32.totalorder %v995, 0
    %v998 = vxor.u32 %v993, 2147483648
    %v999 = vsel %vm997, %v992, %v998
    %vm1000 = vcmp.eq.s32.totalorder %v995, 2
    %v1001 = vxor.u32 %v992, 2147483648
    %v1002 = vsel %vm1000, %v1001, %v993
    %v1003 = vsel %vm996, %v999, %v1002
    %v1004 = vsel %vm994, nan, %v1003
    %v1005 = vand.u32 2147483647, %v59
    %vm1006 = vcmp.le.f32.partialorder %v1005, 0.7853982
    %vm1007 = vcmp.lt.s32.totalorder %v59, 0
    %v1008 = vand.u32 %v59, 2139095040
    %v1009 = vshrl.u32 %v1008, 23
    %v1010 = vsub.s32 %v1009, 127
    %v1011 = vand.u32 2147483647, %v59
    %v1012 = vand.u32 %v1011, 8388607
    %v1013 = vor.u32 %v1012, 8388608
    %v1014 = vsub.s32 0, %v1013
    %v1015 = vadd.s32 %v1010, 1
    %vm1016 = vcmp.gt.s32.totalorder %v1015, 0
    %v1017 = vsel %vm1016, %v1015, 0
    %v1018 = vshrl.u32 %v1017, 5
    %v1019 = vand.u32 %v1017, 31
    %v1020 = vsub.s32 32, %v1019
    %v1021 = vshrl.u32 683565275, %v1020
    %v1022 = vshll.u32 683565275, %v1019
    %v1023 = vshrl.u32 2475754826, %v1020
    %v1024 = vor.u32 %v1022, %v1023
    %v1025 = vshll.u32 2475754826, %v1019
    %v1026 = vshrl.u32 2131351028, %v1020
    %v1027 = vor.u32 %v1025, %v1026
    %v1028 = vshll.u32 2131351028, %v1019
    %v1029 = vshrl.u32 2102212464, %v1020
    %v1030 = vor.u32 %v1028, %v1029
    %v1031 = vshll.u32 2102212464, %v1019
    %v1032 = vshrl.u32 920167782, %v1020
    %v1033 = vor.u32 %v1031, %v1032
    %v1034 = vshll.u32 920167782, %v1019
    %v1035 = vshrl.u32 1326507024, %v1020
    %v1036 = vor.u32 %v1034, %v1035
    %vm1037 = vcmp.lt.s32.totalorder %v1018, 1
    %vm1038 = vcmp.lt.s32.totalorder %v1018, 2
    %vm1039 = vcmp.lt.s32.totalorder %v1018, 3
    %vm1040 = vcmp.lt.s32.totalorder %v1018, 4
    %v1041 = vsel %vm1037, %v1021, %v1024
    %v1042 = vsel %vm1040, %v1030, 2102212464
    %v1043 = vsel %vm1039, %v1027, %v1042
    %v1044 = vsel %vm1038, %v1041, %v1043
    %v1045 = vsel %vm1037, %v1024, %v1027
    %v1046 = vsel %vm1040, %v1033, 920167782
    %v1047 = vsel %vm1039, %v1030, %v1046
    %v1048 = vsel %vm1038, %v1045, %v1047
    %v1049 = vsel %vm1037, %v1027, %v1030
    %v1050 = vsel %vm1040, %v1036, 1326507024
    %v1051 = vsel %vm1039, %v1033, %v1050
    %v1052 = vsel %vm1038, %v1049, %v1051
    %v1053 = vshll.u32 %v1013, 8
    %v1054 = vmul.u32.u64.compose %v1053, %v1052
    %v1055 = vextract.low.u32 %v1054
    %v1056 = vextract.high.u32 %v1054
    %v1057 = vmul.u32.u64.compose %v1053, %v1048
    %v1058 = vextract.low.u32 %v1057
    %v1059 = vextract.high.u32 %v1057
    %v1060 = vmul.u32 %v1053, %v1044
    %v1061 = vadd.s32 %v1056, %v1058
    %vm1062 = vc.u32 %v1056, %v1058
    %v1063 = vadd.s32 %v1059, 1
    %v1064 = vsel %vm1062, %v1063, %v1059
    %v1065 = vadd.s32 %v1060, %v1064
    %v1066 = vadd.s32 %v1065, 536870912
    %v1067 = vshrl.u32 %v1066, 30
    %v1068 = vshll.u32 %v1067, 30
    %v1069 = vsub.s32 %v1065, %v1068
    %vm1070 = vcmp.lt.s32.totalorder %v1069, 0
    %v1071 = vsub.s32 0, %v1069
    %v1072 = vsel %vm1070, %v1071, %v1069
    %v1073 = vclz %v1072
    %v1074 = vsub.s32 %v1073, 2
    %vm1075 = vcmp.gt.s32.totalorder 0, %v1074
    %v1076 = vsel %vm1075, 0, %v1074
    %v1077 = vsub.s32 32, %v1076
    %v1078 = vshll.u32 %v1069, %v1076
    %v1079 = vshrl.u32 %v1061, %v1077
    %v1080 = vor.u32 %v1078, %v1079
    %v1081 = vsub.s32 4294967266, %v1076
    %v1082 = vadd.s32 %v1081, 127
    %v1083 = vshll.u32 %v1082, 23
    %v1084 = vor.u32 4788187, %v1083
    %v1085 = vand.u32 2147483647, %v1084
    %v1087 = vcvt.s32.f32 %v1080
    %v1088 = vmul.f32 %v1087, %v1085
    %v1089 = vxor.u32 %v1088, 2147483648
    %v1090 = vsel %vm1007, %v1089, %v1088
    %v1091 = vsub.s32 4, %v1067
    %v1092 = vsel %vm1007, %v1091, %v1067
    %v1093 = vsel %vm1006, %v59, %v1090
    %v1094 = vsel %vm1006, 0, %v1092
    %v1095 = vcosq.f32.pop %v1093
    %v1096 = vsinq.f32.pop %v1093
    %vm1097 = vweird.f32 %v59
    %v1098 = vand.u32 %v1094, 3
    %vm1099 = vcmp.lt.s32.totalorder %v1098, 2
    %vm1100 = vcmp.eq.s32.totalorder %v1098, 0
    %v1101 = vxor.u32 %v1096, 2147483648
    %v1102 = vsel %vm1100, %v1095, %v1101
    %vm1103 = vcmp.eq.s32.totalorder %v1098, 2
    %v1104 = vxor.u32 %v1095, 2147483648
    %v1105 = vsel %vm1103, %v1104, %v1096
    %v1106 = vsel %vm1099, %v1102, %v1105
    %v1107 = vsel %vm1097, nan, %v1106
    %v1108 = vand.u32 2147483647, %v60
    %vm1109 = vcmp.le.f32.partialorder %v1108, 0.7853982
    %vm1110 = vcmp.lt.s32.totalorder %v60, 0
    %v1111 = vand.u32 %v60, 2139095040
    %v1112 = vshrl.u32 %v1111, 23
    %v1113 = vsub.s32 %v1112, 127
    %v1114 = vand.u32 2147483647, %v60
    %v1115 = vand.u32 %v1114, 8388607
    %v1116 = vor.u32 %v1115, 8388608
    %v1117 = vsub.s32 0, %v1116
    %v1118 = vadd.s32 %v1113, 1
    %vm1119 = vcmp.gt.s32.totalorder %v1118, 0
    %v1120 = vsel %vm1119, %v1118, 0
    %v1121 = vshrl.u32 %v1120, 5
    %v1122 = vand.u32 %v1120, 31
    %v1123 = vsub.s32 32, %v1122
    %v1124 = vshrl.u32 683565275, %v1123
    %v1125 = vshll.u32 683565275, %v1122
    %v1126 = vshrl.u32 2475754826, %v1123
    %v1127 = vor.u32 %v1125, %v1126
    %v1128 = vshll.u32 2475754826, %v1122
    %v1129 = vshrl.u32 2131351028, %v1123
    %v1130 = vor.u32 %v1128, %v1129
    %v1131 = vshll.u32 2131351028, %v1122
    %v1132 = vshrl.u32 2102212464, %v1123
    %v1133 = vor.u32 %v1131, %v1132
    %v1134 = vshll.u32 2102212464, %v1122
    %v1135 = vshrl.u32 920167782, %v1123
    %v1136 = vor.u32 %v1134, %v1135
    %v1137 = vshll.u32 920167782, %v1122
    %v1138 = vshrl.u32 1326507024, %v1123
    %v1139 = vor.u32 %v1137, %v1138
    %vm1140 = vcmp.lt.s32.totalorder %v1121, 1
    %vm1141 = vcmp.lt.s32.totalorder %v1121, 2
    %vm1142 = vcmp.lt.s32.totalorder %v1121, 3
    %vm1143 = vcmp.lt.s32.totalorder %v1121, 4
    %v1144 = vsel %vm1140, %v1124, %v1127
    %v1145 = vsel %vm1143, %v1133, 2102212464
    %v1146 = vsel %vm1142, %v1130, %v1145
    %v1147 = vsel %vm1141, %v1144, %v1146
    %v1148 = vsel %vm1140, %v1127, %v1130
    %v1149 = vsel %vm1143, %v1136, 920167782
    %v1150 = vsel %vm1142, %v1133, %v1149
    %v1151 = vsel %vm1141, %v1148, %v1150
    %v1152 = vsel %vm1140, %v1130, %v1133
    %v1153 = vsel %vm1143, %v1139, 1326507024
    %v1154 = vsel %vm1142, %v1136, %v1153
    %v1155 = vsel %vm1141, %v1152, %v1154
    %v1156 = vshll.u32 %v1116, 8
    %v1157 = vmul.u32.u64.compose %v1156, %v1155
    %v1158 = vextract.low.u32 %v1157
    %v1159 = vextract.high.u32 %v1157
    %v1160 = vmul.u32.u64.compose %v1156, %v1151
    %v1161 = vextract.low.u32 %v1160
    %v1162 = vextract.high.u32 %v1160
    %v1163 = vmul.u32 %v1156, %v1147
    %v1164 = vadd.s32 %v1159, %v1161
    %vm1165 = vc.u32 %v1159, %v1161
    %v1166 = vadd.s32 %v1162, 1
    %v1167 = vsel %vm1165, %v1166, %v1162
    %v1168 = vadd.s32 %v1163, %v1167
    %v1169 = vadd.s32 %v1168, 536870912
    %v1170 = vshrl.u32 %v1169, 30
    %v1171 = vshll.u32 %v1170, 30
    %v1172 = vsub.s32 %v1168, %v1171
    %vm1173 = vcmp.lt.s32.totalorder %v1172, 0
    %v1174 = vsub.s32 0, %v1172
    %v1175 = vsel %vm1173, %v1174, %v1172
    %v1176 = vclz %v1175
    %v1177 = vsub.s32 %v1176, 2
    %vm1178 = vcmp.gt.s32.totalorder 0, %v1177
    %v1179 = vsel %vm1178, 0, %v1177
    %v1180 = vsub.s32 32, %v1179
    %v1181 = vshll.u32 %v1172, %v1179
    %v1182 = vshrl.u32 %v1164, %v1180
    %v1183 = vor.u32 %v1181, %v1182
    %v1184 = vsub.s32 4294967266, %v1179
    %v1185 = vadd.s32 %v1184, 127
    %v1186 = vshll.u32 %v1185, 23
    %v1187 = vor.u32 4788187, %v1186
    %v1188 = vand.u32 2147483647, %v1187
    %v1190 = vcvt.s32.f32 %v1183
    %v1191 = vmul.f32 %v1190, %v1188
    %v1192 = vxor.u32 %v1191, 2147483648
    %v1193 = vsel %vm1110, %v1192, %v1191
    %v1194 = vsub.s32 4, %v1170
    %v1195 = vsel %vm1110, %v1194, %v1170
    %v1196 = vsel %vm1109, %v60, %v1193
    %v1197 = vsel %vm1109, 0, %v1195
    %v1198 = vcosq.f32.pop %v1196
    %v1199 = vsinq.f32.pop %v1196
    %vm1200 = vweird.f32 %v60
    %v1201 = vand.u32 %v1197, 3
    %vm1202 = vcmp.lt.s32.totalorder %v1201, 2
    %vm1203 = vcmp.eq.s32.totalorder %v1201, 0
    %v1204 = vxor.u32 %v1199, 2147483648
    %v1205 = vsel %vm1203, %v1198, %v1204
    %vm1206 = vcmp.eq.s32.totalorder %v1201, 2
    %v1207 = vxor.u32 %v1198, 2147483648
    %v1208 = vsel %vm1206, %v1207, %v1199
    %v1209 = vsel %vm1202, %v1205, %v1208
    %v1210 = vsel %vm1200, nan, %v1209
    %v1211 = vand.u32 2147483647, %v61
    %vm1212 = vcmp.le.f32.partialorder %v1211, 0.7853982
    %vm1213 = vcmp.lt.s32.totalorder %v61, 0
    %v1214 = vand.u32 %v61, 2139095040
    %v1215 = vshrl.u32 %v1214, 23
    %v1216 = vsub.s32 %v1215, 127
    %v1217 = vand.u32 2147483647, %v61
    %v1218 = vand.u32 %v1217, 8388607
    %v1219 = vor.u32 %v1218, 8388608
    %v1220 = vsub.s32 0, %v1219
    %v1221 = vadd.s32 %v1216, 1
    %vm1222 = vcmp.gt.s32.totalorder %v1221, 0
    %v1223 = vsel %vm1222, %v1221, 0
    %v1224 = vshrl.u32 %v1223, 5
    %v1225 = vand.u32 %v1223, 31
    %v1226 = vsub.s32 32, %v1225
    %v1227 = vshrl.u32 683565275, %v1226
    %v1228 = vshll.u32 683565275, %v1225
    %v1229 = vshrl.u32 2475754826, %v1226
    %v1230 = vor.u32 %v1228, %v1229
    %v1231 = vshll.u32 2475754826, %v1225
    %v1232 = vshrl.u32 2131351028, %v1226
    %v1233 = vor.u32 %v1231, %v1232
    %v1234 = vshll.u32 2131351028, %v1225
    %v1235 = vshrl.u32 2102212464, %v1226
    %v1236 = vor.u32 %v1234, %v1235
    %v1237 = vshll.u32 2102212464, %v1225
    %v1238 = vshrl.u32 920167782, %v1226
    %v1239 = vor.u32 %v1237, %v1238
    %v1240 = vshll.u32 920167782, %v1225
    %v1241 = vshrl.u32 1326507024, %v1226
    %v1242 = vor.u32 %v1240, %v1241
    %vm1243 = vcmp.lt.s32.totalorder %v1224, 1
    %vm1244 = vcmp.lt.s32.totalorder %v1224, 2
    %vm1245 = vcmp.lt.s32.totalorder %v1224, 3
    %vm1246 = vcmp.lt.s32.totalorder %v1224, 4
    %v1247 = vsel %vm1243, %v1227, %v1230
    %v1248 = vsel %vm1246, %v1236, 2102212464
    %v1249 = vsel %vm1245, %v1233, %v1248
    %v1250 = vsel %vm1244, %v1247, %v1249
    %v1251 = vsel %vm1243, %v1230, %v1233
    %v1252 = vsel %vm1246, %v1239, 920167782
    %v1253 = vsel %vm1245, %v1236, %v1252
    %v1254 = vsel %vm1244, %v1251, %v1253
    %v1255 = vsel %vm1243, %v1233, %v1236
    %v1256 = vsel %vm1246, %v1242, 1326507024
    %v1257 = vsel %vm1245, %v1239, %v1256
    %v1258 = vsel %vm1244, %v1255, %v1257
    %v1259 = vshll.u32 %v1219, 8
    %v1260 = vmul.u32.u64.compose %v1259, %v1258
    %v1261 = vextract.low.u32 %v1260
    %v1262 = vextract.high.u32 %v1260
    %v1263 = vmul.u32.u64.compose %v1259, %v1254
    %v1264 = vextract.low.u32 %v1263
    %v1265 = vextract.high.u32 %v1263
    %v1266 = vmul.u32 %v1259, %v1250
    %v1267 = vadd.s32 %v1262, %v1264
    %vm1268 = vc.u32 %v1262, %v1264
    %v1269 = vadd.s32 %v1265, 1
    %v1270 = vsel %vm1268, %v1269, %v1265
    %v1271 = vadd.s32 %v1266, %v1270
    %v1272 = vadd.s32 %v1271, 536870912
    %v1273 = vshrl.u32 %v1272, 30
    %v1274 = vshll.u32 %v1273, 30
    %v1275 = vsub.s32 %v1271, %v1274
    %vm1276 = vcmp.lt.s32.totalorder %v1275, 0
    %v1277 = vsub.s32 0, %v1275
    %v1278 = vsel %vm1276, %v1277, %v1275
    %v1279 = vclz %v1278
    %v1280 = vsub.s32 %v1279, 2
    %vm1281 = vcmp.gt.s32.totalorder 0, %v1280
    %v1282 = vsel %vm1281, 0, %v1280
    %v1283 = vsub.s32 32, %v1282
    %v1284 = vshll.u32 %v1275, %v1282
    %v1285 = vshrl.u32 %v1267, %v1283
    %v1286 = vor.u32 %v1284, %v1285
    %v1287 = vsub.s32 4294967266, %v1282
    %v1288 = vadd.s32 %v1287, 127
    %v1289 = vshll.u32 %v1288, 23
    %v1290 = vor.u32 4788187, %v1289
    %v1291 = vand.u32 2147483647, %v1290
    %v1293 = vcvt.s32.f32 %v1286
    %v1294 = vmul.f32 %v1293, %v1291
    %v1295 = vxor.u32 %v1294, 2147483648
    %v1296 = vsel %vm1213, %v1295, %v1294
    %v1297 = vsub.s32 4, %v1273
    %v1298 = vsel %vm1213, %v1297, %v1273
    %v1299 = vsel %vm1212, %v61, %v1296
    %v1300 = vsel %vm1212, 0, %v1298
    %v1301 = vcosq.f32.pop %v1299
    %v1302 = vsinq.f32.pop %v1299
    %vm1303 = vweird.f32 %v61
    %v1304 = vand.u32 %v1300, 3
    %vm1305 = vcmp.lt.s32.totalorder %v1304, 2
    %vm1306 = vcmp.eq.s32.totalorder %v1304, 0
    %v1307 = vxor.u32 %v1302, 2147483648
    %v1308 = vsel %vm1306, %v1301, %v1307
    %vm1309 = vcmp.eq.s32.totalorder %v1304, 2
    %v1310 = vxor.u32 %v1301, 2147483648
    %v1311 = vsel %vm1309, %v1310, %v1302
    %v1312 = vsel %vm1305, %v1308, %v1311
    %v1313 = vsel %vm1303, nan, %v1312
    %v1314 = vand.u32 2147483647, %v62
    %vm1315 = vcmp.le.f32.partialorder %v1314, 0.7853982
    %vm1316 = vcmp.lt.s32.totalorder %v62, 0
    %v1317 = vand.u32 %v62, 2139095040
    %v1318 = vshrl.u32 %v1317, 23
    %v1319 = vsub.s32 %v1318, 127
    %v1320 = vand.u32 2147483647, %v62
    %v1321 = vand.u32 %v1320, 8388607
    %v1322 = vor.u32 %v1321, 8388608
    %v1323 = vsub.s32 0, %v1322
    %v1324 = vadd.s32 %v1319, 1
    %vm1325 = vcmp.gt.s32.totalorder %v1324, 0
    %v1326 = vsel %vm1325, %v1324, 0
    %v1327 = vshrl.u32 %v1326, 5
    %v1328 = vand.u32 %v1326, 31
    %v1329 = vsub.s32 32, %v1328
    %v1330 = vshrl.u32 683565275, %v1329
    %v1331 = vshll.u32 683565275, %v1328
    %v1332 = vshrl.u32 2475754826, %v1329
    %v1333 = vor.u32 %v1331, %v1332
    %v1334 = vshll.u32 2475754826, %v1328
    %v1335 = vshrl.u32 2131351028, %v1329
    %v1336 = vor.u32 %v1334, %v1335
    %v1337 = vshll.u32 2131351028, %v1328
    %v1338 = vshrl.u32 2102212464, %v1329
    %v1339 = vor.u32 %v1337, %v1338
    %v1340 = vshll.u32 2102212464, %v1328
    %v1341 = vshrl.u32 920167782, %v1329
    %v1342 = vor.u32 %v1340, %v1341
    %v1343 = vshll.u32 920167782, %v1328
    %v1344 = vshrl.u32 1326507024, %v1329
    %v1345 = vor.u32 %v1343, %v1344
    %vm1346 = vcmp.lt.s32.totalorder %v1327, 1
    %vm1347 = vcmp.lt.s32.totalorder %v1327, 2
    %vm1348 = vcmp.lt.s32.totalorder %v1327, 3
    %vm1349 = vcmp.lt.s32.totalorder %v1327, 4
    %v1350 = vsel %vm1346, %v1330, %v1333
    %v1351 = vsel %vm1349, %v1339, 2102212464
    %v1352 = vsel %vm1348, %v1336, %v1351
    %v1353 = vsel %vm1347, %v1350, %v1352
    %v1354 = vsel %vm1346, %v1333, %v1336
    %v1355 = vsel %vm1349, %v1342, 920167782
    %v1356 = vsel %vm1348, %v1339, %v1355
    %v1357 = vsel %vm1347, %v1354, %v1356
    %v1358 = vsel %vm1346, %v1336, %v1339
    %v1359 = vsel %vm1349, %v1345, 1326507024
    %v1360 = vsel %vm1348, %v1342, %v1359
    %v1361 = vsel %vm1347, %v1358, %v1360
    %v1362 = vshll.u32 %v1322, 8
    %v1363 = vmul.u32.u64.compose %v1362, %v1361
    %v1364 = vextract.low.u32 %v1363
    %v1365 = vextract.high.u32 %v1363
    %v1366 = vmul.u32.u64.compose %v1362, %v1357
    %v1367 = vextract.low.u32 %v1366
    %v1368 = vextract.high.u32 %v1366
    %v1369 = vmul.u32 %v1362, %v1353
    %v1370 = vadd.s32 %v1365, %v1367
    %vm1371 = vc.u32 %v1365, %v1367
    %v1372 = vadd.s32 %v1368, 1
    %v1373 = vsel %vm1371, %v1372, %v1368
    %v1374 = vadd.s32 %v1369, %v1373
    %v1375 = vadd.s32 %v1374, 536870912
    %v1376 = vshrl.u32 %v1375, 30
    %v1377 = vshll.u32 %v1376, 30
    %v1378 = vsub.s32 %v1374, %v1377
    %vm1379 = vcmp.lt.s32.totalorder %v1378, 0
    %v1380 = vsub.s32 0, %v1378
    %v1381 = vsel %vm1379, %v1380, %v1378
    %v1382 = vclz %v1381
    %v1383 = vsub.s32 %v1382, 2
    %vm1384 = vcmp.gt.s32.totalorder 0, %v1383
    %v1385 = vsel %vm1384, 0, %v1383
    %v1386 = vsub.s32 32, %v1385
    %v1387 = vshll.u32 %v1378, %v1385
    %v1388 = vshrl.u32 %v1370, %v1386
    %v1389 = vor.u32 %v1387, %v1388
    %v1390 = vsub.s32 4294967266, %v1385
    %v1391 = vadd.s32 %v1390, 127
    %v1392 = vshll.u32 %v1391, 23
    %v1393 = vor.u32 4788187, %v1392
    %v1394 = vand.u32 2147483647, %v1393
    %v1396 = vcvt.s32.f32 %v1389
    %v1397 = vmul.f32 %v1396, %v1394
    %v1398 = vxor.u32 %v1397, 2147483648
    %v1399 = vsel %vm1316, %v1398, %v1397
    %v1400 = vsub.s32 4, %v1376
    %v1401 = vsel %vm1316, %v1400, %v1376
    %v1402 = vsel %vm1315, %v62, %v1399
    %v1403 = vsel %vm1315, 0, %v1401
    %v1404 = vcosq.f32.pop %v1402
    %v1405 = vsinq.f32.pop %v1402
    %vm1406 = vweird.f32 %v62
    %v1407 = vand.u32 %v1403, 3
    %vm1408 = vcmp.lt.s32.totalorder %v1407, 2
    %vm1409 = vcmp.eq.s32.totalorder %v1407, 0
    %v1410 = vxor.u32 %v1405, 2147483648
    %v1411 = vsel %vm1409, %v1404, %v1410
    %vm1412 = vcmp.eq.s32.totalorder %v1407, 2
    %v1413 = vxor.u32 %v1404, 2147483648
    %v1414 = vsel %vm1412, %v1413, %v1405
    %v1415 = vsel %vm1408, %v1411, %v1414
    %v1416 = vsel %vm1406, nan, %v1415
    %v1417 = vand.u32 2147483647, %v63
    %vm1418 = vcmp.le.f32.partialorder %v1417, 0.7853982
    %vm1419 = vcmp.lt.s32.totalorder %v63, 0
    %v1420 = vand.u32 %v63, 2139095040
    %v1421 = vshrl.u32 %v1420, 23
    %v1422 = vsub.s32 %v1421, 127
    %v1423 = vand.u32 2147483647, %v63
    %v1424 = vand.u32 %v1423, 8388607
    %v1425 = vor.u32 %v1424, 8388608
    %v1426 = vsub.s32 0, %v1425
    %v1427 = vadd.s32 %v1422, 1
    %vm1428 = vcmp.gt.s32.totalorder %v1427, 0
    %v1429 = vsel %vm1428, %v1427, 0
    %v1430 = vshrl.u32 %v1429, 5
    %v1431 = vand.u32 %v1429, 31
    %v1432 = vsub.s32 32, %v1431
    %v1433 = vshrl.u32 683565275, %v1432
    %v1434 = vshll.u32 683565275, %v1431
    %v1435 = vshrl.u32 2475754826, %v1432
    %v1436 = vor.u32 %v1434, %v1435
    %v1437 = vshll.u32 2475754826, %v1431
    %v1438 = vshrl.u32 2131351028, %v1432
    %v1439 = vor.u32 %v1437, %v1438
    %v1440 = vshll.u32 2131351028, %v1431
    %v1441 = vshrl.u32 2102212464, %v1432
    %v1442 = vor.u32 %v1440, %v1441
    %v1443 = vshll.u32 2102212464, %v1431
    %v1444 = vshrl.u32 920167782, %v1432
    %v1445 = vor.u32 %v1443, %v1444
    %v1446 = vshll.u32 920167782, %v1431
    %v1447 = vshrl.u32 1326507024, %v1432
    %v1448 = vor.u32 %v1446, %v1447
    %vm1449 = vcmp.lt.s32.totalorder %v1430, 1
    %vm1450 = vcmp.lt.s32.totalorder %v1430, 2
    %vm1451 = vcmp.lt.s32.totalorder %v1430, 3
    %vm1452 = vcmp.lt.s32.totalorder %v1430, 4
    %v1453 = vsel %vm1449, %v1433, %v1436
    %v1454 = vsel %vm1452, %v1442, 2102212464
    %v1455 = vsel %vm1451, %v1439, %v1454
    %v1456 = vsel %vm1450, %v1453, %v1455
    %v1457 = vsel %vm1449, %v1436, %v1439
    %v1458 = vsel %vm1452, %v1445, 920167782
    %v1459 = vsel %vm1451, %v1442, %v1458
    %v1460 = vsel %vm1450, %v1457, %v1459
    %v1461 = vsel %vm1449, %v1439, %v1442
    %v1462 = vsel %vm1452, %v1448, 1326507024
    %v1463 = vsel %vm1451, %v1445, %v1462
    %v1464 = vsel %vm1450, %v1461, %v1463
    %v1465 = vshll.u32 %v1425, 8
    %v1466 = vmul.u32.u64.compose %v1465, %v1464
    %v1467 = vextract.low.u32 %v1466
    %v1468 = vextract.high.u32 %v1466
    %v1469 = vmul.u32.u64.compose %v1465, %v1460
    %v1470 = vextract.low.u32 %v1469
    %v1471 = vextract.high.u32 %v1469
    %v1472 = vmul.u32 %v1465, %v1456
    %v1473 = vadd.s32 %v1468, %v1470
    %vm1474 = vc.u32 %v1468, %v1470
    %v1475 = vadd.s32 %v1471, 1
    %v1476 = vsel %vm1474, %v1475, %v1471
    %v1477 = vadd.s32 %v1472, %v1476
    %v1478 = vadd.s32 %v1477, 536870912
    %v1479 = vshrl.u32 %v1478, 30
    %v1480 = vshll.u32 %v1479, 30
    %v1481 = vsub.s32 %v1477, %v1480
    %vm1482 = vcmp.lt.s32.totalorder %v1481, 0
    %v1483 = vsub.s32 0, %v1481
    %v1484 = vsel %vm1482, %v1483, %v1481
    %v1485 = vclz %v1484
    %v1486 = vsub.s32 %v1485, 2
    %vm1487 = vcmp.gt.s32.totalorder 0, %v1486
    %v1488 = vsel %vm1487, 0, %v1486
    %v1489 = vsub.s32 32, %v1488
    %v1490 = vshll.u32 %v1481, %v1488
    %v1491 = vshrl.u32 %v1473, %v1489
    %v1492 = vor.u32 %v1490, %v1491
    %v1493 = vsub.s32 4294967266, %v1488
    %v1494 = vadd.s32 %v1493, 127
    %v1495 = vshll.u32 %v1494, 23
    %v1496 = vor.u32 4788187, %v1495
    %v1497 = vand.u32 2147483647, %v1496
    %v1499 = vcvt.s32.f32 %v1492
    %v1500 = vmul.f32 %v1499, %v1497
    %v1501 = vxor.u32 %v1500, 2147483648
    %v1502 = vsel %vm1419, %v1501, %v1500
    %v1503 = vsub.s32 4, %v1479
    %v1504 = vsel %vm1419, %v1503, %v1479
    %v1505 = vsel %vm1418, %v63, %v1502
    %v1506 = vsel %vm1418, 0, %v1504
    %v1507 = vcosq.f32.pop %v1505
    %v1508 = vsinq.f32.pop %v1505
    %vm1509 = vweird.f32 %v63
    %v1510 = vand.u32 %v1506, 3
    %vm1511 = vcmp.lt.s32.totalorder %v1510, 2
    %vm1512 = vcmp.eq.s32.totalorder %v1510, 0
    %v1513 = vxor.u32 %v1508, 2147483648
    %v1514 = vsel %vm1512, %v1507, %v1513
    %vm1515 = vcmp.eq.s32.totalorder %v1510, 2
    %v1516 = vxor.u32 %v1507, 2147483648
    %v1517 = vsel %vm1515, %v1516, %v1508
    %v1518 = vsel %vm1511, %v1514, %v1517
    %v1519 = vsel %vm1509, nan, %v1518
    %v1520 = vand.u32 2147483647, %v64
    %vm1521 = vcmp.le.f32.partialorder %v1520, 0.7853982
    %vm1522 = vcmp.lt.s32.totalorder %v64, 0
    %v1523 = vand.u32 %v64, 2139095040
    %v1524 = vshrl.u32 %v1523, 23
    %v1525 = vsub.s32 %v1524, 127
    %v1526 = vand.u32 2147483647, %v64
    %v1527 = vand.u32 %v1526, 8388607
    %v1528 = vor.u32 %v1527, 8388608
    %v1529 = vsub.s32 0, %v1528
    %v1530 = vadd.s32 %v1525, 1
    %vm1531 = vcmp.gt.s32.totalorder %v1530, 0
    %v1532 = vsel %vm1531, %v1530, 0
    %v1533 = vshrl.u32 %v1532, 5
    %v1534 = vand.u32 %v1532, 31
    %v1535 = vsub.s32 32, %v1534
    %v1536 = vshrl.u32 683565275, %v1535
    %v1537 = vshll.u32 683565275, %v1534
    %v1538 = vshrl.u32 2475754826, %v1535
    %v1539 = vor.u32 %v1537, %v1538
    %v1540 = vshll.u32 2475754826, %v1534
    %v1541 = vshrl.u32 2131351028, %v1535
    %v1542 = vor.u32 %v1540, %v1541
    %v1543 = vshll.u32 2131351028, %v1534
    %v1544 = vshrl.u32 2102212464, %v1535
    %v1545 = vor.u32 %v1543, %v1544
    %v1546 = vshll.u32 2102212464, %v1534
    %v1547 = vshrl.u32 920167782, %v1535
    %v1548 = vor.u32 %v1546, %v1547
    %v1549 = vshll.u32 920167782, %v1534
    %v1550 = vshrl.u32 1326507024, %v1535
    %v1551 = vor.u32 %v1549, %v1550
    %vm1552 = vcmp.lt.s32.totalorder %v1533, 1
    %vm1553 = vcmp.lt.s32.totalorder %v1533, 2
    %vm1554 = vcmp.lt.s32.totalorder %v1533, 3
    %vm1555 = vcmp.lt.s32.totalorder %v1533, 4
    %v1556 = vsel %vm1552, %v1536, %v1539
    %v1557 = vsel %vm1555, %v1545, 2102212464
    %v1558 = vsel %vm1554, %v1542, %v1557
    %v1559 = vsel %vm1553, %v1556, %v1558
    %v1560 = vsel %vm1552, %v1539, %v1542
    %v1561 = vsel %vm1555, %v1548, 920167782
    %v1562 = vsel %vm1554, %v1545, %v1561
    %v1563 = vsel %vm1553, %v1560, %v1562
    %v1564 = vsel %vm1552, %v1542, %v1545
    %v1565 = vsel %vm1555, %v1551, 1326507024
    %v1566 = vsel %vm1554, %v1548, %v1565
    %v1567 = vsel %vm1553, %v1564, %v1566
    %v1568 = vshll.u32 %v1528, 8
    %v1569 = vmul.u32.u64.compose %v1568, %v1567
    %v1570 = vextract.low.u32 %v1569
    %v1571 = vextract.high.u32 %v1569
    %v1572 = vmul.u32.u64.compose %v1568, %v1563
    %v1573 = vextract.low.u32 %v1572
    %v1574 = vextract.high.u32 %v1572
    %v1575 = vmul.u32 %v1568, %v1559
    %v1576 = vadd.s32 %v1571, %v1573
    %vm1577 = vc.u32 %v1571, %v1573
    %v1578 = vadd.s32 %v1574, 1
    %v1579 = vsel %vm1577, %v1578, %v1574
    %v1580 = vadd.s32 %v1575, %v1579
    %v1581 = vadd.s32 %v1580, 536870912
    %v1582 = vshrl.u32 %v1581, 30
    %v1583 = vshll.u32 %v1582, 30
    %v1584 = vsub.s32 %v1580, %v1583
    %vm1585 = vcmp.lt.s32.totalorder %v1584, 0
    %v1586 = vsub.s32 0, %v1584
    %v1587 = vsel %vm1585, %v1586, %v1584
    %v1588 = vclz %v1587
    %v1589 = vsub.s32 %v1588, 2
    %vm1590 = vcmp.gt.s32.totalorder 0, %v1589
    %v1591 = vsel %vm1590, 0, %v1589
    %v1592 = vsub.s32 32, %v1591
    %v1593 = vshll.u32 %v1584, %v1591
    %v1594 = vshrl.u32 %v1576, %v1592
    %v1595 = vor.u32 %v1593, %v1594
    %v1596 = vsub.s32 4294967266, %v1591
    %v1597 = vadd.s32 %v1596, 127
    %v1598 = vshll.u32 %v1597, 23
    %v1599 = vor.u32 4788187, %v1598
    %v1600 = vand.u32 2147483647, %v1599
    %v1602 = vcvt.s32.f32 %v1595
    %v1603 = vmul.f32 %v1602, %v1600
    %v1604 = vxor.u32 %v1603, 2147483648
    %v1605 = vsel %vm1522, %v1604, %v1603
    %v1606 = vsub.s32 4, %v1582
    %v1607 = vsel %vm1522, %v1606, %v1582
    %v1608 = vsel %vm1521, %v64, %v1605
    %v1609 = vsel %vm1521, 0, %v1607
    %v1610 = vcosq.f32.pop %v1608
    %v1611 = vsinq.f32.pop %v1608
    %vm1612 = vweird.f32 %v64
    %v1613 = vand.u32 %v1609, 3
    %vm1614 = vcmp.lt.s32.totalorder %v1613, 2
    %vm1615 = vcmp.eq.s32.totalorder %v1613, 0
    %v1616 = vxor.u32 %v1611, 2147483648
    %v1617 = vsel %vm1615, %v1610, %v1616
    %vm1618 = vcmp.eq.s32.totalorder %v1613, 2
    %v1619 = vxor.u32 %v1610, 2147483648
    %v1620 = vsel %vm1618, %v1619, %v1611
    %v1621 = vsel %vm1614, %v1617, %v1620
    %v1622 = vsel %vm1612, nan, %v1621
    %v1623 = vand.u32 2147483647, %v65
    %vm1624 = vcmp.le.f32.partialorder %v1623, 0.7853982
    %vm1625 = vcmp.lt.s32.totalorder %v65, 0
    %v1626 = vand.u32 %v65, 2139095040
    %v1627 = vshrl.u32 %v1626, 23
    %v1628 = vsub.s32 %v1627, 127
    %v1629 = vand.u32 2147483647, %v65
    %v1630 = vand.u32 %v1629, 8388607
    %v1631 = vor.u32 %v1630, 8388608
    %v1632 = vsub.s32 0, %v1631
    %v1633 = vadd.s32 %v1628, 1
    %vm1634 = vcmp.gt.s32.totalorder %v1633, 0
    %v1635 = vsel %vm1634, %v1633, 0
    %v1636 = vshrl.u32 %v1635, 5
    %v1637 = vand.u32 %v1635, 31
    %v1638 = vsub.s32 32, %v1637
    %v1639 = vshrl.u32 683565275, %v1638
    %v1640 = vshll.u32 683565275, %v1637
    %v1641 = vshrl.u32 2475754826, %v1638
    %v1642 = vor.u32 %v1640, %v1641
    %v1643 = vshll.u32 2475754826, %v1637
    %v1644 = vshrl.u32 2131351028, %v1638
    %v1645 = vor.u32 %v1643, %v1644
    %v1646 = vshll.u32 2131351028, %v1637
    %v1647 = vshrl.u32 2102212464, %v1638
    %v1648 = vor.u32 %v1646, %v1647
    %v1649 = vshll.u32 2102212464, %v1637
    %v1650 = vshrl.u32 920167782, %v1638
    %v1651 = vor.u32 %v1649, %v1650
    %v1652 = vshll.u32 920167782, %v1637
    %v1653 = vshrl.u32 1326507024, %v1638
    %v1654 = vor.u32 %v1652, %v1653
    %vm1655 = vcmp.lt.s32.totalorder %v1636, 1
    %vm1656 = vcmp.lt.s32.totalorder %v1636, 2
    %vm1657 = vcmp.lt.s32.totalorder %v1636, 3
    %vm1658 = vcmp.lt.s32.totalorder %v1636, 4
    %v1659 = vsel %vm1655, %v1639, %v1642
    %v1660 = vsel %vm1658, %v1648, 2102212464
    %v1661 = vsel %vm1657, %v1645, %v1660
    %v1662 = vsel %vm1656, %v1659, %v1661
    %v1663 = vsel %vm1655, %v1642, %v1645
    %v1664 = vsel %vm1658, %v1651, 920167782
    %v1665 = vsel %vm1657, %v1648, %v1664
    %v1666 = vsel %vm1656, %v1663, %v1665
    %v1667 = vsel %vm1655, %v1645, %v1648
    %v1668 = vsel %vm1658, %v1654, 1326507024
    %v1669 = vsel %vm1657, %v1651, %v1668
    %v1670 = vsel %vm1656, %v1667, %v1669
    %v1671 = vshll.u32 %v1631, 8
    %v1672 = vmul.u32.u64.compose %v1671, %v1670
    %v1673 = vextract.low.u32 %v1672
    %v1674 = vextract.high.u32 %v1672
    %v1675 = vmul.u32.u64.compose %v1671, %v1666
    %v1676 = vextract.low.u32 %v1675
    %v1677 = vextract.high.u32 %v1675
    %v1678 = vmul.u32 %v1671, %v1662
    %v1679 = vadd.s32 %v1674, %v1676
    %vm1680 = vc.u32 %v1674, %v1676
    %v1681 = vadd.s32 %v1677, 1
    %v1682 = vsel %vm1680, %v1681, %v1677
    %v1683 = vadd.s32 %v1678, %v1682
    %v1684 = vadd.s32 %v1683, 536870912
    %v1685 = vshrl.u32 %v1684, 30
    %v1686 = vshll.u32 %v1685, 30
    %v1687 = vsub.s32 %v1683, %v1686
    %vm1688 = vcmp.lt.s32.totalorder %v1687, 0
    %v1689 = vsub.s32 0, %v1687
    %v1690 = vsel %vm1688, %v1689, %v1687
    %v1691 = vclz %v1690
    %v1692 = vsub.s32 %v1691, 2
    %vm1693 = vcmp.gt.s32.totalorder 0, %v1692
    %v1694 = vsel %vm1693, 0, %v1692
    %v1695 = vsub.s32 32, %v1694
    %v1696 = vshll.u32 %v1687, %v1694
    %v1697 = vshrl.u32 %v1679, %v1695
    %v1698 = vor.u32 %v1696, %v1697
    %v1699 = vsub.s32 4294967266, %v1694
    %v1700 = vadd.s32 %v1699, 127
    %v1701 = vshll.u32 %v1700, 23
    %v1702 = vor.u32 4788187, %v1701
    %v1703 = vand.u32 2147483647, %v1702
    %v1705 = vcvt.s32.f32 %v1698
    %v1706 = vmul.f32 %v1705, %v1703
    %v1707 = vxor.u32 %v1706, 2147483648
    %v1708 = vsel %vm1625, %v1707, %v1706
    %v1709 = vsub.s32 4, %v1685
    %v1710 = vsel %vm1625, %v1709, %v1685
    %v1711 = vsel %vm1624, %v65, %v1708
    %v1712 = vsel %vm1624, 0, %v1710
    %v1713 = vcosq.f32.pop %v1711
    %v1714 = vsinq.f32.pop %v1711
    %vm1715 = vweird.f32 %v65
    %v1716 = vand.u32 %v1712, 3
    %vm1717 = vcmp.lt.s32.totalorder %v1716, 2
    %vm1718 = vcmp.eq.s32.totalorder %v1716, 0
    %v1719 = vxor.u32 %v1714, 2147483648
    %v1720 = vsel %vm1718, %v1713, %v1719
    %vm1721 = vcmp.eq.s32.totalorder %v1716, 2
    %v1722 = vxor.u32 %v1713, 2147483648
    %v1723 = vsel %vm1721, %v1722, %v1714
    %v1724 = vsel %vm1717, %v1720, %v1723
    %v1725 = vsel %vm1715, nan, %v1724
    %v1726 = vpack.c.bf16 %v1107, %v1004
    %v1727 = vpack.c.bf16 %v1313, %v1210
    %v1728 = vpack.c.bf16 %v1519, %v1416
    %v1729 = vpack.c.bf16 %v1725, %v1622
    %v1730 = vld [vmem:[%s1] sm:$0xf]
    %v1731 = vld [vmem:[%s1 + $0x4] sm:$0xf]
    %v1732 = vld [vmem:[%s1 + $0x8] sm:$0xf]
    %v1733 = vld [vmem:[%s1 + $0xc] sm:$0xf]
    %v1734 = vld [vmem:[%s1 + $0x10] sm:$0xf]
    %v1735 = vld [vmem:[%s1 + $0x14] sm:$0xf]
    %v1736 = vld [vmem:[%s1 + $0x18] sm:$0xf]
    %v1737 = vld [vmem:[%s1 + $0x1c] sm:$0xf]
    %v1738 = vld [vmem:[%s1 + $0x20] sm:$0xf]
    %v1739 = vld [vmem:[%s1 + $0x24] sm:$0xf]
    %v1740 = vld [vmem:[%s1 + $0x28] sm:$0xf]
    %v1741 = vld [vmem:[%s1 + $0x2c] sm:$0xf]
    %v1742 = vld [vmem:[%s1 + $0x30] sm:$0xf]
    %v1743 = vld [vmem:[%s1 + $0x34] sm:$0xf]
    %v1744 = vld [vmem:[%s1 + $0x38] sm:$0xf]
    %v1745 = vld [vmem:[%s1 + $0x3c] sm:$0xf]
    %v1746 = vld [vmem:[%s1 + $0x40] sm:$0xf]
    %v1747 = vld [vmem:[%s1 + $0x44] sm:$0xf]
    %v1748 = vld [vmem:[%s1 + $0x48] sm:$0xf]
    %v1749 = vld [vmem:[%s1 + $0x4c] sm:$0xf]
    %v1750 = vld [vmem:[%s1 + $0x50] sm:$0xf]
    %v1751 = vld [vmem:[%s1 + $0x54] sm:$0xf]
    %v1752 = vld [vmem:[%s1 + $0x58] sm:$0xf]
    %v1753 = vld [vmem:[%s1 + $0x5c] sm:$0xf]
    %v1754 = vld [vmem:[%s1 + $0x60] sm:$0xf]
    %v1755 = vld [vmem:[%s1 + $0x64] sm:$0xf]
    %v1756 = vld [vmem:[%s1 + $0x68] sm:$0xf]
    %v1757 = vld [vmem:[%s1 + $0x6c] sm:$0xf]
    %v1758 = vld [vmem:[%s1 + $0x70] sm:$0xf]
    %v1759 = vld [vmem:[%s1 + $0x74] sm:$0xf]
    %v1760 = vld [vmem:[%s1 + $0x78] sm:$0xf]
    %v1761 = vld [vmem:[%s1 + $0x7c] sm:$0xf]
    %v1778 = vunpack.c.l.b16 %v1746
    %v1779 = vunpack.c.l.b16 %v1747
    %v1780 = vunpack.c.l.b16 %v1748
    %v1781 = vunpack.c.l.b16 %v1749
    %v1782 = vunpack.c.l.b16 %v1750
    %v1783 = vunpack.c.l.b16 %v1751
    %v1784 = vunpack.c.l.b16 %v1752
    %v1785 = vunpack.c.l.b16 %v1753
    %v1786 = vunpack.c.l.b16 %v1754
    %v1787 = vunpack.c.l.b16 %v1755
    %v1788 = vunpack.c.l.b16 %v1756
    %v1789 = vunpack.c.l.b16 %v1757
    %v1790 = vunpack.c.l.b16 %v1758
    %v1791 = vunpack.c.l.b16 %v1759
    %v1792 = vunpack.c.l.b16 %v1760
    %v1793 = vunpack.c.l.b16 %v1761
    %v1794 = vpack.c.b16 %v1779, %v1778
    %v1795 = vpack.c.b16 %v1781, %v1780
    %v1796 = vpack.c.b16 %v1783, %v1782
    %v1797 = vpack.c.b16 %v1785, %v1784
    %v1798 = vpack.c.b16 %v1787, %v1786
    %v1799 = vpack.c.b16 %v1789, %v1788
    %v1800 = vpack.c.b16 %v1791, %v1790
    %v1801 = vpack.c.b16 %v1793, %v1792
    %1810 = vmatprep.subr.bf16.mxu0 0
    %1811 = vmatpush1.bf16.msra.mxu0 %v1794
    %1812 = vmatprep.subr.bf16.mxu0 0
    %1813 = vmatpush1.bf16.msra.mxu0 %v1795
    %1814 = vmatprep.subr.bf16.mxu0 0
    %1815 = vmatpush1.bf16.msra.mxu0 %v1796
    %1816 = vmatprep.subr.bf16.mxu0 0
    %1817 = vmatpush1.bf16.msra.mxu0 %v1797
    %1818 = vmatprep.subr.bf16.mxu0 0
    %1819 = vmatpush1.bf16.msra.mxu0 %v1798
    %1820 = vmatprep.subr.bf16.mxu0 0
    %1821 = vmatpush1.bf16.msra.mxu0 %v1799
    %1822 = vmatprep.subr.bf16.mxu0 0
    %1823 = vmatpush1.bf16.msra.mxu0 %v1800
    %1824 = vmatprep.subr.bf16.mxu0 0
    %1825 = vmatpush1.bf16.msra.mxu0 %v1801
    %1826 = vmatprep.subr.bf16.mxu0 0
    %1827 = vmatpush1.bf16.msra.mxu0 0
    %1828 = vmatprep.subr.bf16.mxu0 0
    %1829 = vmatpush1.bf16.msra.mxu0 0
    %1830 = vmatprep.subr.bf16.mxu0 0
    %1831 = vmatpush1.bf16.msra.mxu0 0
    %1832 = vmatprep.subr.bf16.mxu0 0
    %1833 = vmatpush1.bf16.msra.mxu0 0
    %1834 = vmatprep.subr.bf16.mxu0 0
    %1835 = vmatpush1.bf16.msra.mxu0 0
    %1836 = vmatprep.subr.bf16.mxu0 0
    %1837 = vmatpush1.bf16.msra.mxu0 0
    %1838 = vmatprep.subr.bf16.mxu0 0
    %1839 = vmatpush1.bf16.msra.mxu0 0
    %1840 = vmatprep.subr.bf16.mxu0 0
    %1841 = vmatpush1.bf16.msra.mxu0 0
    %1842 = vmatprep.mubr.bf16.mxu0 0
    %1843 = vmatmul.mubr.bf16.gmra.mrb[0].mxu0 %v1726
    %v1844 = vpop.f32.mrb[0].mxu0
    %v1845 = vadd.f32 0.0, %v1844
    %v1846 = vpop.f32.mrb[0].mxu0
    %v1847 = vpop.f32.mrb[0].mxu0
    %v1848 = vadd.f32 0.0, %v1847
    %v1849 = vpop.f32.mrb[0].mxu0
    %1850 = vmatprep.mubr.bf16.mxu0 0
    %1851 = vmatmul.mubr.bf16.gmra.mrb[0].mxu0 %v1727
    %v1852 = vpop.f32.mrb[0].mxu0
    %v1853 = vadd.f32 0.0, %v1852
    %v1854 = vpop.f32.mrb[0].mxu0
    %v1855 = vpop.f32.mrb[0].mxu0
    %v1856 = vadd.f32 0.0, %v1855
    %v1857 = vpop.f32.mrb[0].mxu0
    %1858 = vdwg.mxu0
    %v1875 = vunpack.c.l.b16 %v1730
    %v1876 = vunpack.c.l.b16 %v1731
    %v1877 = vunpack.c.l.b16 %v1732
    %v1878 = vunpack.c.l.b16 %v1733
    %v1879 = vunpack.c.l.b16 %v1734
    %v1880 = vunpack.c.l.b16 %v1735
    %v1881 = vunpack.c.l.b16 %v1736
    %v1882 = vunpack.c.l.b16 %v1737
    %v1883 = vunpack.c.l.b16 %v1738
    %v1884 = vunpack.c.l.b16 %v1739
    %v1885 = vunpack.c.l.b16 %v1740
    %v1886 = vunpack.c.l.b16 %v1741
    %v1887 = vunpack.c.l.b16 %v1742
    %v1888 = vunpack.c.l.b16 %v1743
    %v1889 = vunpack.c.l.b16 %v1744
    %v1890 = vunpack.c.l.b16 %v1745
    %v1891 = vpack.c.b16 %v1876, %v1875
    %v1892 = vpack.c.b16 %v1878, %v1877
    %v1893 = vpack.c.b16 %v1880, %v1879
    %v1894 = vpack.c.b16 %v1882, %v1881
    %v1895 = vpack.c.b16 %v1884, %v1883
    %v1896 = vpack.c.b16 %v1886, %v1885
    %v1897 = vpack.c.b16 %v1888, %v1887
    %v1898 = vpack.c.b16 %v1890, %v1889
    %1907 = vmatprep.subr.bf16.mxu0 0
    %1908 = vmatpush1.bf16.msra.mxu0 %v1891
    %1909 = vmatprep.subr.bf16.mxu0 0
    %1910 = vmatpush1.bf16.msra.mxu0 %v1892
    %1911 = vmatprep.subr.bf16.mxu0 0
    %1912 = vmatpush1.bf16.msra.mxu0 %v1893
    %1913 = vmatprep.subr.bf16.mxu0 0
    %1914 = vmatpush1.bf16.msra.mxu0 %v1894
    %1915 = vmatprep.subr.bf16.mxu0 0
    %1916 = vmatpush1.bf16.msra.mxu0 %v1895
    %1917 = vmatprep.subr.bf16.mxu0 0
    %1918 = vmatpush1.bf16.msra.mxu0 %v1896
    %1919 = vmatprep.subr.bf16.mxu0 0
    %1920 = vmatpush1.bf16.msra.mxu0 %v1897
    %1921 = vmatprep.subr.bf16.mxu0 0
    %1922 = vmatpush1.bf16.msra.mxu0 %v1898
    %1923 = vmatprep.subr.bf16.mxu0 0
    %1924 = vmatpush1.bf16.msra.mxu0 0
    %1925 = vmatprep.subr.bf16.mxu0 0
    %1926 = vmatpush1.bf16.msra.mxu0 0
    %1927 = vmatprep.subr.bf16.mxu0 0
    %1928 = vmatpush1.bf16.msra.mxu0 0
    %1929 = vmatprep.subr.bf16.mxu0 0
    %1930 = vmatpush1.bf16.msra.mxu0 0
    %1931 = vmatprep.subr.bf16.mxu0 0
    %1932 = vmatpush1.bf16.msra.mxu0 0
    %1933 = vmatprep.subr.bf16.mxu0 0
    %1934 = vmatpush1.bf16.msra.mxu0 0
    %1935 = vmatprep.subr.bf16.mxu0 0
    %1936 = vmatpush1.bf16.msra.mxu0 0
    %1937 = vmatprep.subr.bf16.mxu0 0
    %1938 = vmatpush1.bf16.msra.mxu0 0
    %1939 = vmatprep.mubr.bf16.mxu0 0
    %1940 = vmatmul.mubr.bf16.gmra.mrb[0].mxu0 %v898
    %v1941 = vpop.f32.mrb[0].mxu0
    %v1942 = vadd.f32 %v1845, %v1941
    %v1943 = vpop.f32.mrb[0].mxu0
    %v1944 = vpop.f32.mrb[0].mxu0
    %v1945 = vadd.f32 %v1848, %v1944
    %v1946 = vpop.f32.mrb[0].mxu0
    %1947 = vmatprep.mubr.bf16.mxu0 0
    %1948 = vmatmul.mubr.bf16.gmra.mrb[0].mxu0 %v899
    %v1949 = vpop.f32.mrb[0].mxu0
    %v1950 = vadd.f32 %v1853, %v1949
    %v1951 = vpop.f32.mrb[0].mxu0
    %v1952 = vpop.f32.mrb[0].mxu0
    %v1953 = vadd.f32 %v1856, %v1952
    %v1954 = vpop.f32.mrb[0].mxu0
    %1955 = vdwg.mxu0
    %v1956 = vld [vmem:[%s1 + $0x80] sm:$0xf]
    %v1957 = vld [vmem:[%s1 + $0x84] sm:$0xf]
    %v1958 = vld [vmem:[%s1 + $0x88] sm:$0xf]
    %v1959 = vld [vmem:[%s1 + $0x8c] sm:$0xf]
    %v1960 = vld [vmem:[%s1 + $0x90] sm:$0xf]
    %v1961 = vld [vmem:[%s1 + $0x94] sm:$0xf]
    %v1962 = vld [vmem:[%s1 + $0x98] sm:$0xf]
    %v1963 = vld [vmem:[%s1 + $0x9c] sm:$0xf]
    %v1964 = vld [vmem:[%s1 + $0xa0] sm:$0xf]
    %v1965 = vld [vmem:[%s1 + $0xa4] sm:$0xf]
    %v1966 = vld [vmem:[%s1 + $0xa8] sm:$0xf]
    %v1967 = vld [vmem:[%s1 + $0xac] sm:$0xf]
    %v1968 = vld [vmem:[%s1 + $0xb0] sm:$0xf]
    %v1969 = vld [vmem:[%s1 + $0xb4] sm:$0xf]
    %v1970 = vld [vmem:[%s1 + $0xb8] sm:$0xf]
    %v1971 = vld [vmem:[%s1 + $0xbc] sm:$0xf]
    %v1988 = vunpack.c.l.b16 %v1956
    %v1989 = vunpack.c.l.b16 %v1957
    %v1990 = vunpack.c.l.b16 %v1958
    %v1991 = vunpack.c.l.b16 %v1959
    %v1992 = vunpack.c.l.b16 %v1960
    %v1993 = vunpack.c.l.b16 %v1961
    %v1994 = vunpack.c.l.b16 %v1962
    %v1995 = vunpack.c.l.b16 %v1963
    %v1996 = vunpack.c.l.b16 %v1964
    %v1997 = vunpack.c.l.b16 %v1965
    %v1998 = vunpack.c.l.b16 %v1966
    %v1999 = vunpack.c.l.b16 %v1967
    %v2000 = vunpack.c.l.b16 %v1968
    %v2001 = vunpack.c.l.b16 %v1969
    %v2002 = vunpack.c.l.b16 %v1970
    %v2003 = vunpack.c.l.b16 %v1971
    %v2004 = vpack.c.b16 %v1989, %v1988
    %v2005 = vpack.c.b16 %v1991, %v1990
    %v2006 = vpack.c.b16 %v1993, %v1992
    %v2007 = vpack.c.b16 %v1995, %v1994
    %v2008 = vpack.c.b16 %v1997, %v1996
    %v2009 = vpack.c.b16 %v1999, %v1998
    %v2010 = vpack.c.b16 %v2001, %v2000
    %v2011 = vpack.c.b16 %v2003, %v2002
    %2020 = vmatprep.subr.bf16.mxu0 0
    %2021 = vmatpush1.bf16.msra.mxu0 %v2004
    %2022 = vmatprep.subr.bf16.mxu0 0
    %2023 = vmatpush1.bf16.msra.mxu0 %v2005
    %2024 = vmatprep.subr.bf16.mxu0 0
    %2025 = vmatpush1.bf16.msra.mxu0 %v2006
    %2026 = vmatprep.subr.bf16.mxu0 0
    %2027 = vmatpush1.bf16.msra.mxu0 %v2007
    %2028 = vmatprep.subr.bf16.mxu0 0
    %2029 = vmatpush1.bf16.msra.mxu0 %v2008
    %2030 = vmatprep.subr.bf16.mxu0 0
    %2031 = vmatpush1.bf16.msra.mxu0 %v2009
    %2032 = vmatprep.subr.bf16.mxu0 0
    %2033 = vmatpush1.bf16.msra.mxu0 %v2010
    %2034 = vmatprep.subr.bf16.mxu0 0
    %2035 = vmatpush1.bf16.msra.mxu0 %v2011
    %2036 = vmatprep.subr.bf16.mxu0 0
    %2037 = vmatpush1.bf16.msra.mxu0 0
    %2038 = vmatprep.subr.bf16.mxu0 0
    %2039 = vmatpush1.bf16.msra.mxu0 0
    %2040 = vmatprep.subr.bf16.mxu0 0
    %2041 = vmatpush1.bf16.msra.mxu0 0
    %2042 = vmatprep.subr.bf16.mxu0 0
    %2043 = vmatpush1.bf16.msra.mxu0 0
    %2044 = vmatprep.subr.bf16.mxu0 0
    %2045 = vmatpush1.bf16.msra.mxu0 0
    %2046 = vmatprep.subr.bf16.mxu0 0
    %2047 = vmatpush1.bf16.msra.mxu0 0
    %2048 = vmatprep.subr.bf16.mxu0 0
    %2049 = vmatpush1.bf16.msra.mxu0 0
    %2050 = vmatprep.subr.bf16.mxu0 0
    %2051 = vmatpush1.bf16.msra.mxu0 0
    %2052 = vmatprep.mubr.bf16.mxu0 0
    %2053 = vmatmul.mubr.bf16.gmra.mrb[0].mxu0 %v900
    %v2054 = vpop.f32.mrb[0].mxu0
    %v2055 = vadd.f32 0.0, %v2054
    %v2056 = vpop.f32.mrb[0].mxu0
    %v2057 = vpop.f32.mrb[0].mxu0
    %v2058 = vadd.f32 0.0, %v2057
    %v2059 = vpop.f32.mrb[0].mxu0
    %2060 = vmatprep.mubr.bf16.mxu0 0
    %2061 = vmatmul.mubr.bf16.gmra.mrb[0].mxu0 %v901
    %v2062 = vpop.f32.mrb[0].mxu0
    %v2063 = vadd.f32 0.0, %v2062
    %v2064 = vpop.f32.mrb[0].mxu0
    %v2065 = vpop.f32.mrb[0].mxu0
    %v2066 = vadd.f32 0.0, %v2065
    %v2067 = vpop.f32.mrb[0].mxu0
    %2068 = vdwg.mxu0
    %v2069 = vadd.f32 %v1942, %v2055
    %v2070 = vadd.f32 %v1945, %v2058
    %v2071 = vadd.f32 %v1950, %v2063
    %v2072 = vadd.f32 %v1953, %v2066
    %v2073 = vld [vmem:[%s1 + $0xc0] sm:$0xf]
    %v2074 = vld [vmem:[%s1 + $0xc4] sm:$0xf]
    %v2075 = vld [vmem:[%s1 + $0xc8] sm:$0xf]
    %v2076 = vld [vmem:[%s1 + $0xcc] sm:$0xf]
    %v2077 = vld [vmem:[%s1 + $0xd0] sm:$0xf]
    %v2078 = vld [vmem:[%s1 + $0xd4] sm:$0xf]
    %v2079 = vld [vmem:[%s1 + $0xd8] sm:$0xf]
    %v2080 = vld [vmem:[%s1 + $0xdc] sm:$0xf]
    %v2081 = vld [vmem:[%s1 + $0xe0] sm:$0xf]
    %v2082 = vld [vmem:[%s1 + $0xe4] sm:$0xf]
    %v2083 = vld [vmem:[%s1 + $0xe8] sm:$0xf]
    %v2084 = vld [vmem:[%s1 + $0xec] sm:$0xf]
    %v2085 = vld [vmem:[%s1 + $0xf0] sm:$0xf]
    %v2086 = vld [vmem:[%s1 + $0xf4] sm:$0xf]
    %v2087 = vld [vmem:[%s1 + $0xf8] sm:$0xf]
    %v2088 = vld [vmem:[%s1 + $0xfc] sm:$0xf]
    %v2105 = vunpack.c.l.b16 %v2073
    %v2106 = vunpack.c.l.b16 %v2074
    %v2107 = vunpack.c.l.b16 %v2075
    %v2108 = vunpack.c.l.b16 %v2076
    %v2109 = vunpack.c.l.b16 %v2077
    %v2110 = vunpack.c.l.b16 %v2078
    %v2111 = vunpack.c.l.b16 %v2079
    %v2112 = vunpack.c.l.b16 %v2080
    %v2113 = vunpack.c.l.b16 %v2081
    %v2114 = vunpack.c.l.b16 %v2082
    %v2115 = vunpack.c.l.b16 %v2083
    %v2116 = vunpack.c.l.b16 %v2084
    %v2117 = vunpack.c.l.b16 %v2085
    %v2118 = vunpack.c.l.b16 %v2086
    %v2119 = vunpack.c.l.b16 %v2087
    %v2120 = vunpack.c.l.b16 %v2088
    %v2121 = vpack.c.b16 %v2106, %v2105
    %v2122 = vpack.c.b16 %v2108, %v2107
    %v2123 = vpack.c.b16 %v2110, %v2109
    %v2124 = vpack.c.b16 %v2112, %v2111
    %v2125 = vpack.c.b16 %v2114, %v2113
    %v2126 = vpack.c.b16 %v2116, %v2115
    %v2127 = vpack.c.b16 %v2118, %v2117
    %v2128 = vpack.c.b16 %v2120, %v2119
    %2137 = vmatprep.subr.bf16.mxu0 0
    %2138 = vmatpush1.bf16.msra.mxu0 %v2121
    %2139 = vmatprep.subr.bf16.mxu0 0
    %2140 = vmatpush1.bf16.msra.mxu0 %v2122
    %2141 = vmatprep.subr.bf16.mxu0 0
    %2142 = vmatpush1.bf16.msra.mxu0 %v2123
    %2143 = vmatprep.subr.bf16.mxu0 0
    %2144 = vmatpush1.bf16.msra.mxu0 %v2124
    %2145 = vmatprep.subr.bf16.mxu0 0
    %2146 = vmatpush1.bf16.msra.mxu0 %v2125
    %2147 = vmatprep.subr.bf16.mxu0 0
    %2148 = vmatpush1.bf16.msra.mxu0 %v2126
    %2149 = vmatprep.subr.bf16.mxu0 0
    %2150 = vmatpush1.bf16.msra.mxu0 %v2127
    %2151 = vmatprep.subr.bf16.mxu0 0
    %2152 = vmatpush1.bf16.msra.mxu0 %v2128
    %2153 = vmatprep.subr.bf16.mxu0 0
    %2154 = vmatpush1.bf16.msra.mxu0 0
    %2155 = vmatprep.subr.bf16.mxu0 0
    %2156 = vmatpush1.bf16.msra.mxu0 0
    %2157 = vmatprep.subr.bf16.mxu0 0
    %2158 = vmatpush1.bf16.msra.mxu0 0
    %2159 = vmatprep.subr.bf16.mxu0 0
    %2160 = vmatpush1.bf16.msra.mxu0 0
    %2161 = vmatprep.subr.bf16.mxu0 0
    %2162 = vmatpush1.bf16.msra.mxu0 0
    %2163 = vmatprep.subr.bf16.mxu0 0
    %2164 = vmatpush1.bf16.msra.mxu0 0
    %2165 = vmatprep.subr.bf16.mxu0 0
    %2166 = vmatpush1.bf16.msra.mxu0 0
    %2167 = vmatprep.subr.bf16.mxu0 0
    %2168 = vmatpush1.bf16.msra.mxu0 0
    %2169 = vmatprep.mubr.bf16.mxu0 0
    %2170 = vmatmul.mubr.bf16.gmra.mrb[0].mxu0 %v1728
    %v2171 = vpop.f32.mrb[0].mxu0
    %v2172 = vadd.f32 0.0, %v2171
    %v2173 = vpop.f32.mrb[0].mxu0
    %v2174 = vpop.f32.mrb[0].mxu0
    %v2175 = vadd.f32 0.0, %v2174
    %v2176 = vpop.f32.mrb[0].mxu0
    %2177 = vmatprep.mubr.bf16.mxu0 0
    %2178 = vmatmul.mubr.bf16.gmra.mrb[0].mxu0 %v1729
    %v2179 = vpop.f32.mrb[0].mxu0
    %v2180 = vadd.f32 0.0, %v2179
    %v2181 = vpop.f32.mrb[0].mxu0
    %v2182 = vpop.f32.mrb[0].mxu0
    %v2183 = vadd.f32 0.0, %v2182
    %v2184 = vpop.f32.mrb[0].mxu0
    %2185 = vdwg.mxu0
    %v2186 = vadd.f32 %v2069, %v2172
    %v2187 = vadd.f32 %v2070, %v2175
    %v2188 = vadd.f32 %v2071, %v2180
    %v2189 = vadd.f32 %v2072, %v2183
    %v2190 = vld [vmem:[%s0 + $0x40] sm:$0xff]
    %v2191 = vld [vmem:[%s0 + $0x48] sm:$0xff]
    %v2192 = vld [vmem:[%s0 + $0x50] sm:$0xff]
    %v2193 = vld [vmem:[%s0 + $0x58] sm:$0xff]
    %v2194 = vld [vmem:[%s1 + $0x100] sm:$0xf]
    %v2195 = vld [vmem:[%s1 + $0x104] sm:$0xf]
    %v2196 = vld [vmem:[%s1 + $0x108] sm:$0xf]
    %v2197 = vld [vmem:[%s1 + $0x10c] sm:$0xf]
    %v2198 = vld [vmem:[%s1 + $0x110] sm:$0xf]
    %v2199 = vld [vmem:[%s1 + $0x114] sm:$0xf]
    %v2200 = vld [vmem:[%s1 + $0x118] sm:$0xf]
    %v2201 = vld [vmem:[%s1 + $0x11c] sm:$0xf]
    %v2202 = vld [vmem:[%s1 + $0x120] sm:$0xf]
    %v2203 = vld [vmem:[%s1 + $0x124] sm:$0xf]
    %v2204 = vld [vmem:[%s1 + $0x128] sm:$0xf]
    %v2205 = vld [vmem:[%s1 + $0x12c] sm:$0xf]
    %v2206 = vld [vmem:[%s1 + $0x130] sm:$0xf]
    %v2207 = vld [vmem:[%s1 + $0x134] sm:$0xf]
    %v2208 = vld [vmem:[%s1 + $0x138] sm:$0xf]
    %v2209 = vld [vmem:[%s1 + $0x13c] sm:$0xf]
    %v2210 = vpack.c.bf16 %v2191, %v2190
    %v2211 = vpack.c.bf16 %v2193, %v2192
    %v2228 = vunpack.c.l.b16 %v2194
    %v2229 = vunpack.c.l.b16 %v2195
    %v2230 = vunpack.c.l.b16 %v2196
    %v2231 = vunpack.c.l.b16 %v2197
    %v2232 = vunpack.c.l.b16 %v2198
    %v2233 = vunpack.c.l.b16 %v2199
    %v2234 = vunpack.c.l.b16 %v2200
    %v2235 = vunpack.c.l.b16 %v2201
    %v2236 = vunpack.c.l.b16 %v2202
    %v2237 = vunpack.c.l.b16 %v2203
    %v2238 = vunpack.c.l.b16 %v2204
    %v2239 = vunpack.c.l.b16 %v2205
    %v2240 = vunpack.c.l.b16 %v2206
    %v2241 = vunpack.c.l.b16 %v2207
    %v2242 = vunpack.c.l.b16 %v2208
    %v2243 = vunpack.c.l.b16 %v2209
    %v2244 = vpack.c.b16 %v2229, %v2228
    %v2245 = vpack.c.b16 %v2231, %v2230
    %v2246 = vpack.c.b16 %v2233, %v2232
    %v2247 = vpack.c.b16 %v2235, %v2234
    %v2248 = vpack.c.b16 %v2237, %v2236
    %v2249 = vpack.c.b16 %v2239, %v2238
    %v2250 = vpack.c.b16 %v2241, %v2240
    %v2251 = vpack.c.b16 %v2243, %v2242
    %2260 = vmatprep.subr.bf16.mxu0 0
    %2261 = vmatpush1.bf16.msra.mxu0 %v2244
    %2262 = vmatprep.subr.bf16.mxu0 0
    %2263 = vmatpush1.bf16.msra.mxu0 %v2245
    %2264 = vmatprep.subr.bf16.mxu0 0
    %2265 = vmatpush1.bf16.msra.mxu0 %v2246
    %2266 = vmatprep.subr.bf16.mxu0 0
    %2267 = vmatpush1.bf16.msra.mxu0 %v2247
    %2268 = vmatprep.subr.bf16.mxu0 0
    %2269 = vmatpush1.bf16.msra.mxu0 %v2248
    %2270 = vmatprep.subr.bf16.mxu0 0
    %2271 = vmatpush1.bf16.msra.mxu0 %v2249
    %2272 = vmatprep.subr.bf16.mxu0 0
    %2273 = vmatpush1.bf16.msra.mxu0 %v2250
    %2274 = vmatprep.subr.bf16.mxu0 0
    %2275 = vmatpush1.bf16.msra.mxu0 %v2251
    %2276 = vmatprep.subr.bf16.mxu0 0
    %2277 = vmatpush1.bf16.msra.mxu0 0
    %2278 = vmatprep.subr.bf16.mxu0 0
    %2279 = vmatpush1.bf16.msra.mxu0 0
    %2280 = vmatprep.subr.bf16.mxu0 0
    %2281 = vmatpush1.bf16.msra.mxu0 0
    %2282 = vmatprep.subr.bf16.mxu0 0
    %2283 = vmatpush1.bf16.msra.mxu0 0
    %2284 = vmatprep.subr.bf16.mxu0 0
    %2285 = vmatpush1.bf16.msra.mxu0 0
    %2286 = vmatprep.subr.bf16.mxu0 0
    %2287 = vmatpush1.bf16.msra.mxu0 0
    %2288 = vmatprep.subr.bf16.mxu0 0
    %2289 = vmatpush1.bf16.msra.mxu0 0
    %2290 = vmatprep.subr.bf16.mxu0 0
    %2291 = vmatpush1.bf16.msra.mxu0 0
    %2292 = vmatprep.mubr.bf16.mxu0 0
    %2293 = vmatmul.mubr.bf16.gmra.mrb[0].mxu0 %v2210
    %v2294 = vpop.f32.mrb[0].mxu0
    %v2295 = vadd.f32 0.0, %v2294
    %v2296 = vpop.f32.mrb[0].mxu0
    %v2297 = vpop.f32.mrb[0].mxu0
    %v2298 = vadd.f32 0.0, %v2297
    %v2299 = vpop.f32.mrb[0].mxu0
    %2300 = vmatprep.mubr.bf16.mxu0 0
    %2301 = vmatmul.mubr.bf16.gmra.mrb[0].mxu0 %v2211
    %v2302 = vpop.f32.mrb[0].mxu0
    %v2303 = vadd.f32 0.0, %v2302
    %v2304 = vpop.f32.mrb[0].mxu0
    %v2305 = vpop.f32.mrb[0].mxu0
    %v2306 = vadd.f32 0.0, %v2305
    %v2307 = vpop.f32.mrb[0].mxu0
    %2308 = vdwg.mxu0
    %v2309 = vadd.f32 %v2186, %v2295
    %v2310 = vadd.f32 %v2187, %v2298
    %v2311 = vadd.f32 %v2188, %v2303
    %v2312 = vadd.f32 %v2189, %v2306
    %v2313 = vld [vmem:[%s0 + $0x60] sm:$0xff]
    %v2314 = vld [vmem:[%s0 + $0x68] sm:$0xff]
    %v2315 = vld [vmem:[%s0 + $0x70] sm:$0xff]
    %v2316 = vld [vmem:[%s0 + $0x78] sm:$0xff]
    %v2317 = vadd.f32 %v2309, %v2313
    %v2318 = vadd.f32 %v2310, %v2314
    %v2319 = vadd.f32 %v2311, %v2315
    %v2320 = vadd.f32 %v2312, %v2316
    %v2321 = vld [vmem:[#allocation4 + $0x20] sm:$0xff]
    %v2322 = vld [vmem:[#allocation4 + $0x40] sm:$0xff]
    %v2323 = vld [vmem:[%s0 + $0x80] sm:$0xff]
    %v2324 = vld [vmem:[%s0 + $0x88] sm:$0xff]
    %v2325 = vpack.c.bf16 %v2318, %v2317
    %v2326 = vpack.c.bf16 %v2320, %v2319
    %v2327 = vld [vmem:[#allocation4 + $0x60] ss:$0 sm:$0xff]
    %v2328 = vld [vmem:[#allocation4 + $0x61] ss:$0 sm:$0xff]
    %2329 = vadd.xlane.f32.xlu0 %v2321
    %v2330 = vpop.xlane.xlu0 %2329
    %2331 = vadd.xlane.f32.xlu0 %v2322
    %v2332 = vpop.xlane.xlu0 %2331
    %v2333 = vrcp.pop 128.0
    %v2334 = vmul.f32 %v2330, %v2333
    %v2335 = vmul.f32 %v2332, %v2333
    %v2336 = vsub.f32 %v2321, %v2334
    %v2337 = vsub.f32 %v2322, %v2335
    %v2338 = vmul.f32 %v2336, %v2336
    %v2339 = vmul.f32 %v2337, %v2337
    %2340 = vadd.xlane.f32.xlu0 %v2338
    %v2341 = vpop.xlane.xlu0 %2340
    %2342 = vadd.xlane.f32.xlu0 %v2339
    %v2343 = vpop.xlane.xlu0 %2342
    %v2344 = vmul.f32 %v2341, %v2333
    %v2345 = vmul.f32 %v2343, %v2333
    %v2346 = vadd.f32 %v2344, 1e-05
    %v2347 = vadd.f32 %v2345, 1e-05
    %v2348 = vrsqrt.pop %v2346
    %v2349 = vrsqrt.pop %v2347
    %v2350 = vmul.f32 %v2336, %v2348
    %v2351 = vmul.f32 %v2337, %v2349
    %v2352 = vmul.f32 %v2350, %v2327
    %v2353 = vmul.f32 %v2351, %v2327
    %v2354 = vadd.f32 %v2352, %v2328
    %v2355 = vadd.f32 %v2353, %v2328
    %v2356 = vpack.c.bf16 %v2355, %v2354
    %v2357 = vld [vmem:[#allocation2] sm:$0xf]
    %v2358 = vld [vmem:[#allocation2 + $0x4] sm:$0xf]
    %v2359 = vld [vmem:[#allocation2 + $0x8] sm:$0xf]
    %v2360 = vld [vmem:[#allocation2 + $0xc] sm:$0xf]
    %v2361 = vld [vmem:[#allocation2 + $0x10] sm:$0xf]
    %v2362 = vld [vmem:[#allocation2 + $0x14] sm:$0xf]
    %v2363 = vld [vmem:[#allocation2 + $0x18] sm:$0xf]
    %v2364 = vld [vmem:[#allocation2 + $0x1c] sm:$0xf]
    %v2365 = vld [vmem:[#allocation2 + $0x20] sm:$0xf]
    %v2366 = vld [vmem:[#allocation2 + $0x24] sm:$0xf]
    %v2367 = vld [vmem:[#allocation2 + $0x28] sm:$0xf]
    %v2368 = vld [vmem:[#allocation2 + $0x2c] sm:$0xf]
    %v2369 = vld [vmem:[#allocation2 + $0x30] sm:$0xf]
    %v2370 = vld [vmem:[#allocation2 + $0x34] sm:$0xf]
    %v2371 = vld [vmem:[#allocation2 + $0x38] sm:$0xf]
    %v2372 = vld [vmem:[#allocation2 + $0x3c] sm:$0xf]
    %v2377 = vunpack.c.l.b16 %v2357
    %v2378 = vunpack.c.l.b16 %v2358
    %v2379 = vunpack.c.l.b16 %v2359
    %v2380 = vunpack.c.l.b16 %v2360
    %v2381 = vpack.c.b16 %v2378, %v2377
    %v2382 = vpack.c.b16 %v2380, %v2379
    %2385 = vmatprep.subr.bf16.mxu0 0
    %2386 = vmatpush1.bf16.xpose.msra.mxu0 %v2381
    %2387 = vmatprep.subr.bf16.mxu0 0
    %2388 = vmatpush1.bf16.xpose.msra.mxu0 %v2382
    %2389 = vmatprep.subr.bf16.mxu0 0
    %2390 = vmatpush1.bf16.xpose.msra.mxu0 0
    %2391 = vmatprep.subr.bf16.mxu0 0
    %2392 = vmatpush1.bf16.xpose.msra.mxu0 0
    %2393 = vmatprep.subr.bf16.mxu0 0
    %2394 = vmatpush1.bf16.xpose.msra.mxu0 0
    %2395 = vmatprep.subr.bf16.mxu0 0
    %2396 = vmatpush1.bf16.xpose.msra.mxu0 0
    %2397 = vmatprep.subr.bf16.mxu0 0
    %2398 = vmatpush1.bf16.xpose.msra.mxu0 0
    %2399 = vmatprep.subr.bf16.mxu0 0
    %2400 = vmatpush1.bf16.xpose.msra.mxu0 0
    %2401 = vmatprep.subr.bf16.mxu0 0
    %2402 = vmatpush1.bf16.xpose.msra.mxu0 0
    %2403 = vmatprep.subr.bf16.mxu0 0
    %2404 = vmatpush1.bf16.xpose.msra.mxu0 0
    %2405 = vmatprep.subr.bf16.mxu0 0
    %2406 = vmatpush1.bf16.xpose.msra.mxu0 0
    %2407 = vmatprep.subr.bf16.mxu0 0
    %2408 = vmatpush1.bf16.xpose.msra.mxu0 0
    %2409 = vmatprep.subr.bf16.mxu0 0
    %2410 = vmatpush1.bf16.xpose.msra.mxu0 0
    %2411 = vmatprep.subr.bf16.mxu0 0
    %2412 = vmatpush1.bf16.xpose.msra.mxu0 0
    %2413 = vmatprep.subr.bf16.mxu0 0
    %2414 = vmatpush1.bf16.xpose.msra.mxu0 0
    %2415 = vmatprep.subr.bf16.mxu0 0
    %2416 = vmatpush1.bf16.xpose.msra.mxu0 0
    %2417 = vmatprep.mubr.bf16.mxu0 0
    %2418 = vmatmul.mubr.bf16.gmra.mrb[0].mxu0 %v2356
    %v2419 = vpop.f32.mrb[0].mxu0
    %v2420 = vadd.f32 0.0, %v2419
    %v2421 = vpop.f32.mrb[0].mxu0
    %v2422 = vpop.f32.mrb[0].mxu0
    %v2423 = vadd.f32 0.0, %v2422
    %v2424 = vpop.f32.mrb[0].mxu0
    %2425 = vdwg.mxu0
    %v2430 = vunpack.c.l.b16 %v2361
    %v2431 = vunpack.c.l.b16 %v2362
    %v2432 = vunpack.c.l.b16 %v2363
    %v2433 = vunpack.c.l.b16 %v2364
    %v2434 = vpack.c.b16 %v2431, %v2430
    %v2435 = vpack.c.b16 %v2433, %v2432
    %2438 = vmatprep.subr.bf16.mxu0 0
    %2439 = vmatpush1.bf16.xpose.msra.mxu0 %v2434
    %2440 = vmatprep.subr.bf16.mxu0 0
    %2441 = vmatpush1.bf16.xpose.msra.mxu0 %v2435
    %2442 = vmatprep.subr.bf16.mxu0 0
    %2443 = vmatpush1.bf16.xpose.msra.mxu0 0
    %2444 = vmatprep.subr.bf16.mxu0 0
    %2445 = vmatpush1.bf16.xpose.msra.mxu0 0
    %2446 = vmatprep.subr.bf16.mxu0 0
    %2447 = vmatpush1.bf16.xpose.msra.mxu0 0
    %2448 = vmatprep.subr.bf16.mxu0 0
    %2449 = vmatpush1.bf16.xpose.msra.mxu0 0
    %2450 = vmatprep.subr.bf16.mxu0 0
    %2451 = vmatpush1.bf16.xpose.msra.mxu0 0
    %2452 = vmatprep.subr.bf16.mxu0 0
    %2453 = vmatpush1.bf16.xpose.msra.mxu0 0
    %2454 = vmatprep.subr.bf16.mxu0 0
    %2455 = vmatpush1.bf16.xpose.msra.mxu0 0
    %2456 = vmatprep.subr.bf16.mxu0 0
    %2457 = vmatpush1.bf16.xpose.msra.mxu0 0
    %2458 = vmatprep.subr.bf16.mxu0 0
    %2459 = vmatpush1.bf16.xpose.msra.mxu0 0
    %2460 = vmatprep.subr.bf16.mxu0 0
    %2461 = vmatpush1.bf16.xpose.msra.mxu0 0
    %2462 = vmatprep.subr.bf16.mxu0 0
    %2463 = vmatpush1.bf16.xpose.msra.mxu0 0
    %2464 = vmatprep.subr.bf16.mxu0 0
    %2465 = vmatpush1.bf16.xpose.msra.mxu0 0
    %2466 = vmatprep.subr.bf16.mxu0 0
    %2467 = vmatpush1.bf16.xpose.msra.mxu0 0
    %2468 = vmatprep.subr.bf16.mxu0 0
    %2469 = vmatpush1.bf16.xpose.msra.mxu0 0
    %2470 = vmatprep.mubr.bf16.mxu0 0
    %2471 = vmatmul.mubr.bf16.gmra.mrb[0].mxu0 %v2356
    %v2472 = vpop.f32.mrb[0].mxu0
    %v2473 = vadd.f32 0.0, %v2472
    %v2474 = vpop.f32.mrb[0].mxu0
    %v2475 = vpop.f32.mrb[0].mxu0
    %v2476 = vadd.f32 0.0, %v2475
    %v2477 = vpop.f32.mrb[0].mxu0
    %2478 = vdwg.mxu0
    %v2483 = vunpack.c.l.b16 %v2365
    %v2484 = vunpack.c.l.b16 %v2366
    %v2485 = vunpack.c.l.b16 %v2367
    %v2486 = vunpack.c.l.b16 %v2368
    %v2487 = vpack.c.b16 %v2484, %v2483
    %v2488 = vpack.c.b16 %v2486, %v2485
    %2491 = vmatprep.subr.bf16.mxu0 0
    %2492 = vmatpush1.bf16.xpose.msra.mxu0 %v2487
    %2493 = vmatprep.subr.bf16.mxu0 0
    %2494 = vmatpush1.bf16.xpose.msra.mxu0 %v2488
    %2495 = vmatprep.subr.bf16.mxu0 0
    %2496 = vmatpush1.bf16.xpose.msra.mxu0 0
    %2497 = vmatprep.subr.bf16.mxu0 0
    %2498 = vmatpush1.bf16.xpose.msra.mxu0 0
    %2499 = vmatprep.subr.bf16.mxu0 0
    %2500 = vmatpush1.bf16.xpose.msra.mxu0 0
    %2501 = vmatprep.subr.bf16.mxu0 0
    %2502 = vmatpush1.bf16.xpose.msra.mxu0 0
    %2503 = vmatprep.subr.bf16.mxu0 0
    %2504 = vmatpush1.bf16.xpose.msra.mxu0 0
    %2505 = vmatprep.subr.bf16.mxu0 0
    %2506 = vmatpush1.bf16.xpose.msra.mxu0 0
    %2507 = vmatprep.subr.bf16.mxu0 0
    %2508 = vmatpush1.bf16.xpose.msra.mxu0 0
    %2509 = vmatprep.subr.bf16.mxu0 0
    %2510 = vmatpush1.bf16.xpose.msra.mxu0 0
    %2511 = vmatprep.subr.bf16.mxu0 0
    %2512 = vmatpush1.bf16.xpose.msra.mxu0 0
    %2513 = vmatprep.subr.bf16.mxu0 0
    %2514 = vmatpush1.bf16.xpose.msra.mxu0 0
    %2515 = vmatprep.subr.bf16.mxu0 0
    %2516 = vmatpush1.bf16.xpose.msra.mxu0 0
    %2517 = vmatprep.subr.bf16.mxu0 0
    %2518 = vmatpush1.bf16.xpose.msra.mxu0 0
    %2519 = vmatprep.subr.bf16.mxu0 0
    %2520 = vmatpush1.bf16.xpose.msra.mxu0 0
    %2521 = vmatprep.subr.bf16.mxu0 0
    %2522 = vmatpush1.bf16.xpose.msra.mxu0 0
    %2523 = vmatprep.mubr.bf16.mxu0 0
    %2524 = vmatmul.mubr.bf16.gmra.mrb[0].mxu0 %v2356
    %v2525 = vpop.f32.mrb[0].mxu0
    %v2526 = vadd.f32 0.0, %v2525
    %v2527 = vpop.f32.mrb[0].mxu0
    %v2528 = vpop.f32.mrb[0].mxu0
    %v2529 = vadd.f32 0.0, %v2528
    %v2530 = vpop.f32.mrb[0].mxu0
    %2531 = vdwg.mxu0
    %v2536 = vunpack.c.l.b16 %v2369
    %v2537 = vunpack.c.l.b16 %v2370
    %v2538 = vunpack.c.l.b16 %v2371
    %v2539 = vunpack.c.l.b16 %v2372
    %v2540 = vpack.c.b16 %v2537, %v2536
    %v2541 = vpack.c.b16 %v2539, %v2538
    %2544 = vmatprep.subr.bf16.mxu0 0
    %2545 = vmatpush1.bf16.xpose.msra.mxu0 %v2540
    %2546 = vmatprep.subr.bf16.mxu0 0
    %2547 = vmatpush1.bf16.xpose.msra.mxu0 %v2541
    %2548 = vmatprep.subr.bf16.mxu0 0
    %2549 = vmatpush1.bf16.xpose.msra.mxu0 0
    %2550 = vmatprep.subr.bf16.mxu0 0
    %2551 = vmatpush1.bf16.xpose.msra.mxu0 0
    %2552 = vmatprep.subr.bf16.mxu0 0
    %2553 = vmatpush1.bf16.xpose.msra.mxu0 0
    %2554 = vmatprep.subr.bf16.mxu0 0
    %2555 = vmatpush1.bf16.xpose.msra.mxu0 0
    %2556 = vmatprep.subr.bf16.mxu0 0
    %2557 = vmatpush1.bf16.xpose.msra.mxu0 0
    %2558 = vmatprep.subr.bf16.mxu0 0
    %2559 = vmatpush1.bf16.xpose.msra.mxu0 0
    %2560 = vmatprep.subr.bf16.mxu0 0
    %2561 = vmatpush1.bf16.xpose.msra.mxu0 0
    %2562 = vmatprep.subr.bf16.mxu0 0
    %2563 = vmatpush1.bf16.xpose.msra.mxu0 0
    %2564 = vmatprep.subr.bf16.mxu0 0
    %2565 = vmatpush1.bf16.xpose.msra.mxu0 0
    %2566 = vmatprep.subr.bf16.mxu0 0
    %2567 = vmatpush1.bf16.xpose.msra.mxu0 0
    %2568 = vmatprep.subr.bf16.mxu0 0
    %2569 = vmatpush1.bf16.xpose.msra.mxu0 0
    %2570 = vmatprep.subr.bf16.mxu0 0
    %2571 = vmatpush1.bf16.xpose.msra.mxu0 0
    %2572 = vmatprep.subr.bf16.mxu0 0
    %2573 = vmatpush1.bf16.xpose.msra.mxu0 0
    %2574 = vmatprep.subr.bf16.mxu0 0
    %2575 = vmatpush1.bf16.xpose.msra.mxu0 0
    %2576 = vmatprep.mubr.bf16.mxu0 0
    %2577 = vmatmul.mubr.bf16.gmra.mrb[0].mxu0 %v2356
    %v2578 = vpop.f32.mrb[0].mxu0
    %v2579 = vadd.f32 0.0, %v2578
    %v2580 = vpop.f32.mrb[0].mxu0
    %v2581 = vpop.f32.mrb[0].mxu0
    %v2582 = vadd.f32 0.0, %v2581
    %v2583 = vpop.f32.mrb[0].mxu0
    %2584 = vdwg.mxu0
    %s2585 = scalar_lea.vmem [#allocation2], 64
    %v2586 = vld [vmem:[%s2585] sm:$0xf]
    %v2587 = vld [vmem:[%s2585 + $0x4] sm:$0xf]
    %v2588 = vld [vmem:[%s2585 + $0x8] sm:$0xf]
    %v2589 = vld [vmem:[%s2585 + $0xc] sm:$0xf]
    %v2590 = vld [vmem:[%s2585 + $0x10] sm:$0xf]
    %v2591 = vld [vmem:[%s2585 + $0x14] sm:$0xf]
    %v2592 = vld [vmem:[%s2585 + $0x18] sm:$0xf]
    %v2593 = vld [vmem:[%s2585 + $0x1c] sm:$0xf]
    %v2594 = vld [vmem:[%s2585 + $0x20] sm:$0xf]
    %v2595 = vld [vmem:[%s2585 + $0x24] sm:$0xf]
    %v2596 = vld [vmem:[%s2585 + $0x28] sm:$0xf]
    %v2597 = vld [vmem:[%s2585 + $0x2c] sm:$0xf]
    %v2598 = vld [vmem:[%s2585 + $0x30] sm:$0xf]
    %v2599 = vld [vmem:[%s2585 + $0x34] sm:$0xf]
    %v2600 = vld [vmem:[%s2585 + $0x38] sm:$0xf]
    %v2601 = vld [vmem:[%s2585 + $0x3c] sm:$0xf]
    %v2606 = vunpack.c.l.b16 %v2586
    %v2607 = vunpack.c.l.b16 %v2587
    %v2608 = vunpack.c.l.b16 %v2588
    %v2609 = vunpack.c.l.b16 %v2589
    %v2610 = vpack.c.b16 %v2607, %v2606
    %v2611 = vpack.c.b16 %v2609, %v2608
    %2614 = vmatprep.subr.bf16.mxu0 0
    %2615 = vmatpush1.bf16.xpose.msra.mxu0 %v2610
    %2616 = vmatprep.subr.bf16.mxu0 0
    %2617 = vmatpush1.bf16.xpose.msra.mxu0 %v2611
    %2618 = vmatprep.subr.bf16.mxu0 0
    %2619 = vmatpush1.bf16.xpose.msra.mxu0 0
    %2620 = vmatprep.subr.bf16.mxu0 0
    %2621 = vmatpush1.bf16.xpose.msra.mxu0 0
    %2622 = vmatprep.subr.bf16.mxu0 0
    %2623 = vmatpush1.bf16.xpose.msra.mxu0 0
    %2624 = vmatprep.subr.bf16.mxu0 0
    %2625 = vmatpush1.bf16.xpose.msra.mxu0 0
    %2626 = vmatprep.subr.bf16.mxu0 0
    %2627 = vmatpush1.bf16.xpose.msra.mxu0 0
    %2628 = vmatprep.subr.bf16.mxu0 0
    %2629 = vmatpush1.bf16.xpose.msra.mxu0 0
    %2630 = vmatprep.subr.bf16.mxu0 0
    %2631 = vmatpush1.bf16.xpose.msra.mxu0 0
    %2632 = vmatprep.subr.bf16.mxu0 0
    %2633 = vmatpush1.bf16.xpose.msra.mxu0 0
    %2634 = vmatprep.subr.bf16.mxu0 0
    %2635 = vmatpush1.bf16.xpose.msra.mxu0 0
    %2636 = vmatprep.subr.bf16.mxu0 0
    %2637 = vmatpush1.bf16.xpose.msra.mxu0 0
    %2638 = vmatprep.subr.bf16.mxu0 0
    %2639 = vmatpush1.bf16.xpose.msra.mxu0 0
    %2640 = vmatprep.subr.bf16.mxu0 0
    %2641 = vmatpush1.bf16.xpose.msra.mxu0 0
    %2642 = vmatprep.subr.bf16.mxu0 0
    %2643 = vmatpush1.bf16.xpose.msra.mxu0 0
    %2644 = vmatprep.subr.bf16.mxu0 0
    %2645 = vmatpush1.bf16.xpose.msra.mxu0 0
    %2646 = vmatprep.mubr.bf16.mxu0 0
    %2647 = vmatmul.mubr.bf16.gmra.mrb[0].mxu0 %v2325
    %v2648 = vpop.f32.mrb[0].mxu0
    %v2649 = vadd.f32 0.0, %v2648
    %v2650 = vpop.f32.mrb[0].mxu0
    %v2651 = vpop.f32.mrb[0].mxu0
    %v2652 = vadd.f32 0.0, %v2651
    %v2653 = vpop.f32.mrb[0].mxu0
    %2654 = vmatprep.mubr.bf16.mxu0 0
    %2655 = vmatmul.mubr.bf16.gmra.mrb[0].mxu0 %v2326
    %v2656 = vpop.f32.mrb[0].mxu0
    %v2657 = vadd.f32 0.0, %v2656
    %v2658 = vpop.f32.mrb[0].mxu0
    %v2659 = vpop.f32.mrb[0].mxu0
    %v2660 = vadd.f32 0.0, %v2659
    %v2661 = vpop.f32.mrb[0].mxu0
    %2662 = vdwg.mxu0
    %v2667 = vunpack.c.l.b16 %v2590
    %v2668 = vunpack.c.l.b16 %v2591
    %v2669 = vunpack.c.l.b16 %v2592
    %v2670 = vunpack.c.l.b16 %v2593
    %v2671 = vpack.c.b16 %v2668, %v2667
    %v2672 = vpack.c.b16 %v2670, %v2669
    %2675 = vmatprep.subr.bf16.mxu0 0
    %2676 = vmatpush1.bf16.xpose.msra.mxu0 %v2671
    %2677 = vmatprep.subr.bf16.mxu0 0
    %2678 = vmatpush1.bf16.xpose.msra.mxu0 %v2672
    %2679 = vmatprep.subr.bf16.mxu0 0
    %2680 = vmatpush1.bf16.xpose.msra.mxu0 0
    %2681 = vmatprep.subr.bf16.mxu0 0
    %2682 = vmatpush1.bf16.xpose.msra.mxu0 0
    %2683 = vmatprep.subr.bf16.mxu0 0
    %2684 = vmatpush1.bf16.xpose.msra.mxu0 0
    %2685 = vmatprep.subr.bf16.mxu0 0
    %2686 = vmatpush1.bf16.xpose.msra.mxu0 0
    %2687 = vmatprep.subr.bf16.mxu0 0
    %2688 = vmatpush1.bf16.xpose.msra.mxu0 0
    %2689 = vmatprep.subr.bf16.mxu0 0
    %2690 = vmatpush1.bf16.xpose.msra.mxu0 0
    %2691 = vmatprep.subr.bf16.mxu0 0
    %2692 = vmatpush1.bf16.xpose.msra.mxu0 0
    %2693 = vmatprep.subr.bf16.mxu0 0
    %2694 = vmatpush1.bf16.xpose.msra.mxu0 0
    %2695 = vmatprep.subr.bf16.mxu0 0
    %2696 = vmatpush1.bf16.xpose.msra.mxu0 0
    %2697 = vmatprep.subr.bf16.mxu0 0
    %2698 = vmatpush1.bf16.xpose.msra.mxu0 0
    %2699 = vmatprep.subr.bf16.mxu0 0
    %2700 = vmatpush1.bf16.xpose.msra.mxu0 0
    %2701 = vmatprep.subr.bf16.mxu0 0
    %2702 = vmatpush1.bf16.xpose.msra.mxu0 0
    %2703 = vmatprep.subr.bf16.mxu0 0
    %2704 = vmatpush1.bf16.xpose.msra.mxu0 0
    %2705 = vmatprep.subr.bf16.mxu0 0
    %2706 = vmatpush1.bf16.xpose.msra.mxu0 0
    %2707 = vmatprep.mubr.bf16.mxu0 0
    %2708 = vmatmul.mubr.bf16.gmra.mrb[0].mxu0 %v2325
    %v2709 = vpop.f32.mrb[0].mxu0
    %v2710 = vadd.f32 0.0, %v2709
    %v2711 = vpop.f32.mrb[0].mxu0
    %v2712 = vpop.f32.mrb[0].mxu0
    %v2713 = vadd.f32 0.0, %v2712
    %v2714 = vpop.f32.mrb[0].mxu0
    %2715 = vmatprep.mubr.bf16.mxu0 0
    %2716 = vmatmul.mubr.bf16.gmra.mrb[0].mxu0 %v2326
    %v2717 = vpop.f32.mrb[0].mxu0
    %v2718 = vadd.f32 0.0, %v2717
    %v2719 = vpop.f32.mrb[0].mxu0
    %v2720 = vpop.f32.mrb[0].mxu0
    %v2721 = vadd.f32 0.0, %v2720
    %v2722 = vpop.f32.mrb[0].mxu0
    %2723 = vdwg.mxu0
    %v2728 = vunpack.c.l.b16 %v2594
    %v2729 = vunpack.c.l.b16 %v2595
    %v2730 = vunpack.c.l.b16 %v2596
    %v2731 = vunpack.c.l.b16 %v2597
    %v2732 = vpack.c.b16 %v2729, %v2728
    %v2733 = vpack.c.b16 %v2731, %v2730
    %2736 = vmatprep.subr.bf16.mxu0 0
    %2737 = vmatpush1.bf16.xpose.msra.mxu0 %v2732
    %2738 = vmatprep.subr.bf16.mxu0 0
    %2739 = vmatpush1.bf16.xpose.msra.mxu0 %v2733
    %2740 = vmatprep.subr.bf16.mxu0 0
    %2741 = vmatpush1.bf16.xpose.msra.mxu0 0
    %2742 = vmatprep.subr.bf16.mxu0 0
    %2743 = vmatpush1.bf16.xpose.msra.mxu0 0
    %2744 = vmatprep.subr.bf16.mxu0 0
    %2745 = vmatpush1.bf16.xpose.msra.mxu0 0
    %2746 = vmatprep.subr.bf16.mxu0 0
    %2747 = vmatpush1.bf16.xpose.msra.mxu0 0
    %2748 = vmatprep.subr.bf16.mxu0 0
    %2749 = vmatpush1.bf16.xpose.msra.mxu0 0
    %2750 = vmatprep.subr.bf16.mxu0 0
    %2751 = vmatpush1.bf16.xpose.msra.mxu0 0
    %2752 = vmatprep.subr.bf16.mxu0 0
    %2753 = vmatpush1.bf16.xpose.msra.mxu0 0
    %2754 = vmatprep.subr.bf16.mxu0 0
    %2755 = vmatpush1.bf16.xpose.msra.mxu0 0
    %2756 = vmatprep.subr.bf16.mxu0 0
    %2757 = vmatpush1.bf16.xpose.msra.mxu0 0
    %2758 = vmatprep.subr.bf16.mxu0 0
    %2759 = vmatpush1.bf16.xpose.msra.mxu0 0
    %2760 = vmatprep.subr.bf16.mxu0 0
    %2761 = vmatpush1.bf16.xpose.msra.mxu0 0
    %2762 = vmatprep.subr.bf16.mxu0 0
    %2763 = vmatpush1.bf16.xpose.msra.mxu0 0
    %2764 = vmatprep.subr.bf16.mxu0 0
    %2765 = vmatpush1.bf16.xpose.msra.mxu0 0
    %2766 = vmatprep.subr.bf16.mxu0 0
    %2767 = vmatpush1.bf16.xpose.msra.mxu0 0
    %2768 = vmatprep.mubr.bf16.mxu0 0
    %2769 = vmatmul.mubr.bf16.gmra.mrb[0].mxu0 %v2325
    %v2770 = vpop.f32.mrb[0].mxu0
    %v2771 = vadd.f32 0.0, %v2770
    %v2772 = vpop.f32.mrb[0].mxu0
    %v2773 = vpop.f32.mrb[0].mxu0
    %v2774 = vadd.f32 0.0, %v2773
    %v2775 = vpop.f32.mrb[0].mxu0
    %2776 = vmatprep.mubr.bf16.mxu0 0
    %2777 = vmatmul.mubr.bf16.gmra.mrb[0].mxu0 %v2326
    %v2778 = vpop.f32.mrb[0].mxu0
    %v2779 = vadd.f32 0.0, %v2778
    %v2780 = vpop.f32.mrb[0].mxu0
    %v2781 = vpop.f32.mrb[0].mxu0
    %v2782 = vadd.f32 0.0, %v2781
    %v2783 = vpop.f32.mrb[0].mxu0
    %2784 = vdwg.mxu0
    %v2789 = vunpack.c.l.b16 %v2598
    %v2790 = vunpack.c.l.b16 %v2599
    %v2791 = vunpack.c.l.b16 %v2600
    %v2792 = vunpack.c.l.b16 %v2601
    %v2793 = vpack.c.b16 %v2790, %v2789
    %v2794 = vpack.c.b16 %v2792, %v2791
    %2797 = vmatprep.subr.bf16.mxu0 0
    %2798 = vmatpush1.bf16.xpose.msra.mxu0 %v2793
    %2799 = vmatprep.subr.bf16.mxu0 0
    %2800 = vmatpush1.bf16.xpose.msra.mxu0 %v2794
    %2801 = vmatprep.subr.bf16.mxu0 0
    %2802 = vmatpush1.bf16.xpose.msra.mxu0 0
    %2803 = vmatprep.subr.bf16.mxu0 0
    %2804 = vmatpush1.bf16.xpose.msra.mxu0 0
    %2805 = vmatprep.subr.bf16.mxu0 0
    %2806 = vmatpush1.bf16.xpose.msra.mxu0 0
    %2807 = vmatprep.subr.bf16.mxu0 0
    %2808 = vmatpush1.bf16.xpose.msra.mxu0 0
    %2809 = vmatprep.subr.bf16.mxu0 0
    %2810 = vmatpush1.bf16.xpose.msra.mxu0 0
    %2811 = vmatprep.subr.bf16.mxu0 0
    %2812 = vmatpush1.bf16.xpose.msra.mxu0 0
    %2813 = vmatprep.subr.bf16.mxu0 0
    %2814 = vmatpush1.bf16.xpose.msra.mxu0 0
    %2815 = vmatprep.subr.bf16.mxu0 0
    %2816 = vmatpush1.bf16.xpose.msra.mxu0 0
    %2817 = vmatprep.subr.bf16.mxu0 0
    %2818 = vmatpush1.bf16.xpose.msra.mxu0 0
    %2819 = vmatprep.subr.bf16.mxu0 0
    %2820 = vmatpush1.bf16.xpose.msra.mxu0 0
    %2821 = vmatprep.subr.bf16.mxu0 0
    %2822 = vmatpush1.bf16.xpose.msra.mxu0 0
    %2823 = vmatprep.subr.bf16.mxu0 0
    %2824 = vmatpush1.bf16.xpose.msra.mxu0 0
    %2825 = vmatprep.subr.bf16.mxu0 0
    %2826 = vmatpush1.bf16.xpose.msra.mxu0 0
    %2827 = vmatprep.subr.bf16.mxu0 0
    %2828 = vmatpush1.bf16.xpose.msra.mxu0 0
    %2829 = vmatprep.mubr.bf16.mxu0 0
    %2830 = vmatmul.mubr.bf16.gmra.mrb[0].mxu0 %v2325
    %v2831 = vpop.f32.mrb[0].mxu0
    %v2832 = vadd.f32 0.0, %v2831
    %v2833 = vpop.f32.mrb[0].mxu0
    %v2834 = vpop.f32.mrb[0].mxu0
    %v2835 = vadd.f32 0.0, %v2834
    %v2836 = vpop.f32.mrb[0].mxu0
    %2837 = vmatprep.mubr.bf16.mxu0 0
    %2838 = vmatmul.mubr.bf16.gmra.mrb[0].mxu0 %v2326
    %v2839 = vpop.f32.mrb[0].mxu0
    %v2840 = vadd.f32 0.0, %v2839
    %v2841 = vpop.f32.mrb[0].mxu0
    %v2842 = vpop.f32.mrb[0].mxu0
    %v2843 = vadd.f32 0.0, %v2842
    %v2844 = vpop.f32.mrb[0].mxu0
    %2845 = vdwg.mxu0
    %s2846 = scalar_lea.vmem [#allocation2], 128
    %v2847 = vld [vmem:[%s2846] sm:$0xf]
    %v2848 = vld [vmem:[%s2846 + $0x4] sm:$0xf]
    %v2849 = vld [vmem:[%s2846 + $0x8] sm:$0xf]
    %v2850 = vld [vmem:[%s2846 + $0xc] sm:$0xf]
    %v2851 = vld [vmem:[%s2846 + $0x10] sm:$0xf]
    %v2852 = vld [vmem:[%s2846 + $0x14] sm:$0xf]
    %v2853 = vld [vmem:[%s2846 + $0x18] sm:$0xf]
    %v2854 = vld [vmem:[%s2846 + $0x1c] sm:$0xf]
    %v2855 = vld [vmem:[%s2846 + $0x20] sm:$0xf]
    %v2856 = vld [vmem:[%s2846 + $0x24] sm:$0xf]
    %v2857 = vld [vmem:[%s2846 + $0x28] sm:$0xf]
    %v2858 = vld [vmem:[%s2846 + $0x2c] sm:$0xf]
    %v2859 = vld [vmem:[%s2846 + $0x30] sm:$0xf]
    %v2860 = vld [vmem:[%s2846 + $0x34] sm:$0xf]
    %v2861 = vld [vmem:[%s2846 + $0x38] sm:$0xf]
    %v2862 = vld [vmem:[%s2846 + $0x3c] sm:$0xf]
    %v2867 = vunpack.c.l.b16 %v2847
    %v2868 = vunpack.c.l.b16 %v2848
    %v2869 = vunpack.c.l.b16 %v2849
    %v2870 = vunpack.c.l.b16 %v2850
    %v2871 = vpack.c.b16 %v2868, %v2867
    %v2872 = vpack.c.b16 %v2870, %v2869
    %2875 = vmatprep.subr.bf16.mxu0 0
    %2876 = vmatpush1.bf16.xpose.msra.mxu0 %v2871
    %2877 = vmatprep.subr.bf16.mxu0 0
    %2878 = vmatpush1.bf16.xpose.msra.mxu0 %v2872
    %2879 = vmatprep.subr.bf16.mxu0 0
    %2880 = vmatpush1.bf16.xpose.msra.mxu0 0
    %2881 = vmatprep.subr.bf16.mxu0 0
    %2882 = vmatpush1.bf16.xpose.msra.mxu0 0
    %2883 = vmatprep.subr.bf16.mxu0 0
    %2884 = vmatpush1.bf16.xpose.msra.mxu0 0
    %2885 = vmatprep.subr.bf16.mxu0 0
    %2886 = vmatpush1.bf16.xpose.msra.mxu0 0
    %2887 = vmatprep.subr.bf16.mxu0 0
    %2888 = vmatpush1.bf16.xpose.msra.mxu0 0
    %2889 = vmatprep.subr.bf16.mxu0 0
    %2890 = vmatpush1.bf16.xpose.msra.mxu0 0
    %2891 = vmatprep.subr.bf16.mxu0 0
    %2892 = vmatpush1.bf16.xpose.msra.mxu0 0
    %2893 = vmatprep.subr.bf16.mxu0 0
    %2894 = vmatpush1.bf16.xpose.msra.mxu0 0
    %2895 = vmatprep.subr.bf16.mxu0 0
    %2896 = vmatpush1.bf16.xpose.msra.mxu0 0
    %2897 = vmatprep.subr.bf16.mxu0 0
    %2898 = vmatpush1.bf16.xpose.msra.mxu0 0
    %2899 = vmatprep.subr.bf16.mxu0 0
    %2900 = vmatpush1.bf16.xpose.msra.mxu0 0
    %2901 = vmatprep.subr.bf16.mxu0 0
    %2902 = vmatpush1.bf16.xpose.msra.mxu0 0
    %2903 = vmatprep.subr.bf16.mxu0 0
    %2904 = vmatpush1.bf16.xpose.msra.mxu0 0
    %2905 = vmatprep.subr.bf16.mxu0 0
    %2906 = vmatpush1.bf16.xpose.msra.mxu0 0
    %2907 = vmatprep.mubr.bf16.mxu0 0
    %2908 = vmatmul.mubr.bf16.gmra.mrb[0].mxu0 %v2325
    %v2909 = vpop.f32.mrb[0].mxu0
    %v2910 = vadd.f32 0.0, %v2909
    %v2911 = vpop.f32.mrb[0].mxu0
    %v2912 = vpop.f32.mrb[0].mxu0
    %v2913 = vadd.f32 0.0, %v2912
    %v2914 = vpop.f32.mrb[0].mxu0
    %2915 = vmatprep.mubr.bf16.mxu0 0
    %2916 = vmatmul.mubr.bf16.gmra.mrb[0].mxu0 %v2326
    %v2917 = vpop.f32.mrb[0].mxu0
    %v2918 = vadd.f32 0.0, %v2917
    %v2919 = vpop.f32.mrb[0].mxu0
    %v2920 = vpop.f32.mrb[0].mxu0
    %v2921 = vadd.f32 0.0, %v2920
    %v2922 = vpop.f32.mrb[0].mxu0
    %2923 = vdwg.mxu0
    %v2928 = vunpack.c.l.b16 %v2851
    %v2929 = vunpack.c.l.b16 %v2852
    %v2930 = vunpack.c.l.b16 %v2853
    %v2931 = vunpack.c.l.b16 %v2854
    %v2932 = vpack.c.b16 %v2929, %v2928
    %v2933 = vpack.c.b16 %v2931, %v2930
    %2936 = vmatprep.subr.bf16.mxu0 0
    %2937 = vmatpush1.bf16.xpose.msra.mxu0 %v2932
    %2938 = vmatprep.subr.bf16.mxu0 0
    %2939 = vmatpush1.bf16.xpose.msra.mxu0 %v2933
    %2940 = vmatprep.subr.bf16.mxu0 0
    %2941 = vmatpush1.bf16.xpose.msra.mxu0 0
    %2942 = vmatprep.subr.bf16.mxu0 0
    %2943 = vmatpush1.bf16.xpose.msra.mxu0 0
    %2944 = vmatprep.subr.bf16.mxu0 0
    %2945 = vmatpush1.bf16.xpose.msra.mxu0 0
    %2946 = vmatprep.subr.bf16.mxu0 0
    %2947 = vmatpush1.bf16.xpose.msra.mxu0 0
    %2948 = vmatprep.subr.bf16.mxu0 0
    %2949 = vmatpush1.bf16.xpose.msra.mxu0 0
    %2950 = vmatprep.subr.bf16.mxu0 0
    %2951 = vmatpush1.bf16.xpose.msra.mxu0 0
    %2952 = vmatprep.subr.bf16.mxu0 0
    %2953 = vmatpush1.bf16.xpose.msra.mxu0 0
    %2954 = vmatprep.subr.bf16.mxu0 0
    %2955 = vmatpush1.bf16.xpose.msra.mxu0 0
    %2956 = vmatprep.subr.bf16.mxu0 0
    %2957 = vmatpush1.bf16.xpose.msra.mxu0 0
    %2958 = vmatprep.subr.bf16.mxu0 0
    %2959 = vmatpush1.bf16.xpose.msra.mxu0 0
    %2960 = vmatprep.subr.bf16.mxu0 0
    %2961 = vmatpush1.bf16.xpose.msra.mxu0 0
    %2962 = vmatprep.subr.bf16.mxu0 0
    %2963 = vmatpush1.bf16.xpose.msra.mxu0 0
    %2964 = vmatprep.subr.bf16.mxu0 0
    %2965 = vmatpush1.bf16.xpose.msra.mxu0 0
    %2966 = vmatprep.subr.bf16.mxu0 0
    %2967 = vmatpush1.bf16.xpose.msra.mxu0 0
    %2968 = vmatprep.mubr.bf16.mxu0 0
    %2969 = vmatmul.mubr.bf16.gmra.mrb[0].mxu0 %v2325
    %v2970 = vpop.f32.mrb[0].mxu0
    %v2971 = vadd.f32 0.0, %v2970
    %v2972 = vpop.f32.mrb[0].mxu0
    %v2973 = vpop.f32.mrb[0].mxu0
    %v2974 = vadd.f32 0.0, %v2973
    %v2975 = vpop.f32.mrb[0].mxu0
    %2976 = vmatprep.mubr.bf16.mxu0 0
    %2977 = vmatmul.mubr.bf16.gmra.mrb[0].mxu0 %v2326
    %v2978 = vpop.f32.mrb[0].mxu0
    %v2979 = vadd.f32 0.0, %v2978
    %v2980 = vpop.f32.mrb[0].mxu0
    %v2981 = vpop.f32.mrb[0].mxu0
    %v2982 = vadd.f32 0.0, %v2981
    %v2983 = vpop.f32.mrb[0].mxu0
    %2984 = vdwg.mxu0
    %v2989 = vunpack.c.l.b16 %v2855
    %v2990 = vunpack.c.l.b16 %v2856
    %v2991 = vunpack.c.l.b16 %v2857
    %v2992 = vunpack.c.l.b16 %v2858
    %v2993 = vpack.c.b16 %v2990, %v2989
    %v2994 = vpack.c.b16 %v2992, %v2991
    %2997 = vmatprep.subr.bf16.mxu0 0
    %2998 = vmatpush1.bf16.xpose.msra.mxu0 %v2993
    %2999 = vmatprep.subr.bf16.mxu0 0
    %3000 = vmatpush1.bf16.xpose.msra.mxu0 %v2994
    %3001 = vmatprep.subr.bf16.mxu0 0
    %3002 = vmatpush1.bf16.xpose.msra.mxu0 0
    %3003 = vmatprep.subr.bf16.mxu0 0
    %3004 = vmatpush1.bf16.xpose.msra.mxu0 0
    %3005 = vmatprep.subr.bf16.mxu0 0
    %3006 = vmatpush1.bf16.xpose.msra.mxu0 0
    %3007 = vmatprep.subr.bf16.mxu0 0
    %3008 = vmatpush1.bf16.xpose.msra.mxu0 0
    %3009 = vmatprep.subr.bf16.mxu0 0
    %3010 = vmatpush1.bf16.xpose.msra.mxu0 0
    %3011 = vmatprep.subr.bf16.mxu0 0
    %3012 = vmatpush1.bf16.xpose.msra.mxu0 0
    %3013 = vmatprep.subr.bf16.mxu0 0
    %3014 = vmatpush1.bf16.xpose.msra.mxu0 0
    %3015 = vmatprep.subr.bf16.mxu0 0
    %3016 = vmatpush1.bf16.xpose.msra.mxu0 0
    %3017 = vmatprep.subr.bf16.mxu0 0
    %3018 = vmatpush1.bf16.xpose.msra.mxu0 0
    %3019 = vmatprep.subr.bf16.mxu0 0
    %3020 = vmatpush1.bf16.xpose.msra.mxu0 0
    %3021 = vmatprep.subr.bf16.mxu0 0
    %3022 = vmatpush1.bf16.xpose.msra.mxu0 0
    %3023 = vmatprep.subr.bf16.mxu0 0
    %3024 = vmatpush1.bf16.xpose.msra.mxu0 0
    %3025 = vmatprep.subr.bf16.mxu0 0
    %3026 = vmatpush1.bf16.xpose.msra.mxu0 0
    %3027 = vmatprep.subr.bf16.mxu0 0
    %3028 = vmatpush1.bf16.xpose.msra.mxu0 0
    %3029 = vmatprep.mubr.bf16.mxu0 0
    %3030 = vmatmul.mubr.bf16.gmra.mrb[0].mxu0 %v2325
    %v3031 = vpop.f32.mrb[0].mxu0
    %v3032 = vadd.f32 0.0, %v3031
    %v3033 = vpop.f32.mrb[0].mxu0
    %v3034 = vpop.f32.mrb[0].mxu0
    %v3035 = vadd.f32 0.0, %v3034
    %v3036 = vpop.f32.mrb[0].mxu0
    %3037 = vmatprep.mubr.bf16.mxu0 0
    %3038 = vmatmul.mubr.bf16.gmra.mrb[0].mxu0 %v2326
    %v3039 = vpop.f32.mrb[0].mxu0
    %v3040 = vadd.f32 0.0, %v3039
    %v3041 = vpop.f32.mrb[0].mxu0
    %v3042 = vpop.f32.mrb[0].mxu0
    %v3043 = vadd.f32 0.0, %v3042
    %v3044 = vpop.f32.mrb[0].mxu0
    %3045 = vdwg.mxu0
    %v3050 = vunpack.c.l.b16 %v2859
    %v3051 = vunpack.c.l.b16 %v2860
    %v3052 = vunpack.c.l.b16 %v2861
    %v3053 = vunpack.c.l.b16 %v2862
    %v3054 = vpack.c.b16 %v3051, %v3050
    %v3055 = vpack.c.b16 %v3053, %v3052
    %3058 = vmatprep.subr.bf16.mxu0 0
    %3059 = vmatpush1.bf16.xpose.msra.mxu0 %v3054
    %3060 = vmatprep.subr.bf16.mxu0 0
    %3061 = vmatpush1.bf16.xpose.msra.mxu0 %v3055
    %3062 = vmatprep.subr.bf16.mxu0 0
    %3063 = vmatpush1.bf16.xpose.msra.mxu0 0
    %3064 = vmatprep.subr.bf16.mxu0 0
    %3065 = vmatpush1.bf16.xpose.msra.mxu0 0
    %3066 = vmatprep.subr.bf16.mxu0 0
    %3067 = vmatpush1.bf16.xpose.msra.mxu0 0
    %3068 = vmatprep.subr.bf16.mxu0 0
    %3069 = vmatpush1.bf16.xpose.msra.mxu0 0
    %3070 = vmatprep.subr.bf16.mxu0 0
    %3071 = vmatpush1.bf16.xpose.msra.mxu0 0
    %3072 = vmatprep.subr.bf16.mxu0 0
    %3073 = vmatpush1.bf16.xpose.msra.mxu0 0
    %3074 = vmatprep.subr.bf16.mxu0 0
    %3075 = vmatpush1.bf16.xpose.msra.mxu0 0
    %3076 = vmatprep.subr.bf16.mxu0 0
    %3077 = vmatpush1.bf16.xpose.msra.mxu0 0
    %3078 = vmatprep.subr.bf16.mxu0 0
    %3079 = vmatpush1.bf16.xpose.msra.mxu0 0
    %3080 = vmatprep.subr.bf16.mxu0 0
    %3081 = vmatpush1.bf16.xpose.msra.mxu0 0
    %3082 = vmatprep.subr.bf16.mxu0 0
    %3083 = vmatpush1.bf16.xpose.msra.mxu0 0
    %3084 = vmatprep.subr.bf16.mxu0 0
    %3085 = vmatpush1.bf16.xpose.msra.mxu0 0
    %3086 = vmatprep.subr.bf16.mxu0 0
    %3087 = vmatpush1.bf16.xpose.msra.mxu0 0
    %3088 = vmatprep.subr.bf16.mxu0 0
    %3089 = vmatpush1.bf16.xpose.msra.mxu0 0
    %3090 = vmatprep.mubr.bf16.mxu0 0
    %3091 = vmatmul.mubr.bf16.gmra.mrb[0].mxu0 %v2325
    %v3092 = vpop.f32.mrb[0].mxu0
    %v3093 = vadd.f32 0.0, %v3092
    %v3094 = vpop.f32.mrb[0].mxu0
    %v3095 = vpop.f32.mrb[0].mxu0
    %v3096 = vadd.f32 0.0, %v3095
    %v3097 = vpop.f32.mrb[0].mxu0
    %3098 = vmatprep.mubr.bf16.mxu0 0
    %3099 = vmatmul.mubr.bf16.gmra.mrb[0].mxu0 %v2326
    %v3100 = vpop.f32.mrb[0].mxu0
    %v3101 = vadd.f32 0.0, %v3100
    %v3102 = vpop.f32.mrb[0].mxu0
    %v3103 = vpop.f32.mrb[0].mxu0
    %v3104 = vadd.f32 0.0, %v3103
    %v3105 = vpop.f32.mrb[0].mxu0
    %3106 = vdwg.mxu0
    %v3107 = vpack.c.bf16 %v2423, %v2420
    %v3108 = vpack.c.bf16 %v2476, %v2473
    %v3109 = vpack.c.bf16 %v2529, %v2526
    %v3110 = vpack.c.bf16 %v2582, %v2579
    %v3111 = vpack.c.bf16 %v2652, %v2649
    %v3112 = vpack.c.bf16 %v2660, %v2657
    %v3113 = vpack.c.bf16 %v2713, %v2710
    %v3114 = vpack.c.bf16 %v2721, %v2718
    %v3115 = vpack.c.bf16 %v2774, %v2771
    %v3116 = vpack.c.bf16 %v2782, %v2779
    %v3117 = vpack.c.bf16 %v2835, %v2832
    %v3118 = vpack.c.bf16 %v2843, %v2840
    %vm3119 = vcmask 261120
    %v3121 = vsel %vm3119, %v3107, 0
    %v3124 = vsel %vm3119, %v3111, 0
    %v3127 = vsel %vm3119, %v3112, 0
    %3129 = vmatprep.subr.bf16.mxu0 0
    %3130 = vmatpush1.bf16.xpose.msra.mxu0 %v3124
    %3131 = vmatprep.subr.bf16.mxu0 0
    %3132 = vmatpush1.bf16.xpose.msra.mxu0 %v3127
    %3133 = vmatprep.subr.bf16.mxu0 0
    %3134 = vmatpush1.bf16.xpose.msra.mxu0 0
    %3135 = vmatprep.subr.bf16.mxu0 0
    %3136 = vmatpush1.bf16.xpose.msra.mxu0 0
    %3137 = vmatprep.subr.bf16.mxu0 0
    %3138 = vmatpush1.bf16.xpose.msra.mxu0 0
    %3139 = vmatprep.subr.bf16.mxu0 0
    %3140 = vmatpush1.bf16.xpose.msra.mxu0 0
    %3141 = vmatprep.subr.bf16.mxu0 0
    %3142 = vmatpush1.bf16.xpose.msra.mxu0 0
    %3143 = vmatprep.subr.bf16.mxu0 0
    %3144 = vmatpush1.bf16.xpose.msra.mxu0 0
    %3145 = vmatprep.subr.bf16.mxu0 0
    %3146 = vmatpush1.bf16.xpose.msra.mxu0 0
    %3147 = vmatprep.subr.bf16.mxu0 0
    %3148 = vmatpush1.bf16.xpose.msra.mxu0 0
    %3149 = vmatprep.subr.bf16.mxu0 0
    %3150 = vmatpush1.bf16.xpose.msra.mxu0 0
    %3151 = vmatprep.subr.bf16.mxu0 0
    %3152 = vmatpush1.bf16.xpose.msra.mxu0 0
    %3153 = vmatprep.subr.bf16.mxu0 0
    %3154 = vmatpush1.bf16.xpose.msra.mxu0 0
    %3155 = vmatprep.subr.bf16.mxu0 0
    %3156 = vmatpush1.bf16.xpose.msra.mxu0 0
    %3157 = vmatprep.subr.bf16.mxu0 0
    %3158 = vmatpush1.bf16.xpose.msra.mxu0 0
    %3159 = vmatprep.subr.bf16.mxu0 0
    %3160 = vmatpush1.bf16.xpose.msra.mxu0 0
    %3161 = vmatprep.mubr.bf16.mxu0 0
    %3162 = vmatmul.mubr.bf16.gmra.mrb[0].mxu0 %v3121
    %v3163 = vpop.f32.mrb[0].mxu0
    %v3164 = vadd.f32 0.0, %v3163
    %v3165 = vpop.f32.mrb[0].mxu0
    %v3166 = vpop.f32.mrb[0].mxu0
    %v3167 = vadd.f32 0.0, %v3166
    %v3168 = vpop.f32.mrb[0].mxu0
    %3169 = vdwg.mxu0
    %v3171 = vsel %vm3119, %v3108, 0
    %v3174 = vsel %vm3119, %v3113, 0
    %v3177 = vsel %vm3119, %v3114, 0
    %3179 = vmatprep.subr.bf16.mxu0 0
    %3180 = vmatpush1.bf16.xpose.msra.mxu0 %v3174
    %3181 = vmatprep.subr.bf16.mxu0 0
    %3182 = vmatpush1.bf16.xpose.msra.mxu0 %v3177
    %3183 = vmatprep.subr.bf16.mxu0 0
    %3184 = vmatpush1.bf16.xpose.msra.mxu0 0
    %3185 = vmatprep.subr.bf16.mxu0 0
    %3186 = vmatpush1.bf16.xpose.msra.mxu0 0
    %3187 = vmatprep.subr.bf16.mxu0 0
    %3188 = vmatpush1.bf16.xpose.msra.mxu0 0
    %3189 = vmatprep.subr.bf16.mxu0 0
    %3190 = vmatpush1.bf16.xpose.msra.mxu0 0
    %3191 = vmatprep.subr.bf16.mxu0 0
    %3192 = vmatpush1.bf16.xpose.msra.mxu0 0
    %3193 = vmatprep.subr.bf16.mxu0 0
    %3194 = vmatpush1.bf16.xpose.msra.mxu0 0
    %3195 = vmatprep.subr.bf16.mxu0 0
    %3196 = vmatpush1.bf16.xpose.msra.mxu0 0
    %3197 = vmatprep.subr.bf16.mxu0 0
    %3198 = vmatpush1.bf16.xpose.msra.mxu0 0
    %3199 = vmatprep.subr.bf16.mxu0 0
    %3200 = vmatpush1.bf16.xpose.msra.mxu0 0
    %3201 = vmatprep.subr.bf16.mxu0 0
    %3202 = vmatpush1.bf16.xpose.msra.mxu0 0
    %3203 = vmatprep.subr.bf16.mxu0 0
    %3204 = vmatpush1.bf16.xpose.msra.mxu0 0
    %3205 = vmatprep.subr.bf16.mxu0 0
    %3206 = vmatpush1.bf16.xpose.msra.mxu0 0
    %3207 = vmatprep.subr.bf16.mxu0 0
    %3208 = vmatpush1.bf16.xpose.msra.mxu0 0
    %3209 = vmatprep.subr.bf16.mxu0 0
    %3210 = vmatpush1.bf16.xpose.msra.mxu0 0
    %3211 = vmatprep.mubr.bf16.mxu0 0
    %3212 = vmatmul.mubr.bf16.gmra.mrb[0].mxu0 %v3171
    %v3213 = vpop.f32.mrb[0].mxu0
    %v3214 = vadd.f32 0.0, %v3213
    %v3215 = vpop.f32.mrb[0].mxu0
    %v3216 = vpop.f32.mrb[0].mxu0
    %v3217 = vadd.f32 0.0, %v3216
    %v3218 = vpop.f32.mrb[0].mxu0
    %3219 = vdwg.mxu0
    %v3221 = vsel %vm3119, %v3109, 0
    %v3224 = vsel %vm3119, %v3115, 0
    %v3227 = vsel %vm3119, %v3116, 0
    %3229 = vmatprep.subr.bf16.mxu0 0
    %3230 = vmatpush1.bf16.xpose.msra.mxu0 %v3224
    %3231 = vmatprep.subr.bf16.mxu0 0
    %3232 = vmatpush1.bf16.xpose.msra.mxu0 %v3227
    %3233 = vmatprep.subr.bf16.mxu0 0
    %3234 = vmatpush1.bf16.xpose.msra.mxu0 0
    %3235 = vmatprep.subr.bf16.mxu0 0
    %3236 = vmatpush1.bf16.xpose.msra.mxu0 0
    %3237 = vmatprep.subr.bf16.mxu0 0
    %3238 = vmatpush1.bf16.xpose.msra.mxu0 0
    %3239 = vmatprep.subr.bf16.mxu0 0
    %3240 = vmatpush1.bf16.xpose.msra.mxu0 0
    %3241 = vmatprep.subr.bf16.mxu0 0
    %3242 = vmatpush1.bf16.xpose.msra.mxu0 0
    %3243 = vmatprep.subr.bf16.mxu0 0
    %3244 = vmatpush1.bf16.xpose.msra.mxu0 0
    %3245 = vmatprep.subr.bf16.mxu0 0
    %3246 = vmatpush1.bf16.xpose.msra.mxu0 0
    %3247 = vmatprep.subr.bf16.mxu0 0
    %3248 = vmatpush1.bf16.xpose.msra.mxu0 0
    %3249 = vmatprep.subr.bf16.mxu0 0
    %3250 = vmatpush1.bf16.xpose.msra.mxu0 0
    %3251 = vmatprep.subr.bf16.mxu0 0
    %3252 = vmatpush1.bf16.xpose.msra.mxu0 0
    %3253 = vmatprep.subr.bf16.mxu0 0
    %3254 = vmatpush1.bf16.xpose.msra.mxu0 0
    %3255 = vmatprep.subr.bf16.mxu0 0
    %3256 = vmatpush1.bf16.xpose.msra.mxu0 0
    %3257 = vmatprep.subr.bf16.mxu0 0
    %3258 = vmatpush1.bf16.xpose.msra.mxu0 0
    %3259 = vmatprep.subr.bf16.mxu0 0
    %3260 = vmatpush1.bf16.xpose.msra.mxu0 0
    %3261 = vmatprep.mubr.bf16.mxu0 0
    %3262 = vmatmul.mubr.bf16.gmra.mrb[0].mxu0 %v3221
    %v3263 = vpop.f32.mrb[0].mxu0
    %v3264 = vadd.f32 0.0, %v3263
    %v3265 = vpop.f32.mrb[0].mxu0
    %v3266 = vpop.f32.mrb[0].mxu0
    %v3267 = vadd.f32 0.0, %v3266
    %v3268 = vpop.f32.mrb[0].mxu0
    %3269 = vdwg.mxu0
    %v3271 = vsel %vm3119, %v3110, 0
    %v3274 = vsel %vm3119, %v3117, 0
    %v3277 = vsel %vm3119, %v3118, 0
    %3279 = vmatprep.subr.bf16.mxu0 0
    %3280 = vmatpush1.bf16.xpose.msra.mxu0 %v3274
    %3281 = vmatprep.subr.bf16.mxu0 0
    %3282 = vmatpush1.bf16.xpose.msra.mxu0 %v3277
    %3283 = vmatprep.subr.bf16.mxu0 0
    %3284 = vmatpush1.bf16.xpose.msra.mxu0 0
    %3285 = vmatprep.subr.bf16.mxu0 0
    %3286 = vmatpush1.bf16.xpose.msra.mxu0 0
    %3287 = vmatprep.subr.bf16.mxu0 0
    %3288 = vmatpush1.bf16.xpose.msra.mxu0 0
    %3289 = vmatprep.subr.bf16.mxu0 0
    %3290 = vmatpush1.bf16.xpose.msra.mxu0 0
    %3291 = vmatprep.subr.bf16.mxu0 0
    %3292 = vmatpush1.bf16.xpose.msra.mxu0 0
    %3293 = vmatprep.subr.bf16.mxu0 0
    %3294 = vmatpush1.bf16.xpose.msra.mxu0 0
    %3295 = vmatprep.subr.bf16.mxu0 0
    %3296 = vmatpush1.bf16.xpose.msra.mxu0 0
    %3297 = vmatprep.subr.bf16.mxu0 0
    %3298 = vmatpush1.bf16.xpose.msra.mxu0 0
    %3299 = vmatprep.subr.bf16.mxu0 0
    %3300 = vmatpush1.bf16.xpose.msra.mxu0 0
    %3301 = vmatprep.subr.bf16.mxu0 0
    %3302 = vmatpush1.bf16.xpose.msra.mxu0 0
    %3303 = vmatprep.subr.bf16.mxu0 0
    %3304 = vmatpush1.bf16.xpose.msra.mxu0 0
    %3305 = vmatprep.subr.bf16.mxu0 0
    %3306 = vmatpush1.bf16.xpose.msra.mxu0 0
    %3307 = vmatprep.subr.bf16.mxu0 0
    %3308 = vmatpush1.bf16.xpose.msra.mxu0 0
    %3309 = vmatprep.subr.bf16.mxu0 0
    %3310 = vmatpush1.bf16.xpose.msra.mxu0 0
    %3311 = vmatprep.mubr.bf16.mxu0 0
    %3312 = vmatmul.mubr.bf16.gmra.mrb[0].mxu0 %v3271
    %v3313 = vpop.f32.mrb[0].mxu0
    %v3314 = vadd.f32 0.0, %v3313
    %v3315 = vpop.f32.mrb[0].mxu0
    %v3316 = vpop.f32.mrb[0].mxu0
    %v3317 = vadd.f32 0.0, %v3316
    %v3318 = vpop.f32.mrb[0].mxu0
    %3319 = vdwg.mxu0
    %v3320 = vmul.f32 %v3164, 0.17677669
    %v3321 = vmul.f32 %v3167, 0.17677669
    %v3322 = vmul.f32 %v3214, 0.17677669
    %v3323 = vmul.f32 %v3217, 0.17677669
    %v3324 = vmul.f32 %v3264, 0.17677669
    %v3325 = vmul.f32 %v3267, 0.17677669
    %v3326 = vmul.f32 %v3314, 0.17677669
    %v3327 = vmul.f32 %v3317, 0.17677669
    %v3328 = vadd.f32 %v3320, %v2323
    %v3329 = vadd.f32 %v3321, %v2324
    %v3330 = vadd.f32 %v3322, %v2323
    %v3331 = vadd.f32 %v3323, %v2324
    %v3332 = vadd.f32 %v3324, %v2323
    %v3333 = vadd.f32 %v3325, %v2324
    %v3334 = vadd.f32 %v3326, %v2323
    %v3335 = vadd.f32 %v3327, %v2324
    %v3336 = vsel %vm3119, %v3328, -inf
    %3337 = vmax.xlane.f32.xlu0 %v3336
    %v3338 = vpop.xlane.xlu0 %3337
    %v3339 = vsel %vm3119, %v3329, -inf
    %3340 = vmax.xlane.f32.xlu0 %v3339
    %v3341 = vpop.xlane.xlu0 %3340
    %v3342 = vsel %vm3119, %v3330, -inf
    %3343 = vmax.xlane.f32.xlu0 %v3342
    %v3344 = vpop.xlane.xlu0 %3343
    %v3345 = vsel %vm3119, %v3331, -inf
    %3346 = vmax.xlane.f32.xlu0 %v3345
    %v3347 = vpop.xlane.xlu0 %3346
    %v3348 = vsel %vm3119, %v3332, -inf
    %3349 = vmax.xlane.f32.xlu0 %v3348
    %v3350 = vpop.xlane.xlu0 %3349
    %v3351 = vsel %vm3119, %v3333, -inf
    %3352 = vmax.xlane.f32.xlu0 %v3351
    %v3353 = vpop.xlane.xlu0 %3352
    %v3354 = vsel %vm3119, %v3334, -inf
    %3355 = vmax.xlane.f32.xlu0 %v3354
    %v3356 = vpop.xlane.xlu0 %3355
    %v3357 = vsel %vm3119, %v3335, -inf
    %3358 = vmax.xlane.f32.xlu0 %v3357
    %v3359 = vpop.xlane.xlu0 %3358
    %v3360 = vsub.f32 %v3328, %v3338
    %v3361 = vsub.f32 %v3329, %v3341
    %v3362 = vsub.f32 %v3330, %v3344
    %v3363 = vsub.f32 %v3331, %v3347
    %v3364 = vsub.f32 %v3332, %v3350
    %v3365 = vsub.f32 %v3333, %v3353
    %v3366 = vsub.f32 %v3334, %v3356
    %v3367 = vsub.f32 %v3335, %v3359
    %v3368 = vmul.f32 %v3360, 1.442695
    %v3369 = vpow.pop %v3368
    %v3370 = vmul.f32 %v3361, 1.442695
    %v3371 = vpow.pop %v3370
    %v3372 = vmul.f32 %v3362, 1.442695
    %v3373 = vpow.pop %v3372
    %v3374 = vmul.f32 %v3363, 1.442695
    %v3375 = vpow.pop %v3374
    %v3376 = vmul.f32 %v3364, 1.442695
    %v3377 = vpow.pop %v3376
    %v3378 = vmul.f32 %v3365, 1.442695
    %v3379 = vpow.pop %v3378
    %v3380 = vmul.f32 %v3366, 1.442695
    %v3381 = vpow.pop %v3380
    %v3382 = vmul.f32 %v3367, 1.442695
    %v3383 = vpow.pop %v3382
    %v3384 = vsel %vm3119, %v3369, 0.0
    %3385 = vadd.xlane.f32.xlu0 %v3384
    %v3386 = vpop.xlane.xlu0 %3385
    %v3387 = vsel %vm3119, %v3371, 0.0
    %3388 = vadd.xlane.f32.xlu0 %v3387
    %v3389 = vpop.xlane.xlu0 %3388
    %v3390 = vsel %vm3119, %v3373, 0.0
    %3391 = vadd.xlane.f32.xlu0 %v3390
    %v3392 = vpop.xlane.xlu0 %3391
    %v3393 = vsel %vm3119, %v3375, 0.0
    %3394 = vadd.xlane.f32.xlu0 %v3393
    %v3395 = vpop.xlane.xlu0 %3394
    %v3396 = vsel %vm3119, %v3377, 0.0
    %3397 = vadd.xlane.f32.xlu0 %v3396
    %v3398 = vpop.xlane.xlu0 %3397
    %v3399 = vsel %vm3119, %v3379, 0.0
    %3400 = vadd.xlane.f32.xlu0 %v3399
    %v3401 = vpop.xlane.xlu0 %3400
    %v3402 = vsel %vm3119, %v3381, 0.0
    %3403 = vadd.xlane.f32.xlu0 %v3402
    %v3404 = vpop.xlane.xlu0 %3403
    %v3405 = vsel %vm3119, %v3383, 0.0
    %3406 = vadd.xlane.f32.xlu0 %v3405
    %v3407 = vpop.xlane.xlu0 %3406
    %v3408 = vrcp.pop %v3386
    %v3409 = vrcp.pop %v3389
    %v3410 = vrcp.pop %v3392
    %v3411 = vrcp.pop %v3395
    %v3412 = vrcp.pop %v3398
    %v3413 = vrcp.pop %v3401
    %v3414 = vrcp.pop %v3404
    %v3415 = vrcp.pop %v3407
    %v3416 = vmul.f32 %v3369, %v3408
    %v3417 = vmul.f32 %v3371, %v3409
    %v3418 = vmul.f32 %v3373, %v3410
    %v3419 = vmul.f32 %v3375, %v3411
    %v3420 = vmul.f32 %v3377, %v3412
    %v3421 = vmul.f32 %v3379, %v3413
    %v3422 = vmul.f32 %v3381, %v3414
    %v3423 = vmul.f32 %v3383, %v3415
    %v3424 = vpack.c.bf16 %v3417, %v3416
    %v3425 = vpack.c.bf16 %v3419, %v3418
    %v3426 = vpack.c.bf16 %v3421, %v3420
    %v3427 = vpack.c.bf16 %v3423, %v3422
    %v3428 = vpack.c.bf16 %v2913, %v2910
    %v3429 = vpack.c.bf16 %v2921, %v2918
    %v3430 = vpack.c.bf16 %v2974, %v2971
    %v3431 = vpack.c.bf16 %v2982, %v2979
    %v3432 = vpack.c.bf16 %v3035, %v3032
    %v3433 = vpack.c.bf16 %v3043, %v3040
    %v3434 = vpack.c.bf16 %v3096, %v3093
    %v3435 = vpack.c.bf16 %v3104, %v3101
    %v3437 = vsel %vm3119, %v3424, 0
    %3439 = vmatprep.subr.bf16.mxu0 0
    %3440 = vmatpush1.bf16.msra.mxu0 %v3428
    %3441 = vmatprep.subr.bf16.mxu0 0
    %3442 = vmatpush1.bf16.msra.mxu0 %v3429
    %3443 = vmatprep.subr.bf16.mxu0 0
    %3444 = vmatpush1.bf16.msra.mxu0 0
    %3445 = vmatprep.subr.bf16.mxu0 0
    %3446 = vmatpush1.bf16.msra.mxu0 0
    %3447 = vmatprep.subr.bf16.mxu0 0
    %3448 = vmatpush1.bf16.msra.mxu0 0
    %3449 = vmatprep.subr.bf16.mxu0 0
    %3450 = vmatpush1.bf16.msra.mxu0 0
    %3451 = vmatprep.subr.bf16.mxu0 0
    %3452 = vmatpush1.bf16.msra.mxu0 0
    %3453 = vmatprep.subr.bf16.mxu0 0
    %3454 = vmatpush1.bf16.msra.mxu0 0
    %3455 = vmatprep.subr.bf16.mxu0 0
    %3456 = vmatpush1.bf16.msra.mxu0 0
    %3457 = vmatprep.subr.bf16.mxu0 0
    %3458 = vmatpush1.bf16.msra.mxu0 0
    %3459 = vmatprep.subr.bf16.mxu0 0
    %3460 = vmatpush1.bf16.msra.mxu0 0
    %3461 = vmatprep.subr.bf16.mxu0 0
    %3462 = vmatpush1.bf16.msra.mxu0 0
    %3463 = vmatprep.subr.bf16.mxu0 0
    %3464 = vmatpush1.bf16.msra.mxu0 0
    %3465 = vmatprep.subr.bf16.mxu0 0
    %3466 = vmatpush1.bf16.msra.mxu0 0
    %3467 = vmatprep.subr.bf16.mxu0 0
    %3468 = vmatpush1.bf16.msra.mxu0 0
    %3469 = vmatprep.subr.bf16.mxu0 0
    %3470 = vmatpush1.bf16.msra.mxu0 0
    %3471 = vmatprep.mubr.bf16.mxu0 0
    %3472 = vmatmul.mubr.bf16.gmra.mrb[0].mxu0 %v3437
    %v3473 = vpop.f32.mrb[0].mxu0
    %v3474 = vadd.f32 0.0, %v3473
    %v3475 = vpop.f32.mrb[0].mxu0
    %v3476 = vpop.f32.mrb[0].mxu0
    %v3477 = vadd.f32 0.0, %v3476
    %v3478 = vpop.f32.mrb[0].mxu0
    %3479 = vdwg.mxu0
    %v3481 = vsel %vm3119, %v3425, 0
    %3483 = vmatprep.subr.bf16.mxu0 0
    %3484 = vmatpush1.bf16.msra.mxu0 %v3430
    %3485 = vmatprep.subr.bf16.mxu0 0
    %3486 = vmatpush1.bf16.msra.mxu0 %v3431
    %3487 = vmatprep.subr.bf16.mxu0 0
    %3488 = vmatpush1.bf16.msra.mxu0 0
    %3489 = vmatprep.subr.bf16.mxu0 0
    %3490 = vmatpush1.bf16.msra.mxu0 0
    %3491 = vmatprep.subr.bf16.mxu0 0
    %3492 = vmatpush1.bf16.msra.mxu0 0
    %3493 = vmatprep.subr.bf16.mxu0 0
    %3494 = vmatpush1.bf16.msra.mxu0 0
    %3495 = vmatprep.subr.bf16.mxu0 0
    %3496 = vmatpush1.bf16.msra.mxu0 0
    %3497 = vmatprep.subr.bf16.mxu0 0
    %3498 = vmatpush1.bf16.msra.mxu0 0
    %3499 = vmatprep.subr.bf16.mxu0 0
    %3500 = vmatpush1.bf16.msra.mxu0 0
    %3501 = vmatprep.subr.bf16.mxu0 0
    %3502 = vmatpush1.bf16.msra.mxu0 0
    %3503 = vmatprep.subr.bf16.mxu0 0
    %3504 = vmatpush1.bf16.msra.mxu0 0
    %3505 = vmatprep.subr.bf16.mxu0 0
    %3506 = vmatpush1.bf16.msra.mxu0 0
    %3507 = vmatprep.subr.bf16.mxu0 0
    %3508 = vmatpush1.bf16.msra.mxu0 0
    %3509 = vmatprep.subr.bf16.mxu0 0
    %3510 = vmatpush1.bf16.msra.mxu0 0
    %3511 = vmatprep.subr.bf16.mxu0 0
    %3512 = vmatpush1.bf16.msra.mxu0 0
    %3513 = vmatprep.subr.bf16.mxu0 0
    %3514 = vmatpush1.bf16.msra.mxu0 0
    %3515 = vmatprep.mubr.bf16.mxu0 0
    %3516 = vmatmul.mubr.bf16.gmra.mrb[0].mxu0 %v3481
    %v3517 = vpop.f32.mrb[0].mxu0
    %v3518 = vadd.f32 0.0, %v3517
    %v3519 = vpop.f32.mrb[0].mxu0
    %v3520 = vpop.f32.mrb[0].mxu0
    %v3521 = vadd.f32 0.0, %v3520
    %v3522 = vpop.f32.mrb[0].mxu0
    %3523 = vdwg.mxu0
    %v3525 = vsel %vm3119, %v3426, 0
    %3527 = vmatprep.subr.bf16.mxu0 0
    %3528 = vmatpush1.bf16.msra.mxu0 %v3432
    %3529 = vmatprep.subr.bf16.mxu0 0
    %3530 = vmatpush1.bf16.msra.mxu0 %v3433
    %3531 = vmatprep.subr.bf16.mxu0 0
    %3532 = vmatpush1.bf16.msra.mxu0 0
    %3533 = vmatprep.subr.bf16.mxu0 0
    %3534 = vmatpush1.bf16.msra.mxu0 0
    %3535 = vmatprep.subr.bf16.mxu0 0
    %3536 = vmatpush1.bf16.msra.mxu0 0
    %3537 = vmatprep.subr.bf16.mxu0 0
    %3538 = vmatpush1.bf16.msra.mxu0 0
    %3539 = vmatprep.subr.bf16.mxu0 0
    %3540 = vmatpush1.bf16.msra.mxu0 0
    %3541 = vmatprep.subr.bf16.mxu0 0
    %3542 = vmatpush1.bf16.msra.mxu0 0
    %3543 = vmatprep.subr.bf16.mxu0 0
    %3544 = vmatpush1.bf16.msra.mxu0 0
    %3545 = vmatprep.subr.bf16.mxu0 0
    %3546 = vmatpush1.bf16.msra.mxu0 0
    %3547 = vmatprep.subr.bf16.mxu0 0
    %3548 = vmatpush1.bf16.msra.mxu0 0
    %3549 = vmatprep.subr.bf16.mxu0 0
    %3550 = vmatpush1.bf16.msra.mxu0 0
    %3551 = vmatprep.subr.bf16.mxu0 0
    %3552 = vmatpush1.bf16.msra.mxu0 0
    %3553 = vmatprep.subr.bf16.mxu0 0
    %3554 = vmatpush1.bf16.msra.mxu0 0
    %3555 = vmatprep.subr.bf16.mxu0 0
    %3556 = vmatpush1.bf16.msra.mxu0 0
    %3557 = vmatprep.subr.bf16.mxu0 0
    %3558 = vmatpush1.bf16.msra.mxu0 0
    %3559 = vmatprep.mubr.bf16.mxu0 0
    %3560 = vmatmul.mubr.bf16.gmra.mrb[0].mxu0 %v3525
    %v3561 = vpop.f32.mrb[0].mxu0
    %v3562 = vadd.f32 0.0, %v3561
    %v3563 = vpop.f32.mrb[0].mxu0
    %v3564 = vpop.f32.mrb[0].mxu0
    %v3565 = vadd.f32 0.0, %v3564
    %v3566 = vpop.f32.mrb[0].mxu0
    %3567 = vdwg.mxu0
    %v3569 = vsel %vm3119, %v3427, 0
    %3571 = vmatprep.subr.bf16.mxu0 0
    %3572 = vmatpush1.bf16.msra.mxu0 %v3434
    %3573 = vmatprep.subr.bf16.mxu0 0
    %3574 = vmatpush1.bf16.msra.mxu0 %v3435
    %3575 = vmatprep.subr.bf16.mxu0 0
    %3576 = vmatpush1.bf16.msra.mxu0 0
    %3577 = vmatprep.subr.bf16.mxu0 0
    %3578 = vmatpush1.bf16.msra.mxu0 0
    %3579 = vmatprep.subr.bf16.mxu0 0
    %3580 = vmatpush1.bf16.msra.mxu0 0
    %3581 = vmatprep.subr.bf16.mxu0 0
    %3582 = vmatpush1.bf16.msra.mxu0 0
    %3583 = vmatprep.subr.bf16.mxu0 0
    %3584 = vmatpush1.bf16.msra.mxu0 0
    %3585 = vmatprep.subr.bf16.mxu0 0
    %3586 = vmatpush1.bf16.msra.mxu0 0
    %3587 = vmatprep.subr.bf16.mxu0 0
    %3588 = vmatpush1.bf16.msra.mxu0 0
    %3589 = vmatprep.subr.bf16.mxu0 0
    %3590 = vmatpush1.bf16.msra.mxu0 0
    %3591 = vmatprep.subr.bf16.mxu0 0
    %3592 = vmatpush1.bf16.msra.mxu0 0
    %3593 = vmatprep.subr.bf16.mxu0 0
    %3594 = vmatpush1.bf16.msra.mxu0 0
    %3595 = vmatprep.subr.bf16.mxu0 0
    %3596 = vmatpush1.bf16.msra.mxu0 0
    %3597 = vmatprep.subr.bf16.mxu0 0
    %3598 = vmatpush1.bf16.msra.mxu0 0
    %3599 = vmatprep.subr.bf16.mxu0 0
    %3600 = vmatpush1.bf16.msra.mxu0 0
    %3601 = vmatprep.subr.bf16.mxu0 0
    %3602 = vmatpush1.bf16.msra.mxu0 0
    %3603 = vmatprep.mubr.bf16.mxu0 0
    %3604 = vmatmul.mubr.bf16.gmra.mrb[0].mxu0 %v3569
    %v3605 = vpop.f32.mrb[0].mxu0
    %v3606 = vadd.f32 0.0, %v3605
    %v3607 = vpop.f32.mrb[0].mxu0
    %v3608 = vpop.f32.mrb[0].mxu0
    %v3609 = vadd.f32 0.0, %v3608
    %v3610 = vpop.f32.mrb[0].mxu0
    %3611 = vdwg.mxu0
    %s3612 = scalar_lea.vmem [#allocation2], 192
    %v3613 = vld [vmem:[%s3612] sm:$0xf]
    %v3614 = vld [vmem:[%s3612 + $0x4] sm:$0xf]
    %v3615 = vld [vmem:[%s3612 + $0x8] sm:$0xf]
    %v3616 = vld [vmem:[%s3612 + $0xc] sm:$0xf]
    %v3617 = vld [vmem:[%s3612 + $0x10] sm:$0xf]
    %v3618 = vld [vmem:[%s3612 + $0x14] sm:$0xf]
    %v3619 = vld [vmem:[%s3612 + $0x18] sm:$0xf]
    %v3620 = vld [vmem:[%s3612 + $0x1c] sm:$0xf]
    %v3621 = vld [vmem:[%s3612 + $0x20] sm:$0xf]
    %v3622 = vld [vmem:[%s3612 + $0x24] sm:$0xf]
    %v3623 = vld [vmem:[%s3612 + $0x28] sm:$0xf]
    %v3624 = vld [vmem:[%s3612 + $0x2c] sm:$0xf]
    %v3625 = vld [vmem:[%s3612 + $0x30] sm:$0xf]
    %v3626 = vld [vmem:[%s3612 + $0x34] sm:$0xf]
    %v3627 = vld [vmem:[%s3612 + $0x38] sm:$0xf]
    %v3628 = vld [vmem:[%s3612 + $0x3c] sm:$0xf]
    %v3629 = vpack.c.bf16 %v3477, %v3474
    %v3630 = vpack.c.bf16 %v3521, %v3518
    %v3631 = vpack.c.bf16 %v3565, %v3562
    %v3632 = vpack.c.bf16 %v3609, %v3606
    %v3637 = vunpack.c.l.b16 %v3613
    %v3638 = vunpack.c.l.b16 %v3614
    %v3639 = vunpack.c.l.b16 %v3615
    %v3640 = vunpack.c.l.b16 %v3616
    %v3641 = vpack.c.b16 %v3638, %v3637
    %v3642 = vpack.c.b16 %v3640, %v3639
    %v3646 = vsel %vm3119, %v3629, 0
    %3648 = vmatprep.subr.bf16.mxu0 0
    %3649 = vmatpush1.bf16.msra.mxu0 %v3641
    %3650 = vmatprep.subr.bf16.mxu0 0
    %3651 = vmatpush1.bf16.msra.mxu0 %v3642
    %3652 = vmatprep.subr.bf16.mxu0 0
    %3653 = vmatpush1.bf16.msra.mxu0 0
    %3654 = vmatprep.subr.bf16.mxu0 0
    %3655 = vmatpush1.bf16.msra.mxu0 0
    %3656 = vmatprep.subr.bf16.mxu0 0
    %3657 = vmatpush1.bf16.msra.mxu0 0
    %3658 = vmatprep.subr.bf16.mxu0 0
    %3659 = vmatpush1.bf16.msra.mxu0 0
    %3660 = vmatprep.subr.bf16.mxu0 0
    %3661 = vmatpush1.bf16.msra.mxu0 0
    %3662 = vmatprep.subr.bf16.mxu0 0
    %3663 = vmatpush1.bf16.msra.mxu0 0
    %3664 = vmatprep.subr.bf16.mxu0 0
    %3665 = vmatpush1.bf16.msra.mxu0 0
    %3666 = vmatprep.subr.bf16.mxu0 0
    %3667 = vmatpush1.bf16.msra.mxu0 0
    %3668 = vmatprep.subr.bf16.mxu0 0
    %3669 = vmatpush1.bf16.msra.mxu0 0
    %3670 = vmatprep.subr.bf16.mxu0 0
    %3671 = vmatpush1.bf16.msra.mxu0 0
    %3672 = vmatprep.subr.bf16.mxu0 0
    %3673 = vmatpush1.bf16.msra.mxu0 0
    %3674 = vmatprep.subr.bf16.mxu0 0
    %3675 = vmatpush1.bf16.msra.mxu0 0
    %3676 = vmatprep.subr.bf16.mxu0 0
    %3677 = vmatpush1.bf16.msra.mxu0 0
    %3678 = vmatprep.subr.bf16.mxu0 0
    %3679 = vmatpush1.bf16.msra.mxu0 0
    %3680 = vmatprep.mubr.bf16.mxu0 0
    %3681 = vmatmul.mubr.bf16.gmra.mrb[0].mxu0 %v3646
    %v3682 = vpop.f32.mrb[0].mxu0
    %v3683 = vadd.f32 0.0, %v3682
    %v3684 = vpop.f32.mrb[0].mxu0
    %v3685 = vpop.f32.mrb[0].mxu0
    %v3686 = vadd.f32 0.0, %v3685
    %v3687 = vpop.f32.mrb[0].mxu0
    %3688 = vdwg.mxu0
    %v3693 = vunpack.c.l.b16 %v3617
    %v3694 = vunpack.c.l.b16 %v3618
    %v3695 = vunpack.c.l.b16 %v3619
    %v3696 = vunpack.c.l.b16 %v3620
    %v3697 = vpack.c.b16 %v3694, %v3693
    %v3698 = vpack.c.b16 %v3696, %v3695
    %v3702 = vsel %vm3119, %v3630, 0
    %3704 = vmatprep.subr.bf16.mxu0 0
    %3705 = vmatpush1.bf16.msra.mxu0 %v3697
    %3706 = vmatprep.subr.bf16.mxu0 0
    %3707 = vmatpush1.bf16.msra.mxu0 %v3698
    %3708 = vmatprep.subr.bf16.mxu0 0
    %3709 = vmatpush1.bf16.msra.mxu0 0
    %3710 = vmatprep.subr.bf16.mxu0 0
    %3711 = vmatpush1.bf16.msra.mxu0 0
    %3712 = vmatprep.subr.bf16.mxu0 0
    %3713 = vmatpush1.bf16.msra.mxu0 0
    %3714 = vmatprep.subr.bf16.mxu0 0
    %3715 = vmatpush1.bf16.msra.mxu0 0
    %3716 = vmatprep.subr.bf16.mxu0 0
    %3717 = vmatpush1.bf16.msra.mxu0 0
    %3718 = vmatprep.subr.bf16.mxu0 0
    %3719 = vmatpush1.bf16.msra.mxu0 0
    %3720 = vmatprep.subr.bf16.mxu0 0
    %3721 = vmatpush1.bf16.msra.mxu0 0
    %3722 = vmatprep.subr.bf16.mxu0 0
    %3723 = vmatpush1.bf16.msra.mxu0 0
    %3724 = vmatprep.subr.bf16.mxu0 0
    %3725 = vmatpush1.bf16.msra.mxu0 0
    %3726 = vmatprep.subr.bf16.mxu0 0
    %3727 = vmatpush1.bf16.msra.mxu0 0
    %3728 = vmatprep.subr.bf16.mxu0 0
    %3729 = vmatpush1.bf16.msra.mxu0 0
    %3730 = vmatprep.subr.bf16.mxu0 0
    %3731 = vmatpush1.bf16.msra.mxu0 0
    %3732 = vmatprep.subr.bf16.mxu0 0
    %3733 = vmatpush1.bf16.msra.mxu0 0
    %3734 = vmatprep.subr.bf16.mxu0 0
    %3735 = vmatpush1.bf16.msra.mxu0 0
    %3736 = vmatprep.mubr.bf16.mxu0 0
    %3737 = vmatmul.mubr.bf16.gmra.mrb[0].mxu0 %v3702
    %v3738 = vpop.f32.mrb[0].mxu0
    %v3739 = vadd.f32 0.0, %v3738
    %v3740 = vpop.f32.mrb[0].mxu0
    %v3741 = vpop.f32.mrb[0].mxu0
    %v3742 = vadd.f32 0.0, %v3741
    %v3743 = vpop.f32.mrb[0].mxu0
    %3744 = vdwg.mxu0
    %v3749 = vunpack.c.l.b16 %v3621
    %v3750 = vunpack.c.l.b16 %v3622
    %v3751 = vunpack.c.l.b16 %v3623
    %v3752 = vunpack.c.l.b16 %v3624
    %v3753 = vpack.c.b16 %v3750, %v3749
    %v3754 = vpack.c.b16 %v3752, %v3751
    %v3758 = vsel %vm3119, %v3631, 0
    %3760 = vmatprep.subr.bf16.mxu0 0
    %3761 = vmatpush1.bf16.msra.mxu0 %v3753
    %3762 = vmatprep.subr.bf16.mxu0 0
    %3763 = vmatpush1.bf16.msra.mxu0 %v3754
    %3764 = vmatprep.subr.bf16.mxu0 0
    %3765 = vmatpush1.bf16.msra.mxu0 0
    %3766 = vmatprep.subr.bf16.mxu0 0
    %3767 = vmatpush1.bf16.msra.mxu0 0
    %3768 = vmatprep.subr.bf16.mxu0 0
    %3769 = vmatpush1.bf16.msra.mxu0 0
    %3770 = vmatprep.subr.bf16.mxu0 0
    %3771 = vmatpush1.bf16.msra.mxu0 0
    %3772 = vmatprep.subr.bf16.mxu0 0
    %3773 = vmatpush1.bf16.msra.mxu0 0
    %3774 = vmatprep.subr.bf16.mxu0 0
    %3775 = vmatpush1.bf16.msra.mxu0 0
    %3776 = vmatprep.subr.bf16.mxu0 0
    %3777 = vmatpush1.bf16.msra.mxu0 0
    %3778 = vmatprep.subr.bf16.mxu0 0
    %3779 = vmatpush1.bf16.msra.mxu0 0
    %3780 = vmatprep.subr.bf16.mxu0 0
    %3781 = vmatpush1.bf16.msra.mxu0 0
    %3782 = vmatprep.subr.bf16.mxu0 0
    %3783 = vmatpush1.bf16.msra.mxu0 0
    %3784 = vmatprep.subr.bf16.mxu0 0
    %3785 = vmatpush1.bf16.msra.mxu0 0
    %3786 = vmatprep.subr.bf16.mxu0 0
    %3787 = vmatpush1.bf16.msra.mxu0 0
    %3788 = vmatprep.subr.bf16.mxu0 0
    %3789 = vmatpush1.bf16.msra.mxu0 0
    %3790 = vmatprep.subr.bf16.mxu0 0
    %3791 = vmatpush1.bf16.msra.mxu0 0
    %3792 = vmatprep.mubr.bf16.mxu0 0
    %3793 = vmatmul.mubr.bf16.gmra.mrb[0].mxu0 %v3758
    %v3794 = vpop.f32.mrb[0].mxu0
    %v3795 = vadd.f32 0.0, %v3794
    %v3796 = vpop.f32.mrb[0].mxu0
    %v3797 = vpop.f32.mrb[0].mxu0
    %v3798 = vadd.f32 0.0, %v3797
    %v3799 = vpop.f32.mrb[0].mxu0
    %3800 = vdwg.mxu0
    %v3805 = vunpack.c.l.b16 %v3625
    %v3806 = vunpack.c.l.b16 %v3626
    %v3807 = vunpack.c.l.b16 %v3627
    %v3808 = vunpack.c.l.b16 %v3628
    %v3809 = vpack.c.b16 %v3806, %v3805
    %v3810 = vpack.c.b16 %v3808, %v3807
    %v3814 = vsel %vm3119, %v3632, 0
    %3816 = vmatprep.subr.bf16.mxu0 0
    %3817 = vmatpush1.bf16.msra.mxu0 %v3809
    %3818 = vmatprep.subr.bf16.mxu0 0
    %3819 = vmatpush1.bf16.msra.mxu0 %v3810
    %3820 = vmatprep.subr.bf16.mxu0 0
    %3821 = vmatpush1.bf16.msra.mxu0 0
    %3822 = vmatprep.subr.bf16.mxu0 0
    %3823 = vmatpush1.bf16.msra.mxu0 0
    %3824 = vmatprep.subr.bf16.mxu0 0
    %3825 = vmatpush1.bf16.msra.mxu0 0
    %3826 = vmatprep.subr.bf16.mxu0 0
    %3827 = vmatpush1.bf16.msra.mxu0 0
    %3828 = vmatprep.subr.bf16.mxu0 0
    %3829 = vmatpush1.bf16.msra.mxu0 0
    %3830 = vmatprep.subr.bf16.mxu0 0
    %3831 = vmatpush1.bf16.msra.mxu0 0
    %3832 = vmatprep.subr.bf16.mxu0 0
    %3833 = vmatpush1.bf16.msra.mxu0 0
    %3834 = vmatprep.subr.bf16.mxu0 0
    %3835 = vmatpush1.bf16.msra.mxu0 0
    %3836 = vmatprep.subr.bf16.mxu0 0
    %3837 = vmatpush1.bf16.msra.mxu0 0
    %3838 = vmatprep.subr.bf16.mxu0 0
    %3839 = vmatpush1.bf16.msra.mxu0 0
    %3840 = vmatprep.subr.bf16.mxu0 0
    %3841 = vmatpush1.bf16.msra.mxu0 0
    %3842 = vmatprep.subr.bf16.mxu0 0
    %3843 = vmatpush1.bf16.msra.mxu0 0
    %3844 = vmatprep.subr.bf16.mxu0 0
    %3845 = vmatpush1.bf16.msra.mxu0 0
    %3846 = vmatprep.subr.bf16.mxu0 0
    %3847 = vmatpush1.bf16.msra.mxu0 0
    %3848 = vmatprep.mubr.bf16.mxu0 0
    %3849 = vmatmul.mubr.bf16.gmra.mrb[0].mxu0 %v3814
    %v3850 = vpop.f32.mrb[0].mxu0
    %v3851 = vadd.f32 0.0, %v3850
    %v3852 = vpop.f32.mrb[0].mxu0
    %v3853 = vpop.f32.mrb[0].mxu0
    %v3854 = vadd.f32 0.0, %v3853
    %v3855 = vpop.f32.mrb[0].mxu0
    %3856 = vdwg.mxu0
    %v3857 = vadd.f32 %v3683, %v3739
    %v3858 = vadd.f32 %v3857, %v3795
    %v3859 = vadd.f32 %v3858, %v3851
    %v3860 = vadd.f32 %v3686, %v3742
    %v3861 = vadd.f32 %v3860, %v3798
    %v3862 = vadd.f32 %v3861, %v3854
    %v3863 = vld [vmem:[#allocation4 + $0x64] ss:$0 sm:$0xff]
    %v3864 = vadd.f32 %v3859, %v3863
    %v3865 = vadd.f32 %v3862, %v3863
    %v3866 = vadd.f32 %v3864, %v2321
    %v3867 = vadd.f32 %v3865, %v2322
    %v3868 = vld [vmem:[#allocation4 + $0x62] ss:$0 sm:$0xff]
    %v3869 = vld [vmem:[#allocation4 + $0x63] ss:$0 sm:$0xff]
    %3870 = vadd.xlane.f32.xlu0 %v3866
    %v3871 = vpop.xlane.xlu0 %3870
    %3872 = vadd.xlane.f32.xlu0 %v3867
    %v3873 = vpop.xlane.xlu0 %3872
    %v3874 = vmul.f32 %v3871, %v2333
    %v3875 = vmul.f32 %v3873, %v2333
    %v3876 = vsub.f32 %v3866, %v3874
    %v3877 = vsub.f32 %v3867, %v3875
    %v3878 = vmul.f32 %v3876, %v3876
    %v3879 = vmul.f32 %v3877, %v3877
    %3880 = vadd.xlane.f32.xlu0 %v3878
    %v3881 = vpop.xlane.xlu0 %3880
    %3882 = vadd.xlane.f32.xlu0 %v3879
    %v3883 = vpop.xlane.xlu0 %3882
    %v3884 = vmul.f32 %v3881, %v2333
    %v3885 = vmul.f32 %v3883, %v2333
    %v3886 = vadd.f32 %v3884, 1e-05
    %v3887 = vadd.f32 %v3885, 1e-05
    %v3888 = vrsqrt.pop %v3886
    %v3889 = vrsqrt.pop %v3887
    %v3890 = vmul.f32 %v3876, %v3888
    %v3891 = vmul.f32 %v3877, %v3889
    %v3892 = vmul.f32 %v3890, %v3868
    %v3893 = vmul.f32 %v3891, %v3868
    %v3894 = vadd.f32 %v3892, %v3869
    %v3895 = vadd.f32 %v3893, %v3869
    %v3896 = vld [vmem:[%s2] sm:$0xff]
    %v3897 = vld [vmem:[%s2 + $0x8] sm:$0xff]
    %v3898 = vld [vmem:[%s2 + $0x10] sm:$0xff]
    %v3899 = vld [vmem:[%s2 + $0x18] sm:$0xff]
    %v3900 = vld [vmem:[%s2 + $0x20] sm:$0xff]
    %v3901 = vld [vmem:[%s2 + $0x28] sm:$0xff]
    %v3902 = vld [vmem:[%s2 + $0x30] sm:$0xff]
    %v3903 = vld [vmem:[%s2 + $0x38] sm:$0xff]
    %v3904 = vld [vmem:[%s2 + $0x40] sm:$0xff]
    %v3905 = vld [vmem:[%s2 + $0x48] sm:$0xff]
    %v3906 = vld [vmem:[%s2 + $0x50] sm:$0xff]
    %v3907 = vld [vmem:[%s2 + $0x58] sm:$0xff]
    %v3908 = vld [vmem:[%s2 + $0x60] sm:$0xff]
    %v3909 = vld [vmem:[%s2 + $0x68] sm:$0xff]
    %v3910 = vld [vmem:[%s2 + $0x70] sm:$0xff]
    %v3911 = vld [vmem:[%s2 + $0x78] sm:$0xff]
    %v3912 = vld [vmem:[%s2 + $0x80] sm:$0xff]
    %v3913 = vld [vmem:[%s2 + $0x88] sm:$0xff]
    %v3914 = vld [vmem:[%s2 + $0x90] sm:$0xff]
    %v3915 = vld [vmem:[%s2 + $0x98] sm:$0xff]
    %v3916 = vld [vmem:[%s2 + $0xa0] sm:$0xff]
    %v3917 = vld [vmem:[%s2 + $0xa8] sm:$0xff]
    %v3918 = vld [vmem:[%s2 + $0xb0] sm:$0xff]
    %v3919 = vld [vmem:[%s2 + $0xb8] sm:$0xff]
    %v3920 = vld [vmem:[%s2 + $0xc0] sm:$0xff]
    %v3921 = vld [vmem:[%s2 + $0xc8] sm:$0xff]
    %v3922 = vld [vmem:[%s2 + $0xd0] sm:$0xff]
    %v3923 = vld [vmem:[%s2 + $0xd8] sm:$0xff]
    %v3924 = vld [vmem:[%s2 + $0xe0] sm:$0xff]
    %v3925 = vld [vmem:[%s2 + $0xe8] sm:$0xff]
    %v3926 = vld [vmem:[%s2 + $0xf0] sm:$0xff]
    %v3927 = vld [vmem:[%s2 + $0xf8] sm:$0xff]
    %v3928 = vpack.c.bf16 %v3895, %v3894
    %s3929 = scalar_lea.vmem [#allocation4], 102
    %v3930 = vld [vmem:[%s3929] ss:$8 sm:$0xf]
    %v3932 = vlaneseq
    %v3933 = vshrl.u32 %v3932, 7
    %v3934 = vsub.s32 0, %v3933
    %v3935 = vrot.slane %v3930, %v3934
    %v3936 = vlaneseq
    %v3937 = vshrl.u32 %v3936, 7
    %v3938 = vsub.s32 1, %v3937
    %v3939 = vrot.slane %v3930, %v3938
    %v3940 = vlaneseq
    %v3941 = vshrl.u32 %v3940, 7
    %v3942 = vsub.s32 2, %v3941
    %v3943 = vrot.slane %v3930, %v3942
    %v3944 = vlaneseq
    %v3945 = vshrl.u32 %v3944, 7
    %v3946 = vsub.s32 3, %v3945
    %v3947 = vrot.slane %v3930, %v3946
    %v3984 = vunpack.c.l.b16 %v3896
    %v3985 = vunpack.c.h.b16 %v3896
    %v3986 = vunpack.c.l.b16 %v3897
    %v3987 = vunpack.c.h.b16 %v3897
    %v3988 = vunpack.c.l.b16 %v3898
    %v3989 = vunpack.c.h.b16 %v3898
    %v3990 = vunpack.c.l.b16 %v3899
    %v3991 = vunpack.c.h.b16 %v3899
    %v3992 = vunpack.c.l.b16 %v3900
    %v3993 = vunpack.c.h.b16 %v3900
    %v3994 = vunpack.c.l.b16 %v3901
    %v3995 = vunpack.c.h.b16 %v3901
    %v3996 = vunpack.c.l.b16 %v3902
    %v3997 = vunpack.c.h.b16 %v3902
    %v3998 = vunpack.c.l.b16 %v3903
    %v3999 = vunpack.c.h.b16 %v3903
    %v4000 = vunpack.c.l.b16 %v3904
    %v4001 = vunpack.c.h.b16 %v3904
    %v4002 = vunpack.c.l.b16 %v3905
    %v4003 = vunpack.c.h.b16 %v3905
    %v4004 = vunpack.c.l.b16 %v3906
    %v4005 = vunpack.c.h.b16 %v3906
    %v4006 = vunpack.c.l.b16 %v3907
    %v4007 = vunpack.c.h.b16 %v3907
    %v4008 = vunpack.c.l.b16 %v3908
    %v4009 = vunpack.c.h.b16 %v3908
    %v4010 = vunpack.c.l.b16 %v3909
    %v4011 = vunpack.c.h.b16 %v3909
    %v4012 = vunpack.c.l.b16 %v3910
    %v4013 = vunpack.c.h.b16 %v3910
    %v4014 = vunpack.c.l.b16 %v3911
    %v4015 = vunpack.c.h.b16 %v3911
    %v4016 = vunpack.c.l.b16 %v3912
    %v4017 = vunpack.c.h.b16 %v3912
    %v4018 = vunpack.c.l.b16 %v3913
    %v4019 = vunpack.c.h.b16 %v3913
    %v4020 = vunpack.c.l.b16 %v3914
    %v4021 = vunpack.c.h.b16 %v3914
    %v4022 = vunpack.c.l.b16 %v3915
    %v4023 = vunpack.c.h.b16 %v3915
    %v4024 = vunpack.c.l.b16 %v3916
    %v4025 = vunpack.c.h.b16 %v3916
    %v4026 = vunpack.c.l.b16 %v3917
    %v4027 = vunpack.c.h.b16 %v3917
    %v4028 = vunpack.c.l.b16 %v3918
    %v4029 = vunpack.c.h.b16 %v3918
    %v4030 = vunpack.c.l.b16 %v3919
    %v4031 = vunpack.c.h.b16 %v3919
    %v4032 = vunpack.c.l.b16 %v3920
    %v4033 = vunpack.c.h.b16 %v3920
    %v4034 = vunpack.c.l.b16 %v3921
    %v4035 = vunpack.c.h.b16 %v3921
    %v4036 = vunpack.c.l.b16 %v3922
    %v4037 = vunpack.c.h.b16 %v3922
    %v4038 = vunpack.c.l.b16 %v3923
    %v4039 = vunpack.c.h.b16 %v3923
    %v4040 = vunpack.c.l.b16 %v3924
    %v4041 = vunpack.c.h.b16 %v3924
    %v4042 = vunpack.c.l.b16 %v3925
    %v4043 = vunpack.c.h.b16 %v3925
    %v4044 = vunpack.c.l.b16 %v3926
    %v4045 = vunpack.c.h.b16 %v3926
    %v4046 = vunpack.c.l.b16 %v3927
    %v4047 = vunpack.c.h.b16 %v3927
    %v4048 = vpack.c.b16 %v3988, %v3984
    %v4049 = vpack.c.b16 %v3989, %v3985
    %v4050 = vpack.c.b16 %v3990, %v3986
    %v4051 = vpack.c.b16 %v3991, %v3987
    %v4052 = vpack.c.b16 %v3996, %v3992
    %v4053 = vpack.c.b16 %v3997, %v3993
    %v4054 = vpack.c.b16 %v3998, %v3994
    %v4055 = vpack.c.b16 %v3999, %v3995
    %v4056 = vpack.c.b16 %v4004, %v4000
    %v4057 = vpack.c.b16 %v4005, %v4001
    %v4058 = vpack.c.b16 %v4006, %v4002
    %v4059 = vpack.c.b16 %v4007, %v4003
    %v4060 = vpack.c.b16 %v4012, %v4008
    %v4061 = vpack.c.b16 %v4013, %v4009
    %v4062 = vpack.c.b16 %v4014, %v4010
    %v4063 = vpack.c.b16 %v4015, %v4011
    %v4064 = vpack.c.b16 %v4020, %v4016
    %v4065 = vpack.c.b16 %v4021, %v4017
    %v4066 = vpack.c.b16 %v4022, %v4018
    %v4067 = vpack.c.b16 %v4023, %v4019
    %v4068 = vpack.c.b16 %v4028, %v4024
    %v4069 = vpack.c.b16 %v4029, %v4025
    %v4070 = vpack.c.b16 %v4030, %v4026
    %v4071 = vpack.c.b16 %v4031, %v4027
    %v4072 = vpack.c.b16 %v4036, %v4032
    %v4073 = vpack.c.b16 %v4037, %v4033
    %v4074 = vpack.c.b16 %v4038, %v4034
    %v4075 = vpack.c.b16 %v4039, %v4035
    %v4076 = vpack.c.b16 %v4044, %v4040
    %v4077 = vpack.c.b16 %v4045, %v4041
    %v4078 = vpack.c.b16 %v4046, %v4042
    %v4079 = vpack.c.b16 %v4047, %v4043
    %4112 = vmatprep.subr.bf16.mxu0 %v4049
    %4113 = vmatpush1.bf16.msra.mxu0 %v4048
    %4114 = vmatprep.subr.bf16.mxu0 %v4053
    %4115 = vmatpush1.bf16.msra.mxu0 %v4052
    %4116 = vmatprep.subr.bf16.mxu0 %v4057
    %4117 = vmatpush1.bf16.msra.mxu0 %v4056
    %4118 = vmatprep.subr.bf16.mxu0 %v4061
    %4119 = vmatpush1.bf16.msra.mxu0 %v4060
    %4120 = vmatprep.subr.bf16.mxu0 %v4065
    %4121 = vmatpush1.bf16.msra.mxu0 %v4064
    %4122 = vmatprep.subr.bf16.mxu0 %v4069
    %4123 = vmatpush1.bf16.msra.mxu0 %v4068
    %4124 = vmatprep.subr.bf16.mxu0 %v4073
    %4125 = vmatpush1.bf16.msra.mxu0 %v4072
    %4126 = vmatprep.subr.bf16.mxu0 %v4077
    %4127 = vmatpush1.bf16.msra.mxu0 %v4076
    %4128 = vmatprep.subr.bf16.mxu0 0
    %4129 = vmatpush1.bf16.msra.mxu0 0
    %4130 = vmatprep.subr.bf16.mxu0 0
    %4131 = vmatpush1.bf16.msra.mxu0 0
    %4132 = vmatprep.subr.bf16.mxu0 0
    %4133 = vmatpush1.bf16.msra.mxu0 0
    %4134 = vmatprep.subr.bf16.mxu0 0
    %4135 = vmatpush1.bf16.msra.mxu0 0
    %4136 = vmatprep.subr.bf16.mxu0 0
    %4137 = vmatpush1.bf16.msra.mxu0 0
    %4138 = vmatprep.subr.bf16.mxu0 0
    %4139 = vmatpush1.bf16.msra.mxu0 0
    %4140 = vmatprep.subr.bf16.mxu0 0
    %4141 = vmatpush1.bf16.msra.mxu0 0
    %4142 = vmatprep.subr.bf16.mxu0 0
    %4143 = vmatpush1.bf16.msra.mxu0 0
    %4144 = vmatprep.mubr.bf16.mxu0 0
    %4145 = vmatmul.mubr.bf16.gmra.mrb[0].mxu0 %v3928
    %v4146 = vpop.f32.mrb[0].mxu0
    %v4147 = vadd.f32 %v3935, %v4146
    %v4148 = vpop.f32.mrb[0].mxu0
    %v4149 = vadd.f32 %v3939, %v4148
    %v4150 = vpop.f32.mrb[0].mxu0
    %v4151 = vadd.f32 %v3935, %v4150
    %v4152 = vpop.f32.mrb[0].mxu0
    %v4153 = vadd.f32 %v3939, %v4152
    %4154 = vdwg.mxu0
    %4155 = vmatprep.subr.bf16.mxu0 %v4051
    %4156 = vmatpush1.bf16.msra.mxu0 %v4050
    %4157 = vmatprep.subr.bf16.mxu0 %v4055
    %4158 = vmatpush1.bf16.msra.mxu0 %v4054
    %4159 = vmatprep.subr.bf16.mxu0 %v4059
    %4160 = vmatpush1.bf16.msra.mxu0 %v4058
    %4161 = vmatprep.subr.bf16.mxu0 %v4063
    %4162 = vmatpush1.bf16.msra.mxu0 %v4062
    %4163 = vmatprep.subr.bf16.mxu0 %v4067
    %4164 = vmatpush1.bf16.msra.mxu0 %v4066
    %4165 = vmatprep.subr.bf16.mxu0 %v4071
    %4166 = vmatpush1.bf16.msra.mxu0 %v4070
    %4167 = vmatprep.subr.bf16.mxu0 %v4075
    %4168 = vmatpush1.bf16.msra.mxu0 %v4074
    %4169 = vmatprep.subr.bf16.mxu0 %v4079
    %4170 = vmatpush1.bf16.msra.mxu0 %v4078
    %4171 = vmatprep.subr.bf16.mxu0 0
    %4172 = vmatpush1.bf16.msra.mxu0 0
    %4173 = vmatprep.subr.bf16.mxu0 0
    %4174 = vmatpush1.bf16.msra.mxu0 0
    %4175 = vmatprep.subr.bf16.mxu0 0
    %4176 = vmatpush1.bf16.msra.mxu0 0
    %4177 = vmatprep.subr.bf16.mxu0 0
    %4178 = vmatpush1.bf16.msra.mxu0 0
    %4179 = vmatprep.subr.bf16.mxu0 0
    %4180 = vmatpush1.bf16.msra.mxu0 0
    %4181 = vmatprep.subr.bf16.mxu0 0
    %4182 = vmatpush1.bf16.msra.mxu0 0
    %4183 = vmatprep.subr.bf16.mxu0 0
    %4184 = vmatpush1.bf16.msra.mxu0 0
    %4185 = vmatprep.subr.bf16.mxu0 0
    %4186 = vmatpush1.bf16.msra.mxu0 0
    %4187 = vmatprep.mubr.bf16.mxu0 0
    %4188 = vmatmul.mubr.bf16.gmra.mrb[0].mxu0 %v3928
    %v4189 = vpop.f32.mrb[0].mxu0
    %v4190 = vadd.f32 %v3943, %v4189
    %v4191 = vpop.f32.mrb[0].mxu0
    %v4192 = vadd.f32 %v3947, %v4191
    %v4193 = vpop.f32.mrb[0].mxu0
    %v4194 = vadd.f32 %v3943, %v4193
    %v4195 = vpop.f32.mrb[0].mxu0
    %v4196 = vadd.f32 %v3947, %v4195
    %4197 = vdwg.mxu0
    %v4198 = vmul.f32 %v4147, %v4147
    %v4199 = vmul.f32 %v4149, %v4149
    %v4200 = vmul.f32 %v4190, %v4190
    %v4201 = vmul.f32 %v4192, %v4192
    %v4202 = vmul.f32 %v4151, %v4151
    %v4203 = vmul.f32 %v4153, %v4153
    %v4204 = vmul.f32 %v4194, %v4194
    %v4205 = vmul.f32 %v4196, %v4196
    %v4206 = vmul.f32 %v4147, %v4198
    %v4207 = vmul.f32 %v4149, %v4199
    %v4208 = vmul.f32 %v4190, %v4200
    %v4209 = vmul.f32 %v4192, %v4201
    %v4210 = vmul.f32 %v4151, %v4202
    %v4211 = vmul.f32 %v4153, %v4203
    %v4212 = vmul.f32 %v4194, %v4204
    %v4213 = vmul.f32 %v4196, %v4205
    %v4214 = vmul.f32 %v4206, 0.044715
    %v4215 = vmul.f32 %v4207, 0.044715
    %v4216 = vmul.f32 %v4208, 0.044715
    %v4217 = vmul.f32 %v4209, 0.044715
    %v4218 = vmul.f32 %v4210, 0.044715
    %v4219 = vmul.f32 %v4211, 0.044715
    %v4220 = vmul.f32 %v4212, 0.044715
    %v4221 = vmul.f32 %v4213, 0.044715
    %v4222 = vadd.f32 %v4147, %v4214
    %v4223 = vadd.f32 %v4149, %v4215
    %v4224 = vadd.f32 %v4190, %v4216
    %v4225 = vadd.f32 %v4192, %v4217
    %v4226 = vadd.f32 %v4151, %v4218
    %v4227 = vadd.f32 %v4153, %v4219
    %v4228 = vadd.f32 %v4194, %v4220
    %v4229 = vadd.f32 %v4196, %v4221
    %v4230 = vmul.f32 %v4222, 0.7978846
    %v4231 = vmul.f32 %v4223, 0.7978846
    %v4232 = vmul.f32 %v4224, 0.7978846
    %v4233 = vmul.f32 %v4225, 0.7978846
    %v4234 = vmul.f32 %v4226, 0.7978846
    %v4235 = vmul.f32 %v4227, 0.7978846
    %v4236 = vmul.f32 %v4228, 0.7978846
    %v4237 = vmul.f32 %v4229, 0.7978846
    %v4238 = vtanh.pop %v4230
    %v4239 = vtanh.pop %v4231
    %v4240 = vtanh.pop %v4232
    %v4241 = vtanh.pop %v4233
    %v4242 = vtanh.pop %v4234
    %v4243 = vtanh.pop %v4235
    %v4244 = vtanh.pop %v4236
    %v4245 = vtanh.pop %v4237
    %v4246 = vadd.f32 %v4238, 1.0
    %v4247 = vadd.f32 %v4239, 1.0
    %v4248 = vadd.f32 %v4240, 1.0
    %v4249 = vadd.f32 %v4241, 1.0
    %v4250 = vadd.f32 %v4242, 1.0
    %v4251 = vadd.f32 %v4243, 1.0
    %v4252 = vadd.f32 %v4244, 1.0
    %v4253 = vadd.f32 %v4245, 1.0
    %v4254 = vmul.f32 %v4246, 0.5
    %v4255 = vmul.f32 %v4247, 0.5
    %v4256 = vmul.f32 %v4248, 0.5
    %v4257 = vmul.f32 %v4249, 0.5
    %v4258 = vmul.f32 %v4250, 0.5
    %v4259 = vmul.f32 %v4251, 0.5
    %v4260 = vmul.f32 %v4252, 0.5
    %v4261 = vmul.f32 %v4253, 0.5
    %v4262 = vmul.f32 %v4147, %v4254
    %v4263 = vmul.f32 %v4149, %v4255
    %v4264 = vmul.f32 %v4190, %v4256
    %v4265 = vmul.f32 %v4192, %v4257
    %v4266 = vmul.f32 %v4151, %v4258
    %v4267 = vmul.f32 %v4153, %v4259
    %v4268 = vmul.f32 %v4194, %v4260
    %v4269 = vmul.f32 %v4196, %v4261
    %v4270 = vld [vmem:[%s1 + $0x180] sm:$0xf]
    %v4271 = vld [vmem:[%s1 + $0x184] sm:$0xf]
    %v4272 = vld [vmem:[%s1 + $0x188] sm:$0xf]
    %v4273 = vld [vmem:[%s1 + $0x18c] sm:$0xf]
    %v4274 = vld [vmem:[%s1 + $0x190] sm:$0xf]
    %v4275 = vld [vmem:[%s1 + $0x194] sm:$0xf]
    %v4276 = vld [vmem:[%s1 + $0x198] sm:$0xf]
    %v4277 = vld [vmem:[%s1 + $0x19c] sm:$0xf]
    %v4278 = vld [vmem:[%s1 + $0x1a0] sm:$0xf]
    %v4279 = vld [vmem:[%s1 + $0x1a4] sm:$0xf]
    %v4280 = vld [vmem:[%s1 + $0x1a8] sm:$0xf]
    %v4281 = vld [vmem:[%s1 + $0x1ac] sm:$0xf]
    %v4282 = vld [vmem:[%s1 + $0x1b0] sm:$0xf]
    %v4283 = vld [vmem:[%s1 + $0x1b4] sm:$0xf]
    %v4284 = vld [vmem:[%s1 + $0x1b8] sm:$0xf]
    %v4285 = vld [vmem:[%s1 + $0x1bc] sm:$0xf]
    %v4286 = vld [vmem:[%s1 + $0x1c0] sm:$0xf]
    %v4287 = vld [vmem:[%s1 + $0x1c4] sm:$0xf]
    %v4288 = vld [vmem:[%s1 + $0x1c8] sm:$0xf]
    %v4289 = vld [vmem:[%s1 + $0x1cc] sm:$0xf]
    %v4290 = vld [vmem:[%s1 + $0x1d0] sm:$0xf]
    %v4291 = vld [vmem:[%s1 + $0x1d4] sm:$0xf]
    %v4292 = vld [vmem:[%s1 + $0x1d8] sm:$0xf]
    %v4293 = vld [vmem:[%s1 + $0x1dc] sm:$0xf]
    %v4294 = vld [vmem:[%s1 + $0x1e0] sm:$0xf]
    %v4295 = vld [vmem:[%s1 + $0x1e4] sm:$0xf]
    %v4296 = vld [vmem:[%s1 + $0x1e8] sm:$0xf]
    %v4297 = vld [vmem:[%s1 + $0x1ec] sm:$0xf]
    %v4298 = vld [vmem:[%s1 + $0x1f0] sm:$0xf]
    %v4299 = vld [vmem:[%s1 + $0x1f4] sm:$0xf]
    %v4300 = vld [vmem:[%s1 + $0x1f8] sm:$0xf]
    %v4301 = vld [vmem:[%s1 + $0x1fc] sm:$0xf]
    %v4302 = vld [vmem:[%s1 + $0x200] sm:$0xf]
    %v4303 = vld [vmem:[%s1 + $0x204] sm:$0xf]
    %v4304 = vld [vmem:[%s1 + $0x208] sm:$0xf]
    %v4305 = vld [vmem:[%s1 + $0x20c] sm:$0xf]
    %v4306 = vld [vmem:[%s1 + $0x210] sm:$0xf]
    %v4307 = vld [vmem:[%s1 + $0x214] sm:$0xf]
    %v4308 = vld [vmem:[%s1 + $0x218] sm:$0xf]
    %v4309 = vld [vmem:[%s1 + $0x21c] sm:$0xf]
    %v4310 = vld [vmem:[%s1 + $0x220] sm:$0xf]
    %v4311 = vld [vmem:[%s1 + $0x224] sm:$0xf]
    %v4312 = vld [vmem:[%s1 + $0x228] sm:$0xf]
    %v4313 = vld [vmem:[%s1 + $0x22c] sm:$0xf]
    %v4314 = vld [vmem:[%s1 + $0x230] sm:$0xf]
    %v4315 = vld [vmem:[%s1 + $0x234] sm:$0xf]
    %v4316 = vld [vmem:[%s1 + $0x238] sm:$0xf]
    %v4317 = vld [vmem:[%s1 + $0x23c] sm:$0xf]
    %v4318 = vld [vmem:[%s1 + $0x240] sm:$0xf]
    %v4319 = vld [vmem:[%s1 + $0x244] sm:$0xf]
    %v4320 = vld [vmem:[%s1 + $0x248] sm:$0xf]
    %v4321 = vld [vmem:[%s1 + $0x24c] sm:$0xf]
    %v4322 = vld [vmem:[%s1 + $0x250] sm:$0xf]
    %v4323 = vld [vmem:[%s1 + $0x254] sm:$0xf]
    %v4324 = vld [vmem:[%s1 + $0x258] sm:$0xf]
    %v4325 = vld [vmem:[%s1 + $0x25c] sm:$0xf]
    %v4326 = vld [vmem:[%s1 + $0x260] sm:$0xf]
    %v4327 = vld [vmem:[%s1 + $0x264] sm:$0xf]
    %v4328 = vld [vmem:[%s1 + $0x268] sm:$0xf]
    %v4329 = vld [vmem:[%s1 + $0x26c] sm:$0xf]
    %v4330 = vld [vmem:[%s1 + $0x270] sm:$0xf]
    %v4331 = vld [vmem:[%s1 + $0x274] sm:$0xf]
    %v4332 = vld [vmem:[%s1 + $0x278] sm:$0xf]
    %v4333 = vld [vmem:[%s1 + $0x27c] sm:$0xf]
    %v4334 = vpack.c.bf16 %v4266, %v4262
    %v4335 = vpack.c.bf16 %v4267, %v4263
    %v4336 = vpack.c.bf16 %v4268, %v4264
    %v4337 = vpack.c.bf16 %v4269, %v4265
    %v4338 = vld [vmem:[#allocation4 + $0x65] ss:$0 sm:$0xff]
    %v4403 = vunpack.c.l.b16 %v4270
    %v4404 = vunpack.c.l.b16 %v4271
    %v4405 = vunpack.c.l.b16 %v4272
    %v4406 = vunpack.c.l.b16 %v4273
    %v4407 = vunpack.c.l.b16 %v4274
    %v4408 = vunpack.c.l.b16 %v4275
    %v4409 = vunpack.c.l.b16 %v4276
    %v4410 = vunpack.c.l.b16 %v4277
    %v4411 = vunpack.c.l.b16 %v4278
    %v4412 = vunpack.c.l.b16 %v4279
    %v4413 = vunpack.c.l.b16 %v4280
    %v4414 = vunpack.c.l.b16 %v4281
    %v4415 = vunpack.c.l.b16 %v4282
    %v4416 = vunpack.c.l.b16 %v4283
    %v4417 = vunpack.c.l.b16 %v4284
    %v4418 = vunpack.c.l.b16 %v4285
    %v4419 = vunpack.c.l.b16 %v4286
    %v4420 = vunpack.c.l.b16 %v4287
    %v4421 = vunpack.c.l.b16 %v4288
    %v4422 = vunpack.c.l.b16 %v4289
    %v4423 = vunpack.c.l.b16 %v4290
    %v4424 = vunpack.c.l.b16 %v4291
    %v4425 = vunpack.c.l.b16 %v4292
    %v4426 = vunpack.c.l.b16 %v4293
    %v4427 = vunpack.c.l.b16 %v4294
    %v4428 = vunpack.c.l.b16 %v4295
    %v4429 = vunpack.c.l.b16 %v4296
    %v4430 = vunpack.c.l.b16 %v4297
    %v4431 = vunpack.c.l.b16 %v4298
    %v4432 = vunpack.c.l.b16 %v4299
    %v4433 = vunpack.c.l.b16 %v4300
    %v4434 = vunpack.c.l.b16 %v4301
    %v4435 = vunpack.c.l.b16 %v4302
    %v4436 = vunpack.c.l.b16 %v4303
    %v4437 = vunpack.c.l.b16 %v4304
    %v4438 = vunpack.c.l.b16 %v4305
    %v4439 = vunpack.c.l.b16 %v4306
    %v4440 = vunpack.c.l.b16 %v4307
    %v4441 = vunpack.c.l.b16 %v4308
    %v4442 = vunpack.c.l.b16 %v4309
    %v4443 = vunpack.c.l.b16 %v4310
    %v4444 = vunpack.c.l.b16 %v4311
    %v4445 = vunpack.c.l.b16 %v4312
    %v4446 = vunpack.c.l.b16 %v4313
    %v4447 = vunpack.c.l.b16 %v4314
    %v4448 = vunpack.c.l.b16 %v4315
    %v4449 = vunpack.c.l.b16 %v4316
    %v4450 = vunpack.c.l.b16 %v4317
    %v4451 = vunpack.c.l.b16 %v4318
    %v4452 = vunpack.c.l.b16 %v4319
    %v4453 = vunpack.c.l.b16 %v4320
    %v4454 = vunpack.c.l.b16 %v4321
    %v4455 = vunpack.c.l.b16 %v4322
    %v4456 = vunpack.c.l.b16 %v4323
    %v4457 = vunpack.c.l.b16 %v4324
    %v4458 = vunpack.c.l.b16 %v4325
    %v4459 = vunpack.c.l.b16 %v4326
    %v4460 = vunpack.c.l.b16 %v4327
    %v4461 = vunpack.c.l.b16 %v4328
    %v4462 = vunpack.c.l.b16 %v4329
    %v4463 = vunpack.c.l.b16 %v4330
    %v4464 = vunpack.c.l.b16 %v4331
    %v4465 = vunpack.c.l.b16 %v4332
    %v4466 = vunpack.c.l.b16 %v4333
    %v4467 = vpack.c.b16 %v4404, %v4403
    %v4468 = vpack.c.b16 %v4406, %v4405
    %v4469 = vpack.c.b16 %v4408, %v4407
    %v4470 = vpack.c.b16 %v4410, %v4409
    %v4471 = vpack.c.b16 %v4412, %v4411
    %v4472 = vpack.c.b16 %v4414, %v4413
    %v4473 = vpack.c.b16 %v4416, %v4415
    %v4474 = vpack.c.b16 %v4418, %v4417
    %v4475 = vpack.c.b16 %v4420, %v4419
    %v4476 = vpack.c.b16 %v4422, %v4421
    %v4477 = vpack.c.b16 %v4424, %v4423
    %v4478 = vpack.c.b16 %v4426, %v4425
    %v4479 = vpack.c.b16 %v4428, %v4427
    %v4480 = vpack.c.b16 %v4430, %v4429
    %v4481 = vpack.c.b16 %v4432, %v4431
    %v4482 = vpack.c.b16 %v4434, %v4433
    %v4483 = vpack.c.b16 %v4436, %v4435
    %v4484 = vpack.c.b16 %v4438, %v4437
    %v4485 = vpack.c.b16 %v4440, %v4439
    %v4486 = vpack.c.b16 %v4442, %v4441
    %v4487 = vpack.c.b16 %v4444, %v4443
    %v4488 = vpack.c.b16 %v4446, %v4445
    %v4489 = vpack.c.b16 %v4448, %v4447
    %v4490 = vpack.c.b16 %v4450, %v4449
    %v4491 = vpack.c.b16 %v4452, %v4451
    %v4492 = vpack.c.b16 %v4454, %v4453
    %v4493 = vpack.c.b16 %v4456, %v4455
    %v4494 = vpack.c.b16 %v4458, %v4457
    %v4495 = vpack.c.b16 %v4460, %v4459
    %v4496 = vpack.c.b16 %v4462, %v4461
    %v4497 = vpack.c.b16 %v4464, %v4463
    %v4498 = vpack.c.b16 %v4466, %v4465
    %4531 = vmatprep.subr.bf16.mxu0 0
    %4532 = vmatpush1.bf16.msra.mxu0 %v4467
    %4533 = vmatprep.subr.bf16.mxu0 0
    %4534 = vmatpush1.bf16.msra.mxu0 %v4468
    %4535 = vmatprep.subr.bf16.mxu0 0
    %4536 = vmatpush1.bf16.msra.mxu0 %v4469
    %4537 = vmatprep.subr.bf16.mxu0 0
    %4538 = vmatpush1.bf16.msra.mxu0 %v4470
    %4539 = vmatprep.subr.bf16.mxu0 0
    %4540 = vmatpush1.bf16.msra.mxu0 %v4471
    %4541 = vmatprep.subr.bf16.mxu0 0
    %4542 = vmatpush1.bf16.msra.mxu0 %v4472
    %4543 = vmatprep.subr.bf16.mxu0 0
    %4544 = vmatpush1.bf16.msra.mxu0 %v4473
    %4545 = vmatprep.subr.bf16.mxu0 0
    %4546 = vmatpush1.bf16.msra.mxu0 %v4474
    %4547 = vmatprep.subr.bf16.mxu0 0
    %4548 = vmatpush1.bf16.msra.mxu0 %v4475
    %4549 = vmatprep.subr.bf16.mxu0 0
    %4550 = vmatpush1.bf16.msra.mxu0 %v4476
    %4551 = vmatprep.subr.bf16.mxu0 0
    %4552 = vmatpush1.bf16.msra.mxu0 %v4477
    %4553 = vmatprep.subr.bf16.mxu0 0
    %4554 = vmatpush1.bf16.msra.mxu0 %v4478
    %4555 = vmatprep.subr.bf16.mxu0 0
    %4556 = vmatpush1.bf16.msra.mxu0 %v4479
    %4557 = vmatprep.subr.bf16.mxu0 0
    %4558 = vmatpush1.bf16.msra.mxu0 %v4480
    %4559 = vmatprep.subr.bf16.mxu0 0
    %4560 = vmatpush1.bf16.msra.mxu0 %v4481
    %4561 = vmatprep.subr.bf16.mxu0 0
    %4562 = vmatpush1.bf16.msra.mxu0 %v4482
    %4563 = vmatprep.mubr.bf16.mxu0 %v4335
    %4564 = vmatmul.mubr.bf16.gmra.mrb[0].mxu0 %v4334
    %v4565 = vpop.f32.mrb[0].mxu0
    %v4566 = vadd.f32 %v4338, %v4565
    %v4567 = vpop.f32.mrb[0].mxu0
    %v4568 = vpop.f32.mrb[0].mxu0
    %v4569 = vadd.f32 %v4338, %v4568
    %v4570 = vpop.f32.mrb[0].mxu0
    %4571 = vdwg.mxu0
    %4572 = vmatprep.subr.bf16.mxu0 0
    %4573 = vmatpush1.bf16.msra.mxu0 %v4483
    %4574 = vmatprep.subr.bf16.mxu0 0
    %4575 = vmatpush1.bf16.msra.mxu0 %v4484
    %4576 = vmatprep.subr.bf16.mxu0 0
    %4577 = vmatpush1.bf16.msra.mxu0 %v4485
    %4578 = vmatprep.subr.bf16.mxu0 0
    %4579 = vmatpush1.bf16.msra.mxu0 %v4486
    %4580 = vmatprep.subr.bf16.mxu0 0
    %4581 = vmatpush1.bf16.msra.mxu0 %v4487
    %4582 = vmatprep.subr.bf16.mxu0 0
    %4583 = vmatpush1.bf16.msra.mxu0 %v4488
    %4584 = vmatprep.subr.bf16.mxu0 0
    %4585 = vmatpush1.bf16.msra.mxu0 %v4489
    %4586 = vmatprep.subr.bf16.mxu0 0
    %4587 = vmatpush1.bf16.msra.mxu0 %v4490
    %4588 = vmatprep.subr.bf16.mxu0 0
    %4589 = vmatpush1.bf16.msra.mxu0 %v4491
    %4590 = vmatprep.subr.bf16.mxu0 0
    %4591 = vmatpush1.bf16.msra.mxu0 %v4492
    %4592 = vmatprep.subr.bf16.mxu0 0
    %4593 = vmatpush1.bf16.msra.mxu0 %v4493
    %4594 = vmatprep.subr.bf16.mxu0 0
    %4595 = vmatpush1.bf16.msra.mxu0 %v4494
    %4596 = vmatprep.subr.bf16.mxu0 0
    %4597 = vmatpush1.bf16.msra.mxu0 %v4495
    %4598 = vmatprep.subr.bf16.mxu0 0
    %4599 = vmatpush1.bf16.msra.mxu0 %v4496
    %4600 = vmatprep.subr.bf16.mxu0 0
    %4601 = vmatpush1.bf16.msra.mxu0 %v4497
    %4602 = vmatprep.subr.bf16.mxu0 0
    %4603 = vmatpush1.bf16.msra.mxu0 %v4498
    %4604 = vmatprep.mubr.bf16.mxu0 %v4337
    %4605 = vmatmul.mubr.bf16.gmra.mrb[0].mxu0 %v4336
    %v4606 = vpop.f32.mrb[0].mxu0
    %v4607 = vadd.f32 %v4566, %v4606
    %v4608 = vpop.f32.mrb[0].mxu0
    %v4609 = vpop.f32.mrb[0].mxu0
    %v4610 = vadd.f32 %v4569, %v4609
    %v4611 = vpop.f32.mrb[0].mxu0
    %4612 = vdwg.mxu0
    %v4613 = vadd.f32 %v4607, %v3866
    %v4614 = vadd.f32 %v4610, %v3867
    %v4615 = vld [vmem:[#allocation4 + $0x80] ss:$0 sm:$0xff]
    %v4616 = vld [vmem:[#allocation4 + $0x81] ss:$0 sm:$0xff]
    %4617 = vadd.xlane.f32.xlu0 %v4613
    %v4618 = vpop.xlane.xlu0 %4617
    %4619 = vadd.xlane.f32.xlu0 %v4614
    %v4620 = vpop.xlane.xlu0 %4619
    %v4621 = vmul.f32 %v4618, %v2333
    %v4622 = vmul.f32 %v4620, %v2333
    %v4623 = vsub.f32 %v4613, %v4621
    %v4624 = vsub.f32 %v4614, %v4622
    %v4625 = vmul.f32 %v4623, %v4623
    %v4626 = vmul.f32 %v4624, %v4624
    %4627 = vadd.xlane.f32.xlu0 %v4625
    %v4628 = vpop.xlane.xlu0 %4627
    %4629 = vadd.xlane.f32.xlu0 %v4626
    %v4630 = vpop.xlane.xlu0 %4629
    %v4631 = vmul.f32 %v4628, %v2333
    %v4632 = vmul.f32 %v4630, %v2333
    %v4633 = vadd.f32 %v4631, 1e-05
    %v4634 = vadd.f32 %v4632, 1e-05
    %v4635 = vrsqrt.pop %v4633
    %v4636 = vrsqrt.pop %v4634
    %v4637 = vmul.f32 %v4623, %v4635
    %v4638 = vmul.f32 %v4624, %v4636
    %v4639 = vmul.f32 %v4637, %v4615
    %v4640 = vmul.f32 %v4638, %v4615
    %v4641 = vadd.f32 %v4639, %v4616
    %v4642 = vadd.f32 %v4640, %v4616
    %v4643 = vpack.c.bf16 %v4642, %v4641
    %s4644 = scalar_lea.vmem [#allocation2], 256
    %v4645 = vld [vmem:[%s4644] sm:$0xf]
    %v4646 = vld [vmem:[%s4644 + $0x4] sm:$0xf]
    %v4647 = vld [vmem:[%s4644 + $0x8] sm:$0xf]
    %v4648 = vld [vmem:[%s4644 + $0xc] sm:$0xf]
    %v4649 = vld [vmem:[%s4644 + $0x10] sm:$0xf]
    %v4650 = vld [vmem:[%s4644 + $0x14] sm:$0xf]
    %v4651 = vld [vmem:[%s4644 + $0x18] sm:$0xf]
    %v4652 = vld [vmem:[%s4644 + $0x1c] sm:$0xf]
    %v4653 = vld [vmem:[%s4644 + $0x20] sm:$0xf]
    %v4654 = vld [vmem:[%s4644 + $0x24] sm:$0xf]
    %v4655 = vld [vmem:[%s4644 + $0x28] sm:$0xf]
    %v4656 = vld [vmem:[%s4644 + $0x2c] sm:$0xf]
    %v4657 = vld [vmem:[%s4644 + $0x30] sm:$0xf]
    %v4658 = vld [vmem:[%s4644 + $0x34] sm:$0xf]
    %v4659 = vld [vmem:[%s4644 + $0x38] sm:$0xf]
    %v4660 = vld [vmem:[%s4644 + $0x3c] sm:$0xf]
    %v4665 = vunpack.c.l.b16 %v4645
    %v4666 = vunpack.c.l.b16 %v4646
    %v4667 = vunpack.c.l.b16 %v4647
    %v4668 = vunpack.c.l.b16 %v4648
    %v4669 = vpack.c.b16 %v4666, %v4665
    %v4670 = vpack.c.b16 %v4668, %v4667
    %4673 = vmatprep.subr.bf16.mxu0 0
    %4674 = vmatpush1.bf16.xpose.msra.mxu0 %v4669
    %4675 = vmatprep.subr.bf16.mxu0 0
    %4676 = vmatpush1.bf16.xpose.msra.mxu0 %v4670
    %4677 = vmatprep.subr.bf16.mxu0 0
    %4678 = vmatpush1.bf16.xpose.msra.mxu0 0
    %4679 = vmatprep.subr.bf16.mxu0 0
    %4680 = vmatpush1.bf16.xpose.msra.mxu0 0
    %4681 = vmatprep.subr.bf16.mxu0 0
    %4682 = vmatpush1.bf16.xpose.msra.mxu0 0
    %4683 = vmatprep.subr.bf16.mxu0 0
    %4684 = vmatpush1.bf16.xpose.msra.mxu0 0
    %4685 = vmatprep.subr.bf16.mxu0 0
    %4686 = vmatpush1.bf16.xpose.msra.mxu0 0
    %4687 = vmatprep.subr.bf16.mxu0 0
    %4688 = vmatpush1.bf16.xpose.msra.mxu0 0
    %4689 = vmatprep.subr.bf16.mxu0 0
    %4690 = vmatpush1.bf16.xpose.msra.mxu0 0
    %4691 = vmatprep.subr.bf16.mxu0 0
    %4692 = vmatpush1.bf16.xpose.msra.mxu0 0
    %4693 = vmatprep.subr.bf16.mxu0 0
    %4694 = vmatpush1.bf16.xpose.msra.mxu0 0
    %4695 = vmatprep.subr.bf16.mxu0 0
    %4696 = vmatpush1.bf16.xpose.msra.mxu0 0
    %4697 = vmatprep.subr.bf16.mxu0 0
    %4698 = vmatpush1.bf16.xpose.msra.mxu0 0
    %4699 = vmatprep.subr.bf16.mxu0 0
    %4700 = vmatpush1.bf16.xpose.msra.mxu0 0
    %4701 = vmatprep.subr.bf16.mxu0 0
    %4702 = vmatpush1.bf16.xpose.msra.mxu0 0
    %4703 = vmatprep.subr.bf16.mxu0 0
    %4704 = vmatpush1.bf16.xpose.msra.mxu0 0
    %4705 = vmatprep.mubr.bf16.mxu0 0
    %4706 = vmatmul.mubr.bf16.gmra.mrb[0].mxu0 %v4643
    %v4707 = vpop.f32.mrb[0].mxu0
    %v4708 = vadd.f32 0.0, %v4707
    %v4709 = vpop.f32.mrb[0].mxu0
    %v4710 = vpop.f32.mrb[0].mxu0
    %v4711 = vadd.f32 0.0, %v4710
    %v4712 = vpop.f32.mrb[0].mxu0
    %4713 = vdwg.mxu0
    %v4718 = vunpack.c.l.b16 %v4649
    %v4719 = vunpack.c.l.b16 %v4650
    %v4720 = vunpack.c.l.b16 %v4651
    %v4721 = vunpack.c.l.b16 %v4652
    %v4722 = vpack.c.b16 %v4719, %v4718
    %v4723 = vpack.c.b16 %v4721, %v4720
    %4726 = vmatprep.subr.bf16.mxu0 0
    %4727 = vmatpush1.bf16.xpose.msra.mxu0 %v4722
    %4728 = vmatprep.subr.bf16.mxu0 0
    %4729 = vmatpush1.bf16.xpose.msra.mxu0 %v4723
    %4730 = vmatprep.subr.bf16.mxu0 0
    %4731 = vmatpush1.bf16.xpose.msra.mxu0 0
    %4732 = vmatprep.subr.bf16.mxu0 0
    %4733 = vmatpush1.bf16.xpose.msra.mxu0 0
    %4734 = vmatprep.subr.bf16.mxu0 0
    %4735 = vmatpush1.bf16.xpose.msra.mxu0 0
    %4736 = vmatprep.subr.bf16.mxu0 0
    %4737 = vmatpush1.bf16.xpose.msra.mxu0 0
    %4738 = vmatprep.subr.bf16.mxu0 0
    %4739 = vmatpush1.bf16.xpose.msra.mxu0 0
    %4740 = vmatprep.subr.bf16.mxu0 0
    %4741 = vmatpush1.bf16.xpose.msra.mxu0 0
    %4742 = vmatprep.subr.bf16.mxu0 0
    %4743 = vmatpush1.bf16.xpose.msra.mxu0 0
    %4744 = vmatprep.subr.bf16.mxu0 0
    %4745 = vmatpush1.bf16.xpose.msra.mxu0 0
    %4746 = vmatprep.subr.bf16.mxu0 0
    %4747 = vmatpush1.bf16.xpose.msra.mxu0 0
    %4748 = vmatprep.subr.bf16.mxu0 0
    %4749 = vmatpush1.bf16.xpose.msra.mxu0 0
    %4750 = vmatprep.subr.bf16.mxu0 0
    %4751 = vmatpush1.bf16.xpose.msra.mxu0 0
    %4752 = vmatprep.subr.bf16.mxu0 0
    %4753 = vmatpush1.bf16.xpose.msra.mxu0 0
    %4754 = vmatprep.subr.bf16.mxu0 0
    %4755 = vmatpush1.bf16.xpose.msra.mxu0 0
    %4756 = vmatprep.subr.bf16.mxu0 0
    %4757 = vmatpush1.bf16.xpose.msra.mxu0 0
    %4758 = vmatprep.mubr.bf16.mxu0 0
    %4759 = vmatmul.mubr.bf16.gmra.mrb[0].mxu0 %v4643
    %v4760 = vpop.f32.mrb[0].mxu0
    %v4761 = vadd.f32 0.0, %v4760
    %v4762 = vpop.f32.mrb[0].mxu0
    %v4763 = vpop.f32.mrb[0].mxu0
    %v4764 = vadd.f32 0.0, %v4763
    %v4765 = vpop.f32.mrb[0].mxu0
    %4766 = vdwg.mxu0
    %v4771 = vunpack.c.l.b16 %v4653
    %v4772 = vunpack.c.l.b16 %v4654
    %v4773 = vunpack.c.l.b16 %v4655
    %v4774 = vunpack.c.l.b16 %v4656
    %v4775 = vpack.c.b16 %v4772, %v4771
    %v4776 = vpack.c.b16 %v4774, %v4773
    %4779 = vmatprep.subr.bf16.mxu0 0
    %4780 = vmatpush1.bf16.xpose.msra.mxu0 %v4775
    %4781 = vmatprep.subr.bf16.mxu0 0
    %4782 = vmatpush1.bf16.xpose.msra.mxu0 %v4776
    %4783 = vmatprep.subr.bf16.mxu0 0
    %4784 = vmatpush1.bf16.xpose.msra.mxu0 0
    %4785 = vmatprep.subr.bf16.mxu0 0
    %4786 = vmatpush1.bf16.xpose.msra.mxu0 0
    %4787 = vmatprep.subr.bf16.mxu0 0
    %4788 = vmatpush1.bf16.xpose.msra.mxu0 0
    %4789 = vmatprep.subr.bf16.mxu0 0
    %4790 = vmatpush1.bf16.xpose.msra.mxu0 0
    %4791 = vmatprep.subr.bf16.mxu0 0
    %4792 = vmatpush1.bf16.xpose.msra.mxu0 0
    %4793 = vmatprep.subr.bf16.mxu0 0
    %4794 = vmatpush1.bf16.xpose.msra.mxu0 0
    %4795 = vmatprep.subr.bf16.mxu0 0
    %4796 = vmatpush1.bf16.xpose.msra.mxu0 0
    %4797 = vmatprep.subr.bf16.mxu0 0
    %4798 = vmatpush1.bf16.xpose.msra.mxu0 0
    %4799 = vmatprep.subr.bf16.mxu0 0
    %4800 = vmatpush1.bf16.xpose.msra.mxu0 0
    %4801 = vmatprep.subr.bf16.mxu0 0
    %4802 = vmatpush1.bf16.xpose.msra.mxu0 0
    %4803 = vmatprep.subr.bf16.mxu0 0
    %4804 = vmatpush1.bf16.xpose.msra.mxu0 0
    %4805 = vmatprep.subr.bf16.mxu0 0
    %4806 = vmatpush1.bf16.xpose.msra.mxu0 0
    %4807 = vmatprep.subr.bf16.mxu0 0
    %4808 = vmatpush1.bf16.xpose.msra.mxu0 0
    %4809 = vmatprep.subr.bf16.mxu0 0
    %4810 = vmatpush1.bf16.xpose.msra.mxu0 0
    %4811 = vmatprep.mubr.bf16.mxu0 0
    %4812 = vmatmul.mubr.bf16.gmra.mrb[0].mxu0 %v4643
    %v4813 = vpop.f32.mrb[0].mxu0
    %v4814 = vadd.f32 0.0, %v4813
    %v4815 = vpop.f32.mrb[0].mxu0
    %v4816 = vpop.f32.mrb[0].mxu0
    %v4817 = vadd.f32 0.0, %v4816
    %v4818 = vpop.f32.mrb[0].mxu0
    %4819 = vdwg.mxu0
    %v4824 = vunpack.c.l.b16 %v4657
    %v4825 = vunpack.c.l.b16 %v4658
    %v4826 = vunpack.c.l.b16 %v4659
    %v4827 = vunpack.c.l.b16 %v4660
    %v4828 = vpack.c.b16 %v4825, %v4824
    %v4829 = vpack.c.b16 %v4827, %v4826
    %4832 = vmatprep.subr.bf16.mxu0 0
    %4833 = vmatpush1.bf16.xpose.msra.mxu0 %v4828
    %4834 = vmatprep.subr.bf16.mxu0 0
    %4835 = vmatpush1.bf16.xpose.msra.mxu0 %v4829
    %4836 = vmatprep.subr.bf16.mxu0 0
    %4837 = vmatpush1.bf16.xpose.msra.mxu0 0
    %4838 = vmatprep.subr.bf16.mxu0 0
    %4839 = vmatpush1.bf16.xpose.msra.mxu0 0
    %4840 = vmatprep.subr.bf16.mxu0 0
    %4841 = vmatpush1.bf16.xpose.msra.mxu0 0
    %4842 = vmatprep.subr.bf16.mxu0 0
    %4843 = vmatpush1.bf16.xpose.msra.mxu0 0
    %4844 = vmatprep.subr.bf16.mxu0 0
    %4845 = vmatpush1.bf16.xpose.msra.mxu0 0
    %4846 = vmatprep.subr.bf16.mxu0 0
    %4847 = vmatpush1.bf16.xpose.msra.mxu0 0
    %4848 = vmatprep.subr.bf16.mxu0 0
    %4849 = vmatpush1.bf16.xpose.msra.mxu0 0
    %4850 = vmatprep.subr.bf16.mxu0 0
    %4851 = vmatpush1.bf16.xpose.msra.mxu0 0
    %4852 = vmatprep.subr.bf16.mxu0 0
    %4853 = vmatpush1.bf16.xpose.msra.mxu0 0
    %4854 = vmatprep.subr.bf16.mxu0 0
    %4855 = vmatpush1.bf16.xpose.msra.mxu0 0
    %4856 = vmatprep.subr.bf16.mxu0 0
    %4857 = vmatpush1.bf16.xpose.msra.mxu0 0
    %4858 = vmatprep.subr.bf16.mxu0 0
    %4859 = vmatpush1.bf16.xpose.msra.mxu0 0
    %4860 = vmatprep.subr.bf16.mxu0 0
    %4861 = vmatpush1.bf16.xpose.msra.mxu0 0
    %4862 = vmatprep.subr.bf16.mxu0 0
    %4863 = vmatpush1.bf16.xpose.msra.mxu0 0
    %4864 = vmatprep.mubr.bf16.mxu0 0
    %4865 = vmatmul.mubr.bf16.gmra.mrb[0].mxu0 %v4643
    %v4866 = vpop.f32.mrb[0].mxu0
    %v4867 = vadd.f32 0.0, %v4866
    %v4868 = vpop.f32.mrb[0].mxu0
    %v4869 = vpop.f32.mrb[0].mxu0
    %v4870 = vadd.f32 0.0, %v4869
    %v4871 = vpop.f32.mrb[0].mxu0
    %4872 = vdwg.mxu0
    %s4873 = scalar_lea.vmem [#allocation2], 320
    %v4874 = vld [vmem:[%s4873] sm:$0xf]
    %v4875 = vld [vmem:[%s4873 + $0x4] sm:$0xf]
    %v4876 = vld [vmem:[%s4873 + $0x8] sm:$0xf]
    %v4877 = vld [vmem:[%s4873 + $0xc] sm:$0xf]
    %v4878 = vld [vmem:[%s4873 + $0x10] sm:$0xf]
    %v4879 = vld [vmem:[%s4873 + $0x14] sm:$0xf]
    %v4880 = vld [vmem:[%s4873 + $0x18] sm:$0xf]
    %v4881 = vld [vmem:[%s4873 + $0x1c] sm:$0xf]
    %v4882 = vld [vmem:[%s4873 + $0x20] sm:$0xf]
    %v4883 = vld [vmem:[%s4873 + $0x24] sm:$0xf]
    %v4884 = vld [vmem:[%s4873 + $0x28] sm:$0xf]
    %v4885 = vld [vmem:[%s4873 + $0x2c] sm:$0xf]
    %v4886 = vld [vmem:[%s4873 + $0x30] sm:$0xf]
    %v4887 = vld [vmem:[%s4873 + $0x34] sm:$0xf]
    %v4888 = vld [vmem:[%s4873 + $0x38] sm:$0xf]
    %v4889 = vld [vmem:[%s4873 + $0x3c] sm:$0xf]
    %v4894 = vunpack.c.l.b16 %v4874
    %v4895 = vunpack.c.l.b16 %v4875
    %v4896 = vunpack.c.l.b16 %v4876
    %v4897 = vunpack.c.l.b16 %v4877
    %v4898 = vpack.c.b16 %v4895, %v4894
    %v4899 = vpack.c.b16 %v4897, %v4896
    %4902 = vmatprep.subr.bf16.mxu0 0
    %4903 = vmatpush1.bf16.xpose.msra.mxu0 %v4898
    %4904 = vmatprep.subr.bf16.mxu0 0
    %4905 = vmatpush1.bf16.xpose.msra.mxu0 %v4899
    %4906 = vmatprep.subr.bf16.mxu0 0
    %4907 = vmatpush1.bf16.xpose.msra.mxu0 0
    %4908 = vmatprep.subr.bf16.mxu0 0
    %4909 = vmatpush1.bf16.xpose.msra.mxu0 0
    %4910 = vmatprep.subr.bf16.mxu0 0
    %4911 = vmatpush1.bf16.xpose.msra.mxu0 0
    %4912 = vmatprep.subr.bf16.mxu0 0
    %4913 = vmatpush1.bf16.xpose.msra.mxu0 0
    %4914 = vmatprep.subr.bf16.mxu0 0
    %4915 = vmatpush1.bf16.xpose.msra.mxu0 0
    %4916 = vmatprep.subr.bf16.mxu0 0
    %4917 = vmatpush1.bf16.xpose.msra.mxu0 0
    %4918 = vmatprep.subr.bf16.mxu0 0
    %4919 = vmatpush1.bf16.xpose.msra.mxu0 0
    %4920 = vmatprep.subr.bf16.mxu0 0
    %4921 = vmatpush1.bf16.xpose.msra.mxu0 0
    %4922 = vmatprep.subr.bf16.mxu0 0
    %4923 = vmatpush1.bf16.xpose.msra.mxu0 0
    %4924 = vmatprep.subr.bf16.mxu0 0
    %4925 = vmatpush1.bf16.xpose.msra.mxu0 0
    %4926 = vmatprep.subr.bf16.mxu0 0
    %4927 = vmatpush1.bf16.xpose.msra.mxu0 0
    %4928 = vmatprep.subr.bf16.mxu0 0
    %4929 = vmatpush1.bf16.xpose.msra.mxu0 0
    %4930 = vmatprep.subr.bf16.mxu0 0
    %4931 = vmatpush1.bf16.xpose.msra.mxu0 0
    %4932 = vmatprep.subr.bf16.mxu0 0
    %4933 = vmatpush1.bf16.xpose.msra.mxu0 0
    %4934 = vmatprep.mubr.bf16.mxu0 0
    %4935 = vmatmul.mubr.bf16.gmra.mrb[0].mxu0 %v2325
    %v4936 = vpop.f32.mrb[0].mxu0
    %v4937 = vadd.f32 0.0, %v4936
    %v4938 = vpop.f32.mrb[0].mxu0
    %v4939 = vpop.f32.mrb[0].mxu0
    %v4940 = vadd.f32 0.0, %v4939
    %v4941 = vpop.f32.mrb[0].mxu0
    %4942 = vmatprep.mubr.bf16.mxu0 0
    %4943 = vmatmul.mubr.bf16.gmra.mrb[0].mxu0 %v2326
    %v4944 = vpop.f32.mrb[0].mxu0
    %v4945 = vadd.f32 0.0, %v4944
    %v4946 = vpop.f32.mrb[0].mxu0
    %v4947 = vpop.f32.mrb[0].mxu0
    %v4948 = vadd.f32 0.0, %v4947
    %v4949 = vpop.f32.mrb[0].mxu0
    %4950 = vdwg.mxu0
    %v4955 = vunpack.c.l.b16 %v4878
    %v4956 = vunpack.c.l.b16 %v4879
    %v4957 = vunpack.c.l.b16 %v4880
    %v4958 = vunpack.c.l.b16 %v4881
    %v4959 = vpack.c.b16 %v4956, %v4955
    %v4960 = vpack.c.b16 %v4958, %v4957
    %4963 = vmatprep.subr.bf16.mxu0 0
    %4964 = vmatpush1.bf16.xpose.msra.mxu0 %v4959
    %4965 = vmatprep.subr.bf16.mxu0 0
    %4966 = vmatpush1.bf16.xpose.msra.mxu0 %v4960
    %4967 = vmatprep.subr.bf16.mxu0 0
    %4968 = vmatpush1.bf16.xpose.msra.mxu0 0
    %4969 = vmatprep.subr.bf16.mxu0 0
    %4970 = vmatpush1.bf16.xpose.msra.mxu0 0
    %4971 = vmatprep.subr.bf16.mxu0 0
    %4972 = vmatpush1.bf16.xpose.msra.mxu0 0
    %4973 = vmatprep.subr.bf16.mxu0 0
    %4974 = vmatpush1.bf16.xpose.msra.mxu0 0
    %4975 = vmatprep.subr.bf16.mxu0 0
    %4976 = vmatpush1.bf16.xpose.msra.mxu0 0
    %4977 = vmatprep.subr.bf16.mxu0 0
    %4978 = vmatpush1.bf16.xpose.msra.mxu0 0
    %4979 = vmatprep.subr.bf16.mxu0 0
    %4980 = vmatpush1.bf16.xpose.msra.mxu0 0
    %4981 = vmatprep.subr.bf16.mxu0 0
    %4982 = vmatpush1.bf16.xpose.msra.mxu0 0
    %4983 = vmatprep.subr.bf16.mxu0 0
    %4984 = vmatpush1.bf16.xpose.msra.mxu0 0
    %4985 = vmatprep.subr.bf16.mxu0 0
    %4986 = vmatpush1.bf16.xpose.msra.mxu0 0
    %4987 = vmatprep.subr.bf16.mxu0 0
    %4988 = vmatpush1.bf16.xpose.msra.mxu0 0
    %4989 = vmatprep.subr.bf16.mxu0 0
    %4990 = vmatpush1.bf16.xpose.msra.mxu0 0
    %4991 = vmatprep.subr.bf16.mxu0 0
    %4992 = vmatpush1.bf16.xpose.msra.mxu0 0
    %4993 = vmatprep.subr.bf16.mxu0 0
    %4994 = vmatpush1.bf16.xpose.msra.mxu0 0
    %4995 = vmatprep.mubr.bf16.mxu0 0
    %4996 = vmatmul.mubr.bf16.gmra.mrb[0].mxu0 %v2325
    %v4997 = vpop.f32.mrb[0].mxu0
    %v4998 = vadd.f32 0.0, %v4997
    %v4999 = vpop.f32.mrb[0].mxu0
    %v5000 = vpop.f32.mrb[0].mxu0
    %v5001 = vadd.f32 0.0, %v5000
    %v5002 = vpop.f32.mrb[0].mxu0
    %5003 = vmatprep.mubr.bf16.mxu0 0
    %5004 = vmatmul.mubr.bf16.gmra.mrb[0].mxu0 %v2326
    %v5005 = vpop.f32.mrb[0].mxu0
    %v5006 = vadd.f32 0.0, %v5005
    %v5007 = vpop.f32.mrb[0].mxu0
    %v5008 = vpop.f32.mrb[0].mxu0
    %v5009 = vadd.f32 0.0, %v5008
    %v5010 = vpop.f32.mrb[0].mxu0
    %5011 = vdwg.mxu0
    %v5016 = vunpack.c.l.b16 %v4882
    %v5017 = vunpack.c.l.b16 %v4883
    %v5018 = vunpack.c.l.b16 %v4884
    %v5019 = vunpack.c.l.b16 %v4885
    %v5020 = vpack.c.b16 %v5017, %v5016
    %v5021 = vpack.c.b16 %v5019, %v5018
    %5024 = vmatprep.subr.bf16.mxu0 0
    %5025 = vmatpush1.bf16.xpose.msra.mxu0 %v5020
    %5026 = vmatprep.subr.bf16.mxu0 0
    %5027 = vmatpush1.bf16.xpose.msra.mxu0 %v5021
    %5028 = vmatprep.subr.bf16.mxu0 0
    %5029 = vmatpush1.bf16.xpose.msra.mxu0 0
    %5030 = vmatprep.subr.bf16.mxu0 0
    %5031 = vmatpush1.bf16.xpose.msra.mxu0 0
    %5032 = vmatprep.subr.bf16.mxu0 0
    %5033 = vmatpush1.bf16.xpose.msra.mxu0 0
    %5034 = vmatprep.subr.bf16.mxu0 0
    %5035 = vmatpush1.bf16.xpose.msra.mxu0 0
    %5036 = vmatprep.subr.bf16.mxu0 0
    %5037 = vmatpush1.bf16.xpose.msra.mxu0 0
    %5038 = vmatprep.subr.bf16.mxu0 0
    %5039 = vmatpush1.bf16.xpose.msra.mxu0 0
    %5040 = vmatprep.subr.bf16.mxu0 0
    %5041 = vmatpush1.bf16.xpose.msra.mxu0 0
    %5042 = vmatprep.subr.bf16.mxu0 0
    %5043 = vmatpush1.bf16.xpose.msra.mxu0 0
    %5044 = vmatprep.subr.bf16.mxu0 0
    %5045 = vmatpush1.bf16.xpose.msra.mxu0 0
    %5046 = vmatprep.subr.bf16.mxu0 0
    %5047 = vmatpush1.bf16.xpose.msra.mxu0 0
    %5048 = vmatprep.subr.bf16.mxu0 0
    %5049 = vmatpush1.bf16.xpose.msra.mxu0 0
    %5050 = vmatprep.subr.bf16.mxu0 0
    %5051 = vmatpush1.bf16.xpose.msra.mxu0 0
    %5052 = vmatprep.subr.bf16.mxu0 0
    %5053 = vmatpush1.bf16.xpose.msra.mxu0 0
    %5054 = vmatprep.subr.bf16.mxu0 0
    %5055 = vmatpush1.bf16.xpose.msra.mxu0 0
    %5056 = vmatprep.mubr.bf16.mxu0 0
    %5057 = vmatmul.mubr.bf16.gmra.mrb[0].mxu0 %v2325
    %v5058 = vpop.f32.mrb[0].mxu0
    %v5059 = vadd.f32 0.0, %v5058
    %v5060 = vpop.f32.mrb[0].mxu0
    %v5061 = vpop.f32.mrb[0].mxu0
    %v5062 = vadd.f32 0.0, %v5061
    %v5063 = vpop.f32.mrb[0].mxu0
    %5064 = vmatprep.mubr.bf16.mxu0 0
    %5065 = vmatmul.mubr.bf16.gmra.mrb[0].mxu0 %v2326
    %v5066 = vpop.f32.mrb[0].mxu0
    %v5067 = vadd.f32 0.0, %v5066
    %v5068 = vpop.f32.mrb[0].mxu0
    %v5069 = vpop.f32.mrb[0].mxu0
    %v5070 = vadd.f32 0.0, %v5069
    %v5071 = vpop.f32.mrb[0].mxu0
    %5072 = vdwg.mxu0
    %v5077 = vunpack.c.l.b16 %v4886
    %v5078 = vunpack.c.l.b16 %v4887
    %v5079 = vunpack.c.l.b16 %v4888
    %v5080 = vunpack.c.l.b16 %v4889
    %v5081 = vpack.c.b16 %v5078, %v5077
    %v5082 = vpack.c.b16 %v5080, %v5079
    %5085 = vmatprep.subr.bf16.mxu0 0
    %5086 = vmatpush1.bf16.xpose.msra.mxu0 %v5081
    %5087 = vmatprep.subr.bf16.mxu0 0
    %5088 = vmatpush1.bf16.xpose.msra.mxu0 %v5082
    %5089 = vmatprep.subr.bf16.mxu0 0
    %5090 = vmatpush1.bf16.xpose.msra.mxu0 0
    %5091 = vmatprep.subr.bf16.mxu0 0
    %5092 = vmatpush1.bf16.xpose.msra.mxu0 0
    %5093 = vmatprep.subr.bf16.mxu0 0
    %5094 = vmatpush1.bf16.xpose.msra.mxu0 0
    %5095 = vmatprep.subr.bf16.mxu0 0
    %5096 = vmatpush1.bf16.xpose.msra.mxu0 0
    %5097 = vmatprep.subr.bf16.mxu0 0
    %5098 = vmatpush1.bf16.xpose.msra.mxu0 0
    %5099 = vmatprep.subr.bf16.mxu0 0
    %5100 = vmatpush1.bf16.xpose.msra.mxu0 0
    %5101 = vmatprep.subr.bf16.mxu0 0
    %5102 = vmatpush1.bf16.xpose.msra.mxu0 0
    %5103 = vmatprep.subr.bf16.mxu0 0
    %5104 = vmatpush1.bf16.xpose.msra.mxu0 0
    %5105 = vmatprep.subr.bf16.mxu0 0
    %5106 = vmatpush1.bf16.xpose.msra.mxu0 0
    %5107 = vmatprep.subr.bf16.mxu0 0
    %5108 = vmatpush1.bf16.xpose.msra.mxu0 0
    %5109 = vmatprep.subr.bf16.mxu0 0
    %5110 = vmatpush1.bf16.xpose.msra.mxu0 0
    %5111 = vmatprep.subr.bf16.mxu0 0
    %5112 = vmatpush1.bf16.xpose.msra.mxu0 0
    %5113 = vmatprep.subr.bf16.mxu0 0
    %5114 = vmatpush1.bf16.xpose.msra.mxu0 0
    %5115 = vmatprep.subr.bf16.mxu0 0
    %5116 = vmatpush1.bf16.xpose.msra.mxu0 0
    %5117 = vmatprep.mubr.bf16.mxu0 0
    %5118 = vmatmul.mubr.bf16.gmra.mrb[0].mxu0 %v2325
    %v5119 = vpop.f32.mrb[0].mxu0
    %v5120 = vadd.f32 0.0, %v5119
    %v5121 = vpop.f32.mrb[0].mxu0
    %v5122 = vpop.f32.mrb[0].mxu0
    %v5123 = vadd.f32 0.0, %v5122
    %v5124 = vpop.f32.mrb[0].mxu0
    %5125 = vmatprep.mubr.bf16.mxu0 0
    %5126 = vmatmul.mubr.bf16.gmra.mrb[0].mxu0 %v2326
    %v5127 = vpop.f32.mrb[0].mxu0
    %v5128 = vadd.f32 0.0, %v5127
    %v5129 = vpop.f32.mrb[0].mxu0
    %v5130 = vpop.f32.mrb[0].mxu0
    %v5131 = vadd.f32 0.0, %v5130
    %v5132 = vpop.f32.mrb[0].mxu0
    %5133 = vdwg.mxu0
    %s5134 = scalar_lea.vmem [#allocation2], 384
    %v5135 = vld [vmem:[%s5134] sm:$0xf]
    %v5136 = vld [vmem:[%s5134 + $0x4] sm:$0xf]
    %v5137 = vld [vmem:[%s5134 + $0x8] sm:$0xf]
    %v5138 = vld [vmem:[%s5134 + $0xc] sm:$0xf]
    %v5139 = vld [vmem:[%s5134 + $0x10] sm:$0xf]
    %v5140 = vld [vmem:[%s5134 + $0x14] sm:$0xf]
    %v5141 = vld [vmem:[%s5134 + $0x18] sm:$0xf]
    %v5142 = vld [vmem:[%s5134 + $0x1c] sm:$0xf]
    %v5143 = vld [vmem:[%s5134 + $0x20] sm:$0xf]
    %v5144 = vld [vmem:[%s5134 + $0x24] sm:$0xf]
    %v5145 = vld [vmem:[%s5134 + $0x28] sm:$0xf]
    %v5146 = vld [vmem:[%s5134 + $0x2c] sm:$0xf]
    %v5147 = vld [vmem:[%s5134 + $0x30] sm:$0xf]
    %v5148 = vld [vmem:[%s5134 + $0x34] sm:$0xf]
    %v5149 = vld [vmem:[%s5134 + $0x38] sm:$0xf]
    %v5150 = vld [vmem:[%s5134 + $0x3c] sm:$0xf]
    %v5155 = vunpack.c.l.b16 %v5135
    %v5156 = vunpack.c.l.b16 %v5136
    %v5157 = vunpack.c.l.b16 %v5137
    %v5158 = vunpack.c.l.b16 %v5138
    %v5159 = vpack.c.b16 %v5156, %v5155
    %v5160 = vpack.c.b16 %v5158, %v5157
    %5163 = vmatprep.subr.bf16.mxu0 0
    %5164 = vmatpush1.bf16.xpose.msra.mxu0 %v5159
    %5165 = vmatprep.subr.bf16.mxu0 0
    %5166 = vmatpush1.bf16.xpose.msra.mxu0 %v5160
    %5167 = vmatprep.subr.bf16.mxu0 0
    %5168 = vmatpush1.bf16.xpose.msra.mxu0 0
    %5169 = vmatprep.subr.bf16.mxu0 0
    %5170 = vmatpush1.bf16.xpose.msra.mxu0 0
    %5171 = vmatprep.subr.bf16.mxu0 0
    %5172 = vmatpush1.bf16.xpose.msra.mxu0 0
    %5173 = vmatprep.subr.bf16.mxu0 0
    %5174 = vmatpush1.bf16.xpose.msra.mxu0 0
    %5175 = vmatprep.subr.bf16.mxu0 0
    %5176 = vmatpush1.bf16.xpose.msra.mxu0 0
    %5177 = vmatprep.subr.bf16.mxu0 0
    %5178 = vmatpush1.bf16.xpose.msra.mxu0 0
    %5179 = vmatprep.subr.bf16.mxu0 0
    %5180 = vmatpush1.bf16.xpose.msra.mxu0 0
    %5181 = vmatprep.subr.bf16.mxu0 0
    %5182 = vmatpush1.bf16.xpose.msra.mxu0 0
    %5183 = vmatprep.subr.bf16.mxu0 0
    %5184 = vmatpush1.bf16.xpose.msra.mxu0 0
    %5185 = vmatprep.subr.bf16.mxu0 0
    %5186 = vmatpush1.bf16.xpose.msra.mxu0 0
    %5187 = vmatprep.subr.bf16.mxu0 0
    %5188 = vmatpush1.bf16.xpose.msra.mxu0 0
    %5189 = vmatprep.subr.bf16.mxu0 0
    %5190 = vmatpush1.bf16.xpose.msra.mxu0 0
    %5191 = vmatprep.subr.bf16.mxu0 0
    %5192 = vmatpush1.bf16.xpose.msra.mxu0 0
    %5193 = vmatprep.subr.bf16.mxu0 0
    %5194 = vmatpush1.bf16.xpose.msra.mxu0 0
    %5195 = vmatprep.mubr.bf16.mxu0 0
    %5196 = vmatmul.mubr.bf16.gmra.mrb[0].mxu0 %v2325
    %v5197 = vpop.f32.mrb[0].mxu0
    %v5198 = vadd.f32 0.0, %v5197
    %v5199 = vpop.f32.mrb[0].mxu0
    %v5200 = vpop.f32.mrb[0].mxu0
    %v5201 = vadd.f32 0.0, %v5200
    %v5202 = vpop.f32.mrb[0].mxu0
    %5203 = vmatprep.mubr.bf16.mxu0 0
    %5204 = vmatmul.mubr.bf16.gmra.mrb[0].mxu0 %v2326
    %v5205 = vpop.f32.mrb[0].mxu0
    %v5206 = vadd.f32 0.0, %v5205
    %v5207 = vpop.f32.mrb[0].mxu0
    %v5208 = vpop.f32.mrb[0].mxu0
    %v5209 = vadd.f32 0.0, %v5208
    %v5210 = vpop.f32.mrb[0].mxu0
    %5211 = vdwg.mxu0
    %v5216 = vunpack.c.l.b16 %v5139
    %v5217 = vunpack.c.l.b16 %v5140
    %v5218 = vunpack.c.l.b16 %v5141
    %v5219 = vunpack.c.l.b16 %v5142
    %v5220 = vpack.c.b16 %v5217, %v5216
    %v5221 = vpack.c.b16 %v5219, %v5218
    %5224 = vmatprep.subr.bf16.mxu0 0
    %5225 = vmatpush1.bf16.xpose.msra.mxu0 %v5220
    %5226 = vmatprep.subr.bf16.mxu0 0
    %5227 = vmatpush1.bf16.xpose.msra.mxu0 %v5221
    %5228 = vmatprep.subr.bf16.mxu0 0
    %5229 = vmatpush1.bf16.xpose.msra.mxu0 0
    %5230 = vmatprep.subr.bf16.mxu0 0
    %5231 = vmatpush1.bf16.xpose.msra.mxu0 0
    %5232 = vmatprep.subr.bf16.mxu0 0
    %5233 = vmatpush1.bf16.xpose.msra.mxu0 0
    %5234 = vmatprep.subr.bf16.mxu0 0
    %5235 = vmatpush1.bf16.xpose.msra.mxu0 0
    %5236 = vmatprep.subr.bf16.mxu0 0
    %5237 = vmatpush1.bf16.xpose.msra.mxu0 0
    %5238 = vmatprep.subr.bf16.mxu0 0
    %5239 = vmatpush1.bf16.xpose.msra.mxu0 0
    %5240 = vmatprep.subr.bf16.mxu0 0
    %5241 = vmatpush1.bf16.xpose.msra.mxu0 0
    %5242 = vmatprep.subr.bf16.mxu0 0
    %5243 = vmatpush1.bf16.xpose.msra.mxu0 0
    %5244 = vmatprep.subr.bf16.mxu0 0
    %5245 = vmatpush1.bf16.xpose.msra.mxu0 0
    %5246 = vmatprep.subr.bf16.mxu0 0
    %5247 = vmatpush1.bf16.xpose.msra.mxu0 0
    %5248 = vmatprep.subr.bf16.mxu0 0
    %5249 = vmatpush1.bf16.xpose.msra.mxu0 0
    %5250 = vmatprep.subr.bf16.mxu0 0
    %5251 = vmatpush1.bf16.xpose.msra.mxu0 0
    %5252 = vmatprep.subr.bf16.mxu0 0
    %5253 = vmatpush1.bf16.xpose.msra.mxu0 0
    %5254 = vmatprep.subr.bf16.mxu0 0
    %5255 = vmatpush1.bf16.xpose.msra.mxu0 0
    %5256 = vmatprep.mubr.bf16.mxu0 0
    %5257 = vmatmul.mubr.bf16.gmra.mrb[0].mxu0 %v2325
    %v5258 = vpop.f32.mrb[0].mxu0
    %v5259 = vadd.f32 0.0, %v5258
    %v5260 = vpop.f32.mrb[0].mxu0
    %v5261 = vpop.f32.mrb[0].mxu0
    %v5262 = vadd.f32 0.0, %v5261
    %v5263 = vpop.f32.mrb[0].mxu0
    %5264 = vmatprep.mubr.bf16.mxu0 0
    %5265 = vmatmul.mubr.bf16.gmra.mrb[0].mxu0 %v2326
    %v5266 = vpop.f32.mrb[0].mxu0
    %v5267 = vadd.f32 0.0, %v5266
    %v5268 = vpop.f32.mrb[0].mxu0
    %v5269 = vpop.f32.mrb[0].mxu0
    %v5270 = vadd.f32 0.0, %v5269
    %v5271 = vpop.f32.mrb[0].mxu0
    %5272 = vdwg.mxu0
    %v5277 = vunpack.c.l.b16 %v5143
    %v5278 = vunpack.c.l.b16 %v5144
    %v5279 = vunpack.c.l.b16 %v5145
    %v5280 = vunpack.c.l.b16 %v5146
    %v5281 = vpack.c.b16 %v5278, %v5277
    %v5282 = vpack.c.b16 %v5280, %v5279
    %5285 = vmatprep.subr.bf16.mxu0 0
    %5286 = vmatpush1.bf16.xpose.msra.mxu0 %v5281
    %5287 = vmatprep.subr.bf16.mxu0 0
    %5288 = vmatpush1.bf16.xpose.msra.mxu0 %v5282
    %5289 = vmatprep.subr.bf16.mxu0 0
    %5290 = vmatpush1.bf16.xpose.msra.mxu0 0
    %5291 = vmatprep.subr.bf16.mxu0 0
    %5292 = vmatpush1.bf16.xpose.msra.mxu0 0
    %5293 = vmatprep.subr.bf16.mxu0 0
    %5294 = vmatpush1.bf16.xpose.msra.mxu0 0
    %5295 = vmatprep.subr.bf16.mxu0 0
    %5296 = vmatpush1.bf16.xpose.msra.mxu0 0
    %5297 = vmatprep.subr.bf16.mxu0 0
    %5298 = vmatpush1.bf16.xpose.msra.mxu0 0
    %5299 = vmatprep.subr.bf16.mxu0 0
    %5300 = vmatpush1.bf16.xpose.msra.mxu0 0
    %5301 = vmatprep.subr.bf16.mxu0 0
    %5302 = vmatpush1.bf16.xpose.msra.mxu0 0
    %5303 = vmatprep.subr.bf16.mxu0 0
    %5304 = vmatpush1.bf16.xpose.msra.mxu0 0
    %5305 = vmatprep.subr.bf16.mxu0 0
    %5306 = vmatpush1.bf16.xpose.msra.mxu0 0
    %5307 = vmatprep.subr.bf16.mxu0 0
    %5308 = vmatpush1.bf16.xpose.msra.mxu0 0
    %5309 = vmatprep.subr.bf16.mxu0 0
    %5310 = vmatpush1.bf16.xpose.msra.mxu0 0
    %5311 = vmatprep.subr.bf16.mxu0 0
    %5312 = vmatpush1.bf16.xpose.msra.mxu0 0
    %5313 = vmatprep.subr.bf16.mxu0 0
    %5314 = vmatpush1.bf16.xpose.msra.mxu0 0
    %5315 = vmatprep.subr.bf16.mxu0 0
    %5316 = vmatpush1.bf16.xpose.msra.mxu0 0
    %5317 = vmatprep.mubr.bf16.mxu0 0
    %5318 = vmatmul.mubr.bf16.gmra.mrb[0].mxu0 %v2325
    %v5319 = vpop.f32.mrb[0].mxu0
    %v5320 = vadd.f32 0.0, %v5319
    %v5321 = vpop.f32.mrb[0].mxu0
    %v5322 = vpop.f32.mrb[0].mxu0
    %v5323 = vadd.f32 0.0, %v5322
    %v5324 = vpop.f32.mrb[0].mxu0
    %5325 = vmatprep.mubr.bf16.mxu0 0
    %5326 = vmatmul.mubr.bf16.gmra.mrb[0].mxu0 %v2326
    %v5327 = vpop.f32.mrb[0].mxu0
    %v5328 = vadd.f32 0.0, %v5327
    %v5329 = vpop.f32.mrb[0].mxu0
    %v5330 = vpop.f32.mrb[0].mxu0
    %v5331 = vadd.f32 0.0, %v5330
    %v5332 = vpop.f32.mrb[0].mxu0
    %5333 = vdwg.mxu0
    %v5338 = vunpack.c.l.b16 %v5147
    %v5339 = vunpack.c.l.b16 %v5148
    %v5340 = vunpack.c.l.b16 %v5149
    %v5341 = vunpack.c.l.b16 %v5150
    %v5342 = vpack.c.b16 %v5339, %v5338
    %v5343 = vpack.c.b16 %v5341, %v5340
    %5346 = vmatprep.subr.bf16.mxu0 0
    %5347 = vmatpush1.bf16.xpose.msra.mxu0 %v5342
    %5348 = vmatprep.subr.bf16.mxu0 0
    %5349 = vmatpush1.bf16.xpose.msra.mxu0 %v5343
    %5350 = vmatprep.subr.bf16.mxu0 0
    %5351 = vmatpush1.bf16.xpose.msra.mxu0 0
    %5352 = vmatprep.subr.bf16.mxu0 0
    %5353 = vmatpush1.bf16.xpose.msra.mxu0 0
    %5354 = vmatprep.subr.bf16.mxu0 0
    %5355 = vmatpush1.bf16.xpose.msra.mxu0 0
    %5356 = vmatprep.subr.bf16.mxu0 0
    %5357 = vmatpush1.bf16.xpose.msra.mxu0 0
    %5358 = vmatprep.subr.bf16.mxu0 0
    %5359 = vmatpush1.bf16.xpose.msra.mxu0 0
    %5360 = vmatprep.subr.bf16.mxu0 0
    %5361 = vmatpush1.bf16.xpose.msra.mxu0 0
    %5362 = vmatprep.subr.bf16.mxu0 0
    %5363 = vmatpush1.bf16.xpose.msra.mxu0 0
    %5364 = vmatprep.subr.bf16.mxu0 0
    %5365 = vmatpush1.bf16.xpose.msra.mxu0 0
    %5366 = vmatprep.subr.bf16.mxu0 0
    %5367 = vmatpush1.bf16.xpose.msra.mxu0 0
    %5368 = vmatprep.subr.bf16.mxu0 0
    %5369 = vmatpush1.bf16.xpose.msra.mxu0 0
    %5370 = vmatprep.subr.bf16.mxu0 0
    %5371 = vmatpush1.bf16.xpose.msra.mxu0 0
    %5372 = vmatprep.subr.bf16.mxu0 0
    %5373 = vmatpush1.bf16.xpose.msra.mxu0 0
    %5374 = vmatprep.subr.bf16.mxu0 0
    %5375 = vmatpush1.bf16.xpose.msra.mxu0 0
    %5376 = vmatprep.subr.bf16.mxu0 0
    %5377 = vmatpush1.bf16.xpose.msra.mxu0 0
    %5378 = vmatprep.mubr.bf16.mxu0 0
    %5379 = vmatmul.mubr.bf16.gmra.mrb[0].mxu0 %v2325
    %v5380 = vpop.f32.mrb[0].mxu0
    %v5381 = vadd.f32 0.0, %v5380
    %v5382 = vpop.f32.mrb[0].mxu0
    %v5383 = vpop.f32.mrb[0].mxu0
    %v5384 = vadd.f32 0.0, %v5383
    %v5385 = vpop.f32.mrb[0].mxu0
    %5386 = vmatprep.mubr.bf16.mxu0 0
    %5387 = vmatmul.mubr.bf16.gmra.mrb[0].mxu0 %v2326
    %v5388 = vpop.f32.mrb[0].mxu0
    %v5389 = vadd.f32 0.0, %v5388
    %v5390 = vpop.f32.mrb[0].mxu0
    %v5391 = vpop.f32.mrb[0].mxu0
    %v5392 = vadd.f32 0.0, %v5391
    %v5393 = vpop.f32.mrb[0].mxu0
    %5394 = vdwg.mxu0
    %v5395 = vpack.c.bf16 %v4711, %v4708
    %v5396 = vpack.c.bf16 %v4764, %v4761
    %v5397 = vpack.c.bf16 %v4817, %v4814
    %v5398 = vpack.c.bf16 %v4870, %v4867
    %v5399 = vpack.c.bf16 %v4940, %v4937
    %v5400 = vpack.c.bf16 %v4948, %v4945
    %v5401 = vpack.c.bf16 %v5001, %v4998
    %v5402 = vpack.c.bf16 %v5009, %v5006
    %v5403 = vpack.c.bf16 %v5062, %v5059
    %v5404 = vpack.c.bf16 %v5070, %v5067
    %v5405 = vpack.c.bf16 %v5123, %v5120
    %v5406 = vpack.c.bf16 %v5131, %v5128
    %v5408 = vsel %vm3119, %v5395, 0
    %v5411 = vsel %vm3119, %v5399, 0
    %v5414 = vsel %vm3119, %v5400, 0
    %5416 = vmatprep.subr.bf16.mxu0 0
    %5417 = vmatpush1.bf16.xpose.msra.mxu0 %v5411
    %5418 = vmatprep.subr.bf16.mxu0 0
    %5419 = vmatpush1.bf16.xpose.msra.mxu0 %v5414
    %5420 = vmatprep.subr.bf16.mxu0 0
    %5421 = vmatpush1.bf16.xpose.msra.mxu0 0
    %5422 = vmatprep.subr.bf16.mxu0 0
    %5423 = vmatpush1.bf16.xpose.msra.mxu0 0
    %5424 = vmatprep.subr.bf16.mxu0 0
    %5425 = vmatpush1.bf16.xpose.msra.mxu0 0
    %5426 = vmatprep.subr.bf16.mxu0 0
    %5427 = vmatpush1.bf16.xpose.msra.mxu0 0
    %5428 = vmatprep.subr.bf16.mxu0 0
    %5429 = vmatpush1.bf16.xpose.msra.mxu0 0
    %5430 = vmatprep.subr.bf16.mxu0 0
    %5431 = vmatpush1.bf16.xpose.msra.mxu0 0
    %5432 = vmatprep.subr.bf16.mxu0 0
    %5433 = vmatpush1.bf16.xpose.msra.mxu0 0
    %5434 = vmatprep.subr.bf16.mxu0 0
    %5435 = vmatpush1.bf16.xpose.msra.mxu0 0
    %5436 = vmatprep.subr.bf16.mxu0 0
    %5437 = vmatpush1.bf16.xpose.msra.mxu0 0
    %5438 = vmatprep.subr.bf16.mxu0 0
    %5439 = vmatpush1.bf16.xpose.msra.mxu0 0
    %5440 = vmatprep.subr.bf16.mxu0 0
    %5441 = vmatpush1.bf16.xpose.msra.mxu0 0
    %5442 = vmatprep.subr.bf16.mxu0 0
    %5443 = vmatpush1.bf16.xpose.msra.mxu0 0
    %5444 = vmatprep.subr.bf16.mxu0 0
    %5445 = vmatpush1.bf16.xpose.msra.mxu0 0
    %5446 = vmatprep.subr.bf16.mxu0 0
    %5447 = vmatpush1.bf16.xpose.msra.mxu0 0
    %5448 = vmatprep.mubr.bf16.mxu0 0
    %5449 = vmatmul.mubr.bf16.gmra.mrb[0].mxu0 %v5408
    %v5450 = vpop.f32.mrb[0].mxu0
    %v5451 = vadd.f32 0.0, %v5450
    %v5452 = vpop.f32.mrb[0].mxu0
    %v5453 = vpop.f32.mrb[0].mxu0
    %v5454 = vadd.f32 0.0, %v5453
    %v5455 = vpop.f32.mrb[0].mxu0
    %5456 = vdwg.mxu0
    %v5458 = vsel %vm3119, %v5396, 0
    %v5461 = vsel %vm3119, %v5401, 0
    %v5464 = vsel %vm3119, %v5402, 0
    %5466 = vmatprep.subr.bf16.mxu0 0
    %5467 = vmatpush1.bf16.xpose.msra.mxu0 %v5461
    %5468 = vmatprep.subr.bf16.mxu0 0
    %5469 = vmatpush1.bf16.xpose.msra.mxu0 %v5464
    %5470 = vmatprep.subr.bf16.mxu0 0
    %5471 = vmatpush1.bf16.xpose.msra.mxu0 0
    %5472 = vmatprep.subr.bf16.mxu0 0
    %5473 = vmatpush1.bf16.xpose.msra.mxu0 0
    %5474 = vmatprep.subr.bf16.mxu0 0
    %5475 = vmatpush1.bf16.xpose.msra.mxu0 0
    %5476 = vmatprep.subr.bf16.mxu0 0
    %5477 = vmatpush1.bf16.xpose.msra.mxu0 0
    %5478 = vmatprep.subr.bf16.mxu0 0
    %5479 = vmatpush1.bf16.xpose.msra.mxu0 0
    %5480 = vmatprep.subr.bf16.mxu0 0
    %5481 = vmatpush1.bf16.xpose.msra.mxu0 0
    %5482 = vmatprep.subr.bf16.mxu0 0
    %5483 = vmatpush1.bf16.xpose.msra.mxu0 0
    %5484 = vmatprep.subr.bf16.mxu0 0
    %5485 = vmatpush1.bf16.xpose.msra.mxu0 0
    %5486 = vmatprep.subr.bf16.mxu0 0
    %5487 = vmatpush1.bf16.xpose.msra.mxu0 0
    %5488 = vmatprep.subr.bf16.mxu0 0
    %5489 = vmatpush1.bf16.xpose.msra.mxu0 0
    %5490 = vmatprep.subr.bf16.mxu0 0
    %5491 = vmatpush1.bf16.xpose.msra.mxu0 0
    %5492 = vmatprep.subr.bf16.mxu0 0
    %5493 = vmatpush1.bf16.xpose.msra.mxu0 0
    %5494 = vmatprep.subr.bf16.mxu0 0
    %5495 = vmatpush1.bf16.xpose.msra.mxu0 0
    %5496 = vmatprep.subr.bf16.mxu0 0
    %5497 = vmatpush1.bf16.xpose.msra.mxu0 0
    %5498 = vmatprep.mubr.bf16.mxu0 0
    %5499 = vmatmul.mubr.bf16.gmra.mrb[0].mxu0 %v5458
    %v5500 = vpop.f32.mrb[0].mxu0
    %v5501 = vadd.f32 0.0, %v5500
    %v5502 = vpop.f32.mrb[0].mxu0
    %v5503 = vpop.f32.mrb[0].mxu0
    %v5504 = vadd.f32 0.0, %v5503
    %v5505 = vpop.f32.mrb[0].mxu0
    %5506 = vdwg.mxu0
    %v5508 = vsel %vm3119, %v5397, 0
    %v5511 = vsel %vm3119, %v5403, 0
    %v5514 = vsel %vm3119, %v5404, 0
    %5516 = vmatprep.subr.bf16.mxu0 0
    %5517 = vmatpush1.bf16.xpose.msra.mxu0 %v5511
    %5518 = vmatprep.subr.bf16.mxu0 0
    %5519 = vmatpush1.bf16.xpose.msra.mxu0 %v5514
    %5520 = vmatprep.subr.bf16.mxu0 0
    %5521 = vmatpush1.bf16.xpose.msra.mxu0 0
    %5522 = vmatprep.subr.bf16.mxu0 0
    %5523 = vmatpush1.bf16.xpose.msra.mxu0 0
    %5524 = vmatprep.subr.bf16.mxu0 0
    %5525 = vmatpush1.bf16.xpose.msra.mxu0 0
    %5526 = vmatprep.subr.bf16.mxu0 0
    %5527 = vmatpush1.bf16.xpose.msra.mxu0 0
    %5528 = vmatprep.subr.bf16.mxu0 0
    %5529 = vmatpush1.bf16.xpose.msra.mxu0 0
    %5530 = vmatprep.subr.bf16.mxu0 0
    %5531 = vmatpush1.bf16.xpose.msra.mxu0 0
    %5532 = vmatprep.subr.bf16.mxu0 0
    %5533 = vmatpush1.bf16.xpose.msra.mxu0 0
    %5534 = vmatprep.subr.bf16.mxu0 0
    %5535 = vmatpush1.bf16.xpose.msra.mxu0 0
    %5536 = vmatprep.subr.bf16.mxu0 0
    %5537 = vmatpush1.bf16.xpose.msra.mxu0 0
    %5538 = vmatprep.subr.bf16.mxu0 0
    %5539 = vmatpush1.bf16.xpose.msra.mxu0 0
    %5540 = vmatprep.subr.bf16.mxu0 0
    %5541 = vmatpush1.bf16.xpose.msra.mxu0 0
    %5542 = vmatprep.subr.bf16.mxu0 0
    %5543 = vmatpush1.bf16.xpose.msra.mxu0 0
    %5544 = vmatprep.subr.bf16.mxu0 0
    %5545 = vmatpush1.bf16.xpose.msra.mxu0 0
    %5546 = vmatprep.subr.bf16.mxu0 0
    %5547 = vmatpush1.bf16.xpose.msra.mxu0 0
    %5548 = vmatprep.mubr.bf16.mxu0 0
    %5549 = vmatmul.mubr.bf16.gmra.mrb[0].mxu0 %v5508
    %v5550 = vpop.f32.mrb[0].mxu0
    %v5551 = vadd.f32 0.0, %v5550
    %v5552 = vpop.f32.mrb[0].mxu0
    %v5553 = vpop.f32.mrb[0].mxu0
    %v5554 = vadd.f32 0.0, %v5553
    %v5555 = vpop.f32.mrb[0].mxu0
    %5556 = vdwg.mxu0
    %v5558 = vsel %vm3119, %v5398, 0
    %v5561 = vsel %vm3119, %v5405, 0
    %v5564 = vsel %vm3119, %v5406, 0
    %5566 = vmatprep.subr.bf16.mxu0 0
    %5567 = vmatpush1.bf16.xpose.msra.mxu0 %v5561
    %5568 = vmatprep.subr.bf16.mxu0 0
    %5569 = vmatpush1.bf16.xpose.msra.mxu0 %v5564
    %5570 = vmatprep.subr.bf16.mxu0 0
    %5571 = vmatpush1.bf16.xpose.msra.mxu0 0
    %5572 = vmatprep.subr.bf16.mxu0 0
    %5573 = vmatpush1.bf16.xpose.msra.mxu0 0
    %5574 = vmatprep.subr.bf16.mxu0 0
    %5575 = vmatpush1.bf16.xpose.msra.mxu0 0
    %5576 = vmatprep.subr.bf16.mxu0 0
    %5577 = vmatpush1.bf16.xpose.msra.mxu0 0
    %5578 = vmatprep.subr.bf16.mxu0 0
    %5579 = vmatpush1.bf16.xpose.msra.mxu0 0
    %5580 = vmatprep.subr.bf16.mxu0 0
    %5581 = vmatpush1.bf16.xpose.msra.mxu0 0
    %5582 = vmatprep.subr.bf16.mxu0 0
    %5583 = vmatpush1.bf16.xpose.msra.mxu0 0
    %5584 = vmatprep.subr.bf16.mxu0 0
    %5585 = vmatpush1.bf16.xpose.msra.mxu0 0
    %5586 = vmatprep.subr.bf16.mxu0 0
    %5587 = vmatpush1.bf16.xpose.msra.mxu0 0
    %5588 = vmatprep.subr.bf16.mxu0 0
    %5589 = vmatpush1.bf16.xpose.msra.mxu0 0
    %5590 = vmatprep.subr.bf16.mxu0 0
    %5591 = vmatpush1.bf16.xpose.msra.mxu0 0
    %5592 = vmatprep.subr.bf16.mxu0 0
    %5593 = vmatpush1.bf16.xpose.msra.mxu0 0
    %5594 = vmatprep.subr.bf16.mxu0 0
    %5595 = vmatpush1.bf16.xpose.msra.mxu0 0
    %5596 = vmatprep.subr.bf16.mxu0 0
    %5597 = vmatpush1.bf16.xpose.msra.mxu0 0
    %5598 = vmatprep.mubr.bf16.mxu0 0
    %5599 = vmatmul.mubr.bf16.gmra.mrb[0].mxu0 %v5558
    %v5600 = vpop.f32.mrb[0].mxu0
    %v5601 = vadd.f32 0.0, %v5600
    %v5602 = vpop.f32.mrb[0].mxu0
    %v5603 = vpop.f32.mrb[0].mxu0
    %v5604 = vadd.f32 0.0, %v5603
    %v5605 = vpop.f32.mrb[0].mxu0
    %5606 = vdwg.mxu0
    %v5607 = vmul.f32 %v5451, 0.17677669
    %v5608 = vmul.f32 %v5454, 0.17677669
    %v5609 = vmul.f32 %v5501, 0.17677669
    %v5610 = vmul.f32 %v5504, 0.17677669
    %v5611 = vmul.f32 %v5551, 0.17677669
    %v5612 = vmul.f32 %v5554, 0.17677669
    %v5613 = vmul.f32 %v5601, 0.17677669
    %v5614 = vmul.f32 %v5604, 0.17677669
    %v5615 = vadd.f32 %v5607, %v2323
    %v5616 = vadd.f32 %v5608, %v2324
    %v5617 = vadd.f32 %v5609, %v2323
    %v5618 = vadd.f32 %v5610, %v2324
    %v5619 = vadd.f32 %v5611, %v2323
    %v5620 = vadd.f32 %v5612, %v2324
    %v5621 = vadd.f32 %v5613, %v2323
    %v5622 = vadd.f32 %v5614, %v2324
    %v5623 = vsel %vm3119, %v5615, -inf
    %5624 = vmax.xlane.f32.xlu0 %v5623
    %v5625 = vpop.xlane.xlu0 %5624
    %v5626 = vsel %vm3119, %v5616, -inf
    %5627 = vmax.xlane.f32.xlu0 %v5626
    %v5628 = vpop.xlane.xlu0 %5627
    %v5629 = vsel %vm3119, %v5617, -inf
    %5630 = vmax.xlane.f32.xlu0 %v5629
    %v5631 = vpop.xlane.xlu0 %5630
    %v5632 = vsel %vm3119, %v5618, -inf
    %5633 = vmax.xlane.f32.xlu0 %v5632
    %v5634 = vpop.xlane.xlu0 %5633
    %v5635 = vsel %vm3119, %v5619, -inf
    %5636 = vmax.xlane.f32.xlu0 %v5635
    %v5637 = vpop.xlane.xlu0 %5636
    %v5638 = vsel %vm3119, %v5620, -inf
    %5639 = vmax.xlane.f32.xlu0 %v5638
    %v5640 = vpop.xlane.xlu0 %5639
    %v5641 = vsel %vm3119, %v5621, -inf
    %5642 = vmax.xlane.f32.xlu0 %v5641
    %v5643 = vpop.xlane.xlu0 %5642
    %v5644 = vsel %vm3119, %v5622, -inf
    %5645 = vmax.xlane.f32.xlu0 %v5644
    %v5646 = vpop.xlane.xlu0 %5645
    %v5647 = vsub.f32 %v5615, %v5625
    %v5648 = vsub.f32 %v5616, %v5628
    %v5649 = vsub.f32 %v5617, %v5631
    %v5650 = vsub.f32 %v5618, %v5634
    %v5651 = vsub.f32 %v5619, %v5637
    %v5652 = vsub.f32 %v5620, %v5640
    %v5653 = vsub.f32 %v5621, %v5643
    %v5654 = vsub.f32 %v5622, %v5646
    %v5655 = vmul.f32 %v5647, 1.442695
    %v5656 = vpow.pop %v5655
    %v5657 = vmul.f32 %v5648, 1.442695
    %v5658 = vpow.pop %v5657
    %v5659 = vmul.f32 %v5649, 1.442695
    %v5660 = vpow.pop %v5659
    %v5661 = vmul.f32 %v5650, 1.442695
    %v5662 = vpow.pop %v5661
    %v5663 = vmul.f32 %v5651, 1.442695
    %v5664 = vpow.pop %v5663
    %v5665 = vmul.f32 %v5652, 1.442695
    %v5666 = vpow.pop %v5665
    %v5667 = vmul.f32 %v5653, 1.442695
    %v5668 = vpow.pop %v5667
    %v5669 = vmul.f32 %v5654, 1.442695
    %v5670 = vpow.pop %v5669
    %v5671 = vsel %vm3119, %v5656, 0.0
    %5672 = vadd.xlane.f32.xlu0 %v5671
    %v5673 = vpop.xlane.xlu0 %5672
    %v5674 = vsel %vm3119, %v5658, 0.0
    %5675 = vadd.xlane.f32.xlu0 %v5674
    %v5676 = vpop.xlane.xlu0 %5675
    %v5677 = vsel %vm3119, %v5660, 0.0
    %5678 = vadd.xlane.f32.xlu0 %v5677
    %v5679 = vpop.xlane.xlu0 %5678
    %v5680 = vsel %vm3119, %v5662, 0.0
    %5681 = vadd.xlane.f32.xlu0 %v5680
    %v5682 = vpop.xlane.xlu0 %5681
    %v5683 = vsel %vm3119, %v5664, 0.0
    %5684 = vadd.xlane.f32.xlu0 %v5683
    %v5685 = vpop.xlane.xlu0 %5684
    %v5686 = vsel %vm3119, %v5666, 0.0
    %5687 = vadd.xlane.f32.xlu0 %v5686
    %v5688 = vpop.xlane.xlu0 %5687
    %v5689 = vsel %vm3119, %v5668, 0.0
    %5690 = vadd.xlane.f32.xlu0 %v5689
    %v5691 = vpop.xlane.xlu0 %5690
    %v5692 = vsel %vm3119, %v5670, 0.0
    %5693 = vadd.xlane.f32.xlu0 %v5692
    %v5694 = vpop.xlane.xlu0 %5693
    %v5695 = vrcp.pop %v5673
    %v5696 = vrcp.pop %v5676
    %v5697 = vrcp.pop %v5679
    %v5698 = vrcp.pop %v5682
    %v5699 = vrcp.pop %v5685
    %v5700 = vrcp.pop %v5688
    %v5701 = vrcp.pop %v5691
    %v5702 = vrcp.pop %v5694
    %v5703 = vmul.f32 %v5656, %v5695
    %v5704 = vmul.f32 %v5658, %v5696
    %v5705 = vmul.f32 %v5660, %v5697
    %v5706 = vmul.f32 %v5662, %v5698
    %v5707 = vmul.f32 %v5664, %v5699
    %v5708 = vmul.f32 %v5666, %v5700
    %v5709 = vmul.f32 %v5668, %v5701
    %v5710 = vmul.f32 %v5670, %v5702
    %v5711 = vpack.c.bf16 %v5704, %v5703
    %v5712 = vpack.c.bf16 %v5706, %v5705
    %v5713 = vpack.c.bf16 %v5708, %v5707
    %v5714 = vpack.c.bf16 %v5710, %v5709
    %v5715 = vpack.c.bf16 %v5201, %v5198
    %v5716 = vpack.c.bf16 %v5209, %v5206
    %v5717 = vpack.c.bf16 %v5262, %v5259
    %v5718 = vpack.c.bf16 %v5270, %v5267
    %v5719 = vpack.c.bf16 %v5323, %v5320
    %v5720 = vpack.c.bf16 %v5331, %v5328
    %v5721 = vpack.c.bf16 %v5384, %v5381
    %v5722 = vpack.c.bf16 %v5392, %v5389
    %v5724 = vsel %vm3119, %v5711, 0
    %5726 = vmatprep.subr.bf16.mxu0 0
    %5727 = vmatpush1.bf16.msra.mxu0 %v5715
    %5728 = vmatprep.subr.bf16.mxu0 0
    %5729 = vmatpush1.bf16.msra.mxu0 %v5716
    %5730 = vmatprep.subr.bf16.mxu0 0
    %5731 = vmatpush1.bf16.msra.mxu0 0
    %5732 = vmatprep.subr.bf16.mxu0 0
    %5733 = vmatpush1.bf16.msra.mxu0 0
    %5734 = vmatprep.subr.bf16.mxu0 0
    %5735 = vmatpush1.bf16.msra.mxu0 0
    %5736 = vmatprep.subr.bf16.mxu0 0
    %5737 = vmatpush1.bf16.msra.mxu0 0
    %5738 = vmatprep.subr.bf16.mxu0 0
    %5739 = vmatpush1.bf16.msra.mxu0 0
    %5740 = vmatprep.subr.bf16.mxu0 0
    %5741 = vmatpush1.bf16.msra.mxu0 0
    %5742 = vmatprep.subr.bf16.mxu0 0
    %5743 = vmatpush1.bf16.msra.mxu0 0
    %5744 = vmatprep.subr.bf16.mxu0 0
    %5745 = vmatpush1.bf16.msra.mxu0 0
    %5746 = vmatprep.subr.bf16.mxu0 0
    %5747 = vmatpush1.bf16.msra.mxu0 0
    %5748 = vmatprep.subr.bf16.mxu0 0
    %5749 = vmatpush1.bf16.msra.mxu0 0
    %5750 = vmatprep.subr.bf16.mxu0 0
    %5751 = vmatpush1.bf16.msra.mxu0 0
    %5752 = vmatprep.subr.bf16.mxu0 0
    %5753 = vmatpush1.bf16.msra.mxu0 0
    %5754 = vmatprep.subr.bf16.mxu0 0
    %5755 = vmatpush1.bf16.msra.mxu0 0
    %5756 = vmatprep.subr.bf16.mxu0 0
    %5757 = vmatpush1.bf16.msra.mxu0 0
    %5758 = vmatprep.mubr.bf16.mxu0 0
    %5759 = vmatmul.mubr.bf16.gmra.mrb[0].mxu0 %v5724
    %v5760 = vpop.f32.mrb[0].mxu0
    %v5761 = vadd.f32 0.0, %v5760
    %v5762 = vpop.f32.mrb[0].mxu0
    %v5763 = vpop.f32.mrb[0].mxu0
    %v5764 = vadd.f32 0.0, %v5763
    %v5765 = vpop.f32.mrb[0].mxu0
    %5766 = vdwg.mxu0
    %v5768 = vsel %vm3119, %v5712, 0
    %5770 = vmatprep.subr.bf16.mxu0 0
    %5771 = vmatpush1.bf16.msra.mxu0 %v5717
    %5772 = vmatprep.subr.bf16.mxu0 0
    %5773 = vmatpush1.bf16.msra.mxu0 %v5718
    %5774 = vmatprep.subr.bf16.mxu0 0
    %5775 = vmatpush1.bf16.msra.mxu0 0
    %5776 = vmatprep.subr.bf16.mxu0 0
    %5777 = vmatpush1.bf16.msra.mxu0 0
    %5778 = vmatprep.subr.bf16.mxu0 0
    %5779 = vmatpush1.bf16.msra.mxu0 0
    %5780 = vmatprep.subr.bf16.mxu0 0
    %5781 = vmatpush1.bf16.msra.mxu0 0
    %5782 = vmatprep.subr.bf16.mxu0 0
    %5783 = vmatpush1.bf16.msra.mxu0 0
    %5784 = vmatprep.subr.bf16.mxu0 0
    %5785 = vmatpush1.bf16.msra.mxu0 0
    %5786 = vmatprep.subr.bf16.mxu0 0
    %5787 = vmatpush1.bf16.msra.mxu0 0
    %5788 = vmatprep.subr.bf16.mxu0 0
    %5789 = vmatpush1.bf16.msra.mxu0 0
    %5790 = vmatprep.subr.bf16.mxu0 0
    %5791 = vmatpush1.bf16.msra.mxu0 0
    %5792 = vmatprep.subr.bf16.mxu0 0
    %5793 = vmatpush1.bf16.msra.mxu0 0
    %5794 = vmatprep.subr.bf16.mxu0 0
    %5795 = vmatpush1.bf16.msra.mxu0 0
    %5796 = vmatprep.subr.bf16.mxu0 0
    %5797 = vmatpush1.bf16.msra.mxu0 0
    %5798 = vmatprep.subr.bf16.mxu0 0
    %5799 = vmatpush1.bf16.msra.mxu0 0
    %5800 = vmatprep.subr.bf16.mxu0 0
    %5801 = vmatpush1.bf16.msra.mxu0 0
    %5802 = vmatprep.mubr.bf16.mxu0 0
    %5803 = vmatmul.mubr.bf16.gmra.mrb[0].mxu0 %v5768
    %v5804 = vpop.f32.mrb[0].mxu0
    %v5805 = vadd.f32 0.0, %v5804
    %v5806 = vpop.f32.mrb[0].mxu0
    %v5807 = vpop.f32.mrb[0].mxu0
    %v5808 = vadd.f32 0.0, %v5807
    %v5809 = vpop.f32.mrb[0].mxu0
    %5810 = vdwg.mxu0
    %v5812 = vsel %vm3119, %v5713, 0
    %5814 = vmatprep.subr.bf16.mxu0 0
    %5815 = vmatpush1.bf16.msra.mxu0 %v5719
    %5816 = vmatprep.subr.bf16.mxu0 0
    %5817 = vmatpush1.bf16.msra.mxu0 %v5720
    %5818 = vmatprep.subr.bf16.mxu0 0
    %5819 = vmatpush1.bf16.msra.mxu0 0
    %5820 = vmatprep.subr.bf16.mxu0 0
    %5821 = vmatpush1.bf16.msra.mxu0 0
    %5822 = vmatprep.subr.bf16.mxu0 0
    %5823 = vmatpush1.bf16.msra.mxu0 0
    %5824 = vmatprep.subr.bf16.mxu0 0
    %5825 = vmatpush1.bf16.msra.mxu0 0
    %5826 = vmatprep.subr.bf16.mxu0 0
    %5827 = vmatpush1.bf16.msra.mxu0 0
    %5828 = vmatprep.subr.bf16.mxu0 0
    %5829 = vmatpush1.bf16.msra.mxu0 0
    %5830 = vmatprep.subr.bf16.mxu0 0
    %5831 = vmatpush1.bf16.msra.mxu0 0
    %5832 = vmatprep.subr.bf16.mxu0 0
    %5833 = vmatpush1.bf16.msra.mxu0 0
    %5834 = vmatprep.subr.bf16.mxu0 0
    %5835 = vmatpush1.bf16.msra.mxu0 0
    %5836 = vmatprep.subr.bf16.mxu0 0
    %5837 = vmatpush1.bf16.msra.mxu0 0
    %5838 = vmatprep.subr.bf16.mxu0 0
    %5839 = vmatpush1.bf16.msra.mxu0 0
    %5840 = vmatprep.subr.bf16.mxu0 0
    %5841 = vmatpush1.bf16.msra.mxu0 0
    %5842 = vmatprep.subr.bf16.mxu0 0
    %5843 = vmatpush1.bf16.msra.mxu0 0
    %5844 = vmatprep.subr.bf16.mxu0 0
    %5845 = vmatpush1.bf16.msra.mxu0 0
    %5846 = vmatprep.mubr.bf16.mxu0 0
    %5847 = vmatmul.mubr.bf16.gmra.mrb[0].mxu0 %v5812
    %v5848 = vpop.f32.mrb[0].mxu0
    %v5849 = vadd.f32 0.0, %v5848
    %v5850 = vpop.f32.mrb[0].mxu0
    %v5851 = vpop.f32.mrb[0].mxu0
    %v5852 = vadd.f32 0.0, %v5851
    %v5853 = vpop.f32.mrb[0].mxu0
    %5854 = vdwg.mxu0
    %v5856 = vsel %vm3119, %v5714, 0
    %5858 = vmatprep.subr.bf16.mxu0 0
    %5859 = vmatpush1.bf16.msra.mxu0 %v5721
    %5860 = vmatprep.subr.bf16.mxu0 0
    %5861 = vmatpush1.bf16.msra.mxu0 %v5722
    %5862 = vmatprep.subr.bf16.mxu0 0
    %5863 = vmatpush1.bf16.msra.mxu0 0
    %5864 = vmatprep.subr.bf16.mxu0 0
    %5865 = vmatpush1.bf16.msra.mxu0 0
    %5866 = vmatprep.subr.bf16.mxu0 0
    %5867 = vmatpush1.bf16.msra.mxu0 0
    %5868 = vmatprep.subr.bf16.mxu0 0
    %5869 = vmatpush1.bf16.msra.mxu0 0
    %5870 = vmatprep.subr.bf16.mxu0 0
    %5871 = vmatpush1.bf16.msra.mxu0 0
    %5872 = vmatprep.subr.bf16.mxu0 0
    %5873 = vmatpush1.bf16.msra.mxu0 0
    %5874 = vmatprep.subr.bf16.mxu0 0
    %5875 = vmatpush1.bf16.msra.mxu0 0
    %5876 = vmatprep.subr.bf16.mxu0 0
    %5877 = vmatpush1.bf16.msra.mxu0 0
    %5878 = vmatprep.subr.bf16.mxu0 0
    %5879 = vmatpush1.bf16.msra.mxu0 0
    %5880 = vmatprep.subr.bf16.mxu0 0
    %5881 = vmatpush1.bf16.msra.mxu0 0
    %5882 = vmatprep.subr.bf16.mxu0 0
    %5883 = vmatpush1.bf16.msra.mxu0 0
    %5884 = vmatprep.subr.bf16.mxu0 0
    %5885 = vmatpush1.bf16.msra.mxu0 0
    %5886 = vmatprep.subr.bf16.mxu0 0
    %5887 = vmatpush1.bf16.msra.mxu0 0
    %5888 = vmatprep.subr.bf16.mxu0 0
    %5889 = vmatpush1.bf16.msra.mxu0 0
    %5890 = vmatprep.mubr.bf16.mxu0 0
    %5891 = vmatmul.mubr.bf16.gmra.mrb[0].mxu0 %v5856
    %v5892 = vpop.f32.mrb[0].mxu0
    %v5893 = vadd.f32 0.0, %v5892
    %v5894 = vpop.f32.mrb[0].mxu0
    %v5895 = vpop.f32.mrb[0].mxu0
    %v5896 = vadd.f32 0.0, %v5895
    %v5897 = vpop.f32.mrb[0].mxu0
    %5898 = vdwg.mxu0
    %s5899 = scalar_lea.vmem [#allocation2], 448
    %v5900 = vld [vmem:[%s5899] sm:$0xf]
    %v5901 = vld [vmem:[%s5899 + $0x4] sm:$0xf]
    %v5902 = vld [vmem:[%s5899 + $0x8] sm:$0xf]
    %v5903 = vld [vmem:[%s5899 + $0xc] sm:$0xf]
    %v5904 = vld [vmem:[%s5899 + $0x10] sm:$0xf]
    %v5905 = vld [vmem:[%s5899 + $0x14] sm:$0xf]
    %v5906 = vld [vmem:[%s5899 + $0x18] sm:$0xf]
    %v5907 = vld [vmem:[%s5899 + $0x1c] sm:$0xf]
    %v5908 = vld [vmem:[%s5899 + $0x20] sm:$0xf]
    %v5909 = vld [vmem:[%s5899 + $0x24] sm:$0xf]
    %v5910 = vld [vmem:[%s5899 + $0x28] sm:$0xf]
    %v5911 = vld [vmem:[%s5899 + $0x2c] sm:$0xf]
    %v5912 = vld [vmem:[%s5899 + $0x30] sm:$0xf]
    %v5913 = vld [vmem:[%s5899 + $0x34] sm:$0xf]
    %v5914 = vld [vmem:[%s5899 + $0x38] sm:$0xf]
    %v5915 = vld [vmem:[%s5899 + $0x3c] sm:$0xf]
    %v5916 = vpack.c.bf16 %v5764, %v5761
    %v5917 = vpack.c.bf16 %v5808, %v5805
    %v5918 = vpack.c.bf16 %v5852, %v5849
    %v5919 = vpack.c.bf16 %v5896, %v5893
    %v5924 = vunpack.c.l.b16 %v5900
    %v5925 = vunpack.c.l.b16 %v5901
    %v5926 = vunpack.c.l.b16 %v5902
    %v5927 = vunpack.c.l.b16 %v5903
    %v5928 = vpack.c.b16 %v5925, %v5924
    %v5929 = vpack.c.b16 %v5927, %v5926
    %v5933 = vsel %vm3119, %v5916, 0
    %5935 = vmatprep.subr.bf16.mxu0 0
    %5936 = vmatpush1.bf16.msra.mxu0 %v5928
    %5937 = vmatprep.subr.bf16.mxu0 0
    %5938 = vmatpush1.bf16.msra.mxu0 %v5929
    %5939 = vmatprep.subr.bf16.mxu0 0
    %5940 = vmatpush1.bf16.msra.mxu0 0
    %5941 = vmatprep.subr.bf16.mxu0 0
    %5942 = vmatpush1.bf16.msra.mxu0 0
    %5943 = vmatprep.subr.bf16.mxu0 0
    %5944 = vmatpush1.bf16.msra.mxu0 0
    %5945 = vmatprep.subr.bf16.mxu0 0
    %5946 = vmatpush1.bf16.msra.mxu0 0
    %5947 = vmatprep.subr.bf16.mxu0 0
    %5948 = vmatpush1.bf16.msra.mxu0 0
    %5949 = vmatprep.subr.bf16.mxu0 0
    %5950 = vmatpush1.bf16.msra.mxu0 0
    %5951 = vmatprep.subr.bf16.mxu0 0
    %5952 = vmatpush1.bf16.msra.mxu0 0
    %5953 = vmatprep.subr.bf16.mxu0 0
    %5954 = vmatpush1.bf16.msra.mxu0 0
    %5955 = vmatprep.subr.bf16.mxu0 0
    %5956 = vmatpush1.bf16.msra.mxu0 0
    %5957 = vmatprep.subr.bf16.mxu0 0
    %5958 = vmatpush1.bf16.msra.mxu0 0
    %5959 = vmatprep.subr.bf16.mxu0 0
    %5960 = vmatpush1.bf16.msra.mxu0 0
    %5961 = vmatprep.subr.bf16.mxu0 0
    %5962 = vmatpush1.bf16.msra.mxu0 0
    %5963 = vmatprep.subr.bf16.mxu0 0
    %5964 = vmatpush1.bf16.msra.mxu0 0
    %5965 = vmatprep.subr.bf16.mxu0 0
    %5966 = vmatpush1.bf16.msra.mxu0 0
    %5967 = vmatprep.mubr.bf16.mxu0 0
    %5968 = vmatmul.mubr.bf16.gmra.mrb[0].mxu0 %v5933
    %v5969 = vpop.f32.mrb[0].mxu0
    %v5970 = vadd.f32 0.0, %v5969
    %v5971 = vpop.f32.mrb[0].mxu0
    %v5972 = vpop.f32.mrb[0].mxu0
    %v5973 = vadd.f32 0.0, %v5972
    %v5974 = vpop.f32.mrb[0].mxu0
    %5975 = vdwg.mxu0
    %v5980 = vunpack.c.l.b16 %v5904
    %v5981 = vunpack.c.l.b16 %v5905
    %v5982 = vunpack.c.l.b16 %v5906
    %v5983 = vunpack.c.l.b16 %v5907
    %v5984 = vpack.c.b16 %v5981, %v5980
    %v5985 = vpack.c.b16 %v5983, %v5982
    %v5989 = vsel %vm3119, %v5917, 0
    %5991 = vmatprep.subr.bf16.mxu0 0
    %5992 = vmatpush1.bf16.msra.mxu0 %v5984
    %5993 = vmatprep.subr.bf16.mxu0 0
    %5994 = vmatpush1.bf16.msra.mxu0 %v5985
    %5995 = vmatprep.subr.bf16.mxu0 0
    %5996 = vmatpush1.bf16.msra.mxu0 0
    %5997 = vmatprep.subr.bf16.mxu0 0
    %5998 = vmatpush1.bf16.msra.mxu0 0
    %5999 = vmatprep.subr.bf16.mxu0 0
    %6000 = vmatpush1.bf16.msra.mxu0 0
    %6001 = vmatprep.subr.bf16.mxu0 0
    %6002 = vmatpush1.bf16.msra.mxu0 0
    %6003 = vmatprep.subr.bf16.mxu0 0
    %6004 = vmatpush1.bf16.msra.mxu0 0
    %6005 = vmatprep.subr.bf16.mxu0 0
    %6006 = vmatpush1.bf16.msra.mxu0 0
    %6007 = vmatprep.subr.bf16.mxu0 0
    %6008 = vmatpush1.bf16.msra.mxu0 0
    %6009 = vmatprep.subr.bf16.mxu0 0
    %6010 = vmatpush1.bf16.msra.mxu0 0
    %6011 = vmatprep.subr.bf16.mxu0 0
    %6012 = vmatpush1.bf16.msra.mxu0 0
    %6013 = vmatprep.subr.bf16.mxu0 0
    %6014 = vmatpush1.bf16.msra.mxu0 0
    %6015 = vmatprep.subr.bf16.mxu0 0
    %6016 = vmatpush1.bf16.msra.mxu0 0
    %6017 = vmatprep.subr.bf16.mxu0 0
    %6018 = vmatpush1.bf16.msra.mxu0 0
    %6019 = vmatprep.subr.bf16.mxu0 0
    %6020 = vmatpush1.bf16.msra.mxu0 0
    %6021 = vmatprep.subr.bf16.mxu0 0
    %6022 = vmatpush1.bf16.msra.mxu0 0
    %6023 = vmatprep.mubr.bf16.mxu0 0
    %6024 = vmatmul.mubr.bf16.gmra.mrb[0].mxu0 %v5989
    %v6025 = vpop.f32.mrb[0].mxu0
    %v6026 = vadd.f32 0.0, %v6025
    %v6027 = vpop.f32.mrb[0].mxu0
    %v6028 = vpop.f32.mrb[0].mxu0
    %v6029 = vadd.f32 0.0, %v6028
    %v6030 = vpop.f32.mrb[0].mxu0
    %6031 = vdwg.mxu0
    %v6036 = vunpack.c.l.b16 %v5908
    %v6037 = vunpack.c.l.b16 %v5909
    %v6038 = vunpack.c.l.b16 %v5910
    %v6039 = vunpack.c.l.b16 %v5911
    %v6040 = vpack.c.b16 %v6037, %v6036
    %v6041 = vpack.c.b16 %v6039, %v6038
    %v6045 = vsel %vm3119, %v5918, 0
    %6047 = vmatprep.subr.bf16.mxu0 0
    %6048 = vmatpush1.bf16.msra.mxu0 %v6040
    %6049 = vmatprep.subr.bf16.mxu0 0
    %6050 = vmatpush1.bf16.msra.mxu0 %v6041
    %6051 = vmatprep.subr.bf16.mxu0 0
    %6052 = vmatpush1.bf16.msra.mxu0 0
    %6053 = vmatprep.subr.bf16.mxu0 0
    %6054 = vmatpush1.bf16.msra.mxu0 0
    %6055 = vmatprep.subr.bf16.mxu0 0
    %6056 = vmatpush1.bf16.msra.mxu0 0
    %6057 = vmatprep.subr.bf16.mxu0 0
    %6058 = vmatpush1.bf16.msra.mxu0 0
    %6059 = vmatprep.subr.bf16.mxu0 0
    %6060 = vmatpush1.bf16.msra.mxu0 0
    %6061 = vmatprep.subr.bf16.mxu0 0
    %6062 = vmatpush1.bf16.msra.mxu0 0
    %6063 = vmatprep.subr.bf16.mxu0 0
    %6064 = vmatpush1.bf16.msra.mxu0 0
    %6065 = vmatprep.subr.bf16.mxu0 0
    %6066 = vmatpush1.bf16.msra.mxu0 0
    %6067 = vmatprep.subr.bf16.mxu0 0
    %6068 = vmatpush1.bf16.msra.mxu0 0
    %6069 = vmatprep.subr.bf16.mxu0 0
    %6070 = vmatpush1.bf16.msra.mxu0 0
    %6071 = vmatprep.subr.bf16.mxu0 0
    %6072 = vmatpush1.bf16.msra.mxu0 0
    %6073 = vmatprep.subr.bf16.mxu0 0
    %6074 = vmatpush1.bf16.msra.mxu0 0
    %6075 = vmatprep.subr.bf16.mxu0 0
    %6076 = vmatpush1.bf16.msra.mxu0 0
    %6077 = vmatprep.subr.bf16.mxu0 0
    %6078 = vmatpush1.bf16.msra.mxu0 0
    %6079 = vmatprep.mubr.bf16.mxu0 0
    %6080 = vmatmul.mubr.bf16.gmra.mrb[0].mxu0 %v6045
    %v6081 = vpop.f32.mrb[0].mxu0
    %v6082 = vadd.f32 0.0, %v6081
    %v6083 = vpop.f32.mrb[0].mxu0
    %v6084 = vpop.f32.mrb[0].mxu0
    %v6085 = vadd.f32 0.0, %v6084
    %v6086 = vpop.f32.mrb[0].mxu0
    %6087 = vdwg.mxu0
    %v6092 = vunpack.c.l.b16 %v5912
    %v6093 = vunpack.c.l.b16 %v5913
    %v6094 = vunpack.c.l.b16 %v5914
    %v6095 = vunpack.c.l.b16 %v5915
    %v6096 = vpack.c.b16 %v6093, %v6092
    %v6097 = vpack.c.b16 %v6095, %v6094
    %v6101 = vsel %vm3119, %v5919, 0
    %6103 = vmatprep.subr.bf16.mxu0 0
    %6104 = vmatpush1.bf16.msra.mxu0 %v6096
    %6105 = vmatprep.subr.bf16.mxu0 0
    %6106 = vmatpush1.bf16.msra.mxu0 %v6097
    %6107 = vmatprep.subr.bf16.mxu0 0
    %6108 = vmatpush1.bf16.msra.mxu0 0
    %6109 = vmatprep.subr.bf16.mxu0 0
    %6110 = vmatpush1.bf16.msra.mxu0 0
    %6111 = vmatprep.subr.bf16.mxu0 0
    %6112 = vmatpush1.bf16.msra.mxu0 0
    %6113 = vmatprep.subr.bf16.mxu0 0
    %6114 = vmatpush1.bf16.msra.mxu0 0
    %6115 = vmatprep.subr.bf16.mxu0 0
    %6116 = vmatpush1.bf16.msra.mxu0 0
    %6117 = vmatprep.subr.bf16.mxu0 0
    %6118 = vmatpush1.bf16.msra.mxu0 0
    %6119 = vmatprep.subr.bf16.mxu0 0
    %6120 = vmatpush1.bf16.msra.mxu0 0
    %6121 = vmatprep.subr.bf16.mxu0 0
    %6122 = vmatpush1.bf16.msra.mxu0 0
    %6123 = vmatprep.subr.bf16.mxu0 0
    %6124 = vmatpush1.bf16.msra.mxu0 0
    %6125 = vmatprep.subr.bf16.mxu0 0
    %6126 = vmatpush1.bf16.msra.mxu0 0
    %6127 = vmatprep.subr.bf16.mxu0 0
    %6128 = vmatpush1.bf16.msra.mxu0 0
    %6129 = vmatprep.subr.bf16.mxu0 0
    %6130 = vmatpush1.bf16.msra.mxu0 0
    %6131 = vmatprep.subr.bf16.mxu0 0
    %6132 = vmatpush1.bf16.msra.mxu0 0
    %6133 = vmatprep.subr.bf16.mxu0 0
    %6134 = vmatpush1.bf16.msra.mxu0 0
    %6135 = vmatprep.mubr.bf16.mxu0 0
    %6136 = vmatmul.mubr.bf16.gmra.mrb[0].mxu0 %v6101
    %v6137 = vpop.f32.mrb[0].mxu0
    %v6138 = vadd.f32 0.0, %v6137
    %v6139 = vpop.f32.mrb[0].mxu0
    %v6140 = vpop.f32.mrb[0].mxu0
    %v6141 = vadd.f32 0.0, %v6140
    %v6142 = vpop.f32.mrb[0].mxu0
    %6143 = vdwg.mxu0
    %v6144 = vadd.f32 %v5970, %v6026
    %v6145 = vadd.f32 %v6144, %v6082
    %v6146 = vadd.f32 %v6145, %v6138
    %v6147 = vadd.f32 %v5973, %v6029
    %v6148 = vadd.f32 %v6147, %v6085
    %v6149 = vadd.f32 %v6148, %v6141
    %v6150 = vld [vmem:[#allocation4 + $0x84] ss:$0 sm:$0xff]
    %v6151 = vadd.f32 %v6146, %v6150
    %v6152 = vadd.f32 %v6149, %v6150
    %v6153 = vadd.f32 %v6151, %v4613
    %v6154 = vadd.f32 %v6152, %v4614
    %v6155 = vld [vmem:[#allocation4 + $0x82] ss:$0 sm:$0xff]
    %v6156 = vld [vmem:[#allocation4 + $0x83] ss:$0 sm:$0xff]
    %6157 = vadd.xlane.f32.xlu0 %v6153
    %v6158 = vpop.xlane.xlu0 %6157
    %6159 = vadd.xlane.f32.xlu0 %v6154
    %v6160 = vpop.xlane.xlu0 %6159
    %v6161 = vmul.f32 %v6158, %v2333
    %v6162 = vmul.f32 %v6160, %v2333
    %v6163 = vsub.f32 %v6153, %v6161
    %v6164 = vsub.f32 %v6154, %v6162
    %v6165 = vmul.f32 %v6163, %v6163
    %v6166 = vmul.f32 %v6164, %v6164
    %6167 = vadd.xlane.f32.xlu0 %v6165
    %v6168 = vpop.xlane.xlu0 %6167
    %6169 = vadd.xlane.f32.xlu0 %v6166
    %v6170 = vpop.xlane.xlu0 %6169
    %v6171 = vmul.f32 %v6168, %v2333
    %v6172 = vmul.f32 %v6170, %v2333
    %v6173 = vadd.f32 %v6171, 1e-05
    %v6174 = vadd.f32 %v6172, 1e-05
    %v6175 = vrsqrt.pop %v6173
    %v6176 = vrsqrt.pop %v6174
    %v6177 = vmul.f32 %v6163, %v6175
    %v6178 = vmul.f32 %v6164, %v6176
    %v6179 = vmul.f32 %v6177, %v6155
    %v6180 = vmul.f32 %v6178, %v6155
    %v6181 = vadd.f32 %v6179, %v6156
    %v6182 = vadd.f32 %v6180, %v6156
    %v6183 = vld [vmem:[%s2 + $0x100] sm:$0xff]
    %v6184 = vld [vmem:[%s2 + $0x108] sm:$0xff]
    %v6185 = vld [vmem:[%s2 + $0x110] sm:$0xff]
    %v6186 = vld [vmem:[%s2 + $0x118] sm:$0xff]
    %v6187 = vld [vmem:[%s2 + $0x120] sm:$0xff]
    %v6188 = vld [vmem:[%s2 + $0x128] sm:$0xff]
    %v6189 = vld [vmem:[%s2 + $0x130] sm:$0xff]
    %v6190 = vld [vmem:[%s2 + $0x138] sm:$0xff]
    %v6191 = vld [vmem:[%s2 + $0x140] sm:$0xff]
    %v6192 = vld [vmem:[%s2 + $0x148] sm:$0xff]
    %v6193 = vld [vmem:[%s2 + $0x150] sm:$0xff]
    %v6194 = vld [vmem:[%s2 + $0x158] sm:$0xff]
    %v6195 = vld [vmem:[%s2 + $0x160] sm:$0xff]
    %v6196 = vld [vmem:[%s2 + $0x168] sm:$0xff]
    %v6197 = vld [vmem:[%s2 + $0x170] sm:$0xff]
    %v6198 = vld [vmem:[%s2 + $0x178] sm:$0xff]
    %v6199 = vld [vmem:[%s2 + $0x180] sm:$0xff]
    %v6200 = vld [vmem:[%s2 + $0x188] sm:$0xff]
    %v6201 = vld [vmem:[%s2 + $0x190] sm:$0xff]
    %v6202 = vld [vmem:[%s2 + $0x198] sm:$0xff]
    %v6203 = vld [vmem:[%s2 + $0x1a0] sm:$0xff]
    %v6204 = vld [vmem:[%s2 + $0x1a8] sm:$0xff]
    %v6205 = vld [vmem:[%s2 + $0x1b0] sm:$0xff]
    %v6206 = vld [vmem:[%s2 + $0x1b8] sm:$0xff]
    %v6207 = vld [vmem:[%s2 + $0x1c0] sm:$0xff]
    %v6208 = vld [vmem:[%s2 + $0x1c8] sm:$0xff]
    %v6209 = vld [vmem:[%s2 + $0x1d0] sm:$0xff]
    %v6210 = vld [vmem:[%s2 + $0x1d8] sm:$0xff]
    %v6211 = vld [vmem:[%s2 + $0x1e0] sm:$0xff]
    %v6212 = vld [vmem:[%s2 + $0x1e8] sm:$0xff]
    %v6213 = vld [vmem:[%s2 + $0x1f0] sm:$0xff]
    %v6214 = vld [vmem:[%s2 + $0x1f8] sm:$0xff]
    %v6215 = vpack.c.bf16 %v6182, %v6181
    %s6216 = scalar_lea.vmem [#allocation4], 134
    %v6217 = vld [vmem:[%s6216] ss:$8 sm:$0xf]
    %v6219 = vlaneseq
    %v6220 = vshrl.u32 %v6219, 7
    %v6221 = vsub.s32 0, %v6220
    %v6222 = vrot.slane %v6217, %v6221
    %v6223 = vlaneseq
    %v6224 = vshrl.u32 %v6223, 7
    %v6225 = vsub.s32 1, %v6224
    %v6226 = vrot.slane %v6217, %v6225
    %v6227 = vlaneseq
    %v6228 = vshrl.u32 %v6227, 7
    %v6229 = vsub.s32 2, %v6228
    %v6230 = vrot.slane %v6217, %v6229
    %v6231 = vlaneseq
    %v6232 = vshrl.u32 %v6231, 7
    %v6233 = vsub.s32 3, %v6232
    %v6234 = vrot.slane %v6217, %v6233
    %v6271 = vunpack.c.l.b16 %v6183
    %v6272 = vunpack.c.h.b16 %v6183
    %v6273 = vunpack.c.l.b16 %v6184
    %v6274 = vunpack.c.h.b16 %v6184
    %v6275 = vunpack.c.l.b16 %v6185
    %v6276 = vunpack.c.h.b16 %v6185
    %v6277 = vunpack.c.l.b16 %v6186
    %v6278 = vunpack.c.h.b16 %v6186
    %v6279 = vunpack.c.l.b16 %v6187
    %v6280 = vunpack.c.h.b16 %v6187
    %v6281 = vunpack.c.l.b16 %v6188
    %v6282 = vunpack.c.h.b16 %v6188
    %v6283 = vunpack.c.l.b16 %v6189
    %v6284 = vunpack.c.h.b16 %v6189
    %v6285 = vunpack.c.l.b16 %v6190
    %v6286 = vunpack.c.h.b16 %v6190
    %v6287 = vunpack.c.l.b16 %v6191
    %v6288 = vunpack.c.h.b16 %v6191
    %v6289 = vunpack.c.l.b16 %v6192
    %v6290 = vunpack.c.h.b16 %v6192
    %v6291 = vunpack.c.l.b16 %v6193
    %v6292 = vunpack.c.h.b16 %v6193
    %v6293 = vunpack.c.l.b16 %v6194
    %v6294 = vunpack.c.h.b16 %v6194
    %v6295 = vunpack.c.l.b16 %v6195
    %v6296 = vunpack.c.h.b16 %v6195
    %v6297 = vunpack.c.l.b16 %v6196
    %v6298 = vunpack.c.h.b16 %v6196
    %v6299 = vunpack.c.l.b16 %v6197
    %v6300 = vunpack.c.h.b16 %v6197
    %v6301 = vunpack.c.l.b16 %v6198
    %v6302 = vunpack.c.h.b16 %v6198
    %v6303 = vunpack.c.l.b16 %v6199
    %v6304 = vunpack.c.h.b16 %v6199
    %v6305 = vunpack.c.l.b16 %v6200
    %v6306 = vunpack.c.h.b16 %v6200
    %v6307 = vunpack.c.l.b16 %v6201
    %v6308 = vunpack.c.h.b16 %v6201
    %v6309 = vunpack.c.l.b16 %v6202
    %v6310 = vunpack.c.h.b16 %v6202
    %v6311 = vunpack.c.l.b16 %v6203
    %v6312 = vunpack.c.h.b16 %v6203
    %v6313 = vunpack.c.l.b16 %v6204
    %v6314 = vunpack.c.h.b16 %v6204
    %v6315 = vunpack.c.l.b16 %v6205
    %v6316 = vunpack.c.h.b16 %v6205
    %v6317 = vunpack.c.l.b16 %v6206
    %v6318 = vunpack.c.h.b16 %v6206
    %v6319 = vunpack.c.l.b16 %v6207
    %v6320 = vunpack.c.h.b16 %v6207
    %v6321 = vunpack.c.l.b16 %v6208
    %v6322 = vunpack.c.h.b16 %v6208
    %v6323 = vunpack.c.l.b16 %v6209
    %v6324 = vunpack.c.h.b16 %v6209
    %v6325 = vunpack.c.l.b16 %v6210
    %v6326 = vunpack.c.h.b16 %v6210
    %v6327 = vunpack.c.l.b16 %v6211
    %v6328 = vunpack.c.h.b16 %v6211
    %v6329 = vunpack.c.l.b16 %v6212
    %v6330 = vunpack.c.h.b16 %v6212
    %v6331 = vunpack.c.l.b16 %v6213
    %v6332 = vunpack.c.h.b16 %v6213
    %v6333 = vunpack.c.l.b16 %v6214
    %v6334 = vunpack.c.h.b16 %v6214
    %v6335 = vpack.c.b16 %v6275, %v6271
    %v6336 = vpack.c.b16 %v6276, %v6272
    %v6337 = vpack.c.b16 %v6277, %v6273
    %v6338 = vpack.c.b16 %v6278, %v6274
    %v6339 = vpack.c.b16 %v6283, %v6279
    %v6340 = vpack.c.b16 %v6284, %v6280
    %v6341 = vpack.c.b16 %v6285, %v6281
    %v6342 = vpack.c.b16 %v6286, %v6282
    %v6343 = vpack.c.b16 %v6291, %v6287
    %v6344 = vpack.c.b16 %v6292, %v6288
    %v6345 = vpack.c.b16 %v6293, %v6289
    %v6346 = vpack.c.b16 %v6294, %v6290
    %v6347 = vpack.c.b16 %v6299, %v6295
    %v6348 = vpack.c.b16 %v6300, %v6296
    %v6349 = vpack.c.b16 %v6301, %v6297
    %v6350 = vpack.c.b16 %v6302, %v6298
    %v6351 = vpack.c.b16 %v6307, %v6303
    %v6352 = vpack.c.b16 %v6308, %v6304
    %v6353 = vpack.c.b16 %v6309, %v6305
    %v6354 = vpack.c.b16 %v6310, %v6306
    %v6355 = vpack.c.b16 %v6315, %v6311
    %v6356 = vpack.c.b16 %v6316, %v6312
    %v6357 = vpack.c.b16 %v6317, %v6313
    %v6358 = vpack.c.b16 %v6318, %v6314
    %v6359 = vpack.c.b16 %v6323, %v6319
    %v6360 = vpack.c.b16 %v6324, %v6320
    %v6361 = vpack.c.b16 %v6325, %v6321
    %v6362 = vpack.c.b16 %v6326, %v6322
    %v6363 = vpack.c.b16 %v6331, %v6327
    %v6364 = vpack.c.b16 %v6332, %v6328
    %v6365 = vpack.c.b16 %v6333, %v6329
    %v6366 = vpack.c.b16 %v6334, %v6330
    %6399 = vmatprep.subr.bf16.mxu0 %v6336
    %6400 = vmatpush1.bf16.msra.mxu0 %v6335
    %6401 = vmatprep.subr.bf16.mxu0 %v6340
    %6402 = vmatpush1.bf16.msra.mxu0 %v6339
    %6403 = vmatprep.subr.bf16.mxu0 %v6344
    %6404 = vmatpush1.bf16.msra.mxu0 %v6343
    %6405 = vmatprep.subr.bf16.mxu0 %v6348
    %6406 = vmatpush1.bf16.msra.mxu0 %v6347
    %6407 = vmatprep.subr.bf16.mxu0 %v6352
    %6408 = vmatpush1.bf16.msra.mxu0 %v6351
    %6409 = vmatprep.subr.bf16.mxu0 %v6356
    %6410 = vmatpush1.bf16.msra.mxu0 %v6355
    %6411 = vmatprep.subr.bf16.mxu0 %v6360
    %6412 = vmatpush1.bf16.msra.mxu0 %v6359
    %6413 = vmatprep.subr.bf16.mxu0 %v6364
    %6414 = vmatpush1.bf16.msra.mxu0 %v6363
    %6415 = vmatprep.subr.bf16.mxu0 0
    %6416 = vmatpush1.bf16.msra.mxu0 0
    %6417 = vmatprep.subr.bf16.mxu0 0
    %6418 = vmatpush1.bf16.msra.mxu0 0
    %6419 = vmatprep.subr.bf16.mxu0 0
    %6420 = vmatpush1.bf16.msra.mxu0 0
    %6421 = vmatprep.subr.bf16.mxu0 0
    %6422 = vmatpush1.bf16.msra.mxu0 0
    %6423 = vmatprep.subr.bf16.mxu0 0
    %6424 = vmatpush1.bf16.msra.mxu0 0
    %6425 = vmatprep.subr.bf16.mxu0 0
    %6426 = vmatpush1.bf16.msra.mxu0 0
    %6427 = vmatprep.subr.bf16.mxu0 0
    %6428 = vmatpush1.bf16.msra.mxu0 0
    %6429 = vmatprep.subr.bf16.mxu0 0
    %6430 = vmatpush1.bf16.msra.mxu0 0
    %6431 = vmatprep.mubr.bf16.mxu0 0
    %6432 = vmatmul.mubr.bf16.gmra.mrb[0].mxu0 %v6215
    %v6433 = vpop.f32.mrb[0].mxu0
    %v6434 = vadd.f32 %v6222, %v6433
    %v6435 = vpop.f32.mrb[0].mxu0
    %v6436 = vadd.f32 %v6226, %v6435
    %v6437 = vpop.f32.mrb[0].mxu0
    %v6438 = vadd.f32 %v6222, %v6437
    %v6439 = vpop.f32.mrb[0].mxu0
    %v6440 = vadd.f32 %v6226, %v6439
    %6441 = vdwg.mxu0
    %6442 = vmatprep.subr.bf16.mxu0 %v6338
    %6443 = vmatpush1.bf16.msra.mxu0 %v6337
    %6444 = vmatprep.subr.bf16.mxu0 %v6342
    %6445 = vmatpush1.bf16.msra.mxu0 %v6341
    %6446 = vmatprep.subr.bf16.mxu0 %v6346
    %6447 = vmatpush1.bf16.msra.mxu0 %v6345
    %6448 = vmatprep.subr.bf16.mxu0 %v6350
    %6449 = vmatpush1.bf16.msra.mxu0 %v6349
    %6450 = vmatprep.subr.bf16.mxu0 %v6354
    %6451 = vmatpush1.bf16.msra.mxu0 %v6353
    %6452 = vmatprep.subr.bf16.mxu0 %v6358
    %6453 = vmatpush1.bf16.msra.mxu0 %v6357
    %6454 = vmatprep.subr.bf16.mxu0 %v6362
    %6455 = vmatpush1.bf16.msra.mxu0 %v6361
    %6456 = vmatprep.subr.bf16.mxu0 %v6366
    %6457 = vmatpush1.bf16.msra.mxu0 %v6365
    %6458 = vmatprep.subr.bf16.mxu0 0
    %6459 = vmatpush1.bf16.msra.mxu0 0
    %6460 = vmatprep.subr.bf16.mxu0 0
    %6461 = vmatpush1.bf16.msra.mxu0 0
    %6462 = vmatprep.subr.bf16.mxu0 0
    %6463 = vmatpush1.bf16.msra.mxu0 0
    %6464 = vmatprep.subr.bf16.mxu0 0
    %6465 = vmatpush1.bf16.msra.mxu0 0
    %6466 = vmatprep.subr.bf16.mxu0 0
    %6467 = vmatpush1.bf16.msra.mxu0 0
    %6468 = vmatprep.subr.bf16.mxu0 0
    %6469 = vmatpush1.bf16.msra.mxu0 0
    %6470 = vmatprep.subr.bf16.mxu0 0
    %6471 = vmatpush1.bf16.msra.mxu0 0
    %6472 = vmatprep.subr.bf16.mxu0 0
    %6473 = vmatpush1.bf16.msra.mxu0 0
    %6474 = vmatprep.mubr.bf16.mxu0 0
    %6475 = vmatmul.mubr.bf16.gmra.mrb[0].mxu0 %v6215
    %v6476 = vpop.f32.mrb[0].mxu0
    %v6477 = vadd.f32 %v6230, %v6476
    %v6478 = vpop.f32.mrb[0].mxu0
    %v6479 = vadd.f32 %v6234, %v6478
    %v6480 = vpop.f32.mrb[0].mxu0
    %v6481 = vadd.f32 %v6230, %v6480
    %v6482 = vpop.f32.mrb[0].mxu0
    %v6483 = vadd.f32 %v6234, %v6482
    %6484 = vdwg.mxu0
    %v6485 = vmul.f32 %v6434, %v6434
    %v6486 = vmul.f32 %v6436, %v6436
    %v6487 = vmul.f32 %v6477, %v6477
    %v6488 = vmul.f32 %v6479, %v6479
    %v6489 = vmul.f32 %v6438, %v6438
    %v6490 = vmul.f32 %v6440, %v6440
    %v6491 = vmul.f32 %v6481, %v6481
    %v6492 = vmul.f32 %v6483, %v6483
    %v6493 = vmul.f32 %v6434, %v6485
    %v6494 = vmul.f32 %v6436, %v6486
    %v6495 = vmul.f32 %v6477, %v6487
    %v6496 = vmul.f32 %v6479, %v6488
    %v6497 = vmul.f32 %v6438, %v6489
    %v6498 = vmul.f32 %v6440, %v6490
    %v6499 = vmul.f32 %v6481, %v6491
    %v6500 = vmul.f32 %v6483, %v6492
    %v6501 = vmul.f32 %v6493, 0.044715
    %v6502 = vmul.f32 %v6494, 0.044715
    %v6503 = vmul.f32 %v6495, 0.044715
    %v6504 = vmul.f32 %v6496, 0.044715
    %v6505 = vmul.f32 %v6497, 0.044715
    %v6506 = vmul.f32 %v6498, 0.044715
    %v6507 = vmul.f32 %v6499, 0.044715
    %v6508 = vmul.f32 %v6500, 0.044715
    %v6509 = vadd.f32 %v6434, %v6501
    %v6510 = vadd.f32 %v6436, %v6502
    %v6511 = vadd.f32 %v6477, %v6503
    %v6512 = vadd.f32 %v6479, %v6504
    %v6513 = vadd.f32 %v6438, %v6505
    %v6514 = vadd.f32 %v6440, %v6506
    %v6515 = vadd.f32 %v6481, %v6507
    %v6516 = vadd.f32 %v6483, %v6508
    %v6517 = vmul.f32 %v6509, 0.7978846
    %v6518 = vmul.f32 %v6510, 0.7978846
    %v6519 = vmul.f32 %v6511, 0.7978846
    %v6520 = vmul.f32 %v6512, 0.7978846
    %v6521 = vmul.f32 %v6513, 0.7978846
    %v6522 = vmul.f32 %v6514, 0.7978846
    %v6523 = vmul.f32 %v6515, 0.7978846
    %v6524 = vmul.f32 %v6516, 0.7978846
    %v6525 = vtanh.pop %v6517
    %v6526 = vtanh.pop %v6518
    %v6527 = vtanh.pop %v6519
    %v6528 = vtanh.pop %v6520
    %v6529 = vtanh.pop %v6521
    %v6530 = vtanh.pop %v6522
    %v6531 = vtanh.pop %v6523
    %v6532 = vtanh.pop %v6524
    %v6533 = vadd.f32 %v6525, 1.0
    %v6534 = vadd.f32 %v6526, 1.0
    %v6535 = vadd.f32 %v6527, 1.0
    %v6536 = vadd.f32 %v6528, 1.0
    %v6537 = vadd.f32 %v6529, 1.0
    %v6538 = vadd.f32 %v6530, 1.0
    %v6539 = vadd.f32 %v6531, 1.0
    %v6540 = vadd.f32 %v6532, 1.0
    %v6541 = vmul.f32 %v6533, 0.5
    %v6542 = vmul.f32 %v6534, 0.5
    %v6543 = vmul.f32 %v6535, 0.5
    %v6544 = vmul.f32 %v6536, 0.5
    %v6545 = vmul.f32 %v6537, 0.5
    %v6546 = vmul.f32 %v6538, 0.5
    %v6547 = vmul.f32 %v6539, 0.5
    %v6548 = vmul.f32 %v6540, 0.5
    %v6549 = vmul.f32 %v6434, %v6541
    %v6550 = vmul.f32 %v6436, %v6542
    %v6551 = vmul.f32 %v6477, %v6543
    %v6552 = vmul.f32 %v6479, %v6544
    %v6553 = vmul.f32 %v6438, %v6545
    %v6554 = vmul.f32 %v6440, %v6546
    %v6555 = vmul.f32 %v6481, %v6547
    %v6556 = vmul.f32 %v6483, %v6548
    %v6557 = vld [vmem:[%s1 + $0x280] sm:$0xf]
    %v6558 = vld [vmem:[%s1 + $0x284] sm:$0xf]
    %v6559 = vld [vmem:[%s1 + $0x288] sm:$0xf]
    %v6560 = vld [vmem:[%s1 + $0x28c] sm:$0xf]
    %v6561 = vld [vmem:[%s1 + $0x290] sm:$0xf]
    %v6562 = vld [vmem:[%s1 + $0x294] sm:$0xf]
    %v6563 = vld [vmem:[%s1 + $0x298] sm:$0xf]
    %v6564 = vld [vmem:[%s1 + $0x29c] sm:$0xf]
    %v6565 = vld [vmem:[%s1 + $0x2a0] sm:$0xf]
    %v6566 = vld [vmem:[%s1 + $0x2a4] sm:$0xf]
    %v6567 = vld [vmem:[%s1 + $0x2a8] sm:$0xf]
    %v6568 = vld [vmem:[%s1 + $0x2ac] sm:$0xf]
    %v6569 = vld [vmem:[%s1 + $0x2b0] sm:$0xf]
    %v6570 = vld [vmem:[%s1 + $0x2b4] sm:$0xf]
    %v6571 = vld [vmem:[%s1 + $0x2b8] sm:$0xf]
    %v6572 = vld [vmem:[%s1 + $0x2bc] sm:$0xf]
    %v6573 = vld [vmem:[%s1 + $0x2c0] sm:$0xf]
    %v6574 = vld [vmem:[%s1 + $0x2c4] sm:$0xf]
    %v6575 = vld [vmem:[%s1 + $0x2c8] sm:$0xf]
    %v6576 = vld [vmem:[%s1 + $0x2cc] sm:$0xf]
    %v6577 = vld [vmem:[%s1 + $0x2d0] sm:$0xf]
    %v6578 = vld [vmem:[%s1 + $0x2d4] sm:$0xf]
    %v6579 = vld [vmem:[%s1 + $0x2d8] sm:$0xf]
    %v6580 = vld [vmem:[%s1 + $0x2dc] sm:$0xf]
    %v6581 = vld [vmem:[%s1 + $0x2e0] sm:$0xf]
    %v6582 = vld [vmem:[%s1 + $0x2e4] sm:$0xf]
    %v6583 = vld [vmem:[%s1 + $0x2e8] sm:$0xf]
    %v6584 = vld [vmem:[%s1 + $0x2ec] sm:$0xf]
    %v6585 = vld [vmem:[%s1 + $0x2f0] sm:$0xf]
    %v6586 = vld [vmem:[%s1 + $0x2f4] sm:$0xf]
    %v6587 = vld [vmem:[%s1 + $0x2f8] sm:$0xf]
    %v6588 = vld [vmem:[%s1 + $0x2fc] sm:$0xf]
    %v6589 = vld [vmem:[%s1 + $0x300] sm:$0xf]
    %v6590 = vld [vmem:[%s1 + $0x304] sm:$0xf]
    %v6591 = vld [vmem:[%s1 + $0x308] sm:$0xf]
    %v6592 = vld [vmem:[%s1 + $0x30c] sm:$0xf]
    %v6593 = vld [vmem:[%s1 + $0x310] sm:$0xf]
    %v6594 = vld [vmem:[%s1 + $0x314] sm:$0xf]
    %v6595 = vld [vmem:[%s1 + $0x318] sm:$0xf]
    %v6596 = vld [vmem:[%s1 + $0x31c] sm:$0xf]
    %v6597 = vld [vmem:[%s1 + $0x320] sm:$0xf]
    %v6598 = vld [vmem:[%s1 + $0x324] sm:$0xf]
    %v6599 = vld [vmem:[%s1 + $0x328] sm:$0xf]
    %v6600 = vld [vmem:[%s1 + $0x32c] sm:$0xf]
    %v6601 = vld [vmem:[%s1 + $0x330] sm:$0xf]
    %v6602 = vld [vmem:[%s1 + $0x334] sm:$0xf]
    %v6603 = vld [vmem:[%s1 + $0x338] sm:$0xf]
    %v6604 = vld [vmem:[%s1 + $0x33c] sm:$0xf]
    %v6605 = vld [vmem:[%s1 + $0x340] sm:$0xf]
    %v6606 = vld [vmem:[%s1 + $0x344] sm:$0xf]
    %v6607 = vld [vmem:[%s1 + $0x348] sm:$0xf]
    %v6608 = vld [vmem:[%s1 + $0x34c] sm:$0xf]
    %v6609 = vld [vmem:[%s1 + $0x350] sm:$0xf]
    %v6610 = vld [vmem:[%s1 + $0x354] sm:$0xf]
    %v6611 = vld [vmem:[%s1 + $0x358] sm:$0xf]
    %v6612 = vld [vmem:[%s1 + $0x35c] sm:$0xf]
    %v6613 = vld [vmem:[%s1 + $0x360] sm:$0xf]
    %v6614 = vld [vmem:[%s1 + $0x364] sm:$0xf]
    %v6615 = vld [vmem:[%s1 + $0x368] sm:$0xf]
    %v6616 = vld [vmem:[%s1 + $0x36c] sm:$0xf]
    %v6617 = vld [vmem:[%s1 + $0x370] sm:$0xf]
    %v6618 = vld [vmem:[%s1 + $0x374] sm:$0xf]
    %v6619 = vld [vmem:[%s1 + $0x378] sm:$0xf]
    %v6620 = vld [vmem:[%s1 + $0x37c] sm:$0xf]
    %v6621 = vpack.c.bf16 %v6553, %v6549
    %v6622 = vpack.c.bf16 %v6554, %v6550
    %v6623 = vpack.c.bf16 %v6555, %v6551
    %v6624 = vpack.c.bf16 %v6556, %v6552
    %v6625 = vld [vmem:[#allocation4 + $0x85] ss:$0 sm:$0xff]
    %v6690 = vunpack.c.l.b16 %v6557
    %v6691 = vunpack.c.l.b16 %v6558
    %v6692 = vunpack.c.l.b16 %v6559
    %v6693 = vunpack.c.l.b16 %v6560
    %v6694 = vunpack.c.l.b16 %v6561
    %v6695 = vunpack.c.l.b16 %v6562
    %v6696 = vunpack.c.l.b16 %v6563
    %v6697 = vunpack.c.l.b16 %v6564
    %v6698 = vunpack.c.l.b16 %v6565
    %v6699 = vunpack.c.l.b16 %v6566
    %v6700 = vunpack.c.l.b16 %v6567
    %v6701 = vunpack.c.l.b16 %v6568
    %v6702 = vunpack.c.l.b16 %v6569
    %v6703 = vunpack.c.l.b16 %v6570
    %v6704 = vunpack.c.l.b16 %v6571
    %v6705 = vunpack.c.l.b16 %v6572
    %v6706 = vunpack.c.l.b16 %v6573
    %v6707 = vunpack.c.l.b16 %v6574
    %v6708 = vunpack.c.l.b16 %v6575
    %v6709 = vunpack.c.l.b16 %v6576
    %v6710 = vunpack.c.l.b16 %v6577
    %v6711 = vunpack.c.l.b16 %v6578
    %v6712 = vunpack.c.l.b16 %v6579
    %v6713 = vunpack.c.l.b16 %v6580
    %v6714 = vunpack.c.l.b16 %v6581
    %v6715 = vunpack.c.l.b16 %v6582
    %v6716 = vunpack.c.l.b16 %v6583
    %v6717 = vunpack.c.l.b16 %v6584
    %v6718 = vunpack.c.l.b16 %v6585
    %v6719 = vunpack.c.l.b16 %v6586
    %v6720 = vunpack.c.l.b16 %v6587
    %v6721 = vunpack.c.l.b16 %v6588
    %v6722 = vunpack.c.l.b16 %v6589
    %v6723 = vunpack.c.l.b16 %v6590
    %v6724 = vunpack.c.l.b16 %v6591
    %v6725 = vunpack.c.l.b16 %v6592
    %v6726 = vunpack.c.l.b16 %v6593
    %v6727 = vunpack.c.l.b16 %v6594
    %v6728 = vunpack.c.l.b16 %v6595
    %v6729 = vunpack.c.l.b16 %v6596
    %v6730 = vunpack.c.l.b16 %v6597
    %v6731 = vunpack.c.l.b16 %v6598
    %v6732 = vunpack.c.l.b16 %v6599
    %v6733 = vunpack.c.l.b16 %v6600
    %v6734 = vunpack.c.l.b16 %v6601
    %v6735 = vunpack.c.l.b16 %v6602
    %v6736 = vunpack.c.l.b16 %v6603
    %v6737 = vunpack.c.l.b16 %v6604
    %v6738 = vunpack.c.l.b16 %v6605
    %v6739 = vunpack.c.l.b16 %v6606
    %v6740 = vunpack.c.l.b16 %v6607
    %v6741 = vunpack.c.l.b16 %v6608
    %v6742 = vunpack.c.l.b16 %v6609
    %v6743 = vunpack.c.l.b16 %v6610
    %v6744 = vunpack.c.l.b16 %v6611
    %v6745 = vunpack.c.l.b16 %v6612
    %v6746 = vunpack.c.l.b16 %v6613
    %v6747 = vunpack.c.l.b16 %v6614
    %v6748 = vunpack.c.l.b16 %v6615
    %v6749 = vunpack.c.l.b16 %v6616
    %v6750 = vunpack.c.l.b16 %v6617
    %v6751 = vunpack.c.l.b16 %v6618
    %v6752 = vunpack.c.l.b16 %v6619
    %v6753 = vunpack.c.l.b16 %v6620
    %v6754 = vpack.c.b16 %v6691, %v6690
    %v6755 = vpack.c.b16 %v6693, %v6692
    %v6756 = vpack.c.b16 %v6695, %v6694
    %v6757 = vpack.c.b16 %v6697, %v6696
    %v6758 = vpack.c.b16 %v6699, %v6698
    %v6759 = vpack.c.b16 %v6701, %v6700
    %v6760 = vpack.c.b16 %v6703, %v6702
    %v6761 = vpack.c.b16 %v6705, %v6704
    %v6762 = vpack.c.b16 %v6707, %v6706
    %v6763 = vpack.c.b16 %v6709, %v6708
    %v6764 = vpack.c.b16 %v6711, %v6710
    %v6765 = vpack.c.b16 %v6713, %v6712
    %v6766 = vpack.c.b16 %v6715, %v6714
    %v6767 = vpack.c.b16 %v6717, %v6716
    %v6768 = vpack.c.b16 %v6719, %v6718
    %v6769 = vpack.c.b16 %v6721, %v6720
    %v6770 = vpack.c.b16 %v6723, %v6722
    %v6771 = vpack.c.b16 %v6725, %v6724
    %v6772 = vpack.c.b16 %v6727, %v6726
    %v6773 = vpack.c.b16 %v6729, %v6728
    %v6774 = vpack.c.b16 %v6731, %v6730
    %v6775 = vpack.c.b16 %v6733, %v6732
    %v6776 = vpack.c.b16 %v6735, %v6734
    %v6777 = vpack.c.b16 %v6737, %v6736
    %v6778 = vpack.c.b16 %v6739, %v6738
    %v6779 = vpack.c.b16 %v6741, %v6740
    %v6780 = vpack.c.b16 %v6743, %v6742
    %v6781 = vpack.c.b16 %v6745, %v6744
    %v6782 = vpack.c.b16 %v6747, %v6746
    %v6783 = vpack.c.b16 %v6749, %v6748
    %v6784 = vpack.c.b16 %v6751, %v6750
    %v6785 = vpack.c.b16 %v6753, %v6752
    %6818 = vmatprep.subr.bf16.mxu0 0
    %6819 = vmatpush1.bf16.msra.mxu0 %v6754
    %6820 = vmatprep.subr.bf16.mxu0 0
    %6821 = vmatpush1.bf16.msra.mxu0 %v6755
    %6822 = vmatprep.subr.bf16.mxu0 0
    %6823 = vmatpush1.bf16.msra.mxu0 %v6756
    %6824 = vmatprep.subr.bf16.mxu0 0
    %6825 = vmatpush1.bf16.msra.mxu0 %v6757
    %6826 = vmatprep.subr.bf16.mxu0 0
    %6827 = vmatpush1.bf16.msra.mxu0 %v6758
    %6828 = vmatprep.subr.bf16.mxu0 0
    %6829 = vmatpush1.bf16.msra.mxu0 %v6759
    %6830 = vmatprep.subr.bf16.mxu0 0
    %6831 = vmatpush1.bf16.msra.mxu0 %v6760
    %6832 = vmatprep.subr.bf16.mxu0 0
    %6833 = vmatpush1.bf16.msra.mxu0 %v6761
    %6834 = vmatprep.subr.bf16.mxu0 0
    %6835 = vmatpush1.bf16.msra.mxu0 %v6762
    %6836 = vmatprep.subr.bf16.mxu0 0
    %6837 = vmatpush1.bf16.msra.mxu0 %v6763
    %6838 = vmatprep.subr.bf16.mxu0 0
    %6839 = vmatpush1.bf16.msra.mxu0 %v6764
    %6840 = vmatprep.subr.bf16.mxu0 0
    %6841 = vmatpush1.bf16.msra.mxu0 %v6765
    %6842 = vmatprep.subr.bf16.mxu0 0
    %6843 = vmatpush1.bf16.msra.mxu0 %v6766
    %6844 = vmatprep.subr.bf16.mxu0 0
    %6845 = vmatpush1.bf16.msra.mxu0 %v6767
    %6846 = vmatprep.subr.bf16.mxu0 0
    %6847 = vmatpush1.bf16.msra.mxu0 %v6768
    %6848 = vmatprep.subr.bf16.mxu0 0
    %6849 = vmatpush1.bf16.msra.mxu0 %v6769
    %6850 = vmatprep.mubr.bf16.mxu0 %v6622
    %6851 = vmatmul.mubr.bf16.gmra.mrb[0].mxu0 %v6621
    %v6852 = vpop.f32.mrb[0].mxu0
    %v6853 = vadd.f32 %v6625, %v6852
    %v6854 = vpop.f32.mrb[0].mxu0
    %v6855 = vpop.f32.mrb[0].mxu0
    %v6856 = vadd.f32 %v6625, %v6855
    %v6857 = vpop.f32.mrb[0].mxu0
    %6858 = vdwg.mxu0
    %6859 = vmatprep.subr.bf16.mxu0 0
    %6860 = vmatpush1.bf16.msra.mxu0 %v6770
    %6861 = vmatprep.subr.bf16.mxu0 0
    %6862 = vmatpush1.bf16.msra.mxu0 %v6771
    %6863 = vmatprep.subr.bf16.mxu0 0
    %6864 = vmatpush1.bf16.msra.mxu0 %v6772
    %6865 = vmatprep.subr.bf16.mxu0 0
    %6866 = vmatpush1.bf16.msra.mxu0 %v6773
    %6867 = vmatprep.subr.bf16.mxu0 0
    %6868 = vmatpush1.bf16.msra.mxu0 %v6774
    %6869 = vmatprep.subr.bf16.mxu0 0
    %6870 = vmatpush1.bf16.msra.mxu0 %v6775
    %6871 = vmatprep.subr.bf16.mxu0 0
    %6872 = vmatpush1.bf16.msra.mxu0 %v6776
    %6873 = vmatprep.subr.bf16.mxu0 0
    %6874 = vmatpush1.bf16.msra.mxu0 %v6777
    %6875 = vmatprep.subr.bf16.mxu0 0
    %6876 = vmatpush1.bf16.msra.mxu0 %v6778
    %6877 = vmatprep.subr.bf16.mxu0 0
    %6878 = vmatpush1.bf16.msra.mxu0 %v6779
    %6879 = vmatprep.subr.bf16.mxu0 0
    %6880 = vmatpush1.bf16.msra.mxu0 %v6780
    %6881 = vmatprep.subr.bf16.mxu0 0
    %6882 = vmatpush1.bf16.msra.mxu0 %v6781
    %6883 = vmatprep.subr.bf16.mxu0 0
    %6884 = vmatpush1.bf16.msra.mxu0 %v6782
    %6885 = vmatprep.subr.bf16.mxu0 0
    %6886 = vmatpush1.bf16.msra.mxu0 %v6783
    %6887 = vmatprep.subr.bf16.mxu0 0
    %6888 = vmatpush1.bf16.msra.mxu0 %v6784
    %6889 = vmatprep.subr.bf16.mxu0 0
    %6890 = vmatpush1.bf16.msra.mxu0 %v6785
    %6891 = vmatprep.mubr.bf16.mxu0 %v6624
    %6892 = vmatmul.mubr.bf16.gmra.mrb[0].mxu0 %v6623
    %v6893 = vpop.f32.mrb[0].mxu0
    %v6894 = vadd.f32 %v6853, %v6893
    %v6895 = vpop.f32.mrb[0].mxu0
    %v6896 = vpop.f32.mrb[0].mxu0
    %v6897 = vadd.f32 %v6856, %v6896
    %v6898 = vpop.f32.mrb[0].mxu0
    %6899 = vdwg.mxu0
    %v6900 = vadd.f32 %v6894, %v6153
    %v6901 = vadd.f32 %v6897, %v6154
    %v6902 = vld [vmem:[#allocation4 + $0x1] ss:$0 sm:$0xff]
    %v6903 = vld [vmem:[#allocation4 + $0x2] ss:$0 sm:$0xff]
    %6904 = vadd.xlane.f32.xlu0 %v6900
    %v6905 = vpop.xlane.xlu0 %6904
    %6906 = vadd.xlane.f32.xlu0 %v6901
    %v6907 = vpop.xlane.xlu0 %6906
    %v6908 = vmul.f32 %v6905, %v2333
    %v6909 = vmul.f32 %v6907, %v2333
    %v6910 = vsub.f32 %v6900, %v6908
    %v6911 = vsub.f32 %v6901, %v6909
    %v6912 = vmul.f32 %v6910, %v6910
    %v6913 = vmul.f32 %v6911, %v6911
    %6914 = vadd.xlane.f32.xlu0 %v6912
    %v6915 = vpop.xlane.xlu0 %6914
    %6916 = vadd.xlane.f32.xlu0 %v6913
    %v6917 = vpop.xlane.xlu0 %6916
    %v6918 = vmul.f32 %v6915, %v2333
    %v6919 = vmul.f32 %v6917, %v2333
    %v6920 = vadd.f32 %v6918, 1e-05
    %v6921 = vadd.f32 %v6919, 1e-05
    %v6922 = vrsqrt.pop %v6920
    %v6923 = vrsqrt.pop %v6921
    %v6924 = vmul.f32 %v6910, %v6922
    %v6925 = vmul.f32 %v6911, %v6923
    %v6926 = vmul.f32 %v6924, %v6902
    %v6927 = vmul.f32 %v6925, %v6902
    %v6928 = vadd.f32 %v6926, %v6903
    %v6929 = vadd.f32 %v6927, %v6903
    %v6930 = vld [vmem:[%s1 + $0x140] sm:$0xf]
    %v6931 = vld [vmem:[%s1 + $0x144] sm:$0xf]
    %v6932 = vld [vmem:[%s1 + $0x148] sm:$0xf]
    %v6933 = vld [vmem:[%s1 + $0x14c] sm:$0xf]
    %v6934 = vld [vmem:[%s1 + $0x150] sm:$0xf]
    %v6935 = vld [vmem:[%s1 + $0x154] sm:$0xf]
    %v6936 = vld [vmem:[%s1 + $0x158] sm:$0xf]
    %v6937 = vld [vmem:[%s1 + $0x15c] sm:$0xf]
    %v6938 = vld [vmem:[%s1 + $0x160] sm:$0xf]
    %v6939 = vld [vmem:[%s1 + $0x164] sm:$0xf]
    %v6940 = vld [vmem:[%s1 + $0x168] sm:$0xf]
    %v6941 = vld [vmem:[%s1 + $0x16c] sm:$0xf]
    %v6942 = vld [vmem:[%s1 + $0x170] sm:$0xf]
    %v6943 = vld [vmem:[%s1 + $0x174] sm:$0xf]
    %v6944 = vld [vmem:[%s1 + $0x178] sm:$0xf]
    %v6945 = vld [vmem:[%s1 + $0x17c] sm:$0xf]
    %v6946 = vpack.c.bf16 %v6929, %v6928
    %v6947 = vld [vmem:[#allocation4 + $0x3] ss:$0 sm:$0xff]
    %v6964 = vunpack.c.l.b16 %v6930
    %v6965 = vunpack.c.l.b16 %v6931
    %v6966 = vunpack.c.l.b16 %v6932
    %v6967 = vunpack.c.l.b16 %v6933
    %v6968 = vunpack.c.l.b16 %v6934
    %v6969 = vunpack.c.l.b16 %v6935
    %v6970 = vunpack.c.l.b16 %v6936
    %v6971 = vunpack.c.l.b16 %v6937
    %v6972 = vunpack.c.l.b16 %v6938
    %v6973 = vunpack.c.l.b16 %v6939
    %v6974 = vunpack.c.l.b16 %v6940
    %v6975 = vunpack.c.l.b16 %v6941
    %v6976 = vunpack.c.l.b16 %v6942
    %v6977 = vunpack.c.l.b16 %v6943
    %v6978 = vunpack.c.l.b16 %v6944
    %v6979 = vunpack.c.l.b16 %v6945
    %v6980 = vpack.c.b16 %v6965, %v6964
    %v6981 = vpack.c.b16 %v6967, %v6966
    %v6982 = vpack.c.b16 %v6969, %v6968
    %v6983 = vpack.c.b16 %v6971, %v6970
    %v6984 = vpack.c.b16 %v6973, %v6972
    %v6985 = vpack.c.b16 %v6975, %v6974
    %v6986 = vpack.c.b16 %v6977, %v6976
    %v6987 = vpack.c.b16 %v6979, %v6978
    %6996 = vmatprep.subr.bf16.mxu0 0
    %6997 = vmatpush1.bf16.msra.mxu0 %v6980
    %6998 = vmatprep.subr.bf16.mxu0 0
    %6999 = vmatpush1.bf16.msra.mxu0 %v6981
    %7000 = vmatprep.subr.bf16.mxu0 0
    %7001 = vmatpush1.bf16.msra.mxu0 %v6982
    %7002 = vmatprep.subr.bf16.mxu0 0
    %7003 = vmatpush1.bf16.msra.mxu0 %v6983
    %7004 = vmatprep.subr.bf16.mxu0 0
    %7005 = vmatpush1.bf16.msra.mxu0 %v6984
    %7006 = vmatprep.subr.bf16.mxu0 0
    %7007 = vmatpush1.bf16.msra.mxu0 %v6985
    %7008 = vmatprep.subr.bf16.mxu0 0
    %7009 = vmatpush1.bf16.msra.mxu0 %v6986
    %7010 = vmatprep.subr.bf16.mxu0 0
    %7011 = vmatpush1.bf16.msra.mxu0 %v6987
    %7012 = vmatprep.subr.bf16.mxu0 0
    %7013 = vmatpush1.bf16.msra.mxu0 0
    %7014 = vmatprep.subr.bf16.mxu0 0
    %7015 = vmatpush1.bf16.msra.mxu0 0
    %7016 = vmatprep.subr.bf16.mxu0 0
    %7017 = vmatpush1.bf16.msra.mxu0 0
    %7018 = vmatprep.subr.bf16.mxu0 0
    %7019 = vmatpush1.bf16.msra.mxu0 0
    %7020 = vmatprep.subr.bf16.mxu0 0
    %7021 = vmatpush1.bf16.msra.mxu0 0
    %7022 = vmatprep.subr.bf16.mxu0 0
    %7023 = vmatpush1.bf16.msra.mxu0 0
    %7024 = vmatprep.subr.bf16.mxu0 0
    %7025 = vmatpush1.bf16.msra.mxu0 0
    %7026 = vmatprep.subr.bf16.mxu0 0
    %7027 = vmatpush1.bf16.msra.mxu0 0
    %7028 = vmatprep.mubr.bf16.mxu0 0
    %7029 = vmatmul.mubr.bf16.gmra.mrb[0].mxu0 %v6946
    %v7030 = vpop.f32.mrb[0].mxu0
    %v7031 = vadd.f32 %v6947, %v7030
    %v7032 = vpop.f32.mrb[0].mxu0
    %v7033 = vpop.f32.mrb[0].mxu0
    %v7034 = vadd.f32 %v6947, %v7033
    %v7035 = vpop.f32.mrb[0].mxu0
    %7036 = vdwg.mxu0
    %7037 = vst [vmem:[%s5] sm:$0xff] %v7031
    %7038 = vst [vmem:[%s5 + $0x8] sm:$0xff] %v7034
    // Predicated region
    $region30: #{encoder1d_forward.1} parent=1 // pred_check
      _
    $region31: #{encoder1d_forward.1} parent=1 // pred_check_branch
      %7040 = sbr.rel (0) target = $region33
    $region32: #{encoder1d_forward.1} parent=1 // pred_region
      _
    $region33: #{encoder1d_forward.1} parent=1 // pred_fallthru
      _
    // Predicated region
    $region34: #{encoder1d_forward.1} parent=1 // pred_check
      _
    $region35: #{encoder1d_forward.1} parent=1 // pred_check_branch
      %7042 = sbr.rel (0) target = $region37
    $region36: #{encoder1d_forward.1} parent=1 // pred_region
      _
    $region37: #{encoder1d_forward.1} parent=1 // pred_fallthru
      _
    %7043 = vsyncpa [#allocation3], 1
    %7044 = vsyncpa [#allocation5], 1

</llo_original>
